<compile_context>
chip_gen: v6e
topology: v6e:2x2x1
jax: 0.10.0
libtpu: 0.0.40
codegen_flags: <defaults>
</compile_context>

<pallas_src>
import functools

import jax
import jax.numpy as jnp
import numpy as np
from jax.experimental import pallas as pl
from jax.experimental.pallas import tpu as pltpu

_PADW = 8  # sublane-aligned left zero margin on the W axis of the padded scratch


# -----------------------------------------------------------------------------
# Fused Net forward kernel: [conv3x3(pad=1)+ReLU+maxpool2]* -> flatten -> MLP
# -----------------------------------------------------------------------------
def _make_net_kernel(nb, conv_cfgs, ksize, n_fc):
    n_conv = len(conv_cfgs)
    Hf = conv_cfgs[-1][0] // 2
    Wf = conv_cfgs[-1][1] // 2
    Cf = conv_cfgs[-1][3]
    P = Hf * Wf  # number of spatial positions feeding the classifier

    def kernel(*refs):
        pos = 0
        x_ref = refs[pos]; pos += 1
        conv_refs = [(refs[pos + 2 * i], refs[pos + 2 * i + 1]) for i in range(n_conv)]
        pos += 2 * n_conv
        fc_refs = [(refs[pos + 2 * i], refs[pos + 2 * i + 1]) for i in range(n_fc)]
        pos += 2 * n_fc
        o_ref = refs[pos]; pos += 1
        pad_refs = [refs[pos + 2 * i] for i in range(n_conv)]
        rp_refs = [refs[pos + 2 * i + 1] for i in range(n_conv)]

        # ---------------- features ------------------------------------------------
        feat = None
        act = x_ref[...]                                   # (nb, H, W, Cin), NHWC
        for bi, (H, W, Cin, Cout) in enumerate(conv_cfgs):
            Ho, Wo = H // 2, W // 2
            w_ref, b_ref = conv_refs[bi]
            pad_ref, rp_ref = pad_refs[bi], rp_refs[bi]
            Wp = W + 2 * _PADW

            # Halo-only zero-fill: only rows 0 / H+1 and columns _PADW-1 / _PADW+W
            # are ever read outside the interior, and the interior is fully
            # overwritten by the act store below.
            zrow = jnp.zeros((nb, 1, Wp, Cin), jnp.float32)
            zcol = jnp.zeros((nb, H + 2, 1, Cin), jnp.float32)
            pad_ref[:, 0:1, :, :] = zrow
            pad_ref[:, H + 1:H + 2, :, :] = zrow
            pad_ref[:, :, _PADW - 1:_PADW, :] = zcol
            pad_ref[:, :, _PADW + W:_PADW + W + 1, :] = zcol
            pad_ref[:, 1:H + 1, _PADW:_PADW + W, :] = act

            # im2col: 9 shifted reads concatenated on the lane (K) axis -> ONE GEMM
            # with K = ksize*ksize*Cin (weight reshaped host-side to match order
            # (kh, kw, ci)); batch folded into M = nb*H*W.
            rows = nb * H * W
            pieces = []
            for kh in range(ksize):
                for kw in range(ksize):
                    c0 = _PADW - 1 + kw
                    pieces.append(
                        pad_ref[:, kh:kh + H, c0:c0 + W, :].reshape(rows, Cin))
            slab = jnp.concatenate(pieces, axis=-1)          # (rows, k*k*Cin)
            acc = jnp.dot(slab.astype(jnp.bfloat16), w_ref[...],
                          preferred_element_type=jnp.float32)
            a = jnp.maximum(acc + b_ref[...], 0.0)           # bias + ReLU

            # 2x2 max-pool: adjacent rows pooled in registers...
            a = a.reshape(nb * Ho, 2, W, Cout)
            a = jnp.maximum(a[:, 0], a[:, 1])                # (nb*Ho, W, Cout)
            # ...column pairs via one contiguous store + strided reads.
            rp_ref[...] = a.reshape(nb * Ho * W, Cout)       # rows ordered (n, ho, w)

            if bi + 1 < n_conv:
                even = rp_ref[pl.ds(0, nb * Ho * Wo, stride=2), :]
                odd = rp_ref[pl.ds(1, nb * Ho * Wo, stride=2), :]
                act = jnp.maximum(even, odd).reshape(nb, Ho, Wo, Cout)
            else:
                # Last block: fuse the column pool with the NHWC flatten — build
                # the (nb, P*Cf) classifier input directly with per-position
                # strided reads + ONE lane concat (no feat scratch, single FC1 GEMM).
                f_pieces = []
                for p in range(P):
                    ho, wo = p // Wo, p % Wo
                    ev = rp_ref[pl.ds(ho * W + 2 * wo, nb, stride=Ho * W), :]
                    od = rp_ref[pl.ds(ho * W + 2 * wo + 1, nb, stride=Ho * W), :]
                    f_pieces.append(jnp.maximum(ev, od))     # (nb, Cf)
                feat = jnp.concatenate(f_pieces, axis=-1)    # (nb, P*Cf)

        # ---------------- classifier ----------------------------------------------
        # TODO(synk): nn.Dropout is treated as inference-mode identity (no RNG mask).
        h = feat
        for li in range(n_fc):
            w_ref, b_ref = fc_refs[li]
            h = jnp.dot(h.astype(jnp.bfloat16), w_ref[...],
                        preferred_element_type=jnp.float32) + b_ref[...]
            if li < n_fc - 1:
                h = jnp.maximum(h, 0.0)
        o_ref[...] = h                                       # (nb, 128) lane-dense

    return kernel


def net_forward(x_nchw, conv_mats, fc_mats, *, kernel_size, num_classes,
                batch_block=None):
    """Full Net forward in a single fused Pallas kernel.

    conv_mats: [(w_flat (k*k*Cin, Cout) bf16, b (1,Cout) f32)]
    fc_mats:   [(w (in,out) bf16, b (1,out) f32)] — FC1 rows NHWC-permuted, last
               layer padded to a multiple of 128 output columns.
    """
    assert kernel_size == 3, "in-kernel padding geometry assumes 3x3, pad=1"
    x = jnp.transpose(x_nchw, (0, 2, 3, 1)).astype(jnp.float32)   # NCHW -> NHWC
    N, H0, W0, C0 = x.shape
    # Whole batch in one grid step by default (batch is tiny).  For large batches
    # (or to feed both v7x TensorCores) set batch_block to a divisor of N that is
    # either N or a multiple of 8 (output-block sublane constraint).
    nb = N if batch_block is None else batch_block
    assert N % nb == 0, "batch_block must divide the batch size"

    # static per-block conv geometry
    cfgs = []
    Hc, Wc, Cc = H0, W0, C0
    for w_flat, _ in conv_mats:
        Cout = w_flat.shape[-1]
        cfgs.append((Hc, Wc, Cc, Cout))
        Hc, Wc, Cc = Hc // 2, Wc // 2, Cout

    n_fc = len(fc_mats)
    cpad = fc_mats[-1][0].shape[1]

    flat_in = [x]
    in_specs = [pl.BlockSpec((nb, H0, W0, C0), lambda n: (n, 0, 0, 0))]
    for w_flat, b_row in conv_mats:
        flat_in += [w_flat, b_row]
        in_specs += [pl.BlockSpec(w_flat.shape, lambda n: (0, 0)),
                     pl.BlockSpec(b_row.shape, lambda n: (0, 0))]
    for w, b_row in fc_mats:
        flat_in += [w, b_row]
        in_specs += [pl.BlockSpec(w.shape, lambda n: (0, 0)),
                     pl.BlockSpec(b_row.shape, lambda n: (0, 0))]

    scratch = []
    for (Hh, Ww, Ci, Co) in cfgs:
        scratch.append(pltpu.VMEM((nb, Hh + 2, Ww + 2 * _PADW, Ci), jnp.float32))
        scratch.append(pltpu.VMEM((nb * (Hh // 2) * Ww, Co), jnp.float32))

    # Advisory cost estimate so XLA doesn't treat the fused call as zero-cost.
    flops = 0
    for (Hh, Ww, Ci, Co) in cfgs:
        flops += 2 * N * Hh * Ww * (kernel_size * kernel_size * Ci) * Co
    for w, _ in fc_mats:
        flops += 2 * N * int(w.shape[0]) * int(w.shape[1])
    bytes_accessed = int(x.size) * 4 + N * cpad * 4
    for w, b in list(conv_mats) + list(fc_mats):
        bytes_accessed += int(w.size) * w.dtype.itemsize + int(b.size) * b.dtype.itemsize

    out = pl.pallas_call(
        _make_net_kernel(nb, tuple(cfgs), kernel_size, n_fc),
        out_shape=jax.ShapeDtypeStruct((N, cpad), jnp.float32),
        grid=(N // nb,),
        in_specs=in_specs,
        out_specs=pl.BlockSpec((nb, cpad), lambda n: (n, 0)),
        scratch_shapes=scratch,
        compiler_params=pltpu.CompilerParams(dimension_semantics=("parallel",)),
        cost_estimate=pl.CostEstimate(flops=int(flops), transcendentals=0,
                                      bytes_accessed=int(bytes_accessed)),
    )(*flat_in)
    return out[:, :num_classes]


# -----------------------------------------------------------------------------
# Pure-JAX reference (torch semantics, for verification only)
# -----------------------------------------------------------------------------
def reference_forward(x_nchw, conv_params, fc_params):
    x = jnp.transpose(x_nchw, (0, 2, 3, 1))
    for w, b in conv_params:
        y = jax.lax.conv_general_dilated(
            x, w, window_strides=(1, 1), padding=((1, 1), (1, 1)),
            dimension_numbers=("NHWC", "HWIO", "NHWC"))
        y = jnp.maximum(y + b.reshape(1, 1, 1, -1), 0.0)
        x = jax.lax.reduce_window(y, -jnp.inf, jax.lax.max,
                                  (1, 2, 2, 1), (1, 2, 2, 1), "VALID")
    h = jnp.transpose(x, (0, 3, 1, 2)).reshape(x.shape[0], -1)   # NCHW flatten
    for i, (w, b) in enumerate(fc_params):
        h = h @ w + b
        if i < len(fc_params) - 1:
            h = jnp.maximum(h, 0.0)
    return h


# -----------------------------------------------------------------------------
# Deterministic parameter construction (PyTorch shapes -> JAX layout)
# -----------------------------------------------------------------------------
def make_params(key, num_filters_list, kernel_size, num_classes, num_fc_layers,
                input_size):
    conv_params = []
    in_channels = 3
    out_size = input_size
    for num_filters in num_filters_list:
        key, kw_, kb_ = jax.random.split(key, 3)
        fan_in = in_channels * kernel_size * kernel_size
        # torch layout (Cout, Cin, kh, kw) -> HWIO
        w_t = jax.random.normal(
            kw_, (num_filters, in_channels, kernel_size, kernel_size),
            jnp.float32) / np.sqrt(fan_in)
        w = jnp.transpose(w_t, (2, 3, 1, 0))
        b = jax.random.normal(kb_, (num_filters,), jnp.float32) * 0.01
        conv_params.append((w, b))
        in_channels = num_filters
        out_size = ((out_size - kernel_size + 2) + 1) // 2
    output_features = int(out_size * out_size * num_filters_list[-1])

    fc_dims = [output_features, 512] + [512] * (num_fc_layers - 1) + [num_classes]
    fc_params = []
    for i in range(len(fc_dims) - 1):
        key, kw_, kb_ = jax.random.split(key, 3)
        # torch layout (out, in) -> (in, out); FC1 rows follow torch's NCHW flatten
        w_t = jax.random.normal(kw_, (fc_dims[i + 1], fc_dims[i]),
                                jnp.float32) / np.sqrt(fc_dims[i])
        w = jnp.transpose(w_t, (1, 0))
        b = jax.random.normal(kb_, (fc_dims[i + 1],), jnp.float32) * 0.01
        fc_params.append((w, b))
    return conv_params, fc_params


def prepare_kernel_params(conv_params, fc_params, num_filters_list, kernel_size,
                          input_size):
    """One-time host-side prep: conv weights reshaped to (k*k*Cin, Cout) im2col
    layout, FC1 row permutation (NCHW->NHWC flatten order), lane-padding of the
    final Linear to a multiple of 128 columns, bf16 weight casts, f32 bias rows."""
    out_size = input_size
    for _ in num_filters_list:
        out_size = ((out_size - kernel_size + 2) + 1) // 2
    Cf, Hf, Wf = num_filters_list[-1], out_size, out_size

    conv_mats = []
    for (w, b) in conv_params:                    # w is HWIO (K, K, Cin, Cout)
        K0, K1, Cin, Cout = w.shape
        w_flat = w.reshape(K0 * K1 * Cin, Cout).astype(jnp.bfloat16)  # (kh,kw,ci) rows
        conv_mats.append((w_flat, b.reshape(1, -1).astype(jnp.float32)))

    F = Cf * Hf * Wf
    idx = np.arange(F)
    hh = idx // (Wf * Cf)
    ww = (idx // Cf) % Wf
    cc = idx % Cf
    perm = cc * (Hf * Wf) + hh * Wf + ww          # NHWC flat index -> NCHW flat index

    fc_mats = []
    n_fc = len(fc_params)
    for i, (w, b) in enumerate(fc_params):
        w = w.astype(jnp.float32)
        b_row = b.reshape(1, -1).astype(jnp.float32)
        if i == 0:
            w = w[perm, :]                        # consume NHWC-flatten features
        if i == n_fc - 1:
            out_dim = w.shape[1]
            cpad = max(128, ((out_dim + 127) // 128) * 128)
            w = jnp.pad(w, ((0, 0), (0, cpad - out_dim)))
            b_row = jnp.pad(b_row, ((0, 0), (0, cpad - out_dim)))
        fc_mats.append((w.astype(jnp.bfloat16), b_row))
    return conv_mats, fc_mats


if __name__ == "__main__":
    # Small config consistent with the module: input 3x16x16, two conv blocks.
    num_filters_list = [4, 8]
    kernel_size = 3
    num_classes = 10
    num_fc_layers = 2
    input_size = 16
    batch = 2

    key = jax.random.PRNGKey(0)
    key, kx = jax.random.split(key)
    x = jax.random.normal(kx, (batch, 3, input_size, input_size), jnp.float32)

    conv_params, fc_params = make_params(
        key, num_filters_list, kernel_size, num_classes, num_fc_layers, input_size)
    conv_mats, fc_mats = prepare_kernel_params(
        conv_params, fc_params, num_filters_list, kernel_size, input_size)

    fwd = jax.jit(functools.partial(
        net_forward, kernel_size=kernel_size, num_classes=num_classes))
    out = jax.block_until_ready(fwd(x, conv_mats, fc_mats))

    ref = jax.block_until_ready(reference_forward(x, conv_params, fc_params))
    np.testing.assert_allclose(np.asarray(out), np.asarray(ref),
                               rtol=3e-2, atol=3e-2)
    assert out.shape == (batch, num_classes)
    print("KERNEL_OK")
</pallas_src>

<mosaic_0001>
module attributes {stable_mosaic.version = 11 : i64} {
  func.func @kernel(%arg0: i32, %arg1: memref<2x16x16x3xf32, #tpu.memory_space<vmem>>, %arg2: memref<27x4xbf16, #tpu.memory_space<vmem>>, %arg3: memref<1x4xf32, #tpu.memory_space<vmem>>, %arg4: memref<36x8xbf16, #tpu.memory_space<vmem>>, %arg5: memref<1x8xf32, #tpu.memory_space<vmem>>, %arg6: memref<128x512xbf16, #tpu.memory_space<vmem>>, %arg7: memref<1x512xf32, #tpu.memory_space<vmem>>, %arg8: memref<512x512xbf16, #tpu.memory_space<vmem>>, %arg9: memref<1x512xf32, #tpu.memory_space<vmem>>, %arg10: memref<512x128xbf16, #tpu.memory_space<vmem>>, %arg11: memref<1x128xf32, #tpu.memory_space<vmem>>, %arg12: memref<2x128xf32, #tpu.memory_space<vmem>>, %arg13: memref<2x18x32x3xf32, #tpu.memory_space<vmem>>, %arg14: memref<256x4xf32, #tpu.memory_space<vmem>>, %arg15: memref<2x10x24x4xf32, #tpu.memory_space<vmem>>, %arg16: memref<64x8xf32, #tpu.memory_space<vmem>>) attributes {dimension_semantics = [#tpu.dimension_semantics<parallel>], iteration_bounds = array<i64: 1>, scalar_prefetch = 0 : i64, scratch_operands = 4 : i64, tpu.core_type = #tpu.core_type<tc>, window_params = [{transform_indices = @transform_0, window_bounds = array<i64: 2, 16, 16, 3>}, {pipeline_mode = #tpu.pipeline_mode<synchronous>, transform_indices = @transform_1, window_bounds = array<i64: 27, 4>}, {pipeline_mode = #tpu.pipeline_mode<synchronous>, transform_indices = @transform_2, window_bounds = array<i64: 1, 4>}, {pipeline_mode = #tpu.pipeline_mode<synchronous>, transform_indices = @transform_3, window_bounds = array<i64: 36, 8>}, {pipeline_mode = #tpu.pipeline_mode<synchronous>, transform_indices = @transform_4, window_bounds = array<i64: 1, 8>}, {pipeline_mode = #tpu.pipeline_mode<synchronous>, transform_indices = @transform_5, window_bounds = array<i64: 128, 512>}, {pipeline_mode = #tpu.pipeline_mode<synchronous>, transform_indices = @transform_6, window_bounds = array<i64: 1, 512>}, {pipeline_mode = #tpu.pipeline_mode<synchronous>, transform_indices = @transform_7, window_bounds = array<i64: 512, 512>}, {pipeline_mode = #tpu.pipeline_mode<synchronous>, transform_indices = @transform_8, window_bounds = array<i64: 1, 512>}, {pipeline_mode = #tpu.pipeline_mode<synchronous>, transform_indices = @transform_9, window_bounds = array<i64: 512, 128>}, {pipeline_mode = #tpu.pipeline_mode<synchronous>, transform_indices = @transform_10, window_bounds = array<i64: 1, 128>}, {transform_indices = @transform_11, window_bounds = array<i64: 2, 128>}]} {
    %c0 = arith.constant 0 : index
    %c0_0 = arith.constant 0 : index
    %c0_1 = arith.constant 0 : index
    %c0_2 = arith.constant 0 : index
    %0 = vector.load %arg1[%c0, %c0_0, %c0_1, %c0_2] : memref<2x16x16x3xf32, #tpu.memory_space<vmem>>, vector<2x16x16x3xf32>
    %cst = arith.constant 0.000000e+00 : f32
    %1 = vector.broadcast %cst : f32 to vector<2x1x32x3xf32>
    %cst_3 = arith.constant 0.000000e+00 : f32
    %2 = vector.broadcast %cst_3 : f32 to vector<2x18x1x3xf32>
    %c0_4 = arith.constant 0 : index
    %c0_5 = arith.constant 0 : index
    %c0_6 = arith.constant 0 : index
    %c0_7 = arith.constant 0 : index
    %3 = vector.load %arg13[%c0_4, %c0_5, %c0_6, %c0_7] : memref<2x18x32x3xf32, #tpu.memory_space<vmem>>, vector<2x1x32x3xf32>
    tpu.vector_store %arg13[%c0_4, %c0_5, %c0_6, %c0_7], %1 {strides = array<i32>} : memref<2x18x32x3xf32, #tpu.memory_space<vmem>>, vector<2x1x32x3xf32>,
    %c0_8 = arith.constant 0 : index
    %c17 = arith.constant 17 : index
    %c0_9 = arith.constant 0 : index
    %c0_10 = arith.constant 0 : index
    %4 = vector.load %arg13[%c0_8, %c17, %c0_9, %c0_10] : memref<2x18x32x3xf32, #tpu.memory_space<vmem>>, vector<2x1x32x3xf32>
    tpu.vector_store %arg13[%c0_8, %c17, %c0_9, %c0_10], %1 {strides = array<i32>} : memref<2x18x32x3xf32, #tpu.memory_space<vmem>>, vector<2x1x32x3xf32>,
    %c0_11 = arith.constant 0 : index
    %c0_12 = arith.constant 0 : index
    %c7 = arith.constant 7 : index
    %c0_13 = arith.constant 0 : index
    %5 = vector.load %arg13[%c0_11, %c0_12, %c7, %c0_13] : memref<2x18x32x3xf32, #tpu.memory_space<vmem>>, vector<2x18x1x3xf32>
    tpu.vector_store %arg13[%c0_11, %c0_12, %c7, %c0_13], %2 {strides = array<i32>} : memref<2x18x32x3xf32, #tpu.memory_space<vmem>>, vector<2x18x1x3xf32>,
    %c0_14 = arith.constant 0 : index
    %c0_15 = arith.constant 0 : index
    %c24 = arith.constant 24 : index
    %c0_16 = arith.constant 0 : index
    %6 = vector.load %arg13[%c0_14, %c0_15, %c24, %c0_16] : memref<2x18x32x3xf32, #tpu.memory_space<vmem>>, vector<2x18x1x3xf32>
    tpu.vector_store %arg13[%c0_14, %c0_15, %c24, %c0_16], %2 {strides = array<i32>} : memref<2x18x32x3xf32, #tpu.memory_space<vmem>>, vector<2x18x1x3xf32>,
    %c0_17 = arith.constant 0 : index
    %c1 = arith.constant 1 : index
    %c8 = arith.constant 8 : index
    %c0_18 = arith.constant 0 : index
    %7 = vector.load %arg13[%c0_17, %c1, %c8, %c0_18] : memref<2x18x32x3xf32, #tpu.memory_space<vmem>>, vector<2x16x16x3xf32>
    tpu.vector_store %arg13[%c0_17, %c1, %c8, %c0_18], %0 {strides = array<i32>} : memref<2x18x32x3xf32, #tpu.memory_space<vmem>>, vector<2x16x16x3xf32>,
    %c0_19 = arith.constant 0 : index
    %c0_20 = arith.constant 0 : index
    %c7_21 = arith.constant 7 : index
    %c0_22 = arith.constant 0 : index
    %8 = vector.load %arg13[%c0_19, %c0_20, %c7_21, %c0_22] : memref<2x18x32x3xf32, #tpu.memory_space<vmem>>, vector<2x16x16x3xf32>
    %9 = vector.shape_cast %8 : vector<2x16x16x3xf32> to vector<512x3xf32>
    %c0_23 = arith.constant 0 : index
    %c0_24 = arith.constant 0 : index
    %c8_25 = arith.constant 8 : index
    %c0_26 = arith.constant 0 : index
    %10 = vector.load %arg13[%c0_23, %c0_24, %c8_25, %c0_26] : memref<2x18x32x3xf32, #tpu.memory_space<vmem>>, vector<2x16x16x3xf32>
    %11 = vector.shape_cast %10 : vector<2x16x16x3xf32> to vector<512x3xf32>
    %c0_27 = arith.constant 0 : index
    %c0_28 = arith.constant 0 : index
    %c9 = arith.constant 9 : index
    %c0_29 = arith.constant 0 : index
    %12 = vector.load %arg13[%c0_27, %c0_28, %c9, %c0_29] : memref<2x18x32x3xf32, #tpu.memory_space<vmem>>, vector<2x16x16x3xf32>
    %13 = vector.shape_cast %12 : vector<2x16x16x3xf32> to vector<512x3xf32>
    %c0_30 = arith.constant 0 : index
    %c1_31 = arith.constant 1 : index
    %c7_32 = arith.constant 7 : index
    %c0_33 = arith.constant 0 : index
    %14 = vector.load %arg13[%c0_30, %c1_31, %c7_32, %c0_33] : memref<2x18x32x3xf32, #tpu.memory_space<vmem>>, vector<2x16x16x3xf32>
    %15 = vector.shape_cast %14 : vector<2x16x16x3xf32> to vector<512x3xf32>
    %c0_34 = arith.constant 0 : index
    %c1_35 = arith.constant 1 : index
    %c8_36 = arith.constant 8 : index
    %c0_37 = arith.constant 0 : index
    %16 = vector.load %arg13[%c0_34, %c1_35, %c8_36, %c0_37] : memref<2x18x32x3xf32, #tpu.memory_space<vmem>>, vector<2x16x16x3xf32>
    %17 = vector.shape_cast %16 : vector<2x16x16x3xf32> to vector<512x3xf32>
    %c0_38 = arith.constant 0 : index
    %c1_39 = arith.constant 1 : index
    %c9_40 = arith.constant 9 : index
    %c0_41 = arith.constant 0 : index
    %18 = vector.load %arg13[%c0_38, %c1_39, %c9_40, %c0_41] : memref<2x18x32x3xf32, #tpu.memory_space<vmem>>, vector<2x16x16x3xf32>
    %19 = vector.shape_cast %18 : vector<2x16x16x3xf32> to vector<512x3xf32>
    %c0_42 = arith.constant 0 : index
    %c2 = arith.constant 2 : index
    %c7_43 = arith.constant 7 : index
    %c0_44 = arith.constant 0 : index
    %20 = vector.load %arg13[%c0_42, %c2, %c7_43, %c0_44] : memref<2x18x32x3xf32, #tpu.memory_space<vmem>>, vector<2x16x16x3xf32>
    %21 = vector.shape_cast %20 : vector<2x16x16x3xf32> to vector<512x3xf32>
    %c0_45 = arith.constant 0 : index
    %c2_46 = arith.constant 2 : index
    %c8_47 = arith.constant 8 : index
    %c0_48 = arith.constant 0 : index
    %22 = vector.load %arg13[%c0_45, %c2_46, %c8_47, %c0_48] : memref<2x18x32x3xf32, #tpu.memory_space<vmem>>, vector<2x16x16x3xf32>
    %23 = vector.shape_cast %22 : vector<2x16x16x3xf32> to vector<512x3xf32>
    %c0_49 = arith.constant 0 : index
    %c2_50 = arith.constant 2 : index
    %c9_51 = arith.constant 9 : index
    %c0_52 = arith.constant 0 : index
    %24 = vector.load %arg13[%c0_49, %c2_50, %c9_51, %c0_52] : memref<2x18x32x3xf32, #tpu.memory_space<vmem>>, vector<2x16x16x3xf32>
    %25 = vector.shape_cast %24 : vector<2x16x16x3xf32> to vector<512x3xf32>
    %26 = tpu.concatenate %9, %11, %13, %15, %17, %19, %21, %23, %25 in 1 : vector<512x3xf32>, vector<512x3xf32>, vector<512x3xf32>, vector<512x3xf32>, vector<512x3xf32>, vector<512x3xf32>, vector<512x3xf32>, vector<512x3xf32>, vector<512x3xf32> -> vector<512x27xf32>
    %27 = arith.truncf %26 : vector<512x27xf32> to vector<512x27xbf16>
    %c0_53 = arith.constant 0 : index
    %c0_54 = arith.constant 0 : index
    %28 = vector.load %arg2[%c0_53, %c0_54] : memref<27x4xbf16, #tpu.memory_space<vmem>>, vector<27x4xbf16>
    %cst_55 = arith.constant dense<0.000000e+00> : vector<512x4xf32>
    %29 = tpu.matmul %27, %28, %cst_55 {dimension_numbers = #tpu.dot_dimension_numbers<[1], [0], [0], [1], [0, 0, 1, 1], [], []>} : vector<512x27xbf16>, vector<27x4xbf16>, vector<512x4xf32> -> vector<512x4xf32>
    %c0_56 = arith.constant 0 : index
    %c0_57 = arith.constant 0 : index
    %30 = vector.load %arg3[%c0_56, %c0_57] : memref<1x4xf32, #tpu.memory_space<vmem>>, vector<1x4xf32>
    %31 = vector.broadcast %30 : vector<1x4xf32> to vector<512x4xf32>
    %32 = arith.addf %29, %31 : vector<512x4xf32>
    %cst_58 = arith.constant 0.000000e+00 : f32
    %33 = vector.broadcast %cst_58 : f32 to vector<512x4xf32>
    %34 = arith.maximumf %32, %33 : vector<512x4xf32>
    %35 = vector.shape_cast %34 : vector<512x4xf32> to vector<16x2x16x4xf32>
    %36 = vector.extract_strided_slice %35 {offsets = [0, 0, 0, 0], sizes = [16, 1, 16, 4], strides = [1, 1, 1, 1]} : vector<16x2x16x4xf32> to vector<16x1x16x4xf32>
    %37 = vector.shape_cast %36 : vector<16x1x16x4xf32> to vector<16x16x4xf32>
    %38 = vector.extract_strided_slice %35 {offsets = [0, 1, 0, 0], sizes = [16, 1, 16, 4], strides = [1, 1, 1, 1]} : vector<16x2x16x4xf32> to vector<16x1x16x4xf32>
    %39 = vector.shape_cast %38 : vector<16x1x16x4xf32> to vector<16x16x4xf32>
    %40 = arith.maximumf %37, %39 : vector<16x16x4xf32>
    %41 = vector.shape_cast %40 : vector<16x16x4xf32> to vector<256x4xf32>
    %c0_59 = arith.constant 0 : index
    %c0_60 = arith.constant 0 : index
    %42 = vector.load %arg14[%c0_59, %c0_60] : memref<256x4xf32, #tpu.memory_space<vmem>>, vector<256x4xf32>
    tpu.vector_store %arg14[%c0_59, %c0_60], %41 {strides = array<i32>} : memref<256x4xf32, #tpu.memory_space<vmem>>, vector<256x4xf32>,
    %c0_61 = arith.constant 0 : index
    %c0_62 = arith.constant 0 : index
    %43 = tpu.strided_load %arg14[%c0_61, %c0_62] {strides = array<i32: 2, 1>} : memref<256x4xf32, #tpu.memory_space<vmem>>, vector<128x4xf32>
    %c1_63 = arith.constant 1 : index
    %c0_64 = arith.constant 0 : index
    %44 = tpu.strided_load %arg14[%c1_63, %c0_64] {strides = array<i32: 2, 1>} : memref<256x4xf32, #tpu.memory_space<vmem>>, vector<128x4xf32>
    %45 = arith.maximumf %43, %44 : vector<128x4xf32>
    %46 = vector.shape_cast %45 : vector<128x4xf32> to vector<2x8x8x4xf32>
    %cst_65 = arith.constant 0.000000e+00 : f32
    %47 = vector.broadcast %cst_65 : f32 to vector<2x1x24x4xf32>
    %cst_66 = arith.constant 0.000000e+00 : f32
    %48 = vector.broadcast %cst_66 : f32 to vector<2x10x1x4xf32>
    %c0_67 = arith.constant 0 : index
    %c0_68 = arith.constant 0 : index
    %c0_69 = arith.constant 0 : index
    %c0_70 = arith.constant 0 : index
    %49 = vector.load %arg15[%c0_67, %c0_68, %c0_69, %c0_70] : memref<2x10x24x4xf32, #tpu.memory_space<vmem>>, vector<2x1x24x4xf32>
    tpu.vector_store %arg15[%c0_67, %c0_68, %c0_69, %c0_70], %47 {strides = array<i32>} : memref<2x10x24x4xf32, #tpu.memory_space<vmem>>, vector<2x1x24x4xf32>,
    %c0_71 = arith.constant 0 : index
    %c9_72 = arith.constant 9 : index
    %c0_73 = arith.constant 0 : index
    %c0_74 = arith.constant 0 : index
    %50 = vector.load %arg15[%c0_71, %c9_72, %c0_73, %c0_74] : memref<2x10x24x4xf32, #tpu.memory_space<vmem>>, vector<2x1x24x4xf32>
    tpu.vector_store %arg15[%c0_71, %c9_72, %c0_73, %c0_74], %47 {strides = array<i32>} : memref<2x10x24x4xf32, #tpu.memory_space<vmem>>, vector<2x1x24x4xf32>,
    %c0_75 = arith.constant 0 : index
    %c0_76 = arith.constant 0 : index
    %c7_77 = arith.constant 7 : index
    %c0_78 = arith.constant 0 : index
    %51 = vector.load %arg15[%c0_75, %c0_76, %c7_77, %c0_78] : memref<2x10x24x4xf32, #tpu.memory_space<vmem>>, vector<2x10x1x4xf32>
    tpu.vector_store %arg15[%c0_75, %c0_76, %c7_77, %c0_78], %48 {strides = array<i32>} : memref<2x10x24x4xf32, #tpu.memory_space<vmem>>, vector<2x10x1x4xf32>,
    %c0_79 = arith.constant 0 : index
    %c0_80 = arith.constant 0 : index
    %c16 = arith.constant 16 : index
    %c0_81 = arith.constant 0 : index
    %52 = vector.load %arg15[%c0_79, %c0_80, %c16, %c0_81] : memref<2x10x24x4xf32, #tpu.memory_space<vmem>>, vector<2x10x1x4xf32>
    tpu.vector_store %arg15[%c0_79, %c0_80, %c16, %c0_81], %48 {strides = array<i32>} : memref<2x10x24x4xf32, #tpu.memory_space<vmem>>, vector<2x10x1x4xf32>,
    %c0_82 = arith.constant 0 : index
    %c1_83 = arith.constant 1 : index
    %c8_84 = arith.constant 8 : index
    %c0_85 = arith.constant 0 : index
    %53 = vector.load %arg15[%c0_82, %c1_83, %c8_84, %c0_85] : memref<2x10x24x4xf32, #tpu.memory_space<vmem>>, vector<2x8x8x4xf32>
    tpu.vector_store %arg15[%c0_82, %c1_83, %c8_84, %c0_85], %46 {strides = array<i32>} : memref<2x10x24x4xf32, #tpu.memory_space<vmem>>, vector<2x8x8x4xf32>,
    %c0_86 = arith.constant 0 : index
    %c0_87 = arith.constant 0 : index
    %c7_88 = arith.constant 7 : index
    %c0_89 = arith.constant 0 : index
    %54 = vector.load %arg15[%c0_86, %c0_87, %c7_88, %c0_89] : memref<2x10x24x4xf32, #tpu.memory_space<vmem>>, vector<2x8x8x4xf32>
    %55 = vector.shape_cast %54 : vector<2x8x8x4xf32> to vector<128x4xf32>
    %c0_90 = arith.constant 0 : index
    %c0_91 = arith.constant 0 : index
    %c8_92 = arith.constant 8 : index
    %c0_93 = arith.constant 0 : index
    %56 = vector.load %arg15[%c0_90, %c0_91, %c8_92, %c0_93] : memref<2x10x24x4xf32, #tpu.memory_space<vmem>>, vector<2x8x8x4xf32>
    %57 = vector.shape_cast %56 : vector<2x8x8x4xf32> to vector<128x4xf32>
    %c0_94 = arith.constant 0 : index
    %c0_95 = arith.constant 0 : index
    %c9_96 = arith.constant 9 : index
    %c0_97 = arith.constant 0 : index
    %58 = vector.load %arg15[%c0_94, %c0_95, %c9_96, %c0_97] : memref<2x10x24x4xf32, #tpu.memory_space<vmem>>, vector<2x8x8x4xf32>
    %59 = vector.shape_cast %58 : vector<2x8x8x4xf32> to vector<128x4xf32>
    %c0_98 = arith.constant 0 : index
    %c1_99 = arith.constant 1 : index
    %c7_100 = arith.constant 7 : index
    %c0_101 = arith.constant 0 : index
    %60 = vector.load %arg15[%c0_98, %c1_99, %c7_100, %c0_101] : memref<2x10x24x4xf32, #tpu.memory_space<vmem>>, vector<2x8x8x4xf32>
    %61 = vector.shape_cast %60 : vector<2x8x8x4xf32> to vector<128x4xf32>
    %c0_102 = arith.constant 0 : index
    %c1_103 = arith.constant 1 : index
    %c8_104 = arith.constant 8 : index
    %c0_105 = arith.constant 0 : index
    %62 = vector.load %arg15[%c0_102, %c1_103, %c8_104, %c0_105] : memref<2x10x24x4xf32, #tpu.memory_space<vmem>>, vector<2x8x8x4xf32>
    %63 = vector.shape_cast %62 : vector<2x8x8x4xf32> to vector<128x4xf32>
    %c0_106 = arith.constant 0 : index
    %c1_107 = arith.constant 1 : index
    %c9_108 = arith.constant 9 : index
    %c0_109 = arith.constant 0 : index
    %64 = vector.load %arg15[%c0_106, %c1_107, %c9_108, %c0_109] : memref<2x10x24x4xf32, #tpu.memory_space<vmem>>, vector<2x8x8x4xf32>
    %65 = vector.shape_cast %64 : vector<2x8x8x4xf32> to vector<128x4xf32>
    %c0_110 = arith.constant 0 : index
    %c2_111 = arith.constant 2 : index
    %c7_112 = arith.constant 7 : index
    %c0_113 = arith.constant 0 : index
    %66 = vector.load %arg15[%c0_110, %c2_111, %c7_112, %c0_113] : memref<2x10x24x4xf32, #tpu.memory_space<vmem>>, vector<2x8x8x4xf32>
    %67 = vector.shape_cast %66 : vector<2x8x8x4xf32> to vector<128x4xf32>
    %c0_114 = arith.constant 0 : index
    %c2_115 = arith.constant 2 : index
    %c8_116 = arith.constant 8 : index
    %c0_117 = arith.constant 0 : index
    %68 = vector.load %arg15[%c0_114, %c2_115, %c8_116, %c0_117] : memref<2x10x24x4xf32, #tpu.memory_space<vmem>>, vector<2x8x8x4xf32>
    %69 = vector.shape_cast %68 : vector<2x8x8x4xf32> to vector<128x4xf32>
    %c0_118 = arith.constant 0 : index
    %c2_119 = arith.constant 2 : index
    %c9_120 = arith.constant 9 : index
    %c0_121 = arith.constant 0 : index
    %70 = vector.load %arg15[%c0_118, %c2_119, %c9_120, %c0_121] : memref<2x10x24x4xf32, #tpu.memory_space<vmem>>, vector<2x8x8x4xf32>
    %71 = vector.shape_cast %70 : vector<2x8x8x4xf32> to vector<128x4xf32>
    %72 = tpu.concatenate %55, %57, %59, %61, %63, %65, %67, %69, %71 in 1 : vector<128x4xf32>, vector<128x4xf32>, vector<128x4xf32>, vector<128x4xf32>, vector<128x4xf32>, vector<128x4xf32>, vector<128x4xf32>, vector<128x4xf32>, vector<128x4xf32> -> vector<128x36xf32>
    %73 = arith.truncf %72 : vector<128x36xf32> to vector<128x36xbf16>
    %c0_122 = arith.constant 0 : index
    %c0_123 = arith.constant 0 : index
    %74 = vector.load %arg4[%c0_122, %c0_123] : memref<36x8xbf16, #tpu.memory_space<vmem>>, vector<36x8xbf16>
    %cst_124 = arith.constant dense<0.000000e+00> : vector<128x8xf32>
    %75 = tpu.matmul %73, %74, %cst_124 {dimension_numbers = #tpu.dot_dimension_numbers<[1], [0], [0], [1], [0, 0, 1, 1], [], []>} : vector<128x36xbf16>, vector<36x8xbf16>, vector<128x8xf32> -> vector<128x8xf32>
    %c0_125 = arith.constant 0 : index
    %c0_126 = arith.constant 0 : index
    %76 = vector.load %arg5[%c0_125, %c0_126] : memref<1x8xf32, #tpu.memory_space<vmem>>, vector<1x8xf32>
    %77 = vector.broadcast %76 : vector<1x8xf32> to vector<128x8xf32>
    %78 = arith.addf %75, %77 : vector<128x8xf32>
    %cst_127 = arith.constant 0.000000e+00 : f32
    %79 = vector.broadcast %cst_127 : f32 to vector<128x8xf32>
    %80 = arith.maximumf %78, %79 : vector<128x8xf32>
    %81 = vector.shape_cast %80 : vector<128x8xf32> to vector<8x2x8x8xf32>
    %82 = vector.extract_strided_slice %81 {offsets = [0, 0, 0, 0], sizes = [8, 1, 8, 8], strides = [1, 1, 1, 1]} : vector<8x2x8x8xf32> to vector<8x1x8x8xf32>
    %83 = vector.shape_cast %82 : vector<8x1x8x8xf32> to vector<8x8x8xf32>
    %84 = vector.extract_strided_slice %81 {offsets = [0, 1, 0, 0], sizes = [8, 1, 8, 8], strides = [1, 1, 1, 1]} : vector<8x2x8x8xf32> to vector<8x1x8x8xf32>
    %85 = vector.shape_cast %84 : vector<8x1x8x8xf32> to vector<8x8x8xf32>
    %86 = arith.maximumf %83, %85 : vector<8x8x8xf32>
    %87 = vector.shape_cast %86 : vector<8x8x8xf32> to vector<64x8xf32>
    %c0_128 = arith.constant 0 : index
    %c0_129 = arith.constant 0 : index
    %88 = vector.load %arg16[%c0_128, %c0_129] : memref<64x8xf32, #tpu.memory_space<vmem>>, vector<64x8xf32>
    tpu.vector_store %arg16[%c0_128, %c0_129], %87 {strides = array<i32>} : memref<64x8xf32, #tpu.memory_space<vmem>>, vector<64x8xf32>,
    %c0_130 = arith.constant 0 : index
    %c0_131 = arith.constant 0 : index
    %89 = tpu.strided_load %arg16[%c0_130, %c0_131] {strides = array<i32: 32, 1>} : memref<64x8xf32, #tpu.memory_space<vmem>>, vector<2x8xf32>
    %c1_132 = arith.constant 1 : index
    %c0_133 = arith.constant 0 : index
    %90 = tpu.strided_load %arg16[%c1_132, %c0_133] {strides = array<i32: 32, 1>} : memref<64x8xf32, #tpu.memory_space<vmem>>, vector<2x8xf32>
    %91 = arith.maximumf %89, %90 : vector<2x8xf32>
    %c2_134 = arith.constant 2 : index
    %c0_135 = arith.constant 0 : index
    %92 = tpu.strided_load %arg16[%c2_134, %c0_135] {strides = array<i32: 32, 1>} : memref<64x8xf32, #tpu.memory_space<vmem>>, vector<2x8xf32>
    %c3 = arith.constant 3 : index
    %c0_136 = arith.constant 0 : index
    %93 = tpu.strided_load %arg16[%c3, %c0_136] {strides = array<i32: 32, 1>} : memref<64x8xf32, #tpu.memory_space<vmem>>, vector<2x8xf32>
    %94 = arith.maximumf %92, %93 : vector<2x8xf32>
    %c4 = arith.constant 4 : index
    %c0_137 = arith.constant 0 : index
    %95 = tpu.strided_load %arg16[%c4, %c0_137] {strides = array<i32: 32, 1>} : memref<64x8xf32, #tpu.memory_space<vmem>>, vector<2x8xf32>
    %c5 = arith.constant 5 : index
    %c0_138 = arith.constant 0 : index
    %96 = tpu.strided_load %arg16[%c5, %c0_138] {strides = array<i32: 32, 1>} : memref<64x8xf32, #tpu.memory_space<vmem>>, vector<2x8xf32>
    %97 = arith.maximumf %95, %96 : vector<2x8xf32>
    %c6 = arith.constant 6 : index
    %c0_139 = arith.constant 0 : index
    %98 = tpu.strided_load %arg16[%c6, %c0_139] {strides = array<i32: 32, 1>} : memref<64x8xf32, #tpu.memory_space<vmem>>, vector<2x8xf32>
    %c7_140 = arith.constant 7 : index
    %c0_141 = arith.constant 0 : index
    %99 = tpu.strided_load %arg16[%c7_140, %c0_141] {strides = array<i32: 32, 1>} : memref<64x8xf32, #tpu.memory_space<vmem>>, vector<2x8xf32>
    %100 = arith.maximumf %98, %99 : vector<2x8xf32>
    %c8_142 = arith.constant 8 : index
    %c0_143 = arith.constant 0 : index
    %101 = tpu.strided_load %arg16[%c8_142, %c0_143] {strides = array<i32: 32, 1>} : memref<64x8xf32, #tpu.memory_space<vmem>>, vector<2x8xf32>
    %c9_144 = arith.constant 9 : index
    %c0_145 = arith.constant 0 : index
    %102 = tpu.strided_load %arg16[%c9_144, %c0_145] {strides = array<i32: 32, 1>} : memref<64x8xf32, #tpu.memory_space<vmem>>, vector<2x8xf32>
    %103 = arith.maximumf %101, %102 : vector<2x8xf32>
    %c10 = arith.constant 10 : index
    %c0_146 = arith.constant 0 : index
    %104 = tpu.strided_load %arg16[%c10, %c0_146] {strides = array<i32: 32, 1>} : memref<64x8xf32, #tpu.memory_space<vmem>>, vector<2x8xf32>
    %c11 = arith.constant 11 : index
    %c0_147 = arith.constant 0 : index
    %105 = tpu.strided_load %arg16[%c11, %c0_147] {strides = array<i32: 32, 1>} : memref<64x8xf32, #tpu.memory_space<vmem>>, vector<2x8xf32>
    %106 = arith.maximumf %104, %105 : vector<2x8xf32>
    %c12 = arith.constant 12 : index
    %c0_148 = arith.constant 0 : index
    %107 = tpu.strided_load %arg16[%c12, %c0_148] {strides = array<i32: 32, 1>} : memref<64x8xf32, #tpu.memory_space<vmem>>, vector<2x8xf32>
    %c13 = arith.constant 13 : index
    %c0_149 = arith.constant 0 : index
    %108 = tpu.strided_load %arg16[%c13, %c0_149] {strides = array<i32: 32, 1>} : memref<64x8xf32, #tpu.memory_space<vmem>>, vector<2x8xf32>
    %109 = arith.maximumf %107, %108 : vector<2x8xf32>
    %c14 = arith.constant 14 : index
    %c0_150 = arith.constant 0 : index
    %110 = tpu.strided_load %arg16[%c14, %c0_150] {strides = array<i32: 32, 1>} : memref<64x8xf32, #tpu.memory_space<vmem>>, vector<2x8xf32>
    %c15 = arith.constant 15 : index
    %c0_151 = arith.constant 0 : index
    %111 = tpu.strided_load %arg16[%c15, %c0_151] {strides = array<i32: 32, 1>} : memref<64x8xf32, #tpu.memory_space<vmem>>, vector<2x8xf32>
    %112 = arith.maximumf %110, %111 : vector<2x8xf32>
    %c16_152 = arith.constant 16 : index
    %c0_153 = arith.constant 0 : index
    %113 = tpu.strided_load %arg16[%c16_152, %c0_153] {strides = array<i32: 32, 1>} : memref<64x8xf32, #tpu.memory_space<vmem>>, vector<2x8xf32>
    %c17_154 = arith.constant 17 : index
    %c0_155 = arith.constant 0 : index
    %114 = tpu.strided_load %arg16[%c17_154, %c0_155] {strides = array<i32: 32, 1>} : memref<64x8xf32, #tpu.memory_space<vmem>>, vector<2x8xf32>
    %115 = arith.maximumf %113, %114 : vector<2x8xf32>
    %c18 = arith.constant 18 : index
    %c0_156 = arith.constant 0 : index
    %116 = tpu.strided_load %arg16[%c18, %c0_156] {strides = array<i32: 32, 1>} : memref<64x8xf32, #tpu.memory_space<vmem>>, vector<2x8xf32>
    %c19 = arith.constant 19 : index
    %c0_157 = arith.constant 0 : index
    %117 = tpu.strided_load %arg16[%c19, %c0_157] {strides = array<i32: 32, 1>} : memref<64x8xf32, #tpu.memory_space<vmem>>, vector<2x8xf32>
    %118 = arith.maximumf %116, %117 : vector<2x8xf32>
    %c20 = arith.constant 20 : index
    %c0_158 = arith.constant 0 : index
    %119 = tpu.strided_load %arg16[%c20, %c0_158] {strides = array<i32: 32, 1>} : memref<64x8xf32, #tpu.memory_space<vmem>>, vector<2x8xf32>
    %c21 = arith.constant 21 : index
    %c0_159 = arith.constant 0 : index
    %120 = tpu.strided_load %arg16[%c21, %c0_159] {strides = array<i32: 32, 1>} : memref<64x8xf32, #tpu.memory_space<vmem>>, vector<2x8xf32>
    %121 = arith.maximumf %119, %120 : vector<2x8xf32>
    %c22 = arith.constant 22 : index
    %c0_160 = arith.constant 0 : index
    %122 = tpu.strided_load %arg16[%c22, %c0_160] {strides = array<i32: 32, 1>} : memref<64x8xf32, #tpu.memory_space<vmem>>, vector<2x8xf32>
    %c23 = arith.constant 23 : index
    %c0_161 = arith.constant 0 : index
    %123 = tpu.strided_load %arg16[%c23, %c0_161] {strides = array<i32: 32, 1>} : memref<64x8xf32, #tpu.memory_space<vmem>>, vector<2x8xf32>
    %124 = arith.maximumf %122, %123 : vector<2x8xf32>
    %c24_162 = arith.constant 24 : index
    %c0_163 = arith.constant 0 : index
    %125 = tpu.strided_load %arg16[%c24_162, %c0_163] {strides = array<i32: 32, 1>} : memref<64x8xf32, #tpu.memory_space<vmem>>, vector<2x8xf32>
    %c25 = arith.constant 25 : index
    %c0_164 = arith.constant 0 : index
    %126 = tpu.strided_load %arg16[%c25, %c0_164] {strides = array<i32: 32, 1>} : memref<64x8xf32, #tpu.memory_space<vmem>>, vector<2x8xf32>
    %127 = arith.maximumf %125, %126 : vector<2x8xf32>
    %c26 = arith.constant 26 : index
    %c0_165 = arith.constant 0 : index
    %128 = tpu.strided_load %arg16[%c26, %c0_165] {strides = array<i32: 32, 1>} : memref<64x8xf32, #tpu.memory_space<vmem>>, vector<2x8xf32>
    %c27 = arith.constant 27 : index
    %c0_166 = arith.constant 0 : index
    %129 = tpu.strided_load %arg16[%c27, %c0_166] {strides = array<i32: 32, 1>} : memref<64x8xf32, #tpu.memory_space<vmem>>, vector<2x8xf32>
    %130 = arith.maximumf %128, %129 : vector<2x8xf32>
    %c28 = arith.constant 28 : index
    %c0_167 = arith.constant 0 : index
    %131 = tpu.strided_load %arg16[%c28, %c0_167] {strides = array<i32: 32, 1>} : memref<64x8xf32, #tpu.memory_space<vmem>>, vector<2x8xf32>
    %c29 = arith.constant 29 : index
    %c0_168 = arith.constant 0 : index
    %132 = tpu.strided_load %arg16[%c29, %c0_168] {strides = array<i32: 32, 1>} : memref<64x8xf32, #tpu.memory_space<vmem>>, vector<2x8xf32>
    %133 = arith.maximumf %131, %132 : vector<2x8xf32>
    %c30 = arith.constant 30 : index
    %c0_169 = arith.constant 0 : index
    %134 = tpu.strided_load %arg16[%c30, %c0_169] {strides = array<i32: 32, 1>} : memref<64x8xf32, #tpu.memory_space<vmem>>, vector<2x8xf32>
    %c31 = arith.constant 31 : index
    %c0_170 = arith.constant 0 : index
    %135 = tpu.strided_load %arg16[%c31, %c0_170] {strides = array<i32: 32, 1>} : memref<64x8xf32, #tpu.memory_space<vmem>>, vector<2x8xf32>
    %136 = arith.maximumf %134, %135 : vector<2x8xf32>
    %137 = tpu.concatenate %91, %94, %97, %100, %103, %106, %109, %112, %115, %118, %121, %124, %127, %130, %133, %136 in 1 : vector<2x8xf32>, vector<2x8xf32>, vector<2x8xf32>, vector<2x8xf32>, vector<2x8xf32>, vector<2x8xf32>, vector<2x8xf32>, vector<2x8xf32>, vector<2x8xf32>, vector<2x8xf32>, vector<2x8xf32>, vector<2x8xf32>, vector<2x8xf32>, vector<2x8xf32>, vector<2x8xf32>, vector<2x8xf32> -> vector<2x128xf32>
    %138 = arith.truncf %137 : vector<2x128xf32> to vector<2x128xbf16>
    %c0_171 = arith.constant 0 : index
    %c0_172 = arith.constant 0 : index
    %139 = vector.load %arg6[%c0_171, %c0_172] : memref<128x512xbf16, #tpu.memory_space<vmem>>, vector<128x512xbf16>
    %cst_173 = arith.constant dense<0.000000e+00> : vector<2x512xf32>
    %140 = tpu.matmul %138, %139, %cst_173 {dimension_numbers = #tpu.dot_dimension_numbers<[1], [0], [0], [1], [0, 0, 1, 1], [], []>} : vector<2x128xbf16>, vector<128x512xbf16>, vector<2x512xf32> -> vector<2x512xf32>
    %c0_174 = arith.constant 0 : index
    %c0_175 = arith.constant 0 : index
    %141 = vector.load %arg7[%c0_174, %c0_175] : memref<1x512xf32, #tpu.memory_space<vmem>>, vector<1x512xf32>
    %142 = vector.broadcast %141 : vector<1x512xf32> to vector<2x512xf32>
    %143 = arith.addf %140, %142 : vector<2x512xf32>
    %cst_176 = arith.constant 0.000000e+00 : f32
    %144 = vector.broadcast %cst_176 : f32 to vector<2x512xf32>
    %145 = arith.maximumf %143, %144 : vector<2x512xf32>
    %146 = arith.truncf %145 : vector<2x512xf32> to vector<2x512xbf16>
    %c0_177 = arith.constant 0 : index
    %c0_178 = arith.constant 0 : index
    %147 = vector.load %arg8[%c0_177, %c0_178] : memref<512x512xbf16, #tpu.memory_space<vmem>>, vector<512x512xbf16>
    %cst_179 = arith.constant dense<0.000000e+00> : vector<2x512xf32>
    %148 = tpu.matmul %146, %147, %cst_179 {dimension_numbers = #tpu.dot_dimension_numbers<[1], [0], [0], [1], [0, 0, 1, 1], [], []>} : vector<2x512xbf16>, vector<512x512xbf16>, vector<2x512xf32> -> vector<2x512xf32>
    %c0_180 = arith.constant 0 : index
    %c0_181 = arith.constant 0 : index
    %149 = vector.load %arg9[%c0_180, %c0_181] : memref<1x512xf32, #tpu.memory_space<vmem>>, vector<1x512xf32>
    %150 = vector.broadcast %149 : vector<1x512xf32> to vector<2x512xf32>
    %151 = arith.addf %148, %150 : vector<2x512xf32>
    %cst_182 = arith.constant 0.000000e+00 : f32
    %152 = vector.broadcast %cst_182 : f32 to vector<2x512xf32>
    %153 = arith.maximumf %151, %152 : vector<2x512xf32>
    %154 = arith.truncf %153 : vector<2x512xf32> to vector<2x512xbf16>
    %c0_183 = arith.constant 0 : index
    %c0_184 = arith.constant 0 : index
    %155 = vector.load %arg10[%c0_183, %c0_184] : memref<512x128xbf16, #tpu.memory_space<vmem>>, vector<512x128xbf16>
    %cst_185 = arith.constant dense<0.000000e+00> : vector<2x128xf32>
    %156 = tpu.matmul %154, %155, %cst_185 {dimension_numbers = #tpu.dot_dimension_numbers<[1], [0], [0], [1], [0, 0, 1, 1], [], []>} : vector<2x512xbf16>, vector<512x128xbf16>, vector<2x128xf32> -> vector<2x128xf32>
    %c0_186 = arith.constant 0 : index
    %c0_187 = arith.constant 0 : index
    %157 = vector.load %arg11[%c0_186, %c0_187] : memref<1x128xf32, #tpu.memory_space<vmem>>, vector<1x128xf32>
    %158 = vector.broadcast %157 : vector<1x128xf32> to vector<2x128xf32>
    %159 = arith.addf %156, %158 : vector<2x128xf32>
    %c0_188 = arith.constant 0 : index
    %c0_189 = arith.constant 0 : index
    %160 = vector.load %arg12[%c0_188, %c0_189] : memref<2x128xf32, #tpu.memory_space<vmem>>, vector<2x128xf32>
    tpu.vector_store %arg12[%c0_188, %c0_189], %159 {strides = array<i32>} : memref<2x128xf32, #tpu.memory_space<vmem>>, vector<2x128xf32>,
    return
  }
  func.func @transform_0(%arg0: i32) -> (i32, i32, i32, i32) {
    %c0_i32 = arith.constant 0 : i32
    %c0_i32_0 = arith.constant 0 : i32
    %c0_i32_1 = arith.constant 0 : i32
    %c0_i32_2 = arith.constant 0 : i32
    return %arg0, %c0_i32, %c0_i32_0, %c0_i32_1 : i32, i32, i32, i32
  }
  func.func @transform_1(%arg0: i32) -> (i32, i32) {
    %c0_i32 = arith.constant 0 : i32
    %c0_i32_0 = arith.constant 0 : i32
    %c0_i32_1 = arith.constant 0 : i32
    return %c0_i32, %c0_i32_0 : i32, i32
  }
  func.func @transform_2(%arg0: i32) -> (i32, i32) {
    %c0_i32 = arith.constant 0 : i32
    %c0_i32_0 = arith.constant 0 : i32
    %c0_i32_1 = arith.constant 0 : i32
    return %c0_i32, %c0_i32_0 : i32, i32
  }
  func.func @transform_3(%arg0: i32) -> (i32, i32) {
    %c0_i32 = arith.constant 0 : i32
    %c0_i32_0 = arith.constant 0 : i32
    %c0_i32_1 = arith.constant 0 : i32
    return %c0_i32, %c0_i32_0 : i32, i32
  }
  func.func @transform_4(%arg0: i32) -> (i32, i32) {
    %c0_i32 = arith.constant 0 : i32
    %c0_i32_0 = arith.constant 0 : i32
    %c0_i32_1 = arith.constant 0 : i32
    return %c0_i32, %c0_i32_0 : i32, i32
  }
  func.func @transform_5(%arg0: i32) -> (i32, i32) {
    %c0_i32 = arith.constant 0 : i32
    %c0_i32_0 = arith.constant 0 : i32
    %c0_i32_1 = arith.constant 0 : i32
    return %c0_i32, %c0_i32_0 : i32, i32
  }
  func.func @transform_6(%arg0: i32) -> (i32, i32) {
    %c0_i32 = arith.constant 0 : i32
    %c0_i32_0 = arith.constant 0 : i32
    %c0_i32_1 = arith.constant 0 : i32
    return %c0_i32, %c0_i32_0 : i32, i32
  }
  func.func @transform_7(%arg0: i32) -> (i32, i32) {
    %c0_i32 = arith.constant 0 : i32
    %c0_i32_0 = arith.constant 0 : i32
    %c0_i32_1 = arith.constant 0 : i32
    return %c0_i32, %c0_i32_0 : i32, i32
  }
  func.func @transform_8(%arg0: i32) -> (i32, i32) {
    %c0_i32 = arith.constant 0 : i32
    %c0_i32_0 = arith.constant 0 : i32
    %c0_i32_1 = arith.constant 0 : i32
    return %c0_i32, %c0_i32_0 : i32, i32
  }
  func.func @transform_9(%arg0: i32) -> (i32, i32) {
    %c0_i32 = arith.constant 0 : i32
    %c0_i32_0 = arith.constant 0 : i32
    %c0_i32_1 = arith.constant 0 : i32
    return %c0_i32, %c0_i32_0 : i32, i32
  }
  func.func @transform_10(%arg0: i32) -> (i32, i32) {
    %c0_i32 = arith.constant 0 : i32
    %c0_i32_0 = arith.constant 0 : i32
    %c0_i32_1 = arith.constant 0 : i32
    return %c0_i32, %c0_i32_0 : i32, i32
  }
  func.func @transform_11(%arg0: i32) -> (i32, i32) {
    %c0_i32 = arith.constant 0 : i32
    %c0_i32_0 = arith.constant 0 : i32
    return %arg0, %c0_i32 : i32, i32
  }
}

</mosaic_0001>

<llo_original>
// kernel: net_forward.1
$region0: #{net_forward.1}
  #allocation0 [shape = 'u32[]', space=smem, size = 0x4, offset = 0x4, fixed_abs, tag = 'smem constant byte address 0x4 - core index']
  #allocation1 [shape = 'u32[144,128]{1,0:T(1,128)}', space=vmem, size = 0x12000, scoped, tag = 'internal scratch']
  #allocation2 [shape = 'f32[2,18,32,3]{3,2,1,0:T(8,128)}', space=vmem, size = 0x90000, scoped, tag = 'scratch operand']
  #allocation3 [shape = 'f32[256,4]{1,0:T(8,128)}', space=vmem, size = 0x20000, scoped, tag = 'scratch operand']
  #allocation4 [shape = 'f32[2,10,24,4]{3,2,1,0:T(8,128)}', space=vmem, size = 0x3c000, scoped, tag = 'scratch operand']
  #allocation5 [shape = 'f32[64,8]{1,0:T(8,128)}', space=vmem, size = 0x8000, scoped, tag = 'scratch operand']
  %s0 = inlined_call_operand.vmem [shape: f32[2,16,16,3], index: 0, kind: input, shape index: {}]
  %s1 = inlined_call_operand.vmem [shape: bf16[27,4], index: 1, kind: input, shape index: {}]
  %s2 = inlined_call_operand.vmem [shape: f32[1,4], index: 2, kind: input, shape index: {}]
  %s3 = inlined_call_operand.vmem [shape: bf16[36,8], index: 3, kind: input, shape index: {}]
  %s4 = inlined_call_operand.vmem [shape: f32[1,8], index: 4, kind: input, shape index: {}]
  %s5 = inlined_call_operand.vmem [shape: bf16[128,512], index: 5, kind: input, shape index: {}]
  %s6 = inlined_call_operand.vmem [shape: f32[1,512], index: 6, kind: input, shape index: {}]
  %s7 = inlined_call_operand.hbm [shape: bf16[512,512], index: 7, kind: input, shape index: {}]
  %s8 = inlined_call_operand.vmem [shape: f32[1,512], index: 8, kind: input, shape index: {}]
  %s9 = inlined_call_operand.vmem [shape: bf16[512,128], index: 9, kind: input, shape index: {}]
  %s10 = inlined_call_operand.vmem [shape: f32[1,128], index: 10, kind: input, shape index: {}]
  %s11 = inlined_call_operand.hbm [shape: f32[2,128], index: 11, kind: output, shape index: {}]
  %s12 = sld [smem:[#allocation0]]
  $region58: #{net_forward.1} parent=0
    _
  %s14 = ssub.s32 1, %s12
  %s15 = scalar_select 0, %s14, %s12
  $region1: #{net_forward.1} parent=0
    #allocation6 [shape = 'u8[524288]{0}', space=vmem, size = 0x80000, scoped, tag = 'input window, operand 7, single buffered']
    #allocation7 [shape = 's32[1]{0}', space=sflag, size = 0x4, scoped, tag = 'scoped memory for net_forward.1']
    #allocation8 [shape = 's32[1]{0}', space=sflag, size = 0x4, scoped, tag = 'scoped memory for net_forward.1']
    #allocation9 [shape = 'u8[1024]{0}', space=vmem, size = 0x400, scoped, tag = 'output window, operand 0, single buffered']
    %16 = vsyncpa [#allocation7], 0
    %17 = vsyncpa [#allocation8], 0
    // Predicated region
    $region2: #{net_forward.1} parent=1 // pred_check
      _
    $region3: #{net_forward.1} parent=1 // pred_check_branch
      %19 = sbr.rel (0) target = $region5
    $region4: #{net_forward.1} parent=1 // pred_region
      _
    $region5: #{net_forward.1} parent=1 // pred_fallthru
      _
    // Predicated region
    $region6: #{net_forward.1} parent=1 // pred_check
      _
    $region7: #{net_forward.1} parent=1 // pred_check_branch
      %21 = sbr.rel (0) target = $region9
    $region8: #{net_forward.1} parent=1 // pred_region
      _
    $region9: #{net_forward.1} parent=1 // pred_fallthru
      _
    // Predicated region
    $region10: #{net_forward.1} parent=1 // pred_check
      _
    $region11: #{net_forward.1} parent=1 // pred_check_branch
      %23 = sbr.rel (0) target = $region13
    $region12: #{net_forward.1} parent=1 // pred_region
      _
    $region13: #{net_forward.1} parent=1 // pred_fallthru
      _
    // Predicated region
    $region14: #{net_forward.1} parent=1 // pred_check
      _
    $region15: #{net_forward.1} parent=1 // pred_check_branch
      %25 = sbr.rel (0) target = $region17
    $region16: #{net_forward.1} parent=1 // pred_region
      _
    $region17: #{net_forward.1} parent=1 // pred_fallthru
      _
    // Predicated region
    $region18: #{net_forward.1} parent=1 // pred_check
      _
    $region19: #{net_forward.1} parent=1 // pred_check_branch
      %27 = sbr.rel (0) target = $region21
    $region20: #{net_forward.1} parent=1 // pred_region
      _
    $region21: #{net_forward.1} parent=1 // pred_fallthru
      _
    // Predicated region
    $region22: #{net_forward.1} parent=1 // pred_check
      _
    $region23: #{net_forward.1} parent=1 // pred_check_branch
      %29 = sbr.rel (0) target = $region25
    $region24: #{net_forward.1} parent=1 // pred_region
      _
    $region25: #{net_forward.1} parent=1 // pred_fallthru
      _
    // Predicated region
    $region26: #{net_forward.1} parent=1 // pred_check
      _
    $region27: #{net_forward.1} parent=1 // pred_check_branch
      %31 = sbr.rel (0) target = $region29
    $region28: #{net_forward.1} parent=1 // pred_region
      _
    $region29: #{net_forward.1} parent=1 // pred_fallthru
      _
    // Predicated region
    $region30: #{net_forward.1} parent=1 // pred_check
      _
    $region31: #{net_forward.1} parent=1 // pred_check_branch
      %33 = sbr.rel (0) target = $region33
    $region32: #{net_forward.1} parent=1 // pred_region
      %s35 = ssub.s32 16384, 16384
      %36 = vsyncadd [#allocation7], %s35
      %s37 = sshll.u32 [#allocation6], 4
      %s38 = int_to_ptr.vmem [resolvable:$true] %s37
      %43 = dma.hbm_to_vmem [thread:$0]  %s7, 16384, %s38, [#allocation7], 256, 256, 16
    $region33: #{net_forward.1} parent=1 // pred_fallthru
      _
    // Predicated region
    $region34: #{net_forward.1} parent=1 // pred_check
      _
    $region35: #{net_forward.1} parent=1 // pred_check_branch
      %45 = sbr.rel (0) target = $region37
    $region36: #{net_forward.1} parent=1 // pred_region
      _
    $region37: #{net_forward.1} parent=1 // pred_fallthru
      _
    // Predicated region
    $region38: #{net_forward.1} parent=1 // pred_check
      _
    $region39: #{net_forward.1} parent=1 // pred_check_branch
      %47 = sbr.rel (0) target = $region41
    $region40: #{net_forward.1} parent=1 // pred_region
      _
    $region41: #{net_forward.1} parent=1 // pred_fallthru
      _
    // Predicated region
    $region42: #{net_forward.1} parent=1 // pred_check
      _
    $region43: #{net_forward.1} parent=1 // pred_check_branch
      %49 = sbr.rel (0) target = $region45
    $region44: #{net_forward.1} parent=1 // pred_region
      _
    $region45: #{net_forward.1} parent=1 // pred_fallthru
      _
    // Predicated region
    $region46: #{net_forward.1} parent=1 // pred_check
      _
    $region47: #{net_forward.1} parent=1 // pred_check_branch
      %51 = sbr.rel (0) target = $region49
    $region48: #{net_forward.1} parent=1 // pred_region
      %52 = dma.done [#allocation7], 16384
    $region49: #{net_forward.1} parent=1 // pred_fallthru
      _
    %v54 = vld [vmem:[%s0] sm:$0xff]
    %v55 = vld [vmem:[%s0 + $0x8] sm:$0xff]
    %v56 = vld [vmem:[%s0 + $0x10] sm:$0xff]
    %v57 = vld [vmem:[%s0 + $0x18] sm:$0xff]
    %v58 = vld [vmem:[%s0 + $0x20] sm:$0xff]
    %v59 = vld [vmem:[%s0 + $0x28] sm:$0xff]
    %v60 = vld [vmem:[%s0 + $0x30] sm:$0xff]
    %v61 = vld [vmem:[%s0 + $0x38] sm:$0xff]
    %v62 = vld [vmem:[%s0 + $0x40] sm:$0xff]
    %v63 = vld [vmem:[%s0 + $0x48] sm:$0xff]
    %v64 = vld [vmem:[%s0 + $0x50] sm:$0xff]
    %v65 = vld [vmem:[%s0 + $0x58] sm:$0xff]
    %v66 = vld [vmem:[%s0 + $0x60] sm:$0xff]
    %v67 = vld [vmem:[%s0 + $0x68] sm:$0xff]
    %v68 = vld [vmem:[%s0 + $0x70] sm:$0xff]
    %v69 = vld [vmem:[%s0 + $0x78] sm:$0xff]
    %v70 = vld [vmem:[%s0 + $0x80] sm:$0xff]
    %v71 = vld [vmem:[%s0 + $0x88] sm:$0xff]
    %v72 = vld [vmem:[%s0 + $0x90] sm:$0xff]
    %v73 = vld [vmem:[%s0 + $0x98] sm:$0xff]
    %v74 = vld [vmem:[%s0 + $0xa0] sm:$0xff]
    %v75 = vld [vmem:[%s0 + $0xa8] sm:$0xff]
    %v76 = vld [vmem:[%s0 + $0xb0] sm:$0xff]
    %v77 = vld [vmem:[%s0 + $0xb8] sm:$0xff]
    %v78 = vld [vmem:[%s0 + $0xc0] sm:$0xff]
    %v79 = vld [vmem:[%s0 + $0xc8] sm:$0xff]
    %v80 = vld [vmem:[%s0 + $0xd0] sm:$0xff]
    %v81 = vld [vmem:[%s0 + $0xd8] sm:$0xff]
    %v82 = vld [vmem:[%s0 + $0xe0] sm:$0xff]
    %v83 = vld [vmem:[%s0 + $0xe8] sm:$0xff]
    %v84 = vld [vmem:[%s0 + $0xf0] sm:$0xff]
    %v85 = vld [vmem:[%s0 + $0xf8] sm:$0xff]
    %v86 = vld [vmem:[%s0 + $0x100] sm:$0xff]
    %v87 = vld [vmem:[%s0 + $0x108] sm:$0xff]
    %v88 = vld [vmem:[%s0 + $0x110] sm:$0xff]
    %v89 = vld [vmem:[%s0 + $0x118] sm:$0xff]
    %v90 = vld [vmem:[%s0 + $0x120] sm:$0xff]
    %v91 = vld [vmem:[%s0 + $0x128] sm:$0xff]
    %v92 = vld [vmem:[%s0 + $0x130] sm:$0xff]
    %v93 = vld [vmem:[%s0 + $0x138] sm:$0xff]
    %v94 = vld [vmem:[%s0 + $0x140] sm:$0xff]
    %v95 = vld [vmem:[%s0 + $0x148] sm:$0xff]
    %v96 = vld [vmem:[%s0 + $0x150] sm:$0xff]
    %v97 = vld [vmem:[%s0 + $0x158] sm:$0xff]
    %v98 = vld [vmem:[%s0 + $0x160] sm:$0xff]
    %v99 = vld [vmem:[%s0 + $0x168] sm:$0xff]
    %v100 = vld [vmem:[%s0 + $0x170] sm:$0xff]
    %v101 = vld [vmem:[%s0 + $0x178] sm:$0xff]
    %v102 = vld [vmem:[%s0 + $0x180] sm:$0xff]
    %v103 = vld [vmem:[%s0 + $0x188] sm:$0xff]
    %v104 = vld [vmem:[%s0 + $0x190] sm:$0xff]
    %v105 = vld [vmem:[%s0 + $0x198] sm:$0xff]
    %v106 = vld [vmem:[%s0 + $0x1a0] sm:$0xff]
    %v107 = vld [vmem:[%s0 + $0x1a8] sm:$0xff]
    %v108 = vld [vmem:[%s0 + $0x1b0] sm:$0xff]
    %v109 = vld [vmem:[%s0 + $0x1b8] sm:$0xff]
    %v110 = vld [vmem:[%s0 + $0x1c0] sm:$0xff]
    %v111 = vld [vmem:[%s0 + $0x1c8] sm:$0xff]
    %v112 = vld [vmem:[%s0 + $0x1d0] sm:$0xff]
    %v113 = vld [vmem:[%s0 + $0x1d8] sm:$0xff]
    %v114 = vld [vmem:[%s0 + $0x1e0] sm:$0xff]
    %v115 = vld [vmem:[%s0 + $0x1e8] sm:$0xff]
    %v116 = vld [vmem:[%s0 + $0x1f0] sm:$0xff]
    %v117 = vld [vmem:[%s0 + $0x1f8] sm:$0xff]
    %vm118 = vcmask 23552
    %119 = vst.msk [vmem:[#allocation2] sm:$0xff] %vm118, 0.0
    %120 = vst.msk [vmem:[#allocation2 + $0x8] sm:$0xff] %vm118, 0.0
    %121 = vst.msk [vmem:[#allocation2 + $0x10] sm:$0xff] %vm118, 0.0
    %122 = vst.msk [vmem:[#allocation2 + $0x18] sm:$0xff] %vm118, 0.0
    %123 = vst.msk [vmem:[#allocation2 + $0x240] sm:$0xff] %vm118, 0.0
    %124 = vst.msk [vmem:[#allocation2 + $0x248] sm:$0xff] %vm118, 0.0
    %125 = vst.msk [vmem:[#allocation2 + $0x250] sm:$0xff] %vm118, 0.0
    %126 = vst.msk [vmem:[#allocation2 + $0x258] sm:$0xff] %vm118, 0.0
    %s127 = scalar_lea.vmem [#allocation2], 544
    %128 = vst.msk [vmem:[%s127] sm:$0xff] %vm118, 0.0
    %129 = vst.msk [vmem:[%s127 + $0x8] sm:$0xff] %vm118, 0.0
    %130 = vst.msk [vmem:[%s127 + $0x10] sm:$0xff] %vm118, 0.0
    %131 = vst.msk [vmem:[%s127 + $0x18] sm:$0xff] %vm118, 0.0
    %132 = vst.msk [vmem:[%s127 + $0x240] sm:$0xff] %vm118, 0.0
    %133 = vst.msk [vmem:[%s127 + $0x248] sm:$0xff] %vm118, 0.0
    %134 = vst.msk [vmem:[%s127 + $0x250] sm:$0xff] %vm118, 0.0
    %135 = vst.msk [vmem:[%s127 + $0x258] sm:$0xff] %vm118, 0.0
    %vm136 = vcmask 16384
    %137 = vst.msk [vmem:[#allocation2 + $0x7] sm:$0x1] %vm136, 0.0
    %138 = vst.msk [vmem:[#allocation2 + $0x27] sm:$0x1] %vm136, 0.0
    %139 = vst.msk [vmem:[#allocation2 + $0x47] sm:$0x1] %vm136, 0.0
    %140 = vst.msk [vmem:[#allocation2 + $0x67] sm:$0x1] %vm136, 0.0
    %141 = vst.msk [vmem:[#allocation2 + $0x87] sm:$0x1] %vm136, 0.0
    %142 = vst.msk [vmem:[#allocation2 + $0xa7] sm:$0x1] %vm136, 0.0
    %143 = vst.msk [vmem:[#allocation2 + $0xc7] sm:$0x1] %vm136, 0.0
    %144 = vst.msk [vmem:[#allocation2 + $0xe7] sm:$0x1] %vm136, 0.0
    %145 = vst.msk [vmem:[#allocation2 + $0x107] sm:$0x1] %vm136, 0.0
    %146 = vst.msk [vmem:[#allocation2 + $0x127] sm:$0x1] %vm136, 0.0
    %147 = vst.msk [vmem:[#allocation2 + $0x147] sm:$0x1] %vm136, 0.0
    %148 = vst.msk [vmem:[#allocation2 + $0x167] sm:$0x1] %vm136, 0.0
    %149 = vst.msk [vmem:[#allocation2 + $0x187] sm:$0x1] %vm136, 0.0
    %150 = vst.msk [vmem:[#allocation2 + $0x1a7] sm:$0x1] %vm136, 0.0
    %151 = vst.msk [vmem:[#allocation2 + $0x1c7] sm:$0x1] %vm136, 0.0
    %152 = vst.msk [vmem:[#allocation2 + $0x1e7] sm:$0x1] %vm136, 0.0
    %153 = vst.msk [vmem:[#allocation2 + $0x207] sm:$0x1] %vm136, 0.0
    %154 = vst.msk [vmem:[#allocation2 + $0x227] sm:$0x1] %vm136, 0.0
    %155 = vst.msk [vmem:[#allocation2 + $0x247] sm:$0x1] %vm136, 0.0
    %156 = vst.msk [vmem:[#allocation2 + $0x267] sm:$0x1] %vm136, 0.0
    %157 = vst.msk [vmem:[#allocation2 + $0x287] sm:$0x1] %vm136, 0.0
    %158 = vst.msk [vmem:[#allocation2 + $0x2a7] sm:$0x1] %vm136, 0.0
    %159 = vst.msk [vmem:[#allocation2 + $0x2c7] sm:$0x1] %vm136, 0.0
    %160 = vst.msk [vmem:[#allocation2 + $0x2e7] sm:$0x1] %vm136, 0.0
    %161 = vst.msk [vmem:[#allocation2 + $0x307] sm:$0x1] %vm136, 0.0
    %162 = vst.msk [vmem:[#allocation2 + $0x327] sm:$0x1] %vm136, 0.0
    %163 = vst.msk [vmem:[#allocation2 + $0x347] sm:$0x1] %vm136, 0.0
    %164 = vst.msk [vmem:[#allocation2 + $0x367] sm:$0x1] %vm136, 0.0
    %165 = vst.msk [vmem:[#allocation2 + $0x387] sm:$0x1] %vm136, 0.0
    %166 = vst.msk [vmem:[#allocation2 + $0x3a7] sm:$0x1] %vm136, 0.0
    %167 = vst.msk [vmem:[#allocation2 + $0x3c7] sm:$0x1] %vm136, 0.0
    %168 = vst.msk [vmem:[#allocation2 + $0x3e7] sm:$0x1] %vm136, 0.0
    %169 = vst.msk [vmem:[#allocation2 + $0x407] sm:$0x1] %vm136, 0.0
    %170 = vst.msk [vmem:[#allocation2 + $0x427] sm:$0x1] %vm136, 0.0
    %171 = vst.msk [vmem:[#allocation2 + $0x447] sm:$0x1] %vm136, 0.0
    %172 = vst.msk [vmem:[#allocation2 + $0x467] sm:$0x1] %vm136, 0.0
    %173 = vst.msk [vmem:[#allocation2 + $0x18] sm:$0x1] %vm136, 0.0
    %174 = vst.msk [vmem:[#allocation2 + $0x38] sm:$0x1] %vm136, 0.0
    %175 = vst.msk [vmem:[#allocation2 + $0x58] sm:$0x1] %vm136, 0.0
    %176 = vst.msk [vmem:[#allocation2 + $0x78] sm:$0x1] %vm136, 0.0
    %177 = vst.msk [vmem:[#allocation2 + $0x98] sm:$0x1] %vm136, 0.0
    %178 = vst.msk [vmem:[#allocation2 + $0xb8] sm:$0x1] %vm136, 0.0
    %179 = vst.msk [vmem:[#allocation2 + $0xd8] sm:$0x1] %vm136, 0.0
    %180 = vst.msk [vmem:[#allocation2 + $0xf8] sm:$0x1] %vm136, 0.0
    %181 = vst.msk [vmem:[#allocation2 + $0x118] sm:$0x1] %vm136, 0.0
    %182 = vst.msk [vmem:[#allocation2 + $0x138] sm:$0x1] %vm136, 0.0
    %183 = vst.msk [vmem:[#allocation2 + $0x158] sm:$0x1] %vm136, 0.0
    %184 = vst.msk [vmem:[#allocation2 + $0x178] sm:$0x1] %vm136, 0.0
    %185 = vst.msk [vmem:[#allocation2 + $0x198] sm:$0x1] %vm136, 0.0
    %186 = vst.msk [vmem:[#allocation2 + $0x1b8] sm:$0x1] %vm136, 0.0
    %187 = vst.msk [vmem:[#allocation2 + $0x1d8] sm:$0x1] %vm136, 0.0
    %188 = vst.msk [vmem:[#allocation2 + $0x1f8] sm:$0x1] %vm136, 0.0
    %189 = vst.msk [vmem:[#allocation2 + $0x218] sm:$0x1] %vm136, 0.0
    %190 = vst.msk [vmem:[#allocation2 + $0x238] sm:$0x1] %vm136, 0.0
    %191 = vst.msk [vmem:[#allocation2 + $0x258] sm:$0x1] %vm136, 0.0
    %192 = vst.msk [vmem:[#allocation2 + $0x278] sm:$0x1] %vm136, 0.0
    %193 = vst.msk [vmem:[#allocation2 + $0x298] sm:$0x1] %vm136, 0.0
    %194 = vst.msk [vmem:[#allocation2 + $0x2b8] sm:$0x1] %vm136, 0.0
    %195 = vst.msk [vmem:[#allocation2 + $0x2d8] sm:$0x1] %vm136, 0.0
    %196 = vst.msk [vmem:[#allocation2 + $0x2f8] sm:$0x1] %vm136, 0.0
    %197 = vst.msk [vmem:[#allocation2 + $0x318] sm:$0x1] %vm136, 0.0
    %198 = vst.msk [vmem:[#allocation2 + $0x338] sm:$0x1] %vm136, 0.0
    %199 = vst.msk [vmem:[#allocation2 + $0x358] sm:$0x1] %vm136, 0.0
    %200 = vst.msk [vmem:[#allocation2 + $0x378] sm:$0x1] %vm136, 0.0
    %201 = vst.msk [vmem:[#allocation2 + $0x398] sm:$0x1] %vm136, 0.0
    %202 = vst.msk [vmem:[#allocation2 + $0x3b8] sm:$0x1] %vm136, 0.0
    %203 = vst.msk [vmem:[#allocation2 + $0x3d8] sm:$0x1] %vm136, 0.0
    %204 = vst.msk [vmem:[#allocation2 + $0x3f8] sm:$0x1] %vm136, 0.0
    %205 = vst.msk [vmem:[#allocation2 + $0x418] sm:$0x1] %vm136, 0.0
    %206 = vst.msk [vmem:[#allocation2 + $0x438] sm:$0x1] %vm136, 0.0
    %207 = vst.msk [vmem:[#allocation2 + $0x458] sm:$0x1] %vm136, 0.0
    %208 = vst.msk [vmem:[#allocation2 + $0x478] sm:$0x1] %vm136, 0.0
    %s209 = scalar_lea.vmem [#allocation2], 32
    %210 = vst.msk [vmem:[%s209 + $0x8] sm:$0xff] %vm118, %v54
    %211 = vst.msk [vmem:[%s209 + $0x10] sm:$0xff] %vm118, %v55
    %212 = vst.msk [vmem:[%s209 + $0x28] sm:$0xff] %vm118, %v56
    %213 = vst.msk [vmem:[%s209 + $0x30] sm:$0xff] %vm118, %v57
    %214 = vst.msk [vmem:[%s209 + $0x48] sm:$0xff] %vm118, %v58
    %215 = vst.msk [vmem:[%s209 + $0x50] sm:$0xff] %vm118, %v59
    %216 = vst.msk [vmem:[%s209 + $0x68] sm:$0xff] %vm118, %v60
    %217 = vst.msk [vmem:[%s209 + $0x70] sm:$0xff] %vm118, %v61
    %218 = vst.msk [vmem:[%s209 + $0x88] sm:$0xff] %vm118, %v62
    %219 = vst.msk [vmem:[%s209 + $0x90] sm:$0xff] %vm118, %v63
    %220 = vst.msk [vmem:[%s209 + $0xa8] sm:$0xff] %vm118, %v64
    %221 = vst.msk [vmem:[%s209 + $0xb0] sm:$0xff] %vm118, %v65
    %222 = vst.msk [vmem:[%s209 + $0xc8] sm:$0xff] %vm118, %v66
    %223 = vst.msk [vmem:[%s209 + $0xd0] sm:$0xff] %vm118, %v67
    %224 = vst.msk [vmem:[%s209 + $0xe8] sm:$0xff] %vm118, %v68
    %225 = vst.msk [vmem:[%s209 + $0xf0] sm:$0xff] %vm118, %v69
    %226 = vst.msk [vmem:[%s209 + $0x108] sm:$0xff] %vm118, %v70
    %227 = vst.msk [vmem:[%s209 + $0x110] sm:$0xff] %vm118, %v71
    %228 = vst.msk [vmem:[%s209 + $0x128] sm:$0xff] %vm118, %v72
    %229 = vst.msk [vmem:[%s209 + $0x130] sm:$0xff] %vm118, %v73
    %230 = vst.msk [vmem:[%s209 + $0x148] sm:$0xff] %vm118, %v74
    %231 = vst.msk [vmem:[%s209 + $0x150] sm:$0xff] %vm118, %v75
    %232 = vst.msk [vmem:[%s209 + $0x168] sm:$0xff] %vm118, %v76
    %233 = vst.msk [vmem:[%s209 + $0x170] sm:$0xff] %vm118, %v77
    %234 = vst.msk [vmem:[%s209 + $0x188] sm:$0xff] %vm118, %v78
    %235 = vst.msk [vmem:[%s209 + $0x190] sm:$0xff] %vm118, %v79
    %236 = vst.msk [vmem:[%s209 + $0x1a8] sm:$0xff] %vm118, %v80
    %237 = vst.msk [vmem:[%s209 + $0x1b0] sm:$0xff] %vm118, %v81
    %238 = vst.msk [vmem:[%s209 + $0x1c8] sm:$0xff] %vm118, %v82
    %239 = vst.msk [vmem:[%s209 + $0x1d0] sm:$0xff] %vm118, %v83
    %240 = vst.msk [vmem:[%s209 + $0x1e8] sm:$0xff] %vm118, %v84
    %241 = vst.msk [vmem:[%s209 + $0x1f0] sm:$0xff] %vm118, %v85
    %242 = vst.msk [vmem:[%s209 + $0x248] sm:$0xff] %vm118, %v86
    %243 = vst.msk [vmem:[%s209 + $0x250] sm:$0xff] %vm118, %v87
    %244 = vst.msk [vmem:[%s209 + $0x268] sm:$0xff] %vm118, %v88
    %245 = vst.msk [vmem:[%s209 + $0x270] sm:$0xff] %vm118, %v89
    %246 = vst.msk [vmem:[%s209 + $0x288] sm:$0xff] %vm118, %v90
    %247 = vst.msk [vmem:[%s209 + $0x290] sm:$0xff] %vm118, %v91
    %248 = vst.msk [vmem:[%s209 + $0x2a8] sm:$0xff] %vm118, %v92
    %249 = vst.msk [vmem:[%s209 + $0x2b0] sm:$0xff] %vm118, %v93
    %250 = vst.msk [vmem:[%s209 + $0x2c8] sm:$0xff] %vm118, %v94
    %251 = vst.msk [vmem:[%s209 + $0x2d0] sm:$0xff] %vm118, %v95
    %252 = vst.msk [vmem:[%s209 + $0x2e8] sm:$0xff] %vm118, %v96
    %253 = vst.msk [vmem:[%s209 + $0x2f0] sm:$0xff] %vm118, %v97
    %254 = vst.msk [vmem:[%s209 + $0x308] sm:$0xff] %vm118, %v98
    %255 = vst.msk [vmem:[%s209 + $0x310] sm:$0xff] %vm118, %v99
    %256 = vst.msk [vmem:[%s209 + $0x328] sm:$0xff] %vm118, %v100
    %257 = vst.msk [vmem:[%s209 + $0x330] sm:$0xff] %vm118, %v101
    %258 = vst.msk [vmem:[%s209 + $0x348] sm:$0xff] %vm118, %v102
    %259 = vst.msk [vmem:[%s209 + $0x350] sm:$0xff] %vm118, %v103
    %260 = vst.msk [vmem:[%s209 + $0x368] sm:$0xff] %vm118, %v104
    %261 = vst.msk [vmem:[%s209 + $0x370] sm:$0xff] %vm118, %v105
    %262 = vst.msk [vmem:[%s209 + $0x388] sm:$0xff] %vm118, %v106
    %263 = vst.msk [vmem:[%s209 + $0x390] sm:$0xff] %vm118, %v107
    %264 = vst.msk [vmem:[%s209 + $0x3a8] sm:$0xff] %vm118, %v108
    %265 = vst.msk [vmem:[%s209 + $0x3b0] sm:$0xff] %vm118, %v109
    %266 = vst.msk [vmem:[%s209 + $0x3c8] sm:$0xff] %vm118, %v110
    %267 = vst.msk [vmem:[%s209 + $0x3d0] sm:$0xff] %vm118, %v111
    %268 = vst.msk [vmem:[%s209 + $0x3e8] sm:$0xff] %vm118, %v112
    %269 = vst.msk [vmem:[%s209 + $0x3f0] sm:$0xff] %vm118, %v113
    %270 = vst.msk [vmem:[%s209 + $0x408] sm:$0xff] %vm118, %v114
    %271 = vst.msk [vmem:[%s209 + $0x410] sm:$0xff] %vm118, %v115
    %272 = vst.msk [vmem:[%s209 + $0x428] sm:$0xff] %vm118, %v116
    %273 = vst.msk [vmem:[%s209 + $0x430] sm:$0xff] %vm118, %v117
    %v274 = vld [vmem:[#allocation2 + $0x7] sm:$0xff]
    %v275 = vld [vmem:[#allocation2 + $0xf] sm:$0xff]
    %v276 = vld [vmem:[#allocation2 + $0x27] sm:$0xff]
    %v277 = vld [vmem:[#allocation2 + $0x2f] sm:$0xff]
    %v278 = vld [vmem:[#allocation2 + $0x47] sm:$0xff]
    %v279 = vld [vmem:[#allocation2 + $0x4f] sm:$0xff]
    %v280 = vld [vmem:[#allocation2 + $0x67] sm:$0xff]
    %v281 = vld [vmem:[#allocation2 + $0x6f] sm:$0xff]
    %v282 = vld [vmem:[#allocation2 + $0x87] sm:$0xff]
    %v283 = vld [vmem:[#allocation2 + $0x8f] sm:$0xff]
    %v284 = vld [vmem:[#allocation2 + $0xa7] sm:$0xff]
    %v285 = vld [vmem:[#allocation2 + $0xaf] sm:$0xff]
    %v286 = vld [vmem:[#allocation2 + $0xc7] sm:$0xff]
    %v287 = vld [vmem:[#allocation2 + $0xcf] sm:$0xff]
    %v288 = vld [vmem:[#allocation2 + $0xe7] sm:$0xff]
    %v289 = vld [vmem:[#allocation2 + $0xef] sm:$0xff]
    %v290 = vld [vmem:[#allocation2 + $0x107] sm:$0xff]
    %v291 = vld [vmem:[#allocation2 + $0x10f] sm:$0xff]
    %v292 = vld [vmem:[#allocation2 + $0x127] sm:$0xff]
    %v293 = vld [vmem:[#allocation2 + $0x12f] sm:$0xff]
    %v294 = vld [vmem:[#allocation2 + $0x147] sm:$0xff]
    %v295 = vld [vmem:[#allocation2 + $0x14f] sm:$0xff]
    %v296 = vld [vmem:[#allocation2 + $0x167] sm:$0xff]
    %v297 = vld [vmem:[#allocation2 + $0x16f] sm:$0xff]
    %v298 = vld [vmem:[#allocation2 + $0x187] sm:$0xff]
    %v299 = vld [vmem:[#allocation2 + $0x18f] sm:$0xff]
    %v300 = vld [vmem:[#allocation2 + $0x1a7] sm:$0xff]
    %v301 = vld [vmem:[#allocation2 + $0x1af] sm:$0xff]
    %v302 = vld [vmem:[#allocation2 + $0x1c7] sm:$0xff]
    %v303 = vld [vmem:[#allocation2 + $0x1cf] sm:$0xff]
    %v304 = vld [vmem:[#allocation2 + $0x1e7] sm:$0xff]
    %v305 = vld [vmem:[#allocation2 + $0x1ef] sm:$0xff]
    %v306 = vld [vmem:[#allocation2 + $0x247] sm:$0xff]
    %v307 = vld [vmem:[#allocation2 + $0x24f] sm:$0xff]
    %v308 = vld [vmem:[#allocation2 + $0x267] sm:$0xff]
    %v309 = vld [vmem:[#allocation2 + $0x26f] sm:$0xff]
    %v310 = vld [vmem:[#allocation2 + $0x287] sm:$0xff]
    %v311 = vld [vmem:[#allocation2 + $0x28f] sm:$0xff]
    %v312 = vld [vmem:[#allocation2 + $0x2a7] sm:$0xff]
    %v313 = vld [vmem:[#allocation2 + $0x2af] sm:$0xff]
    %v314 = vld [vmem:[#allocation2 + $0x2c7] sm:$0xff]
    %v315 = vld [vmem:[#allocation2 + $0x2cf] sm:$0xff]
    %v316 = vld [vmem:[#allocation2 + $0x2e7] sm:$0xff]
    %v317 = vld [vmem:[#allocation2 + $0x2ef] sm:$0xff]
    %v318 = vld [vmem:[#allocation2 + $0x307] sm:$0xff]
    %v319 = vld [vmem:[#allocation2 + $0x30f] sm:$0xff]
    %v320 = vld [vmem:[#allocation2 + $0x327] sm:$0xff]
    %v321 = vld [vmem:[#allocation2 + $0x32f] sm:$0xff]
    %v322 = vld [vmem:[#allocation2 + $0x347] sm:$0xff]
    %v323 = vld [vmem:[#allocation2 + $0x34f] sm:$0xff]
    %v324 = vld [vmem:[#allocation2 + $0x367] sm:$0xff]
    %v325 = vld [vmem:[#allocation2 + $0x36f] sm:$0xff]
    %v326 = vld [vmem:[#allocation2 + $0x387] sm:$0xff]
    %v327 = vld [vmem:[#allocation2 + $0x38f] sm:$0xff]
    %v328 = vld [vmem:[#allocation2 + $0x3a7] sm:$0xff]
    %v329 = vld [vmem:[#allocation2 + $0x3af] sm:$0xff]
    %v330 = vld [vmem:[#allocation2 + $0x3c7] sm:$0xff]
    %v331 = vld [vmem:[#allocation2 + $0x3cf] sm:$0xff]
    %v332 = vld [vmem:[#allocation2 + $0x3e7] sm:$0xff]
    %v333 = vld [vmem:[#allocation2 + $0x3ef] sm:$0xff]
    %v334 = vld [vmem:[#allocation2 + $0x407] sm:$0xff]
    %v335 = vld [vmem:[#allocation2 + $0x40f] sm:$0xff]
    %v336 = vld [vmem:[#allocation2 + $0x427] sm:$0xff]
    %v337 = vld [vmem:[#allocation2 + $0x42f] sm:$0xff]
    %v338 = vld [vmem:[#allocation2 + $0x8] sm:$0xff]
    %v339 = vld [vmem:[#allocation2 + $0x10] sm:$0xff]
    %v340 = vld [vmem:[#allocation2 + $0x28] sm:$0xff]
    %v341 = vld [vmem:[#allocation2 + $0x30] sm:$0xff]
    %v342 = vld [vmem:[#allocation2 + $0x48] sm:$0xff]
    %v343 = vld [vmem:[#allocation2 + $0x50] sm:$0xff]
    %v344 = vld [vmem:[#allocation2 + $0x68] sm:$0xff]
    %v345 = vld [vmem:[#allocation2 + $0x70] sm:$0xff]
    %v346 = vld [vmem:[#allocation2 + $0x88] sm:$0xff]
    %v347 = vld [vmem:[#allocation2 + $0x90] sm:$0xff]
    %v348 = vld [vmem:[#allocation2 + $0xa8] sm:$0xff]
    %v349 = vld [vmem:[#allocation2 + $0xb0] sm:$0xff]
    %v350 = vld [vmem:[#allocation2 + $0xc8] sm:$0xff]
    %v351 = vld [vmem:[#allocation2 + $0xd0] sm:$0xff]
    %v352 = vld [vmem:[#allocation2 + $0xe8] sm:$0xff]
    %v353 = vld [vmem:[#allocation2 + $0xf0] sm:$0xff]
    %v354 = vld [vmem:[#allocation2 + $0x108] sm:$0xff]
    %v355 = vld [vmem:[#allocation2 + $0x110] sm:$0xff]
    %v356 = vld [vmem:[#allocation2 + $0x128] sm:$0xff]
    %v357 = vld [vmem:[#allocation2 + $0x130] sm:$0xff]
    %v358 = vld [vmem:[#allocation2 + $0x148] sm:$0xff]
    %v359 = vld [vmem:[#allocation2 + $0x150] sm:$0xff]
    %v360 = vld [vmem:[#allocation2 + $0x168] sm:$0xff]
    %v361 = vld [vmem:[#allocation2 + $0x170] sm:$0xff]
    %v362 = vld [vmem:[#allocation2 + $0x188] sm:$0xff]
    %v363 = vld [vmem:[#allocation2 + $0x190] sm:$0xff]
    %v364 = vld [vmem:[#allocation2 + $0x1a8] sm:$0xff]
    %v365 = vld [vmem:[#allocation2 + $0x1b0] sm:$0xff]
    %v366 = vld [vmem:[#allocation2 + $0x1c8] sm:$0xff]
    %v367 = vld [vmem:[#allocation2 + $0x1d0] sm:$0xff]
    %v368 = vld [vmem:[#allocation2 + $0x1e8] sm:$0xff]
    %v369 = vld [vmem:[#allocation2 + $0x1f0] sm:$0xff]
    %v370 = vld [vmem:[#allocation2 + $0x248] sm:$0xff]
    %v371 = vld [vmem:[#allocation2 + $0x250] sm:$0xff]
    %v372 = vld [vmem:[#allocation2 + $0x268] sm:$0xff]
    %v373 = vld [vmem:[#allocation2 + $0x270] sm:$0xff]
    %v374 = vld [vmem:[#allocation2 + $0x288] sm:$0xff]
    %v375 = vld [vmem:[#allocation2 + $0x290] sm:$0xff]
    %v376 = vld [vmem:[#allocation2 + $0x2a8] sm:$0xff]
    %v377 = vld [vmem:[#allocation2 + $0x2b0] sm:$0xff]
    %v378 = vld [vmem:[#allocation2 + $0x2c8] sm:$0xff]
    %v379 = vld [vmem:[#allocation2 + $0x2d0] sm:$0xff]
    %v380 = vld [vmem:[#allocation2 + $0x2e8] sm:$0xff]
    %v381 = vld [vmem:[#allocation2 + $0x2f0] sm:$0xff]
    %v382 = vld [vmem:[#allocation2 + $0x308] sm:$0xff]
    %v383 = vld [vmem:[#allocation2 + $0x310] sm:$0xff]
    %v384 = vld [vmem:[#allocation2 + $0x328] sm:$0xff]
    %v385 = vld [vmem:[#allocation2 + $0x330] sm:$0xff]
    %v386 = vld [vmem:[#allocation2 + $0x348] sm:$0xff]
    %v387 = vld [vmem:[#allocation2 + $0x350] sm:$0xff]
    %v388 = vld [vmem:[#allocation2 + $0x368] sm:$0xff]
    %v389 = vld [vmem:[#allocation2 + $0x370] sm:$0xff]
    %v390 = vld [vmem:[#allocation2 + $0x388] sm:$0xff]
    %v391 = vld [vmem:[#allocation2 + $0x390] sm:$0xff]
    %v392 = vld [vmem:[#allocation2 + $0x3a8] sm:$0xff]
    %v393 = vld [vmem:[#allocation2 + $0x3b0] sm:$0xff]
    %v394 = vld [vmem:[#allocation2 + $0x3c8] sm:$0xff]
    %v395 = vld [vmem:[#allocation2 + $0x3d0] sm:$0xff]
    %v396 = vld [vmem:[#allocation2 + $0x3e8] sm:$0xff]
    %v397 = vld [vmem:[#allocation2 + $0x3f0] sm:$0xff]
    %v398 = vld [vmem:[#allocation2 + $0x408] sm:$0xff]
    %v399 = vld [vmem:[#allocation2 + $0x410] sm:$0xff]
    %v400 = vld [vmem:[#allocation2 + $0x428] sm:$0xff]
    %v401 = vld [vmem:[#allocation2 + $0x430] sm:$0xff]
    %v402 = vld [vmem:[#allocation2 + $0x9] sm:$0xff]
    %v403 = vld [vmem:[#allocation2 + $0x11] sm:$0xff]
    %v404 = vld [vmem:[#allocation2 + $0x29] sm:$0xff]
    %v405 = vld [vmem:[#allocation2 + $0x31] sm:$0xff]
    %v406 = vld [vmem:[#allocation2 + $0x49] sm:$0xff]
    %v407 = vld [vmem:[#allocation2 + $0x51] sm:$0xff]
    %v408 = vld [vmem:[#allocation2 + $0x69] sm:$0xff]
    %v409 = vld [vmem:[#allocation2 + $0x71] sm:$0xff]
    %v410 = vld [vmem:[#allocation2 + $0x89] sm:$0xff]
    %v411 = vld [vmem:[#allocation2 + $0x91] sm:$0xff]
    %v412 = vld [vmem:[#allocation2 + $0xa9] sm:$0xff]
    %v413 = vld [vmem:[#allocation2 + $0xb1] sm:$0xff]
    %v414 = vld [vmem:[#allocation2 + $0xc9] sm:$0xff]
    %v415 = vld [vmem:[#allocation2 + $0xd1] sm:$0xff]
    %v416 = vld [vmem:[#allocation2 + $0xe9] sm:$0xff]
    %v417 = vld [vmem:[#allocation2 + $0xf1] sm:$0xff]
    %v418 = vld [vmem:[#allocation2 + $0x109] sm:$0xff]
    %v419 = vld [vmem:[#allocation2 + $0x111] sm:$0xff]
    %v420 = vld [vmem:[#allocation2 + $0x129] sm:$0xff]
    %v421 = vld [vmem:[#allocation2 + $0x131] sm:$0xff]
    %v422 = vld [vmem:[#allocation2 + $0x149] sm:$0xff]
    %v423 = vld [vmem:[#allocation2 + $0x151] sm:$0xff]
    %v424 = vld [vmem:[#allocation2 + $0x169] sm:$0xff]
    %v425 = vld [vmem:[#allocation2 + $0x171] sm:$0xff]
    %v426 = vld [vmem:[#allocation2 + $0x189] sm:$0xff]
    %v427 = vld [vmem:[#allocation2 + $0x191] sm:$0xff]
    %v428 = vld [vmem:[#allocation2 + $0x1a9] sm:$0xff]
    %v429 = vld [vmem:[#allocation2 + $0x1b1] sm:$0xff]
    %v430 = vld [vmem:[#allocation2 + $0x1c9] sm:$0xff]
    %v431 = vld [vmem:[#allocation2 + $0x1d1] sm:$0xff]
    %v432 = vld [vmem:[#allocation2 + $0x1e9] sm:$0xff]
    %v433 = vld [vmem:[#allocation2 + $0x1f1] sm:$0xff]
    %v434 = vld [vmem:[#allocation2 + $0x249] sm:$0xff]
    %v435 = vld [vmem:[#allocation2 + $0x251] sm:$0xff]
    %v436 = vld [vmem:[#allocation2 + $0x269] sm:$0xff]
    %v437 = vld [vmem:[#allocation2 + $0x271] sm:$0xff]
    %v438 = vld [vmem:[#allocation2 + $0x289] sm:$0xff]
    %v439 = vld [vmem:[#allocation2 + $0x291] sm:$0xff]
    %v440 = vld [vmem:[#allocation2 + $0x2a9] sm:$0xff]
    %v441 = vld [vmem:[#allocation2 + $0x2b1] sm:$0xff]
    %v442 = vld [vmem:[#allocation2 + $0x2c9] sm:$0xff]
    %v443 = vld [vmem:[#allocation2 + $0x2d1] sm:$0xff]
    %v444 = vld [vmem:[#allocation2 + $0x2e9] sm:$0xff]
    %v445 = vld [vmem:[#allocation2 + $0x2f1] sm:$0xff]
    %v446 = vld [vmem:[#allocation2 + $0x309] sm:$0xff]
    %v447 = vld [vmem:[#allocation2 + $0x311] sm:$0xff]
    %v448 = vld [vmem:[#allocation2 + $0x329] sm:$0xff]
    %v449 = vld [vmem:[#allocation2 + $0x331] sm:$0xff]
    %v450 = vld [vmem:[#allocation2 + $0x349] sm:$0xff]
    %v451 = vld [vmem:[#allocation2 + $0x351] sm:$0xff]
    %v452 = vld [vmem:[#allocation2 + $0x369] sm:$0xff]
    %v453 = vld [vmem:[#allocation2 + $0x371] sm:$0xff]
    %v454 = vld [vmem:[#allocation2 + $0x389] sm:$0xff]
    %v455 = vld [vmem:[#allocation2 + $0x391] sm:$0xff]
    %v456 = vld [vmem:[#allocation2 + $0x3a9] sm:$0xff]
    %v457 = vld [vmem:[#allocation2 + $0x3b1] sm:$0xff]
    %v458 = vld [vmem:[#allocation2 + $0x3c9] sm:$0xff]
    %v459 = vld [vmem:[#allocation2 + $0x3d1] sm:$0xff]
    %v460 = vld [vmem:[#allocation2 + $0x3e9] sm:$0xff]
    %v461 = vld [vmem:[#allocation2 + $0x3f1] sm:$0xff]
    %v462 = vld [vmem:[#allocation2 + $0x409] sm:$0xff]
    %v463 = vld [vmem:[#allocation2 + $0x411] sm:$0xff]
    %v464 = vld [vmem:[#allocation2 + $0x429] sm:$0xff]
    %v465 = vld [vmem:[#allocation2 + $0x431] sm:$0xff]
    %v466 = vld [vmem:[%s209 + $0x7] sm:$0xff]
    %v467 = vld [vmem:[%s209 + $0xf] sm:$0xff]
    %v468 = vld [vmem:[%s209 + $0x27] sm:$0xff]
    %v469 = vld [vmem:[%s209 + $0x2f] sm:$0xff]
    %v470 = vld [vmem:[%s209 + $0x47] sm:$0xff]
    %v471 = vld [vmem:[%s209 + $0x4f] sm:$0xff]
    %v472 = vld [vmem:[%s209 + $0x67] sm:$0xff]
    %v473 = vld [vmem:[%s209 + $0x6f] sm:$0xff]
    %v474 = vld [vmem:[%s209 + $0x87] sm:$0xff]
    %v475 = vld [vmem:[%s209 + $0x8f] sm:$0xff]
    %v476 = vld [vmem:[%s209 + $0xa7] sm:$0xff]
    %v477 = vld [vmem:[%s209 + $0xaf] sm:$0xff]
    %v478 = vld [vmem:[%s209 + $0xc7] sm:$0xff]
    %v479 = vld [vmem:[%s209 + $0xcf] sm:$0xff]
    %v480 = vld [vmem:[%s209 + $0xe7] sm:$0xff]
    %v481 = vld [vmem:[%s209 + $0xef] sm:$0xff]
    %v482 = vld [vmem:[%s209 + $0x107] sm:$0xff]
    %v483 = vld [vmem:[%s209 + $0x10f] sm:$0xff]
    %v484 = vld [vmem:[%s209 + $0x127] sm:$0xff]
    %v485 = vld [vmem:[%s209 + $0x12f] sm:$0xff]
    %v486 = vld [vmem:[%s209 + $0x147] sm:$0xff]
    %v487 = vld [vmem:[%s209 + $0x14f] sm:$0xff]
    %v488 = vld [vmem:[%s209 + $0x167] sm:$0xff]
    %v489 = vld [vmem:[%s209 + $0x16f] sm:$0xff]
    %v490 = vld [vmem:[%s209 + $0x187] sm:$0xff]
    %v491 = vld [vmem:[%s209 + $0x18f] sm:$0xff]
    %v492 = vld [vmem:[%s209 + $0x1a7] sm:$0xff]
    %v493 = vld [vmem:[%s209 + $0x1af] sm:$0xff]
    %v494 = vld [vmem:[%s209 + $0x1c7] sm:$0xff]
    %v495 = vld [vmem:[%s209 + $0x1cf] sm:$0xff]
    %v496 = vld [vmem:[%s209 + $0x1e7] sm:$0xff]
    %v497 = vld [vmem:[%s209 + $0x1ef] sm:$0xff]
    %v498 = vld [vmem:[%s209 + $0x247] sm:$0xff]
    %v499 = vld [vmem:[%s209 + $0x24f] sm:$0xff]
    %v500 = vld [vmem:[%s209 + $0x267] sm:$0xff]
    %v501 = vld [vmem:[%s209 + $0x26f] sm:$0xff]
    %v502 = vld [vmem:[%s209 + $0x287] sm:$0xff]
    %v503 = vld [vmem:[%s209 + $0x28f] sm:$0xff]
    %v504 = vld [vmem:[%s209 + $0x2a7] sm:$0xff]
    %v505 = vld [vmem:[%s209 + $0x2af] sm:$0xff]
    %v506 = vld [vmem:[%s209 + $0x2c7] sm:$0xff]
    %v507 = vld [vmem:[%s209 + $0x2cf] sm:$0xff]
    %v508 = vld [vmem:[%s209 + $0x2e7] sm:$0xff]
    %v509 = vld [vmem:[%s209 + $0x2ef] sm:$0xff]
    %v510 = vld [vmem:[%s209 + $0x307] sm:$0xff]
    %v511 = vld [vmem:[%s209 + $0x30f] sm:$0xff]
    %v512 = vld [vmem:[%s209 + $0x327] sm:$0xff]
    %v513 = vld [vmem:[%s209 + $0x32f] sm:$0xff]
    %v514 = vld [vmem:[%s209 + $0x347] sm:$0xff]
    %v515 = vld [vmem:[%s209 + $0x34f] sm:$0xff]
    %v516 = vld [vmem:[%s209 + $0x367] sm:$0xff]
    %v517 = vld [vmem:[%s209 + $0x36f] sm:$0xff]
    %v518 = vld [vmem:[%s209 + $0x387] sm:$0xff]
    %v519 = vld [vmem:[%s209 + $0x38f] sm:$0xff]
    %v520 = vld [vmem:[%s209 + $0x3a7] sm:$0xff]
    %v521 = vld [vmem:[%s209 + $0x3af] sm:$0xff]
    %v522 = vld [vmem:[%s209 + $0x3c7] sm:$0xff]
    %v523 = vld [vmem:[%s209 + $0x3cf] sm:$0xff]
    %v524 = vld [vmem:[%s209 + $0x3e7] sm:$0xff]
    %v525 = vld [vmem:[%s209 + $0x3ef] sm:$0xff]
    %v526 = vld [vmem:[%s209 + $0x407] sm:$0xff]
    %v527 = vld [vmem:[%s209 + $0x40f] sm:$0xff]
    %v528 = vld [vmem:[%s209 + $0x427] sm:$0xff]
    %v529 = vld [vmem:[%s209 + $0x42f] sm:$0xff]
    %v530 = vld [vmem:[%s209 + $0x8] sm:$0xff]
    %v531 = vld [vmem:[%s209 + $0x10] sm:$0xff]
    %v532 = vld [vmem:[%s209 + $0x28] sm:$0xff]
    %v533 = vld [vmem:[%s209 + $0x30] sm:$0xff]
    %v534 = vld [vmem:[%s209 + $0x48] sm:$0xff]
    %v535 = vld [vmem:[%s209 + $0x50] sm:$0xff]
    %v536 = vld [vmem:[%s209 + $0x68] sm:$0xff]
    %v537 = vld [vmem:[%s209 + $0x70] sm:$0xff]
    %v538 = vld [vmem:[%s209 + $0x88] sm:$0xff]
    %v539 = vld [vmem:[%s209 + $0x90] sm:$0xff]
    %v540 = vld [vmem:[%s209 + $0xa8] sm:$0xff]
    %v541 = vld [vmem:[%s209 + $0xb0] sm:$0xff]
    %v542 = vld [vmem:[%s209 + $0xc8] sm:$0xff]
    %v543 = vld [vmem:[%s209 + $0xd0] sm:$0xff]
    %v544 = vld [vmem:[%s209 + $0xe8] sm:$0xff]
    %v545 = vld [vmem:[%s209 + $0xf0] sm:$0xff]
    %v546 = vld [vmem:[%s209 + $0x108] sm:$0xff]
    %v547 = vld [vmem:[%s209 + $0x110] sm:$0xff]
    %v548 = vld [vmem:[%s209 + $0x128] sm:$0xff]
    %v549 = vld [vmem:[%s209 + $0x130] sm:$0xff]
    %v550 = vld [vmem:[%s209 + $0x148] sm:$0xff]
    %v551 = vld [vmem:[%s209 + $0x150] sm:$0xff]
    %v552 = vld [vmem:[%s209 + $0x168] sm:$0xff]
    %v553 = vld [vmem:[%s209 + $0x170] sm:$0xff]
    %v554 = vld [vmem:[%s209 + $0x188] sm:$0xff]
    %v555 = vld [vmem:[%s209 + $0x190] sm:$0xff]
    %v556 = vld [vmem:[%s209 + $0x1a8] sm:$0xff]
    %v557 = vld [vmem:[%s209 + $0x1b0] sm:$0xff]
    %v558 = vld [vmem:[%s209 + $0x1c8] sm:$0xff]
    %v559 = vld [vmem:[%s209 + $0x1d0] sm:$0xff]
    %v560 = vld [vmem:[%s209 + $0x1e8] sm:$0xff]
    %v561 = vld [vmem:[%s209 + $0x1f0] sm:$0xff]
    %v562 = vld [vmem:[%s209 + $0x248] sm:$0xff]
    %v563 = vld [vmem:[%s209 + $0x250] sm:$0xff]
    %v564 = vld [vmem:[%s209 + $0x268] sm:$0xff]
    %v565 = vld [vmem:[%s209 + $0x270] sm:$0xff]
    %v566 = vld [vmem:[%s209 + $0x288] sm:$0xff]
    %v567 = vld [vmem:[%s209 + $0x290] sm:$0xff]
    %v568 = vld [vmem:[%s209 + $0x2a8] sm:$0xff]
    %v569 = vld [vmem:[%s209 + $0x2b0] sm:$0xff]
    %v570 = vld [vmem:[%s209 + $0x2c8] sm:$0xff]
    %v571 = vld [vmem:[%s209 + $0x2d0] sm:$0xff]
    %v572 = vld [vmem:[%s209 + $0x2e8] sm:$0xff]
    %v573 = vld [vmem:[%s209 + $0x2f0] sm:$0xff]
    %v574 = vld [vmem:[%s209 + $0x308] sm:$0xff]
    %v575 = vld [vmem:[%s209 + $0x310] sm:$0xff]
    %v576 = vld [vmem:[%s209 + $0x328] sm:$0xff]
    %v577 = vld [vmem:[%s209 + $0x330] sm:$0xff]
    %v578 = vld [vmem:[%s209 + $0x348] sm:$0xff]
    %v579 = vld [vmem:[%s209 + $0x350] sm:$0xff]
    %v580 = vld [vmem:[%s209 + $0x368] sm:$0xff]
    %v581 = vld [vmem:[%s209 + $0x370] sm:$0xff]
    %v582 = vld [vmem:[%s209 + $0x388] sm:$0xff]
    %v583 = vld [vmem:[%s209 + $0x390] sm:$0xff]
    %v584 = vld [vmem:[%s209 + $0x3a8] sm:$0xff]
    %v585 = vld [vmem:[%s209 + $0x3b0] sm:$0xff]
    %v586 = vld [vmem:[%s209 + $0x3c8] sm:$0xff]
    %v587 = vld [vmem:[%s209 + $0x3d0] sm:$0xff]
    %v588 = vld [vmem:[%s209 + $0x3e8] sm:$0xff]
    %v589 = vld [vmem:[%s209 + $0x3f0] sm:$0xff]
    %v590 = vld [vmem:[%s209 + $0x408] sm:$0xff]
    %v591 = vld [vmem:[%s209 + $0x410] sm:$0xff]
    %v592 = vld [vmem:[%s209 + $0x428] sm:$0xff]
    %v593 = vld [vmem:[%s209 + $0x430] sm:$0xff]
    %v594 = vld [vmem:[%s209 + $0x9] sm:$0xff]
    %v595 = vld [vmem:[%s209 + $0x11] sm:$0xff]
    %v596 = vld [vmem:[%s209 + $0x29] sm:$0xff]
    %v597 = vld [vmem:[%s209 + $0x31] sm:$0xff]
    %v598 = vld [vmem:[%s209 + $0x49] sm:$0xff]
    %v599 = vld [vmem:[%s209 + $0x51] sm:$0xff]
    %v600 = vld [vmem:[%s209 + $0x69] sm:$0xff]
    %v601 = vld [vmem:[%s209 + $0x71] sm:$0xff]
    %v602 = vld [vmem:[%s209 + $0x89] sm:$0xff]
    %v603 = vld [vmem:[%s209 + $0x91] sm:$0xff]
    %v604 = vld [vmem:[%s209 + $0xa9] sm:$0xff]
    %v605 = vld [vmem:[%s209 + $0xb1] sm:$0xff]
    %v606 = vld [vmem:[%s209 + $0xc9] sm:$0xff]
    %v607 = vld [vmem:[%s209 + $0xd1] sm:$0xff]
    %v608 = vld [vmem:[%s209 + $0xe9] sm:$0xff]
    %v609 = vld [vmem:[%s209 + $0xf1] sm:$0xff]
    %v610 = vld [vmem:[%s209 + $0x109] sm:$0xff]
    %v611 = vld [vmem:[%s209 + $0x111] sm:$0xff]
    %v612 = vld [vmem:[%s209 + $0x129] sm:$0xff]
    %v613 = vld [vmem:[%s209 + $0x131] sm:$0xff]
    %v614 = vld [vmem:[%s209 + $0x149] sm:$0xff]
    %v615 = vld [vmem:[%s209 + $0x151] sm:$0xff]
    %v616 = vld [vmem:[%s209 + $0x169] sm:$0xff]
    %v617 = vld [vmem:[%s209 + $0x171] sm:$0xff]
    %v618 = vld [vmem:[%s209 + $0x189] sm:$0xff]
    %v619 = vld [vmem:[%s209 + $0x191] sm:$0xff]
    %v620 = vld [vmem:[%s209 + $0x1a9] sm:$0xff]
    %v621 = vld [vmem:[%s209 + $0x1b1] sm:$0xff]
    %v622 = vld [vmem:[%s209 + $0x1c9] sm:$0xff]
    %v623 = vld [vmem:[%s209 + $0x1d1] sm:$0xff]
    %v624 = vld [vmem:[%s209 + $0x1e9] sm:$0xff]
    %v625 = vld [vmem:[%s209 + $0x1f1] sm:$0xff]
    %v626 = vld [vmem:[%s209 + $0x249] sm:$0xff]
    %v627 = vld [vmem:[%s209 + $0x251] sm:$0xff]
    %v628 = vld [vmem:[%s209 + $0x269] sm:$0xff]
    %v629 = vld [vmem:[%s209 + $0x271] sm:$0xff]
    %v630 = vld [vmem:[%s209 + $0x289] sm:$0xff]
    %v631 = vld [vmem:[%s209 + $0x291] sm:$0xff]
    %v632 = vld [vmem:[%s209 + $0x2a9] sm:$0xff]
    %v633 = vld [vmem:[%s209 + $0x2b1] sm:$0xff]
    %v634 = vld [vmem:[%s209 + $0x2c9] sm:$0xff]
    %v635 = vld [vmem:[%s209 + $0x2d1] sm:$0xff]
    %v636 = vld [vmem:[%s209 + $0x2e9] sm:$0xff]
    %v637 = vld [vmem:[%s209 + $0x2f1] sm:$0xff]
    %v638 = vld [vmem:[%s209 + $0x309] sm:$0xff]
    %v639 = vld [vmem:[%s209 + $0x311] sm:$0xff]
    %v640 = vld [vmem:[%s209 + $0x329] sm:$0xff]
    %v641 = vld [vmem:[%s209 + $0x331] sm:$0xff]
    %v642 = vld [vmem:[%s209 + $0x349] sm:$0xff]
    %v643 = vld [vmem:[%s209 + $0x351] sm:$0xff]
    %v644 = vld [vmem:[%s209 + $0x369] sm:$0xff]
    %v645 = vld [vmem:[%s209 + $0x371] sm:$0xff]
    %v646 = vld [vmem:[%s209 + $0x389] sm:$0xff]
    %v647 = vld [vmem:[%s209 + $0x391] sm:$0xff]
    %v648 = vld [vmem:[%s209 + $0x3a9] sm:$0xff]
    %v649 = vld [vmem:[%s209 + $0x3b1] sm:$0xff]
    %v650 = vld [vmem:[%s209 + $0x3c9] sm:$0xff]
    %v651 = vld [vmem:[%s209 + $0x3d1] sm:$0xff]
    %v652 = vld [vmem:[%s209 + $0x3e9] sm:$0xff]
    %v653 = vld [vmem:[%s209 + $0x3f1] sm:$0xff]
    %v654 = vld [vmem:[%s209 + $0x409] sm:$0xff]
    %v655 = vld [vmem:[%s209 + $0x411] sm:$0xff]
    %v656 = vld [vmem:[%s209 + $0x429] sm:$0xff]
    %v657 = vld [vmem:[%s209 + $0x431] sm:$0xff]
    %s658 = scalar_lea.vmem [#allocation2], 64
    %v659 = vld [vmem:[%s658 + $0x7] sm:$0xff]
    %v660 = vld [vmem:[%s658 + $0xf] sm:$0xff]
    %v661 = vld [vmem:[%s658 + $0x27] sm:$0xff]
    %v662 = vld [vmem:[%s658 + $0x2f] sm:$0xff]
    %v663 = vld [vmem:[%s658 + $0x47] sm:$0xff]
    %v664 = vld [vmem:[%s658 + $0x4f] sm:$0xff]
    %v665 = vld [vmem:[%s658 + $0x67] sm:$0xff]
    %v666 = vld [vmem:[%s658 + $0x6f] sm:$0xff]
    %v667 = vld [vmem:[%s658 + $0x87] sm:$0xff]
    %v668 = vld [vmem:[%s658 + $0x8f] sm:$0xff]
    %v669 = vld [vmem:[%s658 + $0xa7] sm:$0xff]
    %v670 = vld [vmem:[%s658 + $0xaf] sm:$0xff]
    %v671 = vld [vmem:[%s658 + $0xc7] sm:$0xff]
    %v672 = vld [vmem:[%s658 + $0xcf] sm:$0xff]
    %v673 = vld [vmem:[%s658 + $0xe7] sm:$0xff]
    %v674 = vld [vmem:[%s658 + $0xef] sm:$0xff]
    %v675 = vld [vmem:[%s658 + $0x107] sm:$0xff]
    %v676 = vld [vmem:[%s658 + $0x10f] sm:$0xff]
    %v677 = vld [vmem:[%s658 + $0x127] sm:$0xff]
    %v678 = vld [vmem:[%s658 + $0x12f] sm:$0xff]
    %v679 = vld [vmem:[%s658 + $0x147] sm:$0xff]
    %v680 = vld [vmem:[%s658 + $0x14f] sm:$0xff]
    %v681 = vld [vmem:[%s658 + $0x167] sm:$0xff]
    %v682 = vld [vmem:[%s658 + $0x16f] sm:$0xff]
    %v683 = vld [vmem:[%s658 + $0x187] sm:$0xff]
    %v684 = vld [vmem:[%s658 + $0x18f] sm:$0xff]
    %v685 = vld [vmem:[%s658 + $0x1a7] sm:$0xff]
    %v686 = vld [vmem:[%s658 + $0x1af] sm:$0xff]
    %v687 = vld [vmem:[%s658 + $0x1c7] sm:$0xff]
    %v688 = vld [vmem:[%s658 + $0x1cf] sm:$0xff]
    %v689 = vld [vmem:[%s658 + $0x1e7] sm:$0xff]
    %v690 = vld [vmem:[%s658 + $0x1ef] sm:$0xff]
    %v691 = vld [vmem:[%s658 + $0x247] sm:$0xff]
    %v692 = vld [vmem:[%s658 + $0x24f] sm:$0xff]
    %v693 = vld [vmem:[%s658 + $0x267] sm:$0xff]
    %v694 = vld [vmem:[%s658 + $0x26f] sm:$0xff]
    %v695 = vld [vmem:[%s658 + $0x287] sm:$0xff]
    %v696 = vld [vmem:[%s658 + $0x28f] sm:$0xff]
    %v697 = vld [vmem:[%s658 + $0x2a7] sm:$0xff]
    %v698 = vld [vmem:[%s658 + $0x2af] sm:$0xff]
    %v699 = vld [vmem:[%s658 + $0x2c7] sm:$0xff]
    %v700 = vld [vmem:[%s658 + $0x2cf] sm:$0xff]
    %v701 = vld [vmem:[%s658 + $0x2e7] sm:$0xff]
    %v702 = vld [vmem:[%s658 + $0x2ef] sm:$0xff]
    %v703 = vld [vmem:[%s658 + $0x307] sm:$0xff]
    %v704 = vld [vmem:[%s658 + $0x30f] sm:$0xff]
    %v705 = vld [vmem:[%s658 + $0x327] sm:$0xff]
    %v706 = vld [vmem:[%s658 + $0x32f] sm:$0xff]
    %v707 = vld [vmem:[%s658 + $0x347] sm:$0xff]
    %v708 = vld [vmem:[%s658 + $0x34f] sm:$0xff]
    %v709 = vld [vmem:[%s658 + $0x367] sm:$0xff]
    %v710 = vld [vmem:[%s658 + $0x36f] sm:$0xff]
    %v711 = vld [vmem:[%s658 + $0x387] sm:$0xff]
    %v712 = vld [vmem:[%s658 + $0x38f] sm:$0xff]
    %v713 = vld [vmem:[%s658 + $0x3a7] sm:$0xff]
    %v714 = vld [vmem:[%s658 + $0x3af] sm:$0xff]
    %v715 = vld [vmem:[%s658 + $0x3c7] sm:$0xff]
    %v716 = vld [vmem:[%s658 + $0x3cf] sm:$0xff]
    %v717 = vld [vmem:[%s658 + $0x3e7] sm:$0xff]
    %v718 = vld [vmem:[%s658 + $0x3ef] sm:$0xff]
    %v719 = vld [vmem:[%s658 + $0x407] sm:$0xff]
    %v720 = vld [vmem:[%s658 + $0x40f] sm:$0xff]
    %v721 = vld [vmem:[%s658 + $0x427] sm:$0xff]
    %v722 = vld [vmem:[%s658 + $0x42f] sm:$0xff]
    %v723 = vld [vmem:[%s658 + $0x8] sm:$0xff]
    %v724 = vld [vmem:[%s658 + $0x10] sm:$0xff]
    %v725 = vld [vmem:[%s658 + $0x28] sm:$0xff]
    %v726 = vld [vmem:[%s658 + $0x30] sm:$0xff]
    %v727 = vld [vmem:[%s658 + $0x48] sm:$0xff]
    %v728 = vld [vmem:[%s658 + $0x50] sm:$0xff]
    %v729 = vld [vmem:[%s658 + $0x68] sm:$0xff]
    %v730 = vld [vmem:[%s658 + $0x70] sm:$0xff]
    %v731 = vld [vmem:[%s658 + $0x88] sm:$0xff]
    %v732 = vld [vmem:[%s658 + $0x90] sm:$0xff]
    %v733 = vld [vmem:[%s658 + $0xa8] sm:$0xff]
    %v734 = vld [vmem:[%s658 + $0xb0] sm:$0xff]
    %v735 = vld [vmem:[%s658 + $0xc8] sm:$0xff]
    %v736 = vld [vmem:[%s658 + $0xd0] sm:$0xff]
    %v737 = vld [vmem:[%s658 + $0xe8] sm:$0xff]
    %v738 = vld [vmem:[%s658 + $0xf0] sm:$0xff]
    %v739 = vld [vmem:[%s658 + $0x108] sm:$0xff]
    %v740 = vld [vmem:[%s658 + $0x110] sm:$0xff]
    %v741 = vld [vmem:[%s658 + $0x128] sm:$0xff]
    %v742 = vld [vmem:[%s658 + $0x130] sm:$0xff]
    %v743 = vld [vmem:[%s658 + $0x148] sm:$0xff]
    %v744 = vld [vmem:[%s658 + $0x150] sm:$0xff]
    %v745 = vld [vmem:[%s658 + $0x168] sm:$0xff]
    %v746 = vld [vmem:[%s658 + $0x170] sm:$0xff]
    %v747 = vld [vmem:[%s658 + $0x188] sm:$0xff]
    %v748 = vld [vmem:[%s658 + $0x190] sm:$0xff]
    %v749 = vld [vmem:[%s658 + $0x1a8] sm:$0xff]
    %v750 = vld [vmem:[%s658 + $0x1b0] sm:$0xff]
    %v751 = vld [vmem:[%s658 + $0x1c8] sm:$0xff]
    %v752 = vld [vmem:[%s658 + $0x1d0] sm:$0xff]
    %v753 = vld [vmem:[%s658 + $0x1e8] sm:$0xff]
    %v754 = vld [vmem:[%s658 + $0x1f0] sm:$0xff]
    %v755 = vld [vmem:[%s658 + $0x248] sm:$0xff]
    %v756 = vld [vmem:[%s658 + $0x250] sm:$0xff]
    %v757 = vld [vmem:[%s658 + $0x268] sm:$0xff]
    %v758 = vld [vmem:[%s658 + $0x270] sm:$0xff]
    %v759 = vld [vmem:[%s658 + $0x288] sm:$0xff]
    %v760 = vld [vmem:[%s658 + $0x290] sm:$0xff]
    %v761 = vld [vmem:[%s658 + $0x2a8] sm:$0xff]
    %v762 = vld [vmem:[%s658 + $0x2b0] sm:$0xff]
    %v763 = vld [vmem:[%s658 + $0x2c8] sm:$0xff]
    %v764 = vld [vmem:[%s658 + $0x2d0] sm:$0xff]
    %v765 = vld [vmem:[%s658 + $0x2e8] sm:$0xff]
    %v766 = vld [vmem:[%s658 + $0x2f0] sm:$0xff]
    %v767 = vld [vmem:[%s658 + $0x308] sm:$0xff]
    %v768 = vld [vmem:[%s658 + $0x310] sm:$0xff]
    %v769 = vld [vmem:[%s658 + $0x328] sm:$0xff]
    %v770 = vld [vmem:[%s658 + $0x330] sm:$0xff]
    %v771 = vld [vmem:[%s658 + $0x348] sm:$0xff]
    %v772 = vld [vmem:[%s658 + $0x350] sm:$0xff]
    %v773 = vld [vmem:[%s658 + $0x368] sm:$0xff]
    %v774 = vld [vmem:[%s658 + $0x370] sm:$0xff]
    %v775 = vld [vmem:[%s658 + $0x388] sm:$0xff]
    %v776 = vld [vmem:[%s658 + $0x390] sm:$0xff]
    %v777 = vld [vmem:[%s658 + $0x3a8] sm:$0xff]
    %v778 = vld [vmem:[%s658 + $0x3b0] sm:$0xff]
    %v779 = vld [vmem:[%s658 + $0x3c8] sm:$0xff]
    %v780 = vld [vmem:[%s658 + $0x3d0] sm:$0xff]
    %v781 = vld [vmem:[%s658 + $0x3e8] sm:$0xff]
    %v782 = vld [vmem:[%s658 + $0x3f0] sm:$0xff]
    %v783 = vld [vmem:[%s658 + $0x408] sm:$0xff]
    %v784 = vld [vmem:[%s658 + $0x410] sm:$0xff]
    %v785 = vld [vmem:[%s658 + $0x428] sm:$0xff]
    %v786 = vld [vmem:[%s658 + $0x430] sm:$0xff]
    %v787 = vld [vmem:[%s658 + $0x9] sm:$0xff]
    %v788 = vld [vmem:[%s658 + $0x11] sm:$0xff]
    %v789 = vld [vmem:[%s658 + $0x29] sm:$0xff]
    %v790 = vld [vmem:[%s658 + $0x31] sm:$0xff]
    %v791 = vld [vmem:[%s658 + $0x49] sm:$0xff]
    %v792 = vld [vmem:[%s658 + $0x51] sm:$0xff]
    %v793 = vld [vmem:[%s658 + $0x69] sm:$0xff]
    %v794 = vld [vmem:[%s658 + $0x71] sm:$0xff]
    %v795 = vld [vmem:[%s658 + $0x89] sm:$0xff]
    %v796 = vld [vmem:[%s658 + $0x91] sm:$0xff]
    %v797 = vld [vmem:[%s658 + $0xa9] sm:$0xff]
    %v798 = vld [vmem:[%s658 + $0xb1] sm:$0xff]
    %v799 = vld [vmem:[%s658 + $0xc9] sm:$0xff]
    %v800 = vld [vmem:[%s658 + $0xd1] sm:$0xff]
    %v801 = vld [vmem:[%s658 + $0xe9] sm:$0xff]
    %v802 = vld [vmem:[%s658 + $0xf1] sm:$0xff]
    %v803 = vld [vmem:[%s658 + $0x109] sm:$0xff]
    %v804 = vld [vmem:[%s658 + $0x111] sm:$0xff]
    %v805 = vld [vmem:[%s658 + $0x129] sm:$0xff]
    %v806 = vld [vmem:[%s658 + $0x131] sm:$0xff]
    %v807 = vld [vmem:[%s658 + $0x149] sm:$0xff]
    %v808 = vld [vmem:[%s658 + $0x151] sm:$0xff]
    %v809 = vld [vmem:[%s658 + $0x169] sm:$0xff]
    %v810 = vld [vmem:[%s658 + $0x171] sm:$0xff]
    %v811 = vld [vmem:[%s658 + $0x189] sm:$0xff]
    %v812 = vld [vmem:[%s658 + $0x191] sm:$0xff]
    %v813 = vld [vmem:[%s658 + $0x1a9] sm:$0xff]
    %v814 = vld [vmem:[%s658 + $0x1b1] sm:$0xff]
    %v815 = vld [vmem:[%s658 + $0x1c9] sm:$0xff]
    %v816 = vld [vmem:[%s658 + $0x1d1] sm:$0xff]
    %v817 = vld [vmem:[%s658 + $0x1e9] sm:$0xff]
    %v818 = vld [vmem:[%s658 + $0x1f1] sm:$0xff]
    %v819 = vld [vmem:[%s658 + $0x249] sm:$0xff]
    %v820 = vld [vmem:[%s658 + $0x251] sm:$0xff]
    %v821 = vld [vmem:[%s658 + $0x269] sm:$0xff]
    %v822 = vld [vmem:[%s658 + $0x271] sm:$0xff]
    %v823 = vld [vmem:[%s658 + $0x289] sm:$0xff]
    %v824 = vld [vmem:[%s658 + $0x291] sm:$0xff]
    %v825 = vld [vmem:[%s658 + $0x2a9] sm:$0xff]
    %v826 = vld [vmem:[%s658 + $0x2b1] sm:$0xff]
    %v827 = vld [vmem:[%s658 + $0x2c9] sm:$0xff]
    %v828 = vld [vmem:[%s658 + $0x2d1] sm:$0xff]
    %v829 = vld [vmem:[%s658 + $0x2e9] sm:$0xff]
    %v830 = vld [vmem:[%s658 + $0x2f1] sm:$0xff]
    %v831 = vld [vmem:[%s658 + $0x309] sm:$0xff]
    %v832 = vld [vmem:[%s658 + $0x311] sm:$0xff]
    %v833 = vld [vmem:[%s658 + $0x329] sm:$0xff]
    %v834 = vld [vmem:[%s658 + $0x331] sm:$0xff]
    %v835 = vld [vmem:[%s658 + $0x349] sm:$0xff]
    %v836 = vld [vmem:[%s658 + $0x351] sm:$0xff]
    %v837 = vld [vmem:[%s658 + $0x369] sm:$0xff]
    %v838 = vld [vmem:[%s658 + $0x371] sm:$0xff]
    %v839 = vld [vmem:[%s658 + $0x389] sm:$0xff]
    %v840 = vld [vmem:[%s658 + $0x391] sm:$0xff]
    %v841 = vld [vmem:[%s658 + $0x3a9] sm:$0xff]
    %v842 = vld [vmem:[%s658 + $0x3b1] sm:$0xff]
    %v843 = vld [vmem:[%s658 + $0x3c9] sm:$0xff]
    %v844 = vld [vmem:[%s658 + $0x3d1] sm:$0xff]
    %v845 = vld [vmem:[%s658 + $0x3e9] sm:$0xff]
    %v846 = vld [vmem:[%s658 + $0x3f1] sm:$0xff]
    %v847 = vld [vmem:[%s658 + $0x409] sm:$0xff]
    %v848 = vld [vmem:[%s658 + $0x411] sm:$0xff]
    %v849 = vld [vmem:[%s658 + $0x429] sm:$0xff]
    %v850 = vld [vmem:[%s658 + $0x431] sm:$0xff]
    %915 = vrot.lane.b32.xlu0 %v338, 3
    %v916 = vpop.permute.xlu0 %915
    %917 = vrot.lane.b32.xlu0 %v339, 3
    %v918 = vpop.permute.xlu0 %917
    %919 = vrot.lane.b32.xlu0 %v340, 3
    %v920 = vpop.permute.xlu0 %919
    %921 = vrot.lane.b32.xlu0 %v341, 3
    %v922 = vpop.permute.xlu0 %921
    %923 = vrot.lane.b32.xlu0 %v342, 3
    %v924 = vpop.permute.xlu0 %923
    %925 = vrot.lane.b32.xlu0 %v343, 3
    %v926 = vpop.permute.xlu0 %925
    %927 = vrot.lane.b32.xlu0 %v344, 3
    %v928 = vpop.permute.xlu0 %927
    %929 = vrot.lane.b32.xlu0 %v345, 3
    %v930 = vpop.permute.xlu0 %929
    %931 = vrot.lane.b32.xlu0 %v346, 3
    %v932 = vpop.permute.xlu0 %931
    %933 = vrot.lane.b32.xlu0 %v347, 3
    %v934 = vpop.permute.xlu0 %933
    %935 = vrot.lane.b32.xlu0 %v348, 3
    %v936 = vpop.permute.xlu0 %935
    %937 = vrot.lane.b32.xlu0 %v349, 3
    %v938 = vpop.permute.xlu0 %937
    %939 = vrot.lane.b32.xlu0 %v350, 3
    %v940 = vpop.permute.xlu0 %939
    %941 = vrot.lane.b32.xlu0 %v351, 3
    %v942 = vpop.permute.xlu0 %941
    %943 = vrot.lane.b32.xlu0 %v352, 3
    %v944 = vpop.permute.xlu0 %943
    %945 = vrot.lane.b32.xlu0 %v353, 3
    %v946 = vpop.permute.xlu0 %945
    %947 = vrot.lane.b32.xlu0 %v354, 3
    %v948 = vpop.permute.xlu0 %947
    %949 = vrot.lane.b32.xlu0 %v355, 3
    %v950 = vpop.permute.xlu0 %949
    %951 = vrot.lane.b32.xlu0 %v356, 3
    %v952 = vpop.permute.xlu0 %951
    %953 = vrot.lane.b32.xlu0 %v357, 3
    %v954 = vpop.permute.xlu0 %953
    %955 = vrot.lane.b32.xlu0 %v358, 3
    %v956 = vpop.permute.xlu0 %955
    %957 = vrot.lane.b32.xlu0 %v359, 3
    %v958 = vpop.permute.xlu0 %957
    %959 = vrot.lane.b32.xlu0 %v360, 3
    %v960 = vpop.permute.xlu0 %959
    %961 = vrot.lane.b32.xlu0 %v361, 3
    %v962 = vpop.permute.xlu0 %961
    %963 = vrot.lane.b32.xlu0 %v362, 3
    %v964 = vpop.permute.xlu0 %963
    %965 = vrot.lane.b32.xlu0 %v363, 3
    %v966 = vpop.permute.xlu0 %965
    %967 = vrot.lane.b32.xlu0 %v364, 3
    %v968 = vpop.permute.xlu0 %967
    %969 = vrot.lane.b32.xlu0 %v365, 3
    %v970 = vpop.permute.xlu0 %969
    %971 = vrot.lane.b32.xlu0 %v366, 3
    %v972 = vpop.permute.xlu0 %971
    %973 = vrot.lane.b32.xlu0 %v367, 3
    %v974 = vpop.permute.xlu0 %973
    %975 = vrot.lane.b32.xlu0 %v368, 3
    %v976 = vpop.permute.xlu0 %975
    %977 = vrot.lane.b32.xlu0 %v369, 3
    %v978 = vpop.permute.xlu0 %977
    %979 = vrot.lane.b32.xlu0 %v370, 3
    %v980 = vpop.permute.xlu0 %979
    %981 = vrot.lane.b32.xlu0 %v371, 3
    %v982 = vpop.permute.xlu0 %981
    %983 = vrot.lane.b32.xlu0 %v372, 3
    %v984 = vpop.permute.xlu0 %983
    %985 = vrot.lane.b32.xlu0 %v373, 3
    %v986 = vpop.permute.xlu0 %985
    %987 = vrot.lane.b32.xlu0 %v374, 3
    %v988 = vpop.permute.xlu0 %987
    %989 = vrot.lane.b32.xlu0 %v375, 3
    %v990 = vpop.permute.xlu0 %989
    %991 = vrot.lane.b32.xlu0 %v376, 3
    %v992 = vpop.permute.xlu0 %991
    %993 = vrot.lane.b32.xlu0 %v377, 3
    %v994 = vpop.permute.xlu0 %993
    %995 = vrot.lane.b32.xlu0 %v378, 3
    %v996 = vpop.permute.xlu0 %995
    %997 = vrot.lane.b32.xlu0 %v379, 3
    %v998 = vpop.permute.xlu0 %997
    %999 = vrot.lane.b32.xlu0 %v380, 3
    %v1000 = vpop.permute.xlu0 %999
    %1001 = vrot.lane.b32.xlu0 %v381, 3
    %v1002 = vpop.permute.xlu0 %1001
    %1003 = vrot.lane.b32.xlu0 %v382, 3
    %v1004 = vpop.permute.xlu0 %1003
    %1005 = vrot.lane.b32.xlu0 %v383, 3
    %v1006 = vpop.permute.xlu0 %1005
    %1007 = vrot.lane.b32.xlu0 %v384, 3
    %v1008 = vpop.permute.xlu0 %1007
    %1009 = vrot.lane.b32.xlu0 %v385, 3
    %v1010 = vpop.permute.xlu0 %1009
    %1011 = vrot.lane.b32.xlu0 %v386, 3
    %v1012 = vpop.permute.xlu0 %1011
    %1013 = vrot.lane.b32.xlu0 %v387, 3
    %v1014 = vpop.permute.xlu0 %1013
    %1015 = vrot.lane.b32.xlu0 %v388, 3
    %v1016 = vpop.permute.xlu0 %1015
    %1017 = vrot.lane.b32.xlu0 %v389, 3
    %v1018 = vpop.permute.xlu0 %1017
    %1019 = vrot.lane.b32.xlu0 %v390, 3
    %v1020 = vpop.permute.xlu0 %1019
    %1021 = vrot.lane.b32.xlu0 %v391, 3
    %v1022 = vpop.permute.xlu0 %1021
    %1023 = vrot.lane.b32.xlu0 %v392, 3
    %v1024 = vpop.permute.xlu0 %1023
    %1025 = vrot.lane.b32.xlu0 %v393, 3
    %v1026 = vpop.permute.xlu0 %1025
    %1027 = vrot.lane.b32.xlu0 %v394, 3
    %v1028 = vpop.permute.xlu0 %1027
    %1029 = vrot.lane.b32.xlu0 %v395, 3
    %v1030 = vpop.permute.xlu0 %1029
    %1031 = vrot.lane.b32.xlu0 %v396, 3
    %v1032 = vpop.permute.xlu0 %1031
    %1033 = vrot.lane.b32.xlu0 %v397, 3
    %v1034 = vpop.permute.xlu0 %1033
    %1035 = vrot.lane.b32.xlu0 %v398, 3
    %v1036 = vpop.permute.xlu0 %1035
    %1037 = vrot.lane.b32.xlu0 %v399, 3
    %v1038 = vpop.permute.xlu0 %1037
    %1039 = vrot.lane.b32.xlu0 %v400, 3
    %v1040 = vpop.permute.xlu0 %1039
    %1041 = vrot.lane.b32.xlu0 %v401, 3
    %v1042 = vpop.permute.xlu0 %1041
    %1171 = vrot.lane.b32.xlu0 %v402, 6
    %v1172 = vpop.permute.xlu0 %1171
    %1173 = vrot.lane.b32.xlu0 %v403, 6
    %v1174 = vpop.permute.xlu0 %1173
    %1175 = vrot.lane.b32.xlu0 %v404, 6
    %v1176 = vpop.permute.xlu0 %1175
    %1177 = vrot.lane.b32.xlu0 %v405, 6
    %v1178 = vpop.permute.xlu0 %1177
    %1179 = vrot.lane.b32.xlu0 %v406, 6
    %v1180 = vpop.permute.xlu0 %1179
    %1181 = vrot.lane.b32.xlu0 %v407, 6
    %v1182 = vpop.permute.xlu0 %1181
    %1183 = vrot.lane.b32.xlu0 %v408, 6
    %v1184 = vpop.permute.xlu0 %1183
    %1185 = vrot.lane.b32.xlu0 %v409, 6
    %v1186 = vpop.permute.xlu0 %1185
    %1187 = vrot.lane.b32.xlu0 %v410, 6
    %v1188 = vpop.permute.xlu0 %1187
    %1189 = vrot.lane.b32.xlu0 %v411, 6
    %v1190 = vpop.permute.xlu0 %1189
    %1191 = vrot.lane.b32.xlu0 %v412, 6
    %v1192 = vpop.permute.xlu0 %1191
    %1193 = vrot.lane.b32.xlu0 %v413, 6
    %v1194 = vpop.permute.xlu0 %1193
    %1195 = vrot.lane.b32.xlu0 %v414, 6
    %v1196 = vpop.permute.xlu0 %1195
    %1197 = vrot.lane.b32.xlu0 %v415, 6
    %v1198 = vpop.permute.xlu0 %1197
    %1199 = vrot.lane.b32.xlu0 %v416, 6
    %v1200 = vpop.permute.xlu0 %1199
    %1201 = vrot.lane.b32.xlu0 %v417, 6
    %v1202 = vpop.permute.xlu0 %1201
    %1203 = vrot.lane.b32.xlu0 %v418, 6
    %v1204 = vpop.permute.xlu0 %1203
    %1205 = vrot.lane.b32.xlu0 %v419, 6
    %v1206 = vpop.permute.xlu0 %1205
    %1207 = vrot.lane.b32.xlu0 %v420, 6
    %v1208 = vpop.permute.xlu0 %1207
    %1209 = vrot.lane.b32.xlu0 %v421, 6
    %v1210 = vpop.permute.xlu0 %1209
    %1211 = vrot.lane.b32.xlu0 %v422, 6
    %v1212 = vpop.permute.xlu0 %1211
    %1213 = vrot.lane.b32.xlu0 %v423, 6
    %v1214 = vpop.permute.xlu0 %1213
    %1215 = vrot.lane.b32.xlu0 %v424, 6
    %v1216 = vpop.permute.xlu0 %1215
    %1217 = vrot.lane.b32.xlu0 %v425, 6
    %v1218 = vpop.permute.xlu0 %1217
    %1219 = vrot.lane.b32.xlu0 %v426, 6
    %v1220 = vpop.permute.xlu0 %1219
    %1221 = vrot.lane.b32.xlu0 %v427, 6
    %v1222 = vpop.permute.xlu0 %1221
    %1223 = vrot.lane.b32.xlu0 %v428, 6
    %v1224 = vpop.permute.xlu0 %1223
    %1225 = vrot.lane.b32.xlu0 %v429, 6
    %v1226 = vpop.permute.xlu0 %1225
    %1227 = vrot.lane.b32.xlu0 %v430, 6
    %v1228 = vpop.permute.xlu0 %1227
    %1229 = vrot.lane.b32.xlu0 %v431, 6
    %v1230 = vpop.permute.xlu0 %1229
    %1231 = vrot.lane.b32.xlu0 %v432, 6
    %v1232 = vpop.permute.xlu0 %1231
    %1233 = vrot.lane.b32.xlu0 %v433, 6
    %v1234 = vpop.permute.xlu0 %1233
    %1235 = vrot.lane.b32.xlu0 %v434, 6
    %v1236 = vpop.permute.xlu0 %1235
    %1237 = vrot.lane.b32.xlu0 %v435, 6
    %v1238 = vpop.permute.xlu0 %1237
    %1239 = vrot.lane.b32.xlu0 %v436, 6
    %v1240 = vpop.permute.xlu0 %1239
    %1241 = vrot.lane.b32.xlu0 %v437, 6
    %v1242 = vpop.permute.xlu0 %1241
    %1243 = vrot.lane.b32.xlu0 %v438, 6
    %v1244 = vpop.permute.xlu0 %1243
    %1245 = vrot.lane.b32.xlu0 %v439, 6
    %v1246 = vpop.permute.xlu0 %1245
    %1247 = vrot.lane.b32.xlu0 %v440, 6
    %v1248 = vpop.permute.xlu0 %1247
    %1249 = vrot.lane.b32.xlu0 %v441, 6
    %v1250 = vpop.permute.xlu0 %1249
    %1251 = vrot.lane.b32.xlu0 %v442, 6
    %v1252 = vpop.permute.xlu0 %1251
    %1253 = vrot.lane.b32.xlu0 %v443, 6
    %v1254 = vpop.permute.xlu0 %1253
    %1255 = vrot.lane.b32.xlu0 %v444, 6
    %v1256 = vpop.permute.xlu0 %1255
    %1257 = vrot.lane.b32.xlu0 %v445, 6
    %v1258 = vpop.permute.xlu0 %1257
    %1259 = vrot.lane.b32.xlu0 %v446, 6
    %v1260 = vpop.permute.xlu0 %1259
    %1261 = vrot.lane.b32.xlu0 %v447, 6
    %v1262 = vpop.permute.xlu0 %1261
    %1263 = vrot.lane.b32.xlu0 %v448, 6
    %v1264 = vpop.permute.xlu0 %1263
    %1265 = vrot.lane.b32.xlu0 %v449, 6
    %v1266 = vpop.permute.xlu0 %1265
    %1267 = vrot.lane.b32.xlu0 %v450, 6
    %v1268 = vpop.permute.xlu0 %1267
    %1269 = vrot.lane.b32.xlu0 %v451, 6
    %v1270 = vpop.permute.xlu0 %1269
    %1271 = vrot.lane.b32.xlu0 %v452, 6
    %v1272 = vpop.permute.xlu0 %1271
    %1273 = vrot.lane.b32.xlu0 %v453, 6
    %v1274 = vpop.permute.xlu0 %1273
    %1275 = vrot.lane.b32.xlu0 %v454, 6
    %v1276 = vpop.permute.xlu0 %1275
    %1277 = vrot.lane.b32.xlu0 %v455, 6
    %v1278 = vpop.permute.xlu0 %1277
    %1279 = vrot.lane.b32.xlu0 %v456, 6
    %v1280 = vpop.permute.xlu0 %1279
    %1281 = vrot.lane.b32.xlu0 %v457, 6
    %v1282 = vpop.permute.xlu0 %1281
    %1283 = vrot.lane.b32.xlu0 %v458, 6
    %v1284 = vpop.permute.xlu0 %1283
    %1285 = vrot.lane.b32.xlu0 %v459, 6
    %v1286 = vpop.permute.xlu0 %1285
    %1287 = vrot.lane.b32.xlu0 %v460, 6
    %v1288 = vpop.permute.xlu0 %1287
    %1289 = vrot.lane.b32.xlu0 %v461, 6
    %v1290 = vpop.permute.xlu0 %1289
    %1291 = vrot.lane.b32.xlu0 %v462, 6
    %v1292 = vpop.permute.xlu0 %1291
    %1293 = vrot.lane.b32.xlu0 %v463, 6
    %v1294 = vpop.permute.xlu0 %1293
    %1295 = vrot.lane.b32.xlu0 %v464, 6
    %v1296 = vpop.permute.xlu0 %1295
    %1297 = vrot.lane.b32.xlu0 %v465, 6
    %v1298 = vpop.permute.xlu0 %1297
    %1427 = vrot.lane.b32.xlu0 %v466, 9
    %v1428 = vpop.permute.xlu0 %1427
    %1429 = vrot.lane.b32.xlu0 %v467, 9
    %v1430 = vpop.permute.xlu0 %1429
    %1431 = vrot.lane.b32.xlu0 %v468, 9
    %v1432 = vpop.permute.xlu0 %1431
    %1433 = vrot.lane.b32.xlu0 %v469, 9
    %v1434 = vpop.permute.xlu0 %1433
    %1435 = vrot.lane.b32.xlu0 %v470, 9
    %v1436 = vpop.permute.xlu0 %1435
    %1437 = vrot.lane.b32.xlu0 %v471, 9
    %v1438 = vpop.permute.xlu0 %1437
    %1439 = vrot.lane.b32.xlu0 %v472, 9
    %v1440 = vpop.permute.xlu0 %1439
    %1441 = vrot.lane.b32.xlu0 %v473, 9
    %v1442 = vpop.permute.xlu0 %1441
    %1443 = vrot.lane.b32.xlu0 %v474, 9
    %v1444 = vpop.permute.xlu0 %1443
    %1445 = vrot.lane.b32.xlu0 %v475, 9
    %v1446 = vpop.permute.xlu0 %1445
    %1447 = vrot.lane.b32.xlu0 %v476, 9
    %v1448 = vpop.permute.xlu0 %1447
    %1449 = vrot.lane.b32.xlu0 %v477, 9
    %v1450 = vpop.permute.xlu0 %1449
    %1451 = vrot.lane.b32.xlu0 %v478, 9
    %v1452 = vpop.permute.xlu0 %1451
    %1453 = vrot.lane.b32.xlu0 %v479, 9
    %v1454 = vpop.permute.xlu0 %1453
    %1455 = vrot.lane.b32.xlu0 %v480, 9
    %v1456 = vpop.permute.xlu0 %1455
    %1457 = vrot.lane.b32.xlu0 %v481, 9
    %v1458 = vpop.permute.xlu0 %1457
    %1459 = vrot.lane.b32.xlu0 %v482, 9
    %v1460 = vpop.permute.xlu0 %1459
    %1461 = vrot.lane.b32.xlu0 %v483, 9
    %v1462 = vpop.permute.xlu0 %1461
    %1463 = vrot.lane.b32.xlu0 %v484, 9
    %v1464 = vpop.permute.xlu0 %1463
    %1465 = vrot.lane.b32.xlu0 %v485, 9
    %v1466 = vpop.permute.xlu0 %1465
    %1467 = vrot.lane.b32.xlu0 %v486, 9
    %v1468 = vpop.permute.xlu0 %1467
    %1469 = vrot.lane.b32.xlu0 %v487, 9
    %v1470 = vpop.permute.xlu0 %1469
    %1471 = vrot.lane.b32.xlu0 %v488, 9
    %v1472 = vpop.permute.xlu0 %1471
    %1473 = vrot.lane.b32.xlu0 %v489, 9
    %v1474 = vpop.permute.xlu0 %1473
    %1475 = vrot.lane.b32.xlu0 %v490, 9
    %v1476 = vpop.permute.xlu0 %1475
    %1477 = vrot.lane.b32.xlu0 %v491, 9
    %v1478 = vpop.permute.xlu0 %1477
    %1479 = vrot.lane.b32.xlu0 %v492, 9
    %v1480 = vpop.permute.xlu0 %1479
    %1481 = vrot.lane.b32.xlu0 %v493, 9
    %v1482 = vpop.permute.xlu0 %1481
    %1483 = vrot.lane.b32.xlu0 %v494, 9
    %v1484 = vpop.permute.xlu0 %1483
    %1485 = vrot.lane.b32.xlu0 %v495, 9
    %v1486 = vpop.permute.xlu0 %1485
    %1487 = vrot.lane.b32.xlu0 %v496, 9
    %v1488 = vpop.permute.xlu0 %1487
    %1489 = vrot.lane.b32.xlu0 %v497, 9
    %v1490 = vpop.permute.xlu0 %1489
    %1491 = vrot.lane.b32.xlu0 %v498, 9
    %v1492 = vpop.permute.xlu0 %1491
    %1493 = vrot.lane.b32.xlu0 %v499, 9
    %v1494 = vpop.permute.xlu0 %1493
    %1495 = vrot.lane.b32.xlu0 %v500, 9
    %v1496 = vpop.permute.xlu0 %1495
    %1497 = vrot.lane.b32.xlu0 %v501, 9
    %v1498 = vpop.permute.xlu0 %1497
    %1499 = vrot.lane.b32.xlu0 %v502, 9
    %v1500 = vpop.permute.xlu0 %1499
    %1501 = vrot.lane.b32.xlu0 %v503, 9
    %v1502 = vpop.permute.xlu0 %1501
    %1503 = vrot.lane.b32.xlu0 %v504, 9
    %v1504 = vpop.permute.xlu0 %1503
    %1505 = vrot.lane.b32.xlu0 %v505, 9
    %v1506 = vpop.permute.xlu0 %1505
    %1507 = vrot.lane.b32.xlu0 %v506, 9
    %v1508 = vpop.permute.xlu0 %1507
    %1509 = vrot.lane.b32.xlu0 %v507, 9
    %v1510 = vpop.permute.xlu0 %1509
    %1511 = vrot.lane.b32.xlu0 %v508, 9
    %v1512 = vpop.permute.xlu0 %1511
    %1513 = vrot.lane.b32.xlu0 %v509, 9
    %v1514 = vpop.permute.xlu0 %1513
    %1515 = vrot.lane.b32.xlu0 %v510, 9
    %v1516 = vpop.permute.xlu0 %1515
    %1517 = vrot.lane.b32.xlu0 %v511, 9
    %v1518 = vpop.permute.xlu0 %1517
    %1519 = vrot.lane.b32.xlu0 %v512, 9
    %v1520 = vpop.permute.xlu0 %1519
    %1521 = vrot.lane.b32.xlu0 %v513, 9
    %v1522 = vpop.permute.xlu0 %1521
    %1523 = vrot.lane.b32.xlu0 %v514, 9
    %v1524 = vpop.permute.xlu0 %1523
    %1525 = vrot.lane.b32.xlu0 %v515, 9
    %v1526 = vpop.permute.xlu0 %1525
    %1527 = vrot.lane.b32.xlu0 %v516, 9
    %v1528 = vpop.permute.xlu0 %1527
    %1529 = vrot.lane.b32.xlu0 %v517, 9
    %v1530 = vpop.permute.xlu0 %1529
    %1531 = vrot.lane.b32.xlu0 %v518, 9
    %v1532 = vpop.permute.xlu0 %1531
    %1533 = vrot.lane.b32.xlu0 %v519, 9
    %v1534 = vpop.permute.xlu0 %1533
    %1535 = vrot.lane.b32.xlu0 %v520, 9
    %v1536 = vpop.permute.xlu0 %1535
    %1537 = vrot.lane.b32.xlu0 %v521, 9
    %v1538 = vpop.permute.xlu0 %1537
    %1539 = vrot.lane.b32.xlu0 %v522, 9
    %v1540 = vpop.permute.xlu0 %1539
    %1541 = vrot.lane.b32.xlu0 %v523, 9
    %v1542 = vpop.permute.xlu0 %1541
    %1543 = vrot.lane.b32.xlu0 %v524, 9
    %v1544 = vpop.permute.xlu0 %1543
    %1545 = vrot.lane.b32.xlu0 %v525, 9
    %v1546 = vpop.permute.xlu0 %1545
    %1547 = vrot.lane.b32.xlu0 %v526, 9
    %v1548 = vpop.permute.xlu0 %1547
    %1549 = vrot.lane.b32.xlu0 %v527, 9
    %v1550 = vpop.permute.xlu0 %1549
    %1551 = vrot.lane.b32.xlu0 %v528, 9
    %v1552 = vpop.permute.xlu0 %1551
    %1553 = vrot.lane.b32.xlu0 %v529, 9
    %v1554 = vpop.permute.xlu0 %1553
    %1683 = vrot.lane.b32.xlu0 %v530, 12
    %v1684 = vpop.permute.xlu0 %1683
    %1685 = vrot.lane.b32.xlu0 %v531, 12
    %v1686 = vpop.permute.xlu0 %1685
    %1687 = vrot.lane.b32.xlu0 %v532, 12
    %v1688 = vpop.permute.xlu0 %1687
    %1689 = vrot.lane.b32.xlu0 %v533, 12
    %v1690 = vpop.permute.xlu0 %1689
    %1691 = vrot.lane.b32.xlu0 %v534, 12
    %v1692 = vpop.permute.xlu0 %1691
    %1693 = vrot.lane.b32.xlu0 %v535, 12
    %v1694 = vpop.permute.xlu0 %1693
    %1695 = vrot.lane.b32.xlu0 %v536, 12
    %v1696 = vpop.permute.xlu0 %1695
    %1697 = vrot.lane.b32.xlu0 %v537, 12
    %v1698 = vpop.permute.xlu0 %1697
    %1699 = vrot.lane.b32.xlu0 %v538, 12
    %v1700 = vpop.permute.xlu0 %1699
    %1701 = vrot.lane.b32.xlu0 %v539, 12
    %v1702 = vpop.permute.xlu0 %1701
    %1703 = vrot.lane.b32.xlu0 %v540, 12
    %v1704 = vpop.permute.xlu0 %1703
    %1705 = vrot.lane.b32.xlu0 %v541, 12
    %v1706 = vpop.permute.xlu0 %1705
    %1707 = vrot.lane.b32.xlu0 %v542, 12
    %v1708 = vpop.permute.xlu0 %1707
    %1709 = vrot.lane.b32.xlu0 %v543, 12
    %v1710 = vpop.permute.xlu0 %1709
    %1711 = vrot.lane.b32.xlu0 %v544, 12
    %v1712 = vpop.permute.xlu0 %1711
    %1713 = vrot.lane.b32.xlu0 %v545, 12
    %v1714 = vpop.permute.xlu0 %1713
    %1715 = vrot.lane.b32.xlu0 %v546, 12
    %v1716 = vpop.permute.xlu0 %1715
    %1717 = vrot.lane.b32.xlu0 %v547, 12
    %v1718 = vpop.permute.xlu0 %1717
    %1719 = vrot.lane.b32.xlu0 %v548, 12
    %v1720 = vpop.permute.xlu0 %1719
    %1721 = vrot.lane.b32.xlu0 %v549, 12
    %v1722 = vpop.permute.xlu0 %1721
    %1723 = vrot.lane.b32.xlu0 %v550, 12
    %v1724 = vpop.permute.xlu0 %1723
    %1725 = vrot.lane.b32.xlu0 %v551, 12
    %v1726 = vpop.permute.xlu0 %1725
    %1727 = vrot.lane.b32.xlu0 %v552, 12
    %v1728 = vpop.permute.xlu0 %1727
    %1729 = vrot.lane.b32.xlu0 %v553, 12
    %v1730 = vpop.permute.xlu0 %1729
    %1731 = vrot.lane.b32.xlu0 %v554, 12
    %v1732 = vpop.permute.xlu0 %1731
    %1733 = vrot.lane.b32.xlu0 %v555, 12
    %v1734 = vpop.permute.xlu0 %1733
    %1735 = vrot.lane.b32.xlu0 %v556, 12
    %v1736 = vpop.permute.xlu0 %1735
    %1737 = vrot.lane.b32.xlu0 %v557, 12
    %v1738 = vpop.permute.xlu0 %1737
    %1739 = vrot.lane.b32.xlu0 %v558, 12
    %v1740 = vpop.permute.xlu0 %1739
    %1741 = vrot.lane.b32.xlu0 %v559, 12
    %v1742 = vpop.permute.xlu0 %1741
    %1743 = vrot.lane.b32.xlu0 %v560, 12
    %v1744 = vpop.permute.xlu0 %1743
    %1745 = vrot.lane.b32.xlu0 %v561, 12
    %v1746 = vpop.permute.xlu0 %1745
    %1747 = vrot.lane.b32.xlu0 %v562, 12
    %v1748 = vpop.permute.xlu0 %1747
    %1749 = vrot.lane.b32.xlu0 %v563, 12
    %v1750 = vpop.permute.xlu0 %1749
    %1751 = vrot.lane.b32.xlu0 %v564, 12
    %v1752 = vpop.permute.xlu0 %1751
    %1753 = vrot.lane.b32.xlu0 %v565, 12
    %v1754 = vpop.permute.xlu0 %1753
    %1755 = vrot.lane.b32.xlu0 %v566, 12
    %v1756 = vpop.permute.xlu0 %1755
    %1757 = vrot.lane.b32.xlu0 %v567, 12
    %v1758 = vpop.permute.xlu0 %1757
    %1759 = vrot.lane.b32.xlu0 %v568, 12
    %v1760 = vpop.permute.xlu0 %1759
    %1761 = vrot.lane.b32.xlu0 %v569, 12
    %v1762 = vpop.permute.xlu0 %1761
    %1763 = vrot.lane.b32.xlu0 %v570, 12
    %v1764 = vpop.permute.xlu0 %1763
    %1765 = vrot.lane.b32.xlu0 %v571, 12
    %v1766 = vpop.permute.xlu0 %1765
    %1767 = vrot.lane.b32.xlu0 %v572, 12
    %v1768 = vpop.permute.xlu0 %1767
    %1769 = vrot.lane.b32.xlu0 %v573, 12
    %v1770 = vpop.permute.xlu0 %1769
    %1771 = vrot.lane.b32.xlu0 %v574, 12
    %v1772 = vpop.permute.xlu0 %1771
    %1773 = vrot.lane.b32.xlu0 %v575, 12
    %v1774 = vpop.permute.xlu0 %1773
    %1775 = vrot.lane.b32.xlu0 %v576, 12
    %v1776 = vpop.permute.xlu0 %1775
    %1777 = vrot.lane.b32.xlu0 %v577, 12
    %v1778 = vpop.permute.xlu0 %1777
    %1779 = vrot.lane.b32.xlu0 %v578, 12
    %v1780 = vpop.permute.xlu0 %1779
    %1781 = vrot.lane.b32.xlu0 %v579, 12
    %v1782 = vpop.permute.xlu0 %1781
    %1783 = vrot.lane.b32.xlu0 %v580, 12
    %v1784 = vpop.permute.xlu0 %1783
    %1785 = vrot.lane.b32.xlu0 %v581, 12
    %v1786 = vpop.permute.xlu0 %1785
    %1787 = vrot.lane.b32.xlu0 %v582, 12
    %v1788 = vpop.permute.xlu0 %1787
    %1789 = vrot.lane.b32.xlu0 %v583, 12
    %v1790 = vpop.permute.xlu0 %1789
    %1791 = vrot.lane.b32.xlu0 %v584, 12
    %v1792 = vpop.permute.xlu0 %1791
    %1793 = vrot.lane.b32.xlu0 %v585, 12
    %v1794 = vpop.permute.xlu0 %1793
    %1795 = vrot.lane.b32.xlu0 %v586, 12
    %v1796 = vpop.permute.xlu0 %1795
    %1797 = vrot.lane.b32.xlu0 %v587, 12
    %v1798 = vpop.permute.xlu0 %1797
    %1799 = vrot.lane.b32.xlu0 %v588, 12
    %v1800 = vpop.permute.xlu0 %1799
    %1801 = vrot.lane.b32.xlu0 %v589, 12
    %v1802 = vpop.permute.xlu0 %1801
    %1803 = vrot.lane.b32.xlu0 %v590, 12
    %v1804 = vpop.permute.xlu0 %1803
    %1805 = vrot.lane.b32.xlu0 %v591, 12
    %v1806 = vpop.permute.xlu0 %1805
    %1807 = vrot.lane.b32.xlu0 %v592, 12
    %v1808 = vpop.permute.xlu0 %1807
    %1809 = vrot.lane.b32.xlu0 %v593, 12
    %v1810 = vpop.permute.xlu0 %1809
    %1939 = vrot.lane.b32.xlu0 %v594, 15
    %v1940 = vpop.permute.xlu0 %1939
    %1941 = vrot.lane.b32.xlu0 %v595, 15
    %v1942 = vpop.permute.xlu0 %1941
    %1943 = vrot.lane.b32.xlu0 %v596, 15
    %v1944 = vpop.permute.xlu0 %1943
    %1945 = vrot.lane.b32.xlu0 %v597, 15
    %v1946 = vpop.permute.xlu0 %1945
    %1947 = vrot.lane.b32.xlu0 %v598, 15
    %v1948 = vpop.permute.xlu0 %1947
    %1949 = vrot.lane.b32.xlu0 %v599, 15
    %v1950 = vpop.permute.xlu0 %1949
    %1951 = vrot.lane.b32.xlu0 %v600, 15
    %v1952 = vpop.permute.xlu0 %1951
    %1953 = vrot.lane.b32.xlu0 %v601, 15
    %v1954 = vpop.permute.xlu0 %1953
    %1955 = vrot.lane.b32.xlu0 %v602, 15
    %v1956 = vpop.permute.xlu0 %1955
    %1957 = vrot.lane.b32.xlu0 %v603, 15
    %v1958 = vpop.permute.xlu0 %1957
    %1959 = vrot.lane.b32.xlu0 %v604, 15
    %v1960 = vpop.permute.xlu0 %1959
    %1961 = vrot.lane.b32.xlu0 %v605, 15
    %v1962 = vpop.permute.xlu0 %1961
    %1963 = vrot.lane.b32.xlu0 %v606, 15
    %v1964 = vpop.permute.xlu0 %1963
    %1965 = vrot.lane.b32.xlu0 %v607, 15
    %v1966 = vpop.permute.xlu0 %1965
    %1967 = vrot.lane.b32.xlu0 %v608, 15
    %v1968 = vpop.permute.xlu0 %1967
    %1969 = vrot.lane.b32.xlu0 %v609, 15
    %v1970 = vpop.permute.xlu0 %1969
    %1971 = vrot.lane.b32.xlu0 %v610, 15
    %v1972 = vpop.permute.xlu0 %1971
    %1973 = vrot.lane.b32.xlu0 %v611, 15
    %v1974 = vpop.permute.xlu0 %1973
    %1975 = vrot.lane.b32.xlu0 %v612, 15
    %v1976 = vpop.permute.xlu0 %1975
    %1977 = vrot.lane.b32.xlu0 %v613, 15
    %v1978 = vpop.permute.xlu0 %1977
    %1979 = vrot.lane.b32.xlu0 %v614, 15
    %v1980 = vpop.permute.xlu0 %1979
    %1981 = vrot.lane.b32.xlu0 %v615, 15
    %v1982 = vpop.permute.xlu0 %1981
    %1983 = vrot.lane.b32.xlu0 %v616, 15
    %v1984 = vpop.permute.xlu0 %1983
    %1985 = vrot.lane.b32.xlu0 %v617, 15
    %v1986 = vpop.permute.xlu0 %1985
    %1987 = vrot.lane.b32.xlu0 %v618, 15
    %v1988 = vpop.permute.xlu0 %1987
    %1989 = vrot.lane.b32.xlu0 %v619, 15
    %v1990 = vpop.permute.xlu0 %1989
    %1991 = vrot.lane.b32.xlu0 %v620, 15
    %v1992 = vpop.permute.xlu0 %1991
    %1993 = vrot.lane.b32.xlu0 %v621, 15
    %v1994 = vpop.permute.xlu0 %1993
    %1995 = vrot.lane.b32.xlu0 %v622, 15
    %v1996 = vpop.permute.xlu0 %1995
    %1997 = vrot.lane.b32.xlu0 %v623, 15
    %v1998 = vpop.permute.xlu0 %1997
    %1999 = vrot.lane.b32.xlu0 %v624, 15
    %v2000 = vpop.permute.xlu0 %1999
    %2001 = vrot.lane.b32.xlu0 %v625, 15
    %v2002 = vpop.permute.xlu0 %2001
    %2003 = vrot.lane.b32.xlu0 %v626, 15
    %v2004 = vpop.permute.xlu0 %2003
    %2005 = vrot.lane.b32.xlu0 %v627, 15
    %v2006 = vpop.permute.xlu0 %2005
    %2007 = vrot.lane.b32.xlu0 %v628, 15
    %v2008 = vpop.permute.xlu0 %2007
    %2009 = vrot.lane.b32.xlu0 %v629, 15
    %v2010 = vpop.permute.xlu0 %2009
    %2011 = vrot.lane.b32.xlu0 %v630, 15
    %v2012 = vpop.permute.xlu0 %2011
    %2013 = vrot.lane.b32.xlu0 %v631, 15
    %v2014 = vpop.permute.xlu0 %2013
    %2015 = vrot.lane.b32.xlu0 %v632, 15
    %v2016 = vpop.permute.xlu0 %2015
    %2017 = vrot.lane.b32.xlu0 %v633, 15
    %v2018 = vpop.permute.xlu0 %2017
    %2019 = vrot.lane.b32.xlu0 %v634, 15
    %v2020 = vpop.permute.xlu0 %2019
    %2021 = vrot.lane.b32.xlu0 %v635, 15
    %v2022 = vpop.permute.xlu0 %2021
    %2023 = vrot.lane.b32.xlu0 %v636, 15
    %v2024 = vpop.permute.xlu0 %2023
    %2025 = vrot.lane.b32.xlu0 %v637, 15
    %v2026 = vpop.permute.xlu0 %2025
    %2027 = vrot.lane.b32.xlu0 %v638, 15
    %v2028 = vpop.permute.xlu0 %2027
    %2029 = vrot.lane.b32.xlu0 %v639, 15
    %v2030 = vpop.permute.xlu0 %2029
    %2031 = vrot.lane.b32.xlu0 %v640, 15
    %v2032 = vpop.permute.xlu0 %2031
    %2033 = vrot.lane.b32.xlu0 %v641, 15
    %v2034 = vpop.permute.xlu0 %2033
    %2035 = vrot.lane.b32.xlu0 %v642, 15
    %v2036 = vpop.permute.xlu0 %2035
    %2037 = vrot.lane.b32.xlu0 %v643, 15
    %v2038 = vpop.permute.xlu0 %2037
    %2039 = vrot.lane.b32.xlu0 %v644, 15
    %v2040 = vpop.permute.xlu0 %2039
    %2041 = vrot.lane.b32.xlu0 %v645, 15
    %v2042 = vpop.permute.xlu0 %2041
    %2043 = vrot.lane.b32.xlu0 %v646, 15
    %v2044 = vpop.permute.xlu0 %2043
    %2045 = vrot.lane.b32.xlu0 %v647, 15
    %v2046 = vpop.permute.xlu0 %2045
    %2047 = vrot.lane.b32.xlu0 %v648, 15
    %v2048 = vpop.permute.xlu0 %2047
    %2049 = vrot.lane.b32.xlu0 %v649, 15
    %v2050 = vpop.permute.xlu0 %2049
    %2051 = vrot.lane.b32.xlu0 %v650, 15
    %v2052 = vpop.permute.xlu0 %2051
    %2053 = vrot.lane.b32.xlu0 %v651, 15
    %v2054 = vpop.permute.xlu0 %2053
    %2055 = vrot.lane.b32.xlu0 %v652, 15
    %v2056 = vpop.permute.xlu0 %2055
    %2057 = vrot.lane.b32.xlu0 %v653, 15
    %v2058 = vpop.permute.xlu0 %2057
    %2059 = vrot.lane.b32.xlu0 %v654, 15
    %v2060 = vpop.permute.xlu0 %2059
    %2061 = vrot.lane.b32.xlu0 %v655, 15
    %v2062 = vpop.permute.xlu0 %2061
    %2063 = vrot.lane.b32.xlu0 %v656, 15
    %v2064 = vpop.permute.xlu0 %2063
    %2065 = vrot.lane.b32.xlu0 %v657, 15
    %v2066 = vpop.permute.xlu0 %2065
    %2195 = vrot.lane.b32.xlu0 %v659, 18
    %v2196 = vpop.permute.xlu0 %2195
    %2197 = vrot.lane.b32.xlu0 %v660, 18
    %v2198 = vpop.permute.xlu0 %2197
    %2199 = vrot.lane.b32.xlu0 %v661, 18
    %v2200 = vpop.permute.xlu0 %2199
    %2201 = vrot.lane.b32.xlu0 %v662, 18
    %v2202 = vpop.permute.xlu0 %2201
    %2203 = vrot.lane.b32.xlu0 %v663, 18
    %v2204 = vpop.permute.xlu0 %2203
    %2205 = vrot.lane.b32.xlu0 %v664, 18
    %v2206 = vpop.permute.xlu0 %2205
    %2207 = vrot.lane.b32.xlu0 %v665, 18
    %v2208 = vpop.permute.xlu0 %2207
    %2209 = vrot.lane.b32.xlu0 %v666, 18
    %v2210 = vpop.permute.xlu0 %2209
    %2211 = vrot.lane.b32.xlu0 %v667, 18
    %v2212 = vpop.permute.xlu0 %2211
    %2213 = vrot.lane.b32.xlu0 %v668, 18
    %v2214 = vpop.permute.xlu0 %2213
    %2215 = vrot.lane.b32.xlu0 %v669, 18
    %v2216 = vpop.permute.xlu0 %2215
    %2217 = vrot.lane.b32.xlu0 %v670, 18
    %v2218 = vpop.permute.xlu0 %2217
    %2219 = vrot.lane.b32.xlu0 %v671, 18
    %v2220 = vpop.permute.xlu0 %2219
    %2221 = vrot.lane.b32.xlu0 %v672, 18
    %v2222 = vpop.permute.xlu0 %2221
    %2223 = vrot.lane.b32.xlu0 %v673, 18
    %v2224 = vpop.permute.xlu0 %2223
    %2225 = vrot.lane.b32.xlu0 %v674, 18
    %v2226 = vpop.permute.xlu0 %2225
    %2227 = vrot.lane.b32.xlu0 %v675, 18
    %v2228 = vpop.permute.xlu0 %2227
    %2229 = vrot.lane.b32.xlu0 %v676, 18
    %v2230 = vpop.permute.xlu0 %2229
    %2231 = vrot.lane.b32.xlu0 %v677, 18
    %v2232 = vpop.permute.xlu0 %2231
    %2233 = vrot.lane.b32.xlu0 %v678, 18
    %v2234 = vpop.permute.xlu0 %2233
    %2235 = vrot.lane.b32.xlu0 %v679, 18
    %v2236 = vpop.permute.xlu0 %2235
    %2237 = vrot.lane.b32.xlu0 %v680, 18
    %v2238 = vpop.permute.xlu0 %2237
    %2239 = vrot.lane.b32.xlu0 %v681, 18
    %v2240 = vpop.permute.xlu0 %2239
    %2241 = vrot.lane.b32.xlu0 %v682, 18
    %v2242 = vpop.permute.xlu0 %2241
    %2243 = vrot.lane.b32.xlu0 %v683, 18
    %v2244 = vpop.permute.xlu0 %2243
    %2245 = vrot.lane.b32.xlu0 %v684, 18
    %v2246 = vpop.permute.xlu0 %2245
    %2247 = vrot.lane.b32.xlu0 %v685, 18
    %v2248 = vpop.permute.xlu0 %2247
    %2249 = vrot.lane.b32.xlu0 %v686, 18
    %v2250 = vpop.permute.xlu0 %2249
    %2251 = vrot.lane.b32.xlu0 %v687, 18
    %v2252 = vpop.permute.xlu0 %2251
    %2253 = vrot.lane.b32.xlu0 %v688, 18
    %v2254 = vpop.permute.xlu0 %2253
    %2255 = vrot.lane.b32.xlu0 %v689, 18
    %v2256 = vpop.permute.xlu0 %2255
    %2257 = vrot.lane.b32.xlu0 %v690, 18
    %v2258 = vpop.permute.xlu0 %2257
    %2259 = vrot.lane.b32.xlu0 %v691, 18
    %v2260 = vpop.permute.xlu0 %2259
    %2261 = vrot.lane.b32.xlu0 %v692, 18
    %v2262 = vpop.permute.xlu0 %2261
    %2263 = vrot.lane.b32.xlu0 %v693, 18
    %v2264 = vpop.permute.xlu0 %2263
    %2265 = vrot.lane.b32.xlu0 %v694, 18
    %v2266 = vpop.permute.xlu0 %2265
    %2267 = vrot.lane.b32.xlu0 %v695, 18
    %v2268 = vpop.permute.xlu0 %2267
    %2269 = vrot.lane.b32.xlu0 %v696, 18
    %v2270 = vpop.permute.xlu0 %2269
    %2271 = vrot.lane.b32.xlu0 %v697, 18
    %v2272 = vpop.permute.xlu0 %2271
    %2273 = vrot.lane.b32.xlu0 %v698, 18
    %v2274 = vpop.permute.xlu0 %2273
    %2275 = vrot.lane.b32.xlu0 %v699, 18
    %v2276 = vpop.permute.xlu0 %2275
    %2277 = vrot.lane.b32.xlu0 %v700, 18
    %v2278 = vpop.permute.xlu0 %2277
    %2279 = vrot.lane.b32.xlu0 %v701, 18
    %v2280 = vpop.permute.xlu0 %2279
    %2281 = vrot.lane.b32.xlu0 %v702, 18
    %v2282 = vpop.permute.xlu0 %2281
    %2283 = vrot.lane.b32.xlu0 %v703, 18
    %v2284 = vpop.permute.xlu0 %2283
    %2285 = vrot.lane.b32.xlu0 %v704, 18
    %v2286 = vpop.permute.xlu0 %2285
    %2287 = vrot.lane.b32.xlu0 %v705, 18
    %v2288 = vpop.permute.xlu0 %2287
    %2289 = vrot.lane.b32.xlu0 %v706, 18
    %v2290 = vpop.permute.xlu0 %2289
    %2291 = vrot.lane.b32.xlu0 %v707, 18
    %v2292 = vpop.permute.xlu0 %2291
    %2293 = vrot.lane.b32.xlu0 %v708, 18
    %v2294 = vpop.permute.xlu0 %2293
    %2295 = vrot.lane.b32.xlu0 %v709, 18
    %v2296 = vpop.permute.xlu0 %2295
    %2297 = vrot.lane.b32.xlu0 %v710, 18
    %v2298 = vpop.permute.xlu0 %2297
    %2299 = vrot.lane.b32.xlu0 %v711, 18
    %v2300 = vpop.permute.xlu0 %2299
    %2301 = vrot.lane.b32.xlu0 %v712, 18
    %v2302 = vpop.permute.xlu0 %2301
    %2303 = vrot.lane.b32.xlu0 %v713, 18
    %v2304 = vpop.permute.xlu0 %2303
    %2305 = vrot.lane.b32.xlu0 %v714, 18
    %v2306 = vpop.permute.xlu0 %2305
    %2307 = vrot.lane.b32.xlu0 %v715, 18
    %v2308 = vpop.permute.xlu0 %2307
    %2309 = vrot.lane.b32.xlu0 %v716, 18
    %v2310 = vpop.permute.xlu0 %2309
    %2311 = vrot.lane.b32.xlu0 %v717, 18
    %v2312 = vpop.permute.xlu0 %2311
    %2313 = vrot.lane.b32.xlu0 %v718, 18
    %v2314 = vpop.permute.xlu0 %2313
    %2315 = vrot.lane.b32.xlu0 %v719, 18
    %v2316 = vpop.permute.xlu0 %2315
    %2317 = vrot.lane.b32.xlu0 %v720, 18
    %v2318 = vpop.permute.xlu0 %2317
    %2319 = vrot.lane.b32.xlu0 %v721, 18
    %v2320 = vpop.permute.xlu0 %2319
    %2321 = vrot.lane.b32.xlu0 %v722, 18
    %v2322 = vpop.permute.xlu0 %2321
    %2451 = vrot.lane.b32.xlu0 %v723, 21
    %v2452 = vpop.permute.xlu0 %2451
    %2453 = vrot.lane.b32.xlu0 %v724, 21
    %v2454 = vpop.permute.xlu0 %2453
    %2455 = vrot.lane.b32.xlu0 %v725, 21
    %v2456 = vpop.permute.xlu0 %2455
    %2457 = vrot.lane.b32.xlu0 %v726, 21
    %v2458 = vpop.permute.xlu0 %2457
    %2459 = vrot.lane.b32.xlu0 %v727, 21
    %v2460 = vpop.permute.xlu0 %2459
    %2461 = vrot.lane.b32.xlu0 %v728, 21
    %v2462 = vpop.permute.xlu0 %2461
    %2463 = vrot.lane.b32.xlu0 %v729, 21
    %v2464 = vpop.permute.xlu0 %2463
    %2465 = vrot.lane.b32.xlu0 %v730, 21
    %v2466 = vpop.permute.xlu0 %2465
    %2467 = vrot.lane.b32.xlu0 %v731, 21
    %v2468 = vpop.permute.xlu0 %2467
    %2469 = vrot.lane.b32.xlu0 %v732, 21
    %v2470 = vpop.permute.xlu0 %2469
    %2471 = vrot.lane.b32.xlu0 %v733, 21
    %v2472 = vpop.permute.xlu0 %2471
    %2473 = vrot.lane.b32.xlu0 %v734, 21
    %v2474 = vpop.permute.xlu0 %2473
    %2475 = vrot.lane.b32.xlu0 %v735, 21
    %v2476 = vpop.permute.xlu0 %2475
    %2477 = vrot.lane.b32.xlu0 %v736, 21
    %v2478 = vpop.permute.xlu0 %2477
    %2479 = vrot.lane.b32.xlu0 %v737, 21
    %v2480 = vpop.permute.xlu0 %2479
    %2481 = vrot.lane.b32.xlu0 %v738, 21
    %v2482 = vpop.permute.xlu0 %2481
    %2483 = vrot.lane.b32.xlu0 %v739, 21
    %v2484 = vpop.permute.xlu0 %2483
    %2485 = vrot.lane.b32.xlu0 %v740, 21
    %v2486 = vpop.permute.xlu0 %2485
    %2487 = vrot.lane.b32.xlu0 %v741, 21
    %v2488 = vpop.permute.xlu0 %2487
    %2489 = vrot.lane.b32.xlu0 %v742, 21
    %v2490 = vpop.permute.xlu0 %2489
    %2491 = vrot.lane.b32.xlu0 %v743, 21
    %v2492 = vpop.permute.xlu0 %2491
    %2493 = vrot.lane.b32.xlu0 %v744, 21
    %v2494 = vpop.permute.xlu0 %2493
    %2495 = vrot.lane.b32.xlu0 %v745, 21
    %v2496 = vpop.permute.xlu0 %2495
    %2497 = vrot.lane.b32.xlu0 %v746, 21
    %v2498 = vpop.permute.xlu0 %2497
    %2499 = vrot.lane.b32.xlu0 %v747, 21
    %v2500 = vpop.permute.xlu0 %2499
    %2501 = vrot.lane.b32.xlu0 %v748, 21
    %v2502 = vpop.permute.xlu0 %2501
    %2503 = vrot.lane.b32.xlu0 %v749, 21
    %v2504 = vpop.permute.xlu0 %2503
    %2505 = vrot.lane.b32.xlu0 %v750, 21
    %v2506 = vpop.permute.xlu0 %2505
    %2507 = vrot.lane.b32.xlu0 %v751, 21
    %v2508 = vpop.permute.xlu0 %2507
    %2509 = vrot.lane.b32.xlu0 %v752, 21
    %v2510 = vpop.permute.xlu0 %2509
    %2511 = vrot.lane.b32.xlu0 %v753, 21
    %v2512 = vpop.permute.xlu0 %2511
    %2513 = vrot.lane.b32.xlu0 %v754, 21
    %v2514 = vpop.permute.xlu0 %2513
    %2515 = vrot.lane.b32.xlu0 %v755, 21
    %v2516 = vpop.permute.xlu0 %2515
    %2517 = vrot.lane.b32.xlu0 %v756, 21
    %v2518 = vpop.permute.xlu0 %2517
    %2519 = vrot.lane.b32.xlu0 %v757, 21
    %v2520 = vpop.permute.xlu0 %2519
    %2521 = vrot.lane.b32.xlu0 %v758, 21
    %v2522 = vpop.permute.xlu0 %2521
    %2523 = vrot.lane.b32.xlu0 %v759, 21
    %v2524 = vpop.permute.xlu0 %2523
    %2525 = vrot.lane.b32.xlu0 %v760, 21
    %v2526 = vpop.permute.xlu0 %2525
    %2527 = vrot.lane.b32.xlu0 %v761, 21
    %v2528 = vpop.permute.xlu0 %2527
    %2529 = vrot.lane.b32.xlu0 %v762, 21
    %v2530 = vpop.permute.xlu0 %2529
    %2531 = vrot.lane.b32.xlu0 %v763, 21
    %v2532 = vpop.permute.xlu0 %2531
    %2533 = vrot.lane.b32.xlu0 %v764, 21
    %v2534 = vpop.permute.xlu0 %2533
    %2535 = vrot.lane.b32.xlu0 %v765, 21
    %v2536 = vpop.permute.xlu0 %2535
    %2537 = vrot.lane.b32.xlu0 %v766, 21
    %v2538 = vpop.permute.xlu0 %2537
    %2539 = vrot.lane.b32.xlu0 %v767, 21
    %v2540 = vpop.permute.xlu0 %2539
    %2541 = vrot.lane.b32.xlu0 %v768, 21
    %v2542 = vpop.permute.xlu0 %2541
    %2543 = vrot.lane.b32.xlu0 %v769, 21
    %v2544 = vpop.permute.xlu0 %2543
    %2545 = vrot.lane.b32.xlu0 %v770, 21
    %v2546 = vpop.permute.xlu0 %2545
    %2547 = vrot.lane.b32.xlu0 %v771, 21
    %v2548 = vpop.permute.xlu0 %2547
    %2549 = vrot.lane.b32.xlu0 %v772, 21
    %v2550 = vpop.permute.xlu0 %2549
    %2551 = vrot.lane.b32.xlu0 %v773, 21
    %v2552 = vpop.permute.xlu0 %2551
    %2553 = vrot.lane.b32.xlu0 %v774, 21
    %v2554 = vpop.permute.xlu0 %2553
    %2555 = vrot.lane.b32.xlu0 %v775, 21
    %v2556 = vpop.permute.xlu0 %2555
    %2557 = vrot.lane.b32.xlu0 %v776, 21
    %v2558 = vpop.permute.xlu0 %2557
    %2559 = vrot.lane.b32.xlu0 %v777, 21
    %v2560 = vpop.permute.xlu0 %2559
    %2561 = vrot.lane.b32.xlu0 %v778, 21
    %v2562 = vpop.permute.xlu0 %2561
    %2563 = vrot.lane.b32.xlu0 %v779, 21
    %v2564 = vpop.permute.xlu0 %2563
    %2565 = vrot.lane.b32.xlu0 %v780, 21
    %v2566 = vpop.permute.xlu0 %2565
    %2567 = vrot.lane.b32.xlu0 %v781, 21
    %v2568 = vpop.permute.xlu0 %2567
    %2569 = vrot.lane.b32.xlu0 %v782, 21
    %v2570 = vpop.permute.xlu0 %2569
    %2571 = vrot.lane.b32.xlu0 %v783, 21
    %v2572 = vpop.permute.xlu0 %2571
    %2573 = vrot.lane.b32.xlu0 %v784, 21
    %v2574 = vpop.permute.xlu0 %2573
    %2575 = vrot.lane.b32.xlu0 %v785, 21
    %v2576 = vpop.permute.xlu0 %2575
    %2577 = vrot.lane.b32.xlu0 %v786, 21
    %v2578 = vpop.permute.xlu0 %2577
    %2707 = vrot.lane.b32.xlu0 %v787, 24
    %v2708 = vpop.permute.xlu0 %2707
    %2709 = vrot.lane.b32.xlu0 %v788, 24
    %v2710 = vpop.permute.xlu0 %2709
    %2711 = vrot.lane.b32.xlu0 %v789, 24
    %v2712 = vpop.permute.xlu0 %2711
    %2713 = vrot.lane.b32.xlu0 %v790, 24
    %v2714 = vpop.permute.xlu0 %2713
    %2715 = vrot.lane.b32.xlu0 %v791, 24
    %v2716 = vpop.permute.xlu0 %2715
    %2717 = vrot.lane.b32.xlu0 %v792, 24
    %v2718 = vpop.permute.xlu0 %2717
    %2719 = vrot.lane.b32.xlu0 %v793, 24
    %v2720 = vpop.permute.xlu0 %2719
    %2721 = vrot.lane.b32.xlu0 %v794, 24
    %v2722 = vpop.permute.xlu0 %2721
    %2723 = vrot.lane.b32.xlu0 %v795, 24
    %v2724 = vpop.permute.xlu0 %2723
    %2725 = vrot.lane.b32.xlu0 %v796, 24
    %v2726 = vpop.permute.xlu0 %2725
    %2727 = vrot.lane.b32.xlu0 %v797, 24
    %v2728 = vpop.permute.xlu0 %2727
    %2729 = vrot.lane.b32.xlu0 %v798, 24
    %v2730 = vpop.permute.xlu0 %2729
    %2731 = vrot.lane.b32.xlu0 %v799, 24
    %v2732 = vpop.permute.xlu0 %2731
    %2733 = vrot.lane.b32.xlu0 %v800, 24
    %v2734 = vpop.permute.xlu0 %2733
    %2735 = vrot.lane.b32.xlu0 %v801, 24
    %v2736 = vpop.permute.xlu0 %2735
    %2737 = vrot.lane.b32.xlu0 %v802, 24
    %v2738 = vpop.permute.xlu0 %2737
    %2739 = vrot.lane.b32.xlu0 %v803, 24
    %v2740 = vpop.permute.xlu0 %2739
    %2741 = vrot.lane.b32.xlu0 %v804, 24
    %v2742 = vpop.permute.xlu0 %2741
    %2743 = vrot.lane.b32.xlu0 %v805, 24
    %v2744 = vpop.permute.xlu0 %2743
    %2745 = vrot.lane.b32.xlu0 %v806, 24
    %v2746 = vpop.permute.xlu0 %2745
    %2747 = vrot.lane.b32.xlu0 %v807, 24
    %v2748 = vpop.permute.xlu0 %2747
    %2749 = vrot.lane.b32.xlu0 %v808, 24
    %v2750 = vpop.permute.xlu0 %2749
    %2751 = vrot.lane.b32.xlu0 %v809, 24
    %v2752 = vpop.permute.xlu0 %2751
    %2753 = vrot.lane.b32.xlu0 %v810, 24
    %v2754 = vpop.permute.xlu0 %2753
    %2755 = vrot.lane.b32.xlu0 %v811, 24
    %v2756 = vpop.permute.xlu0 %2755
    %2757 = vrot.lane.b32.xlu0 %v812, 24
    %v2758 = vpop.permute.xlu0 %2757
    %2759 = vrot.lane.b32.xlu0 %v813, 24
    %v2760 = vpop.permute.xlu0 %2759
    %2761 = vrot.lane.b32.xlu0 %v814, 24
    %v2762 = vpop.permute.xlu0 %2761
    %2763 = vrot.lane.b32.xlu0 %v815, 24
    %v2764 = vpop.permute.xlu0 %2763
    %2765 = vrot.lane.b32.xlu0 %v816, 24
    %v2766 = vpop.permute.xlu0 %2765
    %2767 = vrot.lane.b32.xlu0 %v817, 24
    %v2768 = vpop.permute.xlu0 %2767
    %2769 = vrot.lane.b32.xlu0 %v818, 24
    %v2770 = vpop.permute.xlu0 %2769
    %2771 = vrot.lane.b32.xlu0 %v819, 24
    %v2772 = vpop.permute.xlu0 %2771
    %2773 = vrot.lane.b32.xlu0 %v820, 24
    %v2774 = vpop.permute.xlu0 %2773
    %2775 = vrot.lane.b32.xlu0 %v821, 24
    %v2776 = vpop.permute.xlu0 %2775
    %2777 = vrot.lane.b32.xlu0 %v822, 24
    %v2778 = vpop.permute.xlu0 %2777
    %2779 = vrot.lane.b32.xlu0 %v823, 24
    %v2780 = vpop.permute.xlu0 %2779
    %2781 = vrot.lane.b32.xlu0 %v824, 24
    %v2782 = vpop.permute.xlu0 %2781
    %2783 = vrot.lane.b32.xlu0 %v825, 24
    %v2784 = vpop.permute.xlu0 %2783
    %2785 = vrot.lane.b32.xlu0 %v826, 24
    %v2786 = vpop.permute.xlu0 %2785
    %2787 = vrot.lane.b32.xlu0 %v827, 24
    %v2788 = vpop.permute.xlu0 %2787
    %2789 = vrot.lane.b32.xlu0 %v828, 24
    %v2790 = vpop.permute.xlu0 %2789
    %2791 = vrot.lane.b32.xlu0 %v829, 24
    %v2792 = vpop.permute.xlu0 %2791
    %2793 = vrot.lane.b32.xlu0 %v830, 24
    %v2794 = vpop.permute.xlu0 %2793
    %2795 = vrot.lane.b32.xlu0 %v831, 24
    %v2796 = vpop.permute.xlu0 %2795
    %2797 = vrot.lane.b32.xlu0 %v832, 24
    %v2798 = vpop.permute.xlu0 %2797
    %2799 = vrot.lane.b32.xlu0 %v833, 24
    %v2800 = vpop.permute.xlu0 %2799
    %2801 = vrot.lane.b32.xlu0 %v834, 24
    %v2802 = vpop.permute.xlu0 %2801
    %2803 = vrot.lane.b32.xlu0 %v835, 24
    %v2804 = vpop.permute.xlu0 %2803
    %2805 = vrot.lane.b32.xlu0 %v836, 24
    %v2806 = vpop.permute.xlu0 %2805
    %2807 = vrot.lane.b32.xlu0 %v837, 24
    %v2808 = vpop.permute.xlu0 %2807
    %2809 = vrot.lane.b32.xlu0 %v838, 24
    %v2810 = vpop.permute.xlu0 %2809
    %2811 = vrot.lane.b32.xlu0 %v839, 24
    %v2812 = vpop.permute.xlu0 %2811
    %2813 = vrot.lane.b32.xlu0 %v840, 24
    %v2814 = vpop.permute.xlu0 %2813
    %2815 = vrot.lane.b32.xlu0 %v841, 24
    %v2816 = vpop.permute.xlu0 %2815
    %2817 = vrot.lane.b32.xlu0 %v842, 24
    %v2818 = vpop.permute.xlu0 %2817
    %2819 = vrot.lane.b32.xlu0 %v843, 24
    %v2820 = vpop.permute.xlu0 %2819
    %2821 = vrot.lane.b32.xlu0 %v844, 24
    %v2822 = vpop.permute.xlu0 %2821
    %2823 = vrot.lane.b32.xlu0 %v845, 24
    %v2824 = vpop.permute.xlu0 %2823
    %2825 = vrot.lane.b32.xlu0 %v846, 24
    %v2826 = vpop.permute.xlu0 %2825
    %2827 = vrot.lane.b32.xlu0 %v847, 24
    %v2828 = vpop.permute.xlu0 %2827
    %2829 = vrot.lane.b32.xlu0 %v848, 24
    %v2830 = vpop.permute.xlu0 %2829
    %2831 = vrot.lane.b32.xlu0 %v849, 24
    %v2832 = vpop.permute.xlu0 %2831
    %2833 = vrot.lane.b32.xlu0 %v850, 24
    %v2834 = vpop.permute.xlu0 %2833
    %v2899 = vsel %vm118, %v274, %v916
    %v2900 = vsel %vm118, %v275, %v918
    %v2901 = vsel %vm118, %v276, %v920
    %v2902 = vsel %vm118, %v277, %v922
    %v2903 = vsel %vm118, %v278, %v924
    %v2904 = vsel %vm118, %v279, %v926
    %v2905 = vsel %vm118, %v280, %v928
    %v2906 = vsel %vm118, %v281, %v930
    %v2907 = vsel %vm118, %v282, %v932
    %v2908 = vsel %vm118, %v283, %v934
    %v2909 = vsel %vm118, %v284, %v936
    %v2910 = vsel %vm118, %v285, %v938
    %v2911 = vsel %vm118, %v286, %v940
    %v2912 = vsel %vm118, %v287, %v942
    %v2913 = vsel %vm118, %v288, %v944
    %v2914 = vsel %vm118, %v289, %v946
    %v2915 = vsel %vm118, %v290, %v948
    %v2916 = vsel %vm118, %v291, %v950
    %v2917 = vsel %vm118, %v292, %v952
    %v2918 = vsel %vm118, %v293, %v954
    %v2919 = vsel %vm118, %v294, %v956
    %v2920 = vsel %vm118, %v295, %v958
    %v2921 = vsel %vm118, %v296, %v960
    %v2922 = vsel %vm118, %v297, %v962
    %v2923 = vsel %vm118, %v298, %v964
    %v2924 = vsel %vm118, %v299, %v966
    %v2925 = vsel %vm118, %v300, %v968
    %v2926 = vsel %vm118, %v301, %v970
    %v2927 = vsel %vm118, %v302, %v972
    %v2928 = vsel %vm118, %v303, %v974
    %v2929 = vsel %vm118, %v304, %v976
    %v2930 = vsel %vm118, %v305, %v978
    %v2931 = vsel %vm118, %v306, %v980
    %v2932 = vsel %vm118, %v307, %v982
    %v2933 = vsel %vm118, %v308, %v984
    %v2934 = vsel %vm118, %v309, %v986
    %v2935 = vsel %vm118, %v310, %v988
    %v2936 = vsel %vm118, %v311, %v990
    %v2937 = vsel %vm118, %v312, %v992
    %v2938 = vsel %vm118, %v313, %v994
    %v2939 = vsel %vm118, %v314, %v996
    %v2940 = vsel %vm118, %v315, %v998
    %v2941 = vsel %vm118, %v316, %v1000
    %v2942 = vsel %vm118, %v317, %v1002
    %v2943 = vsel %vm118, %v318, %v1004
    %v2944 = vsel %vm118, %v319, %v1006
    %v2945 = vsel %vm118, %v320, %v1008
    %v2946 = vsel %vm118, %v321, %v1010
    %v2947 = vsel %vm118, %v322, %v1012
    %v2948 = vsel %vm118, %v323, %v1014
    %v2949 = vsel %vm118, %v324, %v1016
    %v2950 = vsel %vm118, %v325, %v1018
    %v2951 = vsel %vm118, %v326, %v1020
    %v2952 = vsel %vm118, %v327, %v1022
    %v2953 = vsel %vm118, %v328, %v1024
    %v2954 = vsel %vm118, %v329, %v1026
    %v2955 = vsel %vm118, %v330, %v1028
    %v2956 = vsel %vm118, %v331, %v1030
    %v2957 = vsel %vm118, %v332, %v1032
    %v2958 = vsel %vm118, %v333, %v1034
    %v2959 = vsel %vm118, %v334, %v1036
    %v2960 = vsel %vm118, %v335, %v1038
    %v2961 = vsel %vm118, %v336, %v1040
    %v2962 = vsel %vm118, %v337, %v1042
    %vm2963 = vcmask 48128
    %v2964 = vsel %vm2963, %v2899, %v1172
    %v2965 = vsel %vm2963, %v2900, %v1174
    %v2966 = vsel %vm2963, %v2901, %v1176
    %v2967 = vsel %vm2963, %v2902, %v1178
    %v2968 = vsel %vm2963, %v2903, %v1180
    %v2969 = vsel %vm2963, %v2904, %v1182
    %v2970 = vsel %vm2963, %v2905, %v1184
    %v2971 = vsel %vm2963, %v2906, %v1186
    %v2972 = vsel %vm2963, %v2907, %v1188
    %v2973 = vsel %vm2963, %v2908, %v1190
    %v2974 = vsel %vm2963, %v2909, %v1192
    %v2975 = vsel %vm2963, %v2910, %v1194
    %v2976 = vsel %vm2963, %v2911, %v1196
    %v2977 = vsel %vm2963, %v2912, %v1198
    %v2978 = vsel %vm2963, %v2913, %v1200
    %v2979 = vsel %vm2963, %v2914, %v1202
    %v2980 = vsel %vm2963, %v2915, %v1204
    %v2981 = vsel %vm2963, %v2916, %v1206
    %v2982 = vsel %vm2963, %v2917, %v1208
    %v2983 = vsel %vm2963, %v2918, %v1210
    %v2984 = vsel %vm2963, %v2919, %v1212
    %v2985 = vsel %vm2963, %v2920, %v1214
    %v2986 = vsel %vm2963, %v2921, %v1216
    %v2987 = vsel %vm2963, %v2922, %v1218
    %v2988 = vsel %vm2963, %v2923, %v1220
    %v2989 = vsel %vm2963, %v2924, %v1222
    %v2990 = vsel %vm2963, %v2925, %v1224
    %v2991 = vsel %vm2963, %v2926, %v1226
    %v2992 = vsel %vm2963, %v2927, %v1228
    %v2993 = vsel %vm2963, %v2928, %v1230
    %v2994 = vsel %vm2963, %v2929, %v1232
    %v2995 = vsel %vm2963, %v2930, %v1234
    %v2996 = vsel %vm2963, %v2931, %v1236
    %v2997 = vsel %vm2963, %v2932, %v1238
    %v2998 = vsel %vm2963, %v2933, %v1240
    %v2999 = vsel %vm2963, %v2934, %v1242
    %v3000 = vsel %vm2963, %v2935, %v1244
    %v3001 = vsel %vm2963, %v2936, %v1246
    %v3002 = vsel %vm2963, %v2937, %v1248
    %v3003 = vsel %vm2963, %v2938, %v1250
    %v3004 = vsel %vm2963, %v2939, %v1252
    %v3005 = vsel %vm2963, %v2940, %v1254
    %v3006 = vsel %vm2963, %v2941, %v1256
    %v3007 = vsel %vm2963, %v2942, %v1258
    %v3008 = vsel %vm2963, %v2943, %v1260
    %v3009 = vsel %vm2963, %v2944, %v1262
    %v3010 = vsel %vm2963, %v2945, %v1264
    %v3011 = vsel %vm2963, %v2946, %v1266
    %v3012 = vsel %vm2963, %v2947, %v1268
    %v3013 = vsel %vm2963, %v2948, %v1270
    %v3014 = vsel %vm2963, %v2949, %v1272
    %v3015 = vsel %vm2963, %v2950, %v1274
    %v3016 = vsel %vm2963, %v2951, %v1276
    %v3017 = vsel %vm2963, %v2952, %v1278
    %v3018 = vsel %vm2963, %v2953, %v1280
    %v3019 = vsel %vm2963, %v2954, %v1282
    %v3020 = vsel %vm2963, %v2955, %v1284
    %v3021 = vsel %vm2963, %v2956, %v1286
    %v3022 = vsel %vm2963, %v2957, %v1288
    %v3023 = vsel %vm2963, %v2958, %v1290
    %v3024 = vsel %vm2963, %v2959, %v1292
    %v3025 = vsel %vm2963, %v2960, %v1294
    %v3026 = vsel %vm2963, %v2961, %v1296
    %v3027 = vsel %vm2963, %v2962, %v1298
    %vm3028 = vcmask 72704
    %v3029 = vsel %vm3028, %v2964, %v1428
    %v3030 = vsel %vm3028, %v2965, %v1430
    %v3031 = vsel %vm3028, %v2966, %v1432
    %v3032 = vsel %vm3028, %v2967, %v1434
    %v3033 = vsel %vm3028, %v2968, %v1436
    %v3034 = vsel %vm3028, %v2969, %v1438
    %v3035 = vsel %vm3028, %v2970, %v1440
    %v3036 = vsel %vm3028, %v2971, %v1442
    %v3037 = vsel %vm3028, %v2972, %v1444
    %v3038 = vsel %vm3028, %v2973, %v1446
    %v3039 = vsel %vm3028, %v2974, %v1448
    %v3040 = vsel %vm3028, %v2975, %v1450
    %v3041 = vsel %vm3028, %v2976, %v1452
    %v3042 = vsel %vm3028, %v2977, %v1454
    %v3043 = vsel %vm3028, %v2978, %v1456
    %v3044 = vsel %vm3028, %v2979, %v1458
    %v3045 = vsel %vm3028, %v2980, %v1460
    %v3046 = vsel %vm3028, %v2981, %v1462
    %v3047 = vsel %vm3028, %v2982, %v1464
    %v3048 = vsel %vm3028, %v2983, %v1466
    %v3049 = vsel %vm3028, %v2984, %v1468
    %v3050 = vsel %vm3028, %v2985, %v1470
    %v3051 = vsel %vm3028, %v2986, %v1472
    %v3052 = vsel %vm3028, %v2987, %v1474
    %v3053 = vsel %vm3028, %v2988, %v1476
    %v3054 = vsel %vm3028, %v2989, %v1478
    %v3055 = vsel %vm3028, %v2990, %v1480
    %v3056 = vsel %vm3028, %v2991, %v1482
    %v3057 = vsel %vm3028, %v2992, %v1484
    %v3058 = vsel %vm3028, %v2993, %v1486
    %v3059 = vsel %vm3028, %v2994, %v1488
    %v3060 = vsel %vm3028, %v2995, %v1490
    %v3061 = vsel %vm3028, %v2996, %v1492
    %v3062 = vsel %vm3028, %v2997, %v1494
    %v3063 = vsel %vm3028, %v2998, %v1496
    %v3064 = vsel %vm3028, %v2999, %v1498
    %v3065 = vsel %vm3028, %v3000, %v1500
    %v3066 = vsel %vm3028, %v3001, %v1502
    %v3067 = vsel %vm3028, %v3002, %v1504
    %v3068 = vsel %vm3028, %v3003, %v1506
    %v3069 = vsel %vm3028, %v3004, %v1508
    %v3070 = vsel %vm3028, %v3005, %v1510
    %v3071 = vsel %vm3028, %v3006, %v1512
    %v3072 = vsel %vm3028, %v3007, %v1514
    %v3073 = vsel %vm3028, %v3008, %v1516
    %v3074 = vsel %vm3028, %v3009, %v1518
    %v3075 = vsel %vm3028, %v3010, %v1520
    %v3076 = vsel %vm3028, %v3011, %v1522
    %v3077 = vsel %vm3028, %v3012, %v1524
    %v3078 = vsel %vm3028, %v3013, %v1526
    %v3079 = vsel %vm3028, %v3014, %v1528
    %v3080 = vsel %vm3028, %v3015, %v1530
    %v3081 = vsel %vm3028, %v3016, %v1532
    %v3082 = vsel %vm3028, %v3017, %v1534
    %v3083 = vsel %vm3028, %v3018, %v1536
    %v3084 = vsel %vm3028, %v3019, %v1538
    %v3085 = vsel %vm3028, %v3020, %v1540
    %v3086 = vsel %vm3028, %v3021, %v1542
    %v3087 = vsel %vm3028, %v3022, %v1544
    %v3088 = vsel %vm3028, %v3023, %v1546
    %v3089 = vsel %vm3028, %v3024, %v1548
    %v3090 = vsel %vm3028, %v3025, %v1550
    %v3091 = vsel %vm3028, %v3026, %v1552
    %v3092 = vsel %vm3028, %v3027, %v1554
    %vm3093 = vcmask 97280
    %v3094 = vsel %vm3093, %v3029, %v1684
    %v3095 = vsel %vm3093, %v3030, %v1686
    %v3096 = vsel %vm3093, %v3031, %v1688
    %v3097 = vsel %vm3093, %v3032, %v1690
    %v3098 = vsel %vm3093, %v3033, %v1692
    %v3099 = vsel %vm3093, %v3034, %v1694
    %v3100 = vsel %vm3093, %v3035, %v1696
    %v3101 = vsel %vm3093, %v3036, %v1698
    %v3102 = vsel %vm3093, %v3037, %v1700
    %v3103 = vsel %vm3093, %v3038, %v1702
    %v3104 = vsel %vm3093, %v3039, %v1704
    %v3105 = vsel %vm3093, %v3040, %v1706
    %v3106 = vsel %vm3093, %v3041, %v1708
    %v3107 = vsel %vm3093, %v3042, %v1710
    %v3108 = vsel %vm3093, %v3043, %v1712
    %v3109 = vsel %vm3093, %v3044, %v1714
    %v3110 = vsel %vm3093, %v3045, %v1716
    %v3111 = vsel %vm3093, %v3046, %v1718
    %v3112 = vsel %vm3093, %v3047, %v1720
    %v3113 = vsel %vm3093, %v3048, %v1722
    %v3114 = vsel %vm3093, %v3049, %v1724
    %v3115 = vsel %vm3093, %v3050, %v1726
    %v3116 = vsel %vm3093, %v3051, %v1728
    %v3117 = vsel %vm3093, %v3052, %v1730
    %v3118 = vsel %vm3093, %v3053, %v1732
    %v3119 = vsel %vm3093, %v3054, %v1734
    %v3120 = vsel %vm3093, %v3055, %v1736
    %v3121 = vsel %vm3093, %v3056, %v1738
    %v3122 = vsel %vm3093, %v3057, %v1740
    %v3123 = vsel %vm3093, %v3058, %v1742
    %v3124 = vsel %vm3093, %v3059, %v1744
    %v3125 = vsel %vm3093, %v3060, %v1746
    %v3126 = vsel %vm3093, %v3061, %v1748
    %v3127 = vsel %vm3093, %v3062, %v1750
    %v3128 = vsel %vm3093, %v3063, %v1752
    %v3129 = vsel %vm3093, %v3064, %v1754
    %v3130 = vsel %vm3093, %v3065, %v1756
    %v3131 = vsel %vm3093, %v3066, %v1758
    %v3132 = vsel %vm3093, %v3067, %v1760
    %v3133 = vsel %vm3093, %v3068, %v1762
    %v3134 = vsel %vm3093, %v3069, %v1764
    %v3135 = vsel %vm3093, %v3070, %v1766
    %v3136 = vsel %vm3093, %v3071, %v1768
    %v3137 = vsel %vm3093, %v3072, %v1770
    %v3138 = vsel %vm3093, %v3073, %v1772
    %v3139 = vsel %vm3093, %v3074, %v1774
    %v3140 = vsel %vm3093, %v3075, %v1776
    %v3141 = vsel %vm3093, %v3076, %v1778
    %v3142 = vsel %vm3093, %v3077, %v1780
    %v3143 = vsel %vm3093, %v3078, %v1782
    %v3144 = vsel %vm3093, %v3079, %v1784
    %v3145 = vsel %vm3093, %v3080, %v1786
    %v3146 = vsel %vm3093, %v3081, %v1788
    %v3147 = vsel %vm3093, %v3082, %v1790
    %v3148 = vsel %vm3093, %v3083, %v1792
    %v3149 = vsel %vm3093, %v3084, %v1794
    %v3150 = vsel %vm3093, %v3085, %v1796
    %v3151 = vsel %vm3093, %v3086, %v1798
    %v3152 = vsel %vm3093, %v3087, %v1800
    %v3153 = vsel %vm3093, %v3088, %v1802
    %v3154 = vsel %vm3093, %v3089, %v1804
    %v3155 = vsel %vm3093, %v3090, %v1806
    %v3156 = vsel %vm3093, %v3091, %v1808
    %v3157 = vsel %vm3093, %v3092, %v1810
    %vm3158 = vcmask 121856
    %v3159 = vsel %vm3158, %v3094, %v1940
    %v3160 = vsel %vm3158, %v3095, %v1942
    %v3161 = vsel %vm3158, %v3096, %v1944
    %v3162 = vsel %vm3158, %v3097, %v1946
    %v3163 = vsel %vm3158, %v3098, %v1948
    %v3164 = vsel %vm3158, %v3099, %v1950
    %v3165 = vsel %vm3158, %v3100, %v1952
    %v3166 = vsel %vm3158, %v3101, %v1954
    %v3167 = vsel %vm3158, %v3102, %v1956
    %v3168 = vsel %vm3158, %v3103, %v1958
    %v3169 = vsel %vm3158, %v3104, %v1960
    %v3170 = vsel %vm3158, %v3105, %v1962
    %v3171 = vsel %vm3158, %v3106, %v1964
    %v3172 = vsel %vm3158, %v3107, %v1966
    %v3173 = vsel %vm3158, %v3108, %v1968
    %v3174 = vsel %vm3158, %v3109, %v1970
    %v3175 = vsel %vm3158, %v3110, %v1972
    %v3176 = vsel %vm3158, %v3111, %v1974
    %v3177 = vsel %vm3158, %v3112, %v1976
    %v3178 = vsel %vm3158, %v3113, %v1978
    %v3179 = vsel %vm3158, %v3114, %v1980
    %v3180 = vsel %vm3158, %v3115, %v1982
    %v3181 = vsel %vm3158, %v3116, %v1984
    %v3182 = vsel %vm3158, %v3117, %v1986
    %v3183 = vsel %vm3158, %v3118, %v1988
    %v3184 = vsel %vm3158, %v3119, %v1990
    %v3185 = vsel %vm3158, %v3120, %v1992
    %v3186 = vsel %vm3158, %v3121, %v1994
    %v3187 = vsel %vm3158, %v3122, %v1996
    %v3188 = vsel %vm3158, %v3123, %v1998
    %v3189 = vsel %vm3158, %v3124, %v2000
    %v3190 = vsel %vm3158, %v3125, %v2002
    %v3191 = vsel %vm3158, %v3126, %v2004
    %v3192 = vsel %vm3158, %v3127, %v2006
    %v3193 = vsel %vm3158, %v3128, %v2008
    %v3194 = vsel %vm3158, %v3129, %v2010
    %v3195 = vsel %vm3158, %v3130, %v2012
    %v3196 = vsel %vm3158, %v3131, %v2014
    %v3197 = vsel %vm3158, %v3132, %v2016
    %v3198 = vsel %vm3158, %v3133, %v2018
    %v3199 = vsel %vm3158, %v3134, %v2020
    %v3200 = vsel %vm3158, %v3135, %v2022
    %v3201 = vsel %vm3158, %v3136, %v2024
    %v3202 = vsel %vm3158, %v3137, %v2026
    %v3203 = vsel %vm3158, %v3138, %v2028
    %v3204 = vsel %vm3158, %v3139, %v2030
    %v3205 = vsel %vm3158, %v3140, %v2032
    %v3206 = vsel %vm3158, %v3141, %v2034
    %v3207 = vsel %vm3158, %v3142, %v2036
    %v3208 = vsel %vm3158, %v3143, %v2038
    %v3209 = vsel %vm3158, %v3144, %v2040
    %v3210 = vsel %vm3158, %v3145, %v2042
    %v3211 = vsel %vm3158, %v3146, %v2044
    %v3212 = vsel %vm3158, %v3147, %v2046
    %v3213 = vsel %vm3158, %v3148, %v2048
    %v3214 = vsel %vm3158, %v3149, %v2050
    %v3215 = vsel %vm3158, %v3150, %v2052
    %v3216 = vsel %vm3158, %v3151, %v2054
    %v3217 = vsel %vm3158, %v3152, %v2056
    %v3218 = vsel %vm3158, %v3153, %v2058
    %v3219 = vsel %vm3158, %v3154, %v2060
    %v3220 = vsel %vm3158, %v3155, %v2062
    %v3221 = vsel %vm3158, %v3156, %v2064
    %v3222 = vsel %vm3158, %v3157, %v2066
    %vm3223 = vcmask 146432
    %v3224 = vsel %vm3223, %v3159, %v2196
    %v3225 = vsel %vm3223, %v3160, %v2198
    %v3226 = vsel %vm3223, %v3161, %v2200
    %v3227 = vsel %vm3223, %v3162, %v2202
    %v3228 = vsel %vm3223, %v3163, %v2204
    %v3229 = vsel %vm3223, %v3164, %v2206
    %v3230 = vsel %vm3223, %v3165, %v2208
    %v3231 = vsel %vm3223, %v3166, %v2210
    %v3232 = vsel %vm3223, %v3167, %v2212
    %v3233 = vsel %vm3223, %v3168, %v2214
    %v3234 = vsel %vm3223, %v3169, %v2216
    %v3235 = vsel %vm3223, %v3170, %v2218
    %v3236 = vsel %vm3223, %v3171, %v2220
    %v3237 = vsel %vm3223, %v3172, %v2222
    %v3238 = vsel %vm3223, %v3173, %v2224
    %v3239 = vsel %vm3223, %v3174, %v2226
    %v3240 = vsel %vm3223, %v3175, %v2228
    %v3241 = vsel %vm3223, %v3176, %v2230
    %v3242 = vsel %vm3223, %v3177, %v2232
    %v3243 = vsel %vm3223, %v3178, %v2234
    %v3244 = vsel %vm3223, %v3179, %v2236
    %v3245 = vsel %vm3223, %v3180, %v2238
    %v3246 = vsel %vm3223, %v3181, %v2240
    %v3247 = vsel %vm3223, %v3182, %v2242
    %v3248 = vsel %vm3223, %v3183, %v2244
    %v3249 = vsel %vm3223, %v3184, %v2246
    %v3250 = vsel %vm3223, %v3185, %v2248
    %v3251 = vsel %vm3223, %v3186, %v2250
    %v3252 = vsel %vm3223, %v3187, %v2252
    %v3253 = vsel %vm3223, %v3188, %v2254
    %v3254 = vsel %vm3223, %v3189, %v2256
    %v3255 = vsel %vm3223, %v3190, %v2258
    %v3256 = vsel %vm3223, %v3191, %v2260
    %v3257 = vsel %vm3223, %v3192, %v2262
    %v3258 = vsel %vm3223, %v3193, %v2264
    %v3259 = vsel %vm3223, %v3194, %v2266
    %v3260 = vsel %vm3223, %v3195, %v2268
    %v3261 = vsel %vm3223, %v3196, %v2270
    %v3262 = vsel %vm3223, %v3197, %v2272
    %v3263 = vsel %vm3223, %v3198, %v2274
    %v3264 = vsel %vm3223, %v3199, %v2276
    %v3265 = vsel %vm3223, %v3200, %v2278
    %v3266 = vsel %vm3223, %v3201, %v2280
    %v3267 = vsel %vm3223, %v3202, %v2282
    %v3268 = vsel %vm3223, %v3203, %v2284
    %v3269 = vsel %vm3223, %v3204, %v2286
    %v3270 = vsel %vm3223, %v3205, %v2288
    %v3271 = vsel %vm3223, %v3206, %v2290
    %v3272 = vsel %vm3223, %v3207, %v2292
    %v3273 = vsel %vm3223, %v3208, %v2294
    %v3274 = vsel %vm3223, %v3209, %v2296
    %v3275 = vsel %vm3223, %v3210, %v2298
    %v3276 = vsel %vm3223, %v3211, %v2300
    %v3277 = vsel %vm3223, %v3212, %v2302
    %v3278 = vsel %vm3223, %v3213, %v2304
    %v3279 = vsel %vm3223, %v3214, %v2306
    %v3280 = vsel %vm3223, %v3215, %v2308
    %v3281 = vsel %vm3223, %v3216, %v2310
    %v3282 = vsel %vm3223, %v3217, %v2312
    %v3283 = vsel %vm3223, %v3218, %v2314
    %v3284 = vsel %vm3223, %v3219, %v2316
    %v3285 = vsel %vm3223, %v3220, %v2318
    %v3286 = vsel %vm3223, %v3221, %v2320
    %v3287 = vsel %vm3223, %v3222, %v2322
    %vm3288 = vcmask 171008
    %v3289 = vsel %vm3288, %v3224, %v2452
    %v3290 = vsel %vm3288, %v3225, %v2454
    %v3291 = vsel %vm3288, %v3226, %v2456
    %v3292 = vsel %vm3288, %v3227, %v2458
    %v3293 = vsel %vm3288, %v3228, %v2460
    %v3294 = vsel %vm3288, %v3229, %v2462
    %v3295 = vsel %vm3288, %v3230, %v2464
    %v3296 = vsel %vm3288, %v3231, %v2466
    %v3297 = vsel %vm3288, %v3232, %v2468
    %v3298 = vsel %vm3288, %v3233, %v2470
    %v3299 = vsel %vm3288, %v3234, %v2472
    %v3300 = vsel %vm3288, %v3235, %v2474
    %v3301 = vsel %vm3288, %v3236, %v2476
    %v3302 = vsel %vm3288, %v3237, %v2478
    %v3303 = vsel %vm3288, %v3238, %v2480
    %v3304 = vsel %vm3288, %v3239, %v2482
    %v3305 = vsel %vm3288, %v3240, %v2484
    %v3306 = vsel %vm3288, %v3241, %v2486
    %v3307 = vsel %vm3288, %v3242, %v2488
    %v3308 = vsel %vm3288, %v3243, %v2490
    %v3309 = vsel %vm3288, %v3244, %v2492
    %v3310 = vsel %vm3288, %v3245, %v2494
    %v3311 = vsel %vm3288, %v3246, %v2496
    %v3312 = vsel %vm3288, %v3247, %v2498
    %v3313 = vsel %vm3288, %v3248, %v2500
    %v3314 = vsel %vm3288, %v3249, %v2502
    %v3315 = vsel %vm3288, %v3250, %v2504
    %v3316 = vsel %vm3288, %v3251, %v2506
    %v3317 = vsel %vm3288, %v3252, %v2508
    %v3318 = vsel %vm3288, %v3253, %v2510
    %v3319 = vsel %vm3288, %v3254, %v2512
    %v3320 = vsel %vm3288, %v3255, %v2514
    %v3321 = vsel %vm3288, %v3256, %v2516
    %v3322 = vsel %vm3288, %v3257, %v2518
    %v3323 = vsel %vm3288, %v3258, %v2520
    %v3324 = vsel %vm3288, %v3259, %v2522
    %v3325 = vsel %vm3288, %v3260, %v2524
    %v3326 = vsel %vm3288, %v3261, %v2526
    %v3327 = vsel %vm3288, %v3262, %v2528
    %v3328 = vsel %vm3288, %v3263, %v2530
    %v3329 = vsel %vm3288, %v3264, %v2532
    %v3330 = vsel %vm3288, %v3265, %v2534
    %v3331 = vsel %vm3288, %v3266, %v2536
    %v3332 = vsel %vm3288, %v3267, %v2538
    %v3333 = vsel %vm3288, %v3268, %v2540
    %v3334 = vsel %vm3288, %v3269, %v2542
    %v3335 = vsel %vm3288, %v3270, %v2544
    %v3336 = vsel %vm3288, %v3271, %v2546
    %v3337 = vsel %vm3288, %v3272, %v2548
    %v3338 = vsel %vm3288, %v3273, %v2550
    %v3339 = vsel %vm3288, %v3274, %v2552
    %v3340 = vsel %vm3288, %v3275, %v2554
    %v3341 = vsel %vm3288, %v3276, %v2556
    %v3342 = vsel %vm3288, %v3277, %v2558
    %v3343 = vsel %vm3288, %v3278, %v2560
    %v3344 = vsel %vm3288, %v3279, %v2562
    %v3345 = vsel %vm3288, %v3280, %v2564
    %v3346 = vsel %vm3288, %v3281, %v2566
    %v3347 = vsel %vm3288, %v3282, %v2568
    %v3348 = vsel %vm3288, %v3283, %v2570
    %v3349 = vsel %vm3288, %v3284, %v2572
    %v3350 = vsel %vm3288, %v3285, %v2574
    %v3351 = vsel %vm3288, %v3286, %v2576
    %v3352 = vsel %vm3288, %v3287, %v2578
    %vm3353 = vcmask 195584
    %v3354 = vsel %vm3353, %v3289, %v2708
    %v3355 = vsel %vm3353, %v3290, %v2710
    %v3356 = vsel %vm3353, %v3291, %v2712
    %v3357 = vsel %vm3353, %v3292, %v2714
    %v3358 = vsel %vm3353, %v3293, %v2716
    %v3359 = vsel %vm3353, %v3294, %v2718
    %v3360 = vsel %vm3353, %v3295, %v2720
    %v3361 = vsel %vm3353, %v3296, %v2722
    %v3362 = vsel %vm3353, %v3297, %v2724
    %v3363 = vsel %vm3353, %v3298, %v2726
    %v3364 = vsel %vm3353, %v3299, %v2728
    %v3365 = vsel %vm3353, %v3300, %v2730
    %v3366 = vsel %vm3353, %v3301, %v2732
    %v3367 = vsel %vm3353, %v3302, %v2734
    %v3368 = vsel %vm3353, %v3303, %v2736
    %v3369 = vsel %vm3353, %v3304, %v2738
    %v3370 = vsel %vm3353, %v3305, %v2740
    %v3371 = vsel %vm3353, %v3306, %v2742
    %v3372 = vsel %vm3353, %v3307, %v2744
    %v3373 = vsel %vm3353, %v3308, %v2746
    %v3374 = vsel %vm3353, %v3309, %v2748
    %v3375 = vsel %vm3353, %v3310, %v2750
    %v3376 = vsel %vm3353, %v3311, %v2752
    %v3377 = vsel %vm3353, %v3312, %v2754
    %v3378 = vsel %vm3353, %v3313, %v2756
    %v3379 = vsel %vm3353, %v3314, %v2758
    %v3380 = vsel %vm3353, %v3315, %v2760
    %v3381 = vsel %vm3353, %v3316, %v2762
    %v3382 = vsel %vm3353, %v3317, %v2764
    %v3383 = vsel %vm3353, %v3318, %v2766
    %v3384 = vsel %vm3353, %v3319, %v2768
    %v3385 = vsel %vm3353, %v3320, %v2770
    %v3386 = vsel %vm3353, %v3321, %v2772
    %v3387 = vsel %vm3353, %v3322, %v2774
    %v3388 = vsel %vm3353, %v3323, %v2776
    %v3389 = vsel %vm3353, %v3324, %v2778
    %v3390 = vsel %vm3353, %v3325, %v2780
    %v3391 = vsel %vm3353, %v3326, %v2782
    %v3392 = vsel %vm3353, %v3327, %v2784
    %v3393 = vsel %vm3353, %v3328, %v2786
    %v3394 = vsel %vm3353, %v3329, %v2788
    %v3395 = vsel %vm3353, %v3330, %v2790
    %v3396 = vsel %vm3353, %v3331, %v2792
    %v3397 = vsel %vm3353, %v3332, %v2794
    %v3398 = vsel %vm3353, %v3333, %v2796
    %v3399 = vsel %vm3353, %v3334, %v2798
    %v3400 = vsel %vm3353, %v3335, %v2800
    %v3401 = vsel %vm3353, %v3336, %v2802
    %v3402 = vsel %vm3353, %v3337, %v2804
    %v3403 = vsel %vm3353, %v3338, %v2806
    %v3404 = vsel %vm3353, %v3339, %v2808
    %v3405 = vsel %vm3353, %v3340, %v2810
    %v3406 = vsel %vm3353, %v3341, %v2812
    %v3407 = vsel %vm3353, %v3342, %v2814
    %v3408 = vsel %vm3353, %v3343, %v2816
    %v3409 = vsel %vm3353, %v3344, %v2818
    %v3410 = vsel %vm3353, %v3345, %v2820
    %v3411 = vsel %vm3353, %v3346, %v2822
    %v3412 = vsel %vm3353, %v3347, %v2824
    %v3413 = vsel %vm3353, %v3348, %v2826
    %v3414 = vsel %vm3353, %v3349, %v2828
    %v3415 = vsel %vm3353, %v3350, %v2830
    %v3416 = vsel %vm3353, %v3351, %v2832
    %v3417 = vsel %vm3353, %v3352, %v2834
    %v3418 = vpack.c.bf16 %v3355, %v3354
    %v3419 = vpack.c.bf16 %v3357, %v3356
    %v3420 = vpack.c.bf16 %v3359, %v3358
    %v3421 = vpack.c.bf16 %v3361, %v3360
    %v3422 = vpack.c.bf16 %v3363, %v3362
    %v3423 = vpack.c.bf16 %v3365, %v3364
    %v3424 = vpack.c.bf16 %v3367, %v3366
    %v3425 = vpack.c.bf16 %v3369, %v3368
    %v3426 = vpack.c.bf16 %v3371, %v3370
    %v3427 = vpack.c.bf16 %v3373, %v3372
    %v3428 = vpack.c.bf16 %v3375, %v3374
    %v3429 = vpack.c.bf16 %v3377, %v3376
    %v3430 = vpack.c.bf16 %v3379, %v3378
    %v3431 = vpack.c.bf16 %v3381, %v3380
    %v3432 = vpack.c.bf16 %v3383, %v3382
    %v3433 = vpack.c.bf16 %v3385, %v3384
    %v3434 = vpack.c.bf16 %v3387, %v3386
    %v3435 = vpack.c.bf16 %v3389, %v3388
    %v3436 = vpack.c.bf16 %v3391, %v3390
    %v3437 = vpack.c.bf16 %v3393, %v3392
    %v3438 = vpack.c.bf16 %v3395, %v3394
    %v3439 = vpack.c.bf16 %v3397, %v3396
    %v3440 = vpack.c.bf16 %v3399, %v3398
    %v3441 = vpack.c.bf16 %v3401, %v3400
    %v3442 = vpack.c.bf16 %v3403, %v3402
    %v3443 = vpack.c.bf16 %v3405, %v3404
    %v3444 = vpack.c.bf16 %v3407, %v3406
    %v3445 = vpack.c.bf16 %v3409, %v3408
    %v3446 = vpack.c.bf16 %v3411, %v3410
    %v3447 = vpack.c.bf16 %v3413, %v3412
    %v3448 = vpack.c.bf16 %v3415, %v3414
    %v3449 = vpack.c.bf16 %v3417, %v3416
    %v3450 = vld [vmem:[%s1] sm:$0xf]
    %v3451 = vld [vmem:[%s1 + $0x4] sm:$0xf]
    %v3452 = vld [vmem:[%s1 + $0x8] sm:$0xf]
    %v3453 = vld [vmem:[%s1 + $0xc] sm:$0x3]
    %v3454 = vld [vmem:[%s2] sm:$0x1]
    %v3456 = vlaneseq
    %v3457 = vshrl.u32 %v3456, 7
    %v3458 = vsub.s32 0, %v3457
    %v3459 = vrot.slane %v3454, %v3458
    %v3465 = vunpack.c.l.b16 %v3450
    %v3466 = vunpack.c.l.b16 %v3451
    %v3467 = vunpack.c.l.b16 %v3452
    %v3468 = vunpack.c.l.b16 %v3453
    %v3469 = vpack.c.b16 %v3466, %v3465
    %v3470 = vpack.c.b16 %v3468, %v3467
    %vm3472 = vcmask 220160
    %v3474 = vsel %vm3472, %v3418, 0
    %v3477 = vsel %vm3472, %v3419, 0
    %v3480 = vsel %vm3472, %v3420, 0
    %v3483 = vsel %vm3472, %v3421, 0
    %v3486 = vsel %vm3472, %v3422, 0
    %v3489 = vsel %vm3472, %v3423, 0
    %v3492 = vsel %vm3472, %v3424, 0
    %v3495 = vsel %vm3472, %v3425, 0
    %v3498 = vsel %vm3472, %v3426, 0
    %v3501 = vsel %vm3472, %v3427, 0
    %v3504 = vsel %vm3472, %v3428, 0
    %v3507 = vsel %vm3472, %v3429, 0
    %v3510 = vsel %vm3472, %v3430, 0
    %v3513 = vsel %vm3472, %v3431, 0
    %v3516 = vsel %vm3472, %v3432, 0
    %v3519 = vsel %vm3472, %v3433, 0
    %v3522 = vsel %vm3472, %v3434, 0
    %v3525 = vsel %vm3472, %v3435, 0
    %v3528 = vsel %vm3472, %v3436, 0
    %v3531 = vsel %vm3472, %v3437, 0
    %v3534 = vsel %vm3472, %v3438, 0
    %v3537 = vsel %vm3472, %v3439, 0
    %v3540 = vsel %vm3472, %v3440, 0
    %v3543 = vsel %vm3472, %v3441, 0
    %v3546 = vsel %vm3472, %v3442, 0
    %v3549 = vsel %vm3472, %v3443, 0
    %v3552 = vsel %vm3472, %v3444, 0
    %v3555 = vsel %vm3472, %v3445, 0
    %v3558 = vsel %vm3472, %v3446, 0
    %v3561 = vsel %vm3472, %v3447, 0
    %v3564 = vsel %vm3472, %v3448, 0
    %v3567 = vsel %vm3472, %v3449, 0
    %vm3569 = vcmask 1044480
    %vm3570 = vcmask 1045504
    %v3571 = vsel %vm3569, 4294967295, 65535
    %v3572 = vsel %vm3570, %v3571, 0
    %v3574 = vand.u32 %v3470, %v3572
    %3576 = vmatprep.subr.bf16.mxu0 0
    %3577 = vmatpush1.bf16.msra.mxu0 0
    %3578 = vmatprep.subr.bf16.mxu0 0
    %3579 = vmatpush1.bf16.msra.mxu0 0
    %3580 = vmatprep.subr.bf16.mxu0 0
    %3581 = vmatpush1.bf16.msra.mxu0 0
    %3582 = vmatprep.subr.bf16.mxu0 0
    %3583 = vmatpush1.bf16.msra.mxu0 0
    %3584 = vmatprep.subr.bf16.mxu0 0
    %3585 = vmatpush1.bf16.msra.mxu0 0
    %3586 = vmatprep.subr.bf16.mxu0 0
    %3587 = vmatpush1.bf16.msra.mxu0 0
    %3588 = vmatprep.subr.bf16.mxu0 0
    %3589 = vmatpush1.bf16.msra.mxu0 %v3574
    %3590 = vmatprep.subr.bf16.mxu0 0
    %3591 = vmatpush1.bf16.msra.mxu0 %v3469
    %3592 = vmatprep.subr.bf16.mxu0 0
    %3593 = vmatpush2.bf16.msra.mxu0 0
    %3594 = vmatprep.subr.bf16.mxu0 0
    %3595 = vmatpush2.bf16.msra.mxu0 0
    %3596 = vmatprep.subr.bf16.mxu0 0
    %3597 = vmatpush2.bf16.msra.mxu0 0
    %3598 = vmatprep.subr.bf16.mxu0 0
    %3599 = vmatpush2.bf16.msra.mxu0 0
    %3600 = vmatprep.subr.bf16.mxu0 0
    %3601 = vmatpush2.bf16.msra.mxu0 0
    %3602 = vmatprep.subr.bf16.mxu0 0
    %3603 = vmatpush2.bf16.msra.mxu0 0
    %3604 = vmatprep.subr.bf16.mxu0 0
    %3605 = vmatpush2.bf16.msra.mxu0 0
    %3606 = vmatprep.subr.bf16.mxu0 0
    %3607 = vmatpush2.bf16.msra.mxu0 0
    %3608 = vmatprep.mubr.bf16.mxu0 0
    %3609 = vmatmul.mubr.bf16.gmra.mxu0 %v3474
    %v3610 = vpop.f32.mrf.mxu0
    %v3611 = vadd.f32 %v3459, %v3610
    %v3612 = vpop.f32.mrf.mxu0
    %v3613 = vpop.f32.mrf.mxu0
    %v3614 = vadd.f32 %v3459, %v3613
    %v3615 = vpop.f32.mrf.mxu0
    %3616 = vmatprep.mubr.bf16.mxu0 0
    %3617 = vmatmul.mubr.bf16.gmra.mxu0 %v3477
    %v3618 = vpop.f32.mrf.mxu0
    %v3619 = vadd.f32 %v3459, %v3618
    %v3620 = vpop.f32.mrf.mxu0
    %v3621 = vpop.f32.mrf.mxu0
    %v3622 = vadd.f32 %v3459, %v3621
    %v3623 = vpop.f32.mrf.mxu0
    %3624 = vmatprep.mubr.bf16.mxu0 0
    %3625 = vmatmul.mubr.bf16.gmra.mxu0 %v3480
    %v3626 = vpop.f32.mrf.mxu0
    %v3627 = vadd.f32 %v3459, %v3626
    %v3628 = vpop.f32.mrf.mxu0
    %v3629 = vpop.f32.mrf.mxu0
    %v3630 = vadd.f32 %v3459, %v3629
    %v3631 = vpop.f32.mrf.mxu0
    %3632 = vmatprep.mubr.bf16.mxu0 0
    %3633 = vmatmul.mubr.bf16.gmra.mxu0 %v3483
    %v3634 = vpop.f32.mrf.mxu0
    %v3635 = vadd.f32 %v3459, %v3634
    %v3636 = vpop.f32.mrf.mxu0
    %v3637 = vpop.f32.mrf.mxu0
    %v3638 = vadd.f32 %v3459, %v3637
    %v3639 = vpop.f32.mrf.mxu0
    %3640 = vmatprep.mubr.bf16.mxu0 0
    %3641 = vmatmul.mubr.bf16.gmra.mxu0 %v3486
    %v3642 = vpop.f32.mrf.mxu0
    %v3643 = vadd.f32 %v3459, %v3642
    %v3644 = vpop.f32.mrf.mxu0
    %v3645 = vpop.f32.mrf.mxu0
    %v3646 = vadd.f32 %v3459, %v3645
    %v3647 = vpop.f32.mrf.mxu0
    %3648 = vmatprep.mubr.bf16.mxu0 0
    %3649 = vmatmul.mubr.bf16.gmra.mxu0 %v3489
    %v3650 = vpop.f32.mrf.mxu0
    %v3651 = vadd.f32 %v3459, %v3650
    %v3652 = vpop.f32.mrf.mxu0
    %v3653 = vpop.f32.mrf.mxu0
    %v3654 = vadd.f32 %v3459, %v3653
    %v3655 = vpop.f32.mrf.mxu0
    %3656 = vmatprep.mubr.bf16.mxu0 0
    %3657 = vmatmul.mubr.bf16.gmra.mxu0 %v3492
    %v3658 = vpop.f32.mrf.mxu0
    %v3659 = vadd.f32 %v3459, %v3658
    %v3660 = vpop.f32.mrf.mxu0
    %v3661 = vpop.f32.mrf.mxu0
    %v3662 = vadd.f32 %v3459, %v3661
    %v3663 = vpop.f32.mrf.mxu0
    %3664 = vmatprep.mubr.bf16.mxu0 0
    %3665 = vmatmul.mubr.bf16.gmra.mxu0 %v3495
    %v3666 = vpop.f32.mrf.mxu0
    %v3667 = vadd.f32 %v3459, %v3666
    %v3668 = vpop.f32.mrf.mxu0
    %v3669 = vpop.f32.mrf.mxu0
    %v3670 = vadd.f32 %v3459, %v3669
    %v3671 = vpop.f32.mrf.mxu0
    %3672 = vmatprep.mubr.bf16.mxu0 0
    %3673 = vmatmul.mubr.bf16.gmra.mxu0 %v3498
    %v3674 = vpop.f32.mrf.mxu0
    %v3675 = vadd.f32 %v3459, %v3674
    %v3676 = vpop.f32.mrf.mxu0
    %v3677 = vpop.f32.mrf.mxu0
    %v3678 = vadd.f32 %v3459, %v3677
    %v3679 = vpop.f32.mrf.mxu0
    %3680 = vmatprep.mubr.bf16.mxu0 0
    %3681 = vmatmul.mubr.bf16.gmra.mxu0 %v3501
    %v3682 = vpop.f32.mrf.mxu0
    %v3683 = vadd.f32 %v3459, %v3682
    %v3684 = vpop.f32.mrf.mxu0
    %v3685 = vpop.f32.mrf.mxu0
    %v3686 = vadd.f32 %v3459, %v3685
    %v3687 = vpop.f32.mrf.mxu0
    %3688 = vmatprep.mubr.bf16.mxu0 0
    %3689 = vmatmul.mubr.bf16.gmra.mxu0 %v3504
    %v3690 = vpop.f32.mrf.mxu0
    %v3691 = vadd.f32 %v3459, %v3690
    %v3692 = vpop.f32.mrf.mxu0
    %v3693 = vpop.f32.mrf.mxu0
    %v3694 = vadd.f32 %v3459, %v3693
    %v3695 = vpop.f32.mrf.mxu0
    %3696 = vmatprep.mubr.bf16.mxu0 0
    %3697 = vmatmul.mubr.bf16.gmra.mxu0 %v3507
    %v3698 = vpop.f32.mrf.mxu0
    %v3699 = vadd.f32 %v3459, %v3698
    %v3700 = vpop.f32.mrf.mxu0
    %v3701 = vpop.f32.mrf.mxu0
    %v3702 = vadd.f32 %v3459, %v3701
    %v3703 = vpop.f32.mrf.mxu0
    %3704 = vmatprep.mubr.bf16.mxu0 0
    %3705 = vmatmul.mubr.bf16.gmra.mxu0 %v3510
    %v3706 = vpop.f32.mrf.mxu0
    %v3707 = vadd.f32 %v3459, %v3706
    %v3708 = vpop.f32.mrf.mxu0
    %v3709 = vpop.f32.mrf.mxu0
    %v3710 = vadd.f32 %v3459, %v3709
    %v3711 = vpop.f32.mrf.mxu0
    %3712 = vmatprep.mubr.bf16.mxu0 0
    %3713 = vmatmul.mubr.bf16.gmra.mxu0 %v3513
    %v3714 = vpop.f32.mrf.mxu0
    %v3715 = vadd.f32 %v3459, %v3714
    %v3716 = vpop.f32.mrf.mxu0
    %v3717 = vpop.f32.mrf.mxu0
    %v3718 = vadd.f32 %v3459, %v3717
    %v3719 = vpop.f32.mrf.mxu0
    %3720 = vmatprep.mubr.bf16.mxu0 0
    %3721 = vmatmul.mubr.bf16.gmra.mxu0 %v3516
    %v3722 = vpop.f32.mrf.mxu0
    %v3723 = vadd.f32 %v3459, %v3722
    %v3724 = vpop.f32.mrf.mxu0
    %v3725 = vpop.f32.mrf.mxu0
    %v3726 = vadd.f32 %v3459, %v3725
    %v3727 = vpop.f32.mrf.mxu0
    %3728 = vmatprep.mubr.bf16.mxu0 0
    %3729 = vmatmul.mubr.bf16.gmra.mxu0 %v3519
    %v3730 = vpop.f32.mrf.mxu0
    %v3731 = vadd.f32 %v3459, %v3730
    %v3732 = vpop.f32.mrf.mxu0
    %v3733 = vpop.f32.mrf.mxu0
    %v3734 = vadd.f32 %v3459, %v3733
    %v3735 = vpop.f32.mrf.mxu0
    %3736 = vmatprep.mubr.bf16.mxu0 0
    %3737 = vmatmul.mubr.bf16.gmra.mxu0 %v3522
    %v3738 = vpop.f32.mrf.mxu0
    %v3739 = vadd.f32 %v3459, %v3738
    %v3740 = vpop.f32.mrf.mxu0
    %v3741 = vpop.f32.mrf.mxu0
    %v3742 = vadd.f32 %v3459, %v3741
    %v3743 = vpop.f32.mrf.mxu0
    %3744 = vmatprep.mubr.bf16.mxu0 0
    %3745 = vmatmul.mubr.bf16.gmra.mxu0 %v3525
    %v3746 = vpop.f32.mrf.mxu0
    %v3747 = vadd.f32 %v3459, %v3746
    %v3748 = vpop.f32.mrf.mxu0
    %v3749 = vpop.f32.mrf.mxu0
    %v3750 = vadd.f32 %v3459, %v3749
    %v3751 = vpop.f32.mrf.mxu0
    %3752 = vmatprep.mubr.bf16.mxu0 0
    %3753 = vmatmul.mubr.bf16.gmra.mxu0 %v3528
    %v3754 = vpop.f32.mrf.mxu0
    %v3755 = vadd.f32 %v3459, %v3754
    %v3756 = vpop.f32.mrf.mxu0
    %v3757 = vpop.f32.mrf.mxu0
    %v3758 = vadd.f32 %v3459, %v3757
    %v3759 = vpop.f32.mrf.mxu0
    %3760 = vmatprep.mubr.bf16.mxu0 0
    %3761 = vmatmul.mubr.bf16.gmra.mxu0 %v3531
    %v3762 = vpop.f32.mrf.mxu0
    %v3763 = vadd.f32 %v3459, %v3762
    %v3764 = vpop.f32.mrf.mxu0
    %v3765 = vpop.f32.mrf.mxu0
    %v3766 = vadd.f32 %v3459, %v3765
    %v3767 = vpop.f32.mrf.mxu0
    %3768 = vmatprep.mubr.bf16.mxu0 0
    %3769 = vmatmul.mubr.bf16.gmra.mxu0 %v3534
    %v3770 = vpop.f32.mrf.mxu0
    %v3771 = vadd.f32 %v3459, %v3770
    %v3772 = vpop.f32.mrf.mxu0
    %v3773 = vpop.f32.mrf.mxu0
    %v3774 = vadd.f32 %v3459, %v3773
    %v3775 = vpop.f32.mrf.mxu0
    %3776 = vmatprep.mubr.bf16.mxu0 0
    %3777 = vmatmul.mubr.bf16.gmra.mxu0 %v3537
    %v3778 = vpop.f32.mrf.mxu0
    %v3779 = vadd.f32 %v3459, %v3778
    %v3780 = vpop.f32.mrf.mxu0
    %v3781 = vpop.f32.mrf.mxu0
    %v3782 = vadd.f32 %v3459, %v3781
    %v3783 = vpop.f32.mrf.mxu0
    %3784 = vmatprep.mubr.bf16.mxu0 0
    %3785 = vmatmul.mubr.bf16.gmra.mxu0 %v3540
    %v3786 = vpop.f32.mrf.mxu0
    %v3787 = vadd.f32 %v3459, %v3786
    %v3788 = vpop.f32.mrf.mxu0
    %v3789 = vpop.f32.mrf.mxu0
    %v3790 = vadd.f32 %v3459, %v3789
    %v3791 = vpop.f32.mrf.mxu0
    %3792 = vmatprep.mubr.bf16.mxu0 0
    %3793 = vmatmul.mubr.bf16.gmra.mxu0 %v3543
    %v3794 = vpop.f32.mrf.mxu0
    %v3795 = vadd.f32 %v3459, %v3794
    %v3796 = vpop.f32.mrf.mxu0
    %v3797 = vpop.f32.mrf.mxu0
    %v3798 = vadd.f32 %v3459, %v3797
    %v3799 = vpop.f32.mrf.mxu0
    %3800 = vmatprep.mubr.bf16.mxu0 0
    %3801 = vmatmul.mubr.bf16.gmra.mxu0 %v3546
    %v3802 = vpop.f32.mrf.mxu0
    %v3803 = vadd.f32 %v3459, %v3802
    %v3804 = vpop.f32.mrf.mxu0
    %v3805 = vpop.f32.mrf.mxu0
    %v3806 = vadd.f32 %v3459, %v3805
    %v3807 = vpop.f32.mrf.mxu0
    %3808 = vmatprep.mubr.bf16.mxu0 0
    %3809 = vmatmul.mubr.bf16.gmra.mxu0 %v3549
    %v3810 = vpop.f32.mrf.mxu0
    %v3811 = vadd.f32 %v3459, %v3810
    %v3812 = vpop.f32.mrf.mxu0
    %v3813 = vpop.f32.mrf.mxu0
    %v3814 = vadd.f32 %v3459, %v3813
    %v3815 = vpop.f32.mrf.mxu0
    %3816 = vmatprep.mubr.bf16.mxu0 0
    %3817 = vmatmul.mubr.bf16.gmra.mxu0 %v3552
    %v3818 = vpop.f32.mrf.mxu0
    %v3819 = vadd.f32 %v3459, %v3818
    %v3820 = vpop.f32.mrf.mxu0
    %v3821 = vpop.f32.mrf.mxu0
    %v3822 = vadd.f32 %v3459, %v3821
    %v3823 = vpop.f32.mrf.mxu0
    %3824 = vmatprep.mubr.bf16.mxu0 0
    %3825 = vmatmul.mubr.bf16.gmra.mxu0 %v3555
    %v3826 = vpop.f32.mrf.mxu0
    %v3827 = vadd.f32 %v3459, %v3826
    %v3828 = vpop.f32.mrf.mxu0
    %v3829 = vpop.f32.mrf.mxu0
    %v3830 = vadd.f32 %v3459, %v3829
    %v3831 = vpop.f32.mrf.mxu0
    %3832 = vmatprep.mubr.bf16.mxu0 0
    %3833 = vmatmul.mubr.bf16.gmra.mxu0 %v3558
    %v3834 = vpop.f32.mrf.mxu0
    %v3835 = vadd.f32 %v3459, %v3834
    %v3836 = vpop.f32.mrf.mxu0
    %v3837 = vpop.f32.mrf.mxu0
    %v3838 = vadd.f32 %v3459, %v3837
    %v3839 = vpop.f32.mrf.mxu0
    %3840 = vmatprep.mubr.bf16.mxu0 0
    %3841 = vmatmul.mubr.bf16.gmra.mxu0 %v3561
    %v3842 = vpop.f32.mrf.mxu0
    %v3843 = vadd.f32 %v3459, %v3842
    %v3844 = vpop.f32.mrf.mxu0
    %v3845 = vpop.f32.mrf.mxu0
    %v3846 = vadd.f32 %v3459, %v3845
    %v3847 = vpop.f32.mrf.mxu0
    %3848 = vmatprep.mubr.bf16.mxu0 0
    %3849 = vmatmul.mubr.bf16.gmra.mxu0 %v3564
    %v3850 = vpop.f32.mrf.mxu0
    %v3851 = vadd.f32 %v3459, %v3850
    %v3852 = vpop.f32.mrf.mxu0
    %v3853 = vpop.f32.mrf.mxu0
    %v3854 = vadd.f32 %v3459, %v3853
    %v3855 = vpop.f32.mrf.mxu0
    %3856 = vmatprep.mubr.bf16.mxu0 0
    %3857 = vmatmul.mubr.bf16.gmra.mxu0 %v3567
    %v3858 = vpop.f32.mrf.mxu0
    %v3859 = vadd.f32 %v3459, %v3858
    %v3860 = vpop.f32.mrf.mxu0
    %v3861 = vpop.f32.mrf.mxu0
    %v3862 = vadd.f32 %v3459, %v3861
    %v3863 = vpop.f32.mrf.mxu0
    %3864 = vdwg.mxu0
    %v3865 = vmax.f32 %v3611, 0.0
    %v3866 = vmax.f32 %v3614, 0.0
    %v3867 = vmax.f32 %v3619, 0.0
    %v3868 = vmax.f32 %v3622, 0.0
    %v3869 = vmax.f32 %v3627, 0.0
    %v3870 = vmax.f32 %v3630, 0.0
    %v3871 = vmax.f32 %v3635, 0.0
    %v3872 = vmax.f32 %v3638, 0.0
    %v3873 = vmax.f32 %v3643, 0.0
    %v3874 = vmax.f32 %v3646, 0.0
    %v3875 = vmax.f32 %v3651, 0.0
    %v3876 = vmax.f32 %v3654, 0.0
    %v3877 = vmax.f32 %v3659, 0.0
    %v3878 = vmax.f32 %v3662, 0.0
    %v3879 = vmax.f32 %v3667, 0.0
    %v3880 = vmax.f32 %v3670, 0.0
    %v3881 = vmax.f32 %v3675, 0.0
    %v3882 = vmax.f32 %v3678, 0.0
    %v3883 = vmax.f32 %v3683, 0.0
    %v3884 = vmax.f32 %v3686, 0.0
    %v3885 = vmax.f32 %v3691, 0.0
    %v3886 = vmax.f32 %v3694, 0.0
    %v3887 = vmax.f32 %v3699, 0.0
    %v3888 = vmax.f32 %v3702, 0.0
    %v3889 = vmax.f32 %v3707, 0.0
    %v3890 = vmax.f32 %v3710, 0.0
    %v3891 = vmax.f32 %v3715, 0.0
    %v3892 = vmax.f32 %v3718, 0.0
    %v3893 = vmax.f32 %v3723, 0.0
    %v3894 = vmax.f32 %v3726, 0.0
    %v3895 = vmax.f32 %v3731, 0.0
    %v3896 = vmax.f32 %v3734, 0.0
    %v3897 = vmax.f32 %v3739, 0.0
    %v3898 = vmax.f32 %v3742, 0.0
    %v3899 = vmax.f32 %v3747, 0.0
    %v3900 = vmax.f32 %v3750, 0.0
    %v3901 = vmax.f32 %v3755, 0.0
    %v3902 = vmax.f32 %v3758, 0.0
    %v3903 = vmax.f32 %v3763, 0.0
    %v3904 = vmax.f32 %v3766, 0.0
    %v3905 = vmax.f32 %v3771, 0.0
    %v3906 = vmax.f32 %v3774, 0.0
    %v3907 = vmax.f32 %v3779, 0.0
    %v3908 = vmax.f32 %v3782, 0.0
    %v3909 = vmax.f32 %v3787, 0.0
    %v3910 = vmax.f32 %v3790, 0.0
    %v3911 = vmax.f32 %v3795, 0.0
    %v3912 = vmax.f32 %v3798, 0.0
    %v3913 = vmax.f32 %v3803, 0.0
    %v3914 = vmax.f32 %v3806, 0.0
    %v3915 = vmax.f32 %v3811, 0.0
    %v3916 = vmax.f32 %v3814, 0.0
    %v3917 = vmax.f32 %v3819, 0.0
    %v3918 = vmax.f32 %v3822, 0.0
    %v3919 = vmax.f32 %v3827, 0.0
    %v3920 = vmax.f32 %v3830, 0.0
    %v3921 = vmax.f32 %v3835, 0.0
    %v3922 = vmax.f32 %v3838, 0.0
    %v3923 = vmax.f32 %v3843, 0.0
    %v3924 = vmax.f32 %v3846, 0.0
    %v3925 = vmax.f32 %v3851, 0.0
    %v3926 = vmax.f32 %v3854, 0.0
    %v3927 = vmax.f32 %v3859, 0.0
    %v3928 = vmax.f32 %v3862, 0.0
    %v3929 = vmax.f32 %v3865, %v3867
    %v3930 = vmax.f32 %v3866, %v3868
    %v3931 = vmax.f32 %v3869, %v3871
    %v3932 = vmax.f32 %v3870, %v3872
    %v3933 = vmax.f32 %v3873, %v3875
    %v3934 = vmax.f32 %v3874, %v3876
    %v3935 = vmax.f32 %v3877, %v3879
    %v3936 = vmax.f32 %v3878, %v3880
    %v3937 = vmax.f32 %v3881, %v3883
    %v3938 = vmax.f32 %v3882, %v3884
    %v3939 = vmax.f32 %v3885, %v3887
    %v3940 = vmax.f32 %v3886, %v3888
    %v3941 = vmax.f32 %v3889, %v3891
    %v3942 = vmax.f32 %v3890, %v3892
    %v3943 = vmax.f32 %v3893, %v3895
    %v3944 = vmax.f32 %v3894, %v3896
    %v3945 = vmax.f32 %v3897, %v3899
    %v3946 = vmax.f32 %v3898, %v3900
    %v3947 = vmax.f32 %v3901, %v3903
    %v3948 = vmax.f32 %v3902, %v3904
    %v3949 = vmax.f32 %v3905, %v3907
    %v3950 = vmax.f32 %v3906, %v3908
    %v3951 = vmax.f32 %v3909, %v3911
    %v3952 = vmax.f32 %v3910, %v3912
    %v3953 = vmax.f32 %v3913, %v3915
    %v3954 = vmax.f32 %v3914, %v3916
    %v3955 = vmax.f32 %v3917, %v3919
    %v3956 = vmax.f32 %v3918, %v3920
    %v3957 = vmax.f32 %v3921, %v3923
    %v3958 = vmax.f32 %v3922, %v3924
    %v3959 = vmax.f32 %v3925, %v3927
    %v3960 = vmax.f32 %v3926, %v3928
    %vm3961 = vcmask 31744
    %3962 = vst.msk [vmem:[#allocation3] sm:$0xff] %vm3961, %v3929
    %3963 = vst.msk [vmem:[#allocation3 + $0x8] sm:$0xff] %vm3961, %v3930
    %3964 = vst.msk [vmem:[#allocation3 + $0x10] sm:$0xff] %vm3961, %v3931
    %3965 = vst.msk [vmem:[#allocation3 + $0x18] sm:$0xff] %vm3961, %v3932
    %3966 = vst.msk [vmem:[#allocation3 + $0x20] sm:$0xff] %vm3961, %v3933
    %3967 = vst.msk [vmem:[#allocation3 + $0x28] sm:$0xff] %vm3961, %v3934
    %3968 = vst.msk [vmem:[#allocation3 + $0x30] sm:$0xff] %vm3961, %v3935
    %3969 = vst.msk [vmem:[#allocation3 + $0x38] sm:$0xff] %vm3961, %v3936
    %3970 = vst.msk [vmem:[#allocation3 + $0x40] sm:$0xff] %vm3961, %v3937
    %3971 = vst.msk [vmem:[#allocation3 + $0x48] sm:$0xff] %vm3961, %v3938
    %3972 = vst.msk [vmem:[#allocation3 + $0x50] sm:$0xff] %vm3961, %v3939
    %3973 = vst.msk [vmem:[#allocation3 + $0x58] sm:$0xff] %vm3961, %v3940
    %3974 = vst.msk [vmem:[#allocation3 + $0x60] sm:$0xff] %vm3961, %v3941
    %3975 = vst.msk [vmem:[#allocation3 + $0x68] sm:$0xff] %vm3961, %v3942
    %3976 = vst.msk [vmem:[#allocation3 + $0x70] sm:$0xff] %vm3961, %v3943
    %3977 = vst.msk [vmem:[#allocation3 + $0x78] sm:$0xff] %vm3961, %v3944
    %3978 = vst.msk [vmem:[#allocation3 + $0x80] sm:$0xff] %vm3961, %v3945
    %3979 = vst.msk [vmem:[#allocation3 + $0x88] sm:$0xff] %vm3961, %v3946
    %3980 = vst.msk [vmem:[#allocation3 + $0x90] sm:$0xff] %vm3961, %v3947
    %3981 = vst.msk [vmem:[#allocation3 + $0x98] sm:$0xff] %vm3961, %v3948
    %3982 = vst.msk [vmem:[#allocation3 + $0xa0] sm:$0xff] %vm3961, %v3949
    %3983 = vst.msk [vmem:[#allocation3 + $0xa8] sm:$0xff] %vm3961, %v3950
    %3984 = vst.msk [vmem:[#allocation3 + $0xb0] sm:$0xff] %vm3961, %v3951
    %3985 = vst.msk [vmem:[#allocation3 + $0xb8] sm:$0xff] %vm3961, %v3952
    %3986 = vst.msk [vmem:[#allocation3 + $0xc0] sm:$0xff] %vm3961, %v3953
    %3987 = vst.msk [vmem:[#allocation3 + $0xc8] sm:$0xff] %vm3961, %v3954
    %3988 = vst.msk [vmem:[#allocation3 + $0xd0] sm:$0xff] %vm3961, %v3955
    %3989 = vst.msk [vmem:[#allocation3 + $0xd8] sm:$0xff] %vm3961, %v3956
    %3990 = vst.msk [vmem:[#allocation3 + $0xe0] sm:$0xff] %vm3961, %v3957
    %3991 = vst.msk [vmem:[#allocation3 + $0xe8] sm:$0xff] %vm3961, %v3958
    %3992 = vst.msk [vmem:[#allocation3 + $0xf0] sm:$0xff] %vm3961, %v3959
    %3993 = vst.msk [vmem:[#allocation3 + $0xf8] sm:$0xff] %vm3961, %v3960
    %v3994 = vld [vmem:[#allocation3] ss:$2 sm:$0xff]
    %s3995 = scalar_lea.vmem [#allocation3], 16
    %v3996 = vld [vmem:[%s3995] ss:$2 sm:$0xff]
    %s3997 = scalar_lea.vmem [#allocation3], 32
    %v3998 = vld [vmem:[%s3997] ss:$2 sm:$0xff]
    %s3999 = scalar_lea.vmem [#allocation3], 48
    %v4000 = vld [vmem:[%s3999] ss:$2 sm:$0xff]
    %s4001 = scalar_lea.vmem [#allocation3], 64
    %v4002 = vld [vmem:[%s4001] ss:$2 sm:$0xff]
    %s4003 = scalar_lea.vmem [#allocation3], 80
    %v4004 = vld [vmem:[%s4003] ss:$2 sm:$0xff]
    %s4005 = scalar_lea.vmem [#allocation3], 96
    %v4006 = vld [vmem:[%s4005] ss:$2 sm:$0xff]
    %s4007 = scalar_lea.vmem [#allocation3], 112
    %v4008 = vld [vmem:[%s4007] ss:$2 sm:$0xff]
    %s4009 = scalar_lea.vmem [#allocation3], 128
    %v4010 = vld [vmem:[%s4009] ss:$2 sm:$0xff]
    %s4011 = scalar_lea.vmem [#allocation3], 144
    %v4012 = vld [vmem:[%s4011] ss:$2 sm:$0xff]
    %s4013 = scalar_lea.vmem [#allocation3], 160
    %v4014 = vld [vmem:[%s4013] ss:$2 sm:$0xff]
    %s4015 = scalar_lea.vmem [#allocation3], 176
    %v4016 = vld [vmem:[%s4015] ss:$2 sm:$0xff]
    %s4017 = scalar_lea.vmem [#allocation3], 192
    %v4018 = vld [vmem:[%s4017] ss:$2 sm:$0xff]
    %s4019 = scalar_lea.vmem [#allocation3], 208
    %v4020 = vld [vmem:[%s4019] ss:$2 sm:$0xff]
    %s4021 = scalar_lea.vmem [#allocation3], 224
    %v4022 = vld [vmem:[%s4021] ss:$2 sm:$0xff]
    %s4023 = scalar_lea.vmem [#allocation3], 240
    %v4024 = vld [vmem:[%s4023] ss:$2 sm:$0xff]
    %s4025 = scalar_lea.vmem [#allocation3], 1
    %v4026 = vld [vmem:[%s4025] ss:$2 sm:$0xff]
    %s4027 = scalar_lea.vmem [#allocation3], 17
    %v4028 = vld [vmem:[%s4027] ss:$2 sm:$0xff]
    %s4029 = scalar_lea.vmem [#allocation3], 33
    %v4030 = vld [vmem:[%s4029] ss:$2 sm:$0xff]
    %s4031 = scalar_lea.vmem [#allocation3], 49
    %v4032 = vld [vmem:[%s4031] ss:$2 sm:$0xff]
    %s4033 = scalar_lea.vmem [#allocation3], 65
    %v4034 = vld [vmem:[%s4033] ss:$2 sm:$0xff]
    %s4035 = scalar_lea.vmem [#allocation3], 81
    %v4036 = vld [vmem:[%s4035] ss:$2 sm:$0xff]
    %s4037 = scalar_lea.vmem [#allocation3], 97
    %v4038 = vld [vmem:[%s4037] ss:$2 sm:$0xff]
    %s4039 = scalar_lea.vmem [#allocation3], 113
    %v4040 = vld [vmem:[%s4039] ss:$2 sm:$0xff]
    %s4041 = scalar_lea.vmem [#allocation3], 129
    %v4042 = vld [vmem:[%s4041] ss:$2 sm:$0xff]
    %s4043 = scalar_lea.vmem [#allocation3], 145
    %v4044 = vld [vmem:[%s4043] ss:$2 sm:$0xff]
    %s4045 = scalar_lea.vmem [#allocation3], 161
    %v4046 = vld [vmem:[%s4045] ss:$2 sm:$0xff]
    %s4047 = scalar_lea.vmem [#allocation3], 177
    %v4048 = vld [vmem:[%s4047] ss:$2 sm:$0xff]
    %s4049 = scalar_lea.vmem [#allocation3], 193
    %v4050 = vld [vmem:[%s4049] ss:$2 sm:$0xff]
    %s4051 = scalar_lea.vmem [#allocation3], 209
    %v4052 = vld [vmem:[%s4051] ss:$2 sm:$0xff]
    %s4053 = scalar_lea.vmem [#allocation3], 225
    %v4054 = vld [vmem:[%s4053] ss:$2 sm:$0xff]
    %s4055 = scalar_lea.vmem [#allocation3], 241
    %v4056 = vld [vmem:[%s4055] ss:$2 sm:$0xff]
    %v4057 = vmax.f32 %v3994, %v4026
    %v4058 = vmax.f32 %v3996, %v4028
    %v4059 = vmax.f32 %v3998, %v4030
    %v4060 = vmax.f32 %v4000, %v4032
    %v4061 = vmax.f32 %v4002, %v4034
    %v4062 = vmax.f32 %v4004, %v4036
    %v4063 = vmax.f32 %v4006, %v4038
    %v4064 = vmax.f32 %v4008, %v4040
    %v4065 = vmax.f32 %v4010, %v4042
    %v4066 = vmax.f32 %v4012, %v4044
    %v4067 = vmax.f32 %v4014, %v4046
    %v4068 = vmax.f32 %v4016, %v4048
    %v4069 = vmax.f32 %v4018, %v4050
    %v4070 = vmax.f32 %v4020, %v4052
    %v4071 = vmax.f32 %v4022, %v4054
    %v4072 = vmax.f32 %v4024, %v4056
    %4073 = vst.msk [vmem:[#allocation4] sm:$0xff] %vm3961, 0.0
    %4074 = vst.msk [vmem:[#allocation4 + $0x8] sm:$0xff] %vm3961, 0.0
    %4075 = vst.msk [vmem:[#allocation4 + $0x10] sm:$0xff] %vm3961, 0.0
    %4076 = vst.msk [vmem:[#allocation4 + $0xf0] sm:$0xff] %vm3961, 0.0
    %4077 = vst.msk [vmem:[#allocation4 + $0xf8] sm:$0xff] %vm3961, 0.0
    %4078 = vst.msk [vmem:[#allocation4 + $0x100] sm:$0xff] %vm3961, 0.0
    %s4079 = scalar_lea.vmem [#allocation4], 216
    %4080 = vst.msk [vmem:[%s4079] sm:$0xff] %vm3961, 0.0
    %4081 = vst.msk [vmem:[%s4079 + $0x8] sm:$0xff] %vm3961, 0.0
    %4082 = vst.msk [vmem:[%s4079 + $0x10] sm:$0xff] %vm3961, 0.0
    %4083 = vst.msk [vmem:[%s4079 + $0xf0] sm:$0xff] %vm3961, 0.0
    %4084 = vst.msk [vmem:[%s4079 + $0xf8] sm:$0xff] %vm3961, 0.0
    %4085 = vst.msk [vmem:[%s4079 + $0x100] sm:$0xff] %vm3961, 0.0
    %vm4086 = vcmask 24576
    %4087 = vst.msk [vmem:[#allocation4 + $0x7] sm:$0x1] %vm4086, 0.0
    %4088 = vst.msk [vmem:[#allocation4 + $0x1f] sm:$0x1] %vm4086, 0.0
    %4089 = vst.msk [vmem:[#allocation4 + $0x37] sm:$0x1] %vm4086, 0.0
    %4090 = vst.msk [vmem:[#allocation4 + $0x4f] sm:$0x1] %vm4086, 0.0
    %4091 = vst.msk [vmem:[#allocation4 + $0x67] sm:$0x1] %vm4086, 0.0
    %4092 = vst.msk [vmem:[#allocation4 + $0x7f] sm:$0x1] %vm4086, 0.0
    %4093 = vst.msk [vmem:[#allocation4 + $0x97] sm:$0x1] %vm4086, 0.0
    %4094 = vst.msk [vmem:[#allocation4 + $0xaf] sm:$0x1] %vm4086, 0.0
    %4095 = vst.msk [vmem:[#allocation4 + $0xc7] sm:$0x1] %vm4086, 0.0
    %4096 = vst.msk [vmem:[#allocation4 + $0xdf] sm:$0x1] %vm4086, 0.0
    %4097 = vst.msk [vmem:[#allocation4 + $0xf7] sm:$0x1] %vm4086, 0.0
    %4098 = vst.msk [vmem:[#allocation4 + $0x10f] sm:$0x1] %vm4086, 0.0
    %4099 = vst.msk [vmem:[#allocation4 + $0x127] sm:$0x1] %vm4086, 0.0
    %4100 = vst.msk [vmem:[#allocation4 + $0x13f] sm:$0x1] %vm4086, 0.0
    %4101 = vst.msk [vmem:[#allocation4 + $0x157] sm:$0x1] %vm4086, 0.0
    %4102 = vst.msk [vmem:[#allocation4 + $0x16f] sm:$0x1] %vm4086, 0.0
    %4103 = vst.msk [vmem:[#allocation4 + $0x187] sm:$0x1] %vm4086, 0.0
    %4104 = vst.msk [vmem:[#allocation4 + $0x19f] sm:$0x1] %vm4086, 0.0
    %4105 = vst.msk [vmem:[#allocation4 + $0x1b7] sm:$0x1] %vm4086, 0.0
    %4106 = vst.msk [vmem:[#allocation4 + $0x1cf] sm:$0x1] %vm4086, 0.0
    %4107 = vst.msk [vmem:[#allocation4 + $0x10] sm:$0x1] %vm4086, 0.0
    %4108 = vst.msk [vmem:[#allocation4 + $0x28] sm:$0x1] %vm4086, 0.0
    %4109 = vst.msk [vmem:[#allocation4 + $0x40] sm:$0x1] %vm4086, 0.0
    %4110 = vst.msk [vmem:[#allocation4 + $0x58] sm:$0x1] %vm4086, 0.0
    %4111 = vst.msk [vmem:[#allocation4 + $0x70] sm:$0x1] %vm4086, 0.0
    %4112 = vst.msk [vmem:[#allocation4 + $0x88] sm:$0x1] %vm4086, 0.0
    %4113 = vst.msk [vmem:[#allocation4 + $0xa0] sm:$0x1] %vm4086, 0.0
    %4114 = vst.msk [vmem:[#allocation4 + $0xb8] sm:$0x1] %vm4086, 0.0
    %4115 = vst.msk [vmem:[#allocation4 + $0xd0] sm:$0x1] %vm4086, 0.0
    %4116 = vst.msk [vmem:[#allocation4 + $0xe8] sm:$0x1] %vm4086, 0.0
    %4117 = vst.msk [vmem:[#allocation4 + $0x100] sm:$0x1] %vm4086, 0.0
    %4118 = vst.msk [vmem:[#allocation4 + $0x118] sm:$0x1] %vm4086, 0.0
    %4119 = vst.msk [vmem:[#allocation4 + $0x130] sm:$0x1] %vm4086, 0.0
    %4120 = vst.msk [vmem:[#allocation4 + $0x148] sm:$0x1] %vm4086, 0.0
    %4121 = vst.msk [vmem:[#allocation4 + $0x160] sm:$0x1] %vm4086, 0.0
    %4122 = vst.msk [vmem:[#allocation4 + $0x178] sm:$0x1] %vm4086, 0.0
    %4123 = vst.msk [vmem:[#allocation4 + $0x190] sm:$0x1] %vm4086, 0.0
    %4124 = vst.msk [vmem:[#allocation4 + $0x1a8] sm:$0x1] %vm4086, 0.0
    %4125 = vst.msk [vmem:[#allocation4 + $0x1c0] sm:$0x1] %vm4086, 0.0
    %4126 = vst.msk [vmem:[#allocation4 + $0x1d8] sm:$0x1] %vm4086, 0.0
    %s4127 = scalar_lea.vmem [#allocation4], 24
    %4128 = vst.msk [vmem:[%s4127 + $0x8] sm:$0xff] %vm3961, %v4057
    %4129 = vst.msk [vmem:[%s4127 + $0x20] sm:$0xff] %vm3961, %v4058
    %4130 = vst.msk [vmem:[%s4127 + $0x38] sm:$0xff] %vm3961, %v4059
    %4131 = vst.msk [vmem:[%s4127 + $0x50] sm:$0xff] %vm3961, %v4060
    %4132 = vst.msk [vmem:[%s4127 + $0x68] sm:$0xff] %vm3961, %v4061
    %4133 = vst.msk [vmem:[%s4127 + $0x80] sm:$0xff] %vm3961, %v4062
    %4134 = vst.msk [vmem:[%s4127 + $0x98] sm:$0xff] %vm3961, %v4063
    %4135 = vst.msk [vmem:[%s4127 + $0xb0] sm:$0xff] %vm3961, %v4064
    %4136 = vst.msk [vmem:[%s4127 + $0xf8] sm:$0xff] %vm3961, %v4065
    %4137 = vst.msk [vmem:[%s4127 + $0x110] sm:$0xff] %vm3961, %v4066
    %4138 = vst.msk [vmem:[%s4127 + $0x128] sm:$0xff] %vm3961, %v4067
    %4139 = vst.msk [vmem:[%s4127 + $0x140] sm:$0xff] %vm3961, %v4068
    %4140 = vst.msk [vmem:[%s4127 + $0x158] sm:$0xff] %vm3961, %v4069
    %4141 = vst.msk [vmem:[%s4127 + $0x170] sm:$0xff] %vm3961, %v4070
    %4142 = vst.msk [vmem:[%s4127 + $0x188] sm:$0xff] %vm3961, %v4071
    %4143 = vst.msk [vmem:[%s4127 + $0x1a0] sm:$0xff] %vm3961, %v4072
    %v4144 = vld [vmem:[#allocation4 + $0x7] sm:$0xff]
    %v4145 = vld [vmem:[#allocation4 + $0x1f] sm:$0xff]
    %v4146 = vld [vmem:[#allocation4 + $0x37] sm:$0xff]
    %v4147 = vld [vmem:[#allocation4 + $0x4f] sm:$0xff]
    %v4148 = vld [vmem:[#allocation4 + $0x67] sm:$0xff]
    %v4149 = vld [vmem:[#allocation4 + $0x7f] sm:$0xff]
    %v4150 = vld [vmem:[#allocation4 + $0x97] sm:$0xff]
    %v4151 = vld [vmem:[#allocation4 + $0xaf] sm:$0xff]
    %v4152 = vld [vmem:[#allocation4 + $0xf7] sm:$0xff]
    %v4153 = vld [vmem:[#allocation4 + $0x10f] sm:$0xff]
    %v4154 = vld [vmem:[#allocation4 + $0x127] sm:$0xff]
    %v4155 = vld [vmem:[#allocation4 + $0x13f] sm:$0xff]
    %v4156 = vld [vmem:[#allocation4 + $0x157] sm:$0xff]
    %v4157 = vld [vmem:[#allocation4 + $0x16f] sm:$0xff]
    %v4158 = vld [vmem:[#allocation4 + $0x187] sm:$0xff]
    %v4159 = vld [vmem:[#allocation4 + $0x19f] sm:$0xff]
    %v4160 = vld [vmem:[#allocation4 + $0x8] sm:$0xff]
    %v4161 = vld [vmem:[#allocation4 + $0x20] sm:$0xff]
    %v4162 = vld [vmem:[#allocation4 + $0x38] sm:$0xff]
    %v4163 = vld [vmem:[#allocation4 + $0x50] sm:$0xff]
    %v4164 = vld [vmem:[#allocation4 + $0x68] sm:$0xff]
    %v4165 = vld [vmem:[#allocation4 + $0x80] sm:$0xff]
    %v4166 = vld [vmem:[#allocation4 + $0x98] sm:$0xff]
    %v4167 = vld [vmem:[#allocation4 + $0xb0] sm:$0xff]
    %v4168 = vld [vmem:[#allocation4 + $0xf8] sm:$0xff]
    %v4169 = vld [vmem:[#allocation4 + $0x110] sm:$0xff]
    %v4170 = vld [vmem:[#allocation4 + $0x128] sm:$0xff]
    %v4171 = vld [vmem:[#allocation4 + $0x140] sm:$0xff]
    %v4172 = vld [vmem:[#allocation4 + $0x158] sm:$0xff]
    %v4173 = vld [vmem:[#allocation4 + $0x170] sm:$0xff]
    %v4174 = vld [vmem:[#allocation4 + $0x188] sm:$0xff]
    %v4175 = vld [vmem:[#allocation4 + $0x1a0] sm:$0xff]
    %v4176 = vld [vmem:[#allocation4 + $0x9] sm:$0xff]
    %v4177 = vld [vmem:[#allocation4 + $0x21] sm:$0xff]
    %v4178 = vld [vmem:[#allocation4 + $0x39] sm:$0xff]
    %v4179 = vld [vmem:[#allocation4 + $0x51] sm:$0xff]
    %v4180 = vld [vmem:[#allocation4 + $0x69] sm:$0xff]
    %v4181 = vld [vmem:[#allocation4 + $0x81] sm:$0xff]
    %v4182 = vld [vmem:[#allocation4 + $0x99] sm:$0xff]
    %v4183 = vld [vmem:[#allocation4 + $0xb1] sm:$0xff]
    %v4184 = vld [vmem:[#allocation4 + $0xf9] sm:$0xff]
    %v4185 = vld [vmem:[#allocation4 + $0x111] sm:$0xff]
    %v4186 = vld [vmem:[#allocation4 + $0x129] sm:$0xff]
    %v4187 = vld [vmem:[#allocation4 + $0x141] sm:$0xff]
    %v4188 = vld [vmem:[#allocation4 + $0x159] sm:$0xff]
    %v4189 = vld [vmem:[#allocation4 + $0x171] sm:$0xff]
    %v4190 = vld [vmem:[#allocation4 + $0x189] sm:$0xff]
    %v4191 = vld [vmem:[#allocation4 + $0x1a1] sm:$0xff]
    %v4192 = vld [vmem:[%s4127 + $0x7] sm:$0xff]
    %v4193 = vld [vmem:[%s4127 + $0x1f] sm:$0xff]
    %v4194 = vld [vmem:[%s4127 + $0x37] sm:$0xff]
    %v4195 = vld [vmem:[%s4127 + $0x4f] sm:$0xff]
    %v4196 = vld [vmem:[%s4127 + $0x67] sm:$0xff]
    %v4197 = vld [vmem:[%s4127 + $0x7f] sm:$0xff]
    %v4198 = vld [vmem:[%s4127 + $0x97] sm:$0xff]
    %v4199 = vld [vmem:[%s4127 + $0xaf] sm:$0xff]
    %v4200 = vld [vmem:[%s4127 + $0xf7] sm:$0xff]
    %v4201 = vld [vmem:[%s4127 + $0x10f] sm:$0xff]
    %v4202 = vld [vmem:[%s4127 + $0x127] sm:$0xff]
    %v4203 = vld [vmem:[%s4127 + $0x13f] sm:$0xff]
    %v4204 = vld [vmem:[%s4127 + $0x157] sm:$0xff]
    %v4205 = vld [vmem:[%s4127 + $0x16f] sm:$0xff]
    %v4206 = vld [vmem:[%s4127 + $0x187] sm:$0xff]
    %v4207 = vld [vmem:[%s4127 + $0x19f] sm:$0xff]
    %v4208 = vld [vmem:[%s4127 + $0x8] sm:$0xff]
    %v4209 = vld [vmem:[%s4127 + $0x20] sm:$0xff]
    %v4210 = vld [vmem:[%s4127 + $0x38] sm:$0xff]
    %v4211 = vld [vmem:[%s4127 + $0x50] sm:$0xff]
    %v4212 = vld [vmem:[%s4127 + $0x68] sm:$0xff]
    %v4213 = vld [vmem:[%s4127 + $0x80] sm:$0xff]
    %v4214 = vld [vmem:[%s4127 + $0x98] sm:$0xff]
    %v4215 = vld [vmem:[%s4127 + $0xb0] sm:$0xff]
    %v4216 = vld [vmem:[%s4127 + $0xf8] sm:$0xff]
    %v4217 = vld [vmem:[%s4127 + $0x110] sm:$0xff]
    %v4218 = vld [vmem:[%s4127 + $0x128] sm:$0xff]
    %v4219 = vld [vmem:[%s4127 + $0x140] sm:$0xff]
    %v4220 = vld [vmem:[%s4127 + $0x158] sm:$0xff]
    %v4221 = vld [vmem:[%s4127 + $0x170] sm:$0xff]
    %v4222 = vld [vmem:[%s4127 + $0x188] sm:$0xff]
    %v4223 = vld [vmem:[%s4127 + $0x1a0] sm:$0xff]
    %v4224 = vld [vmem:[%s4127 + $0x9] sm:$0xff]
    %v4225 = vld [vmem:[%s4127 + $0x21] sm:$0xff]
    %v4226 = vld [vmem:[%s4127 + $0x39] sm:$0xff]
    %v4227 = vld [vmem:[%s4127 + $0x51] sm:$0xff]
    %v4228 = vld [vmem:[%s4127 + $0x69] sm:$0xff]
    %v4229 = vld [vmem:[%s4127 + $0x81] sm:$0xff]
    %v4230 = vld [vmem:[%s4127 + $0x99] sm:$0xff]
    %v4231 = vld [vmem:[%s4127 + $0xb1] sm:$0xff]
    %v4232 = vld [vmem:[%s4127 + $0xf9] sm:$0xff]
    %v4233 = vld [vmem:[%s4127 + $0x111] sm:$0xff]
    %v4234 = vld [vmem:[%s4127 + $0x129] sm:$0xff]
    %v4235 = vld [vmem:[%s4127 + $0x141] sm:$0xff]
    %v4236 = vld [vmem:[%s4127 + $0x159] sm:$0xff]
    %v4237 = vld [vmem:[%s4127 + $0x171] sm:$0xff]
    %v4238 = vld [vmem:[%s4127 + $0x189] sm:$0xff]
    %v4239 = vld [vmem:[%s4127 + $0x1a1] sm:$0xff]
    %s4240 = scalar_lea.vmem [#allocation4], 48
    %v4241 = vld [vmem:[%s4240 + $0x7] sm:$0xff]
    %v4242 = vld [vmem:[%s4240 + $0x1f] sm:$0xff]
    %v4243 = vld [vmem:[%s4240 + $0x37] sm:$0xff]
    %v4244 = vld [vmem:[%s4240 + $0x4f] sm:$0xff]
    %v4245 = vld [vmem:[%s4240 + $0x67] sm:$0xff]
    %v4246 = vld [vmem:[%s4240 + $0x7f] sm:$0xff]
    %v4247 = vld [vmem:[%s4240 + $0x97] sm:$0xff]
    %v4248 = vld [vmem:[%s4240 + $0xaf] sm:$0xff]
    %v4249 = vld [vmem:[%s4240 + $0xf7] sm:$0xff]
    %v4250 = vld [vmem:[%s4240 + $0x10f] sm:$0xff]
    %v4251 = vld [vmem:[%s4240 + $0x127] sm:$0xff]
    %v4252 = vld [vmem:[%s4240 + $0x13f] sm:$0xff]
    %v4253 = vld [vmem:[%s4240 + $0x157] sm:$0xff]
    %v4254 = vld [vmem:[%s4240 + $0x16f] sm:$0xff]
    %v4255 = vld [vmem:[%s4240 + $0x187] sm:$0xff]
    %v4256 = vld [vmem:[%s4240 + $0x19f] sm:$0xff]
    %v4257 = vld [vmem:[%s4240 + $0x8] sm:$0xff]
    %v4258 = vld [vmem:[%s4240 + $0x20] sm:$0xff]
    %v4259 = vld [vmem:[%s4240 + $0x38] sm:$0xff]
    %v4260 = vld [vmem:[%s4240 + $0x50] sm:$0xff]
    %v4261 = vld [vmem:[%s4240 + $0x68] sm:$0xff]
    %v4262 = vld [vmem:[%s4240 + $0x80] sm:$0xff]
    %v4263 = vld [vmem:[%s4240 + $0x98] sm:$0xff]
    %v4264 = vld [vmem:[%s4240 + $0xb0] sm:$0xff]
    %v4265 = vld [vmem:[%s4240 + $0xf8] sm:$0xff]
    %v4266 = vld [vmem:[%s4240 + $0x110] sm:$0xff]
    %v4267 = vld [vmem:[%s4240 + $0x128] sm:$0xff]
    %v4268 = vld [vmem:[%s4240 + $0x140] sm:$0xff]
    %v4269 = vld [vmem:[%s4240 + $0x158] sm:$0xff]
    %v4270 = vld [vmem:[%s4240 + $0x170] sm:$0xff]
    %v4271 = vld [vmem:[%s4240 + $0x188] sm:$0xff]
    %v4272 = vld [vmem:[%s4240 + $0x1a0] sm:$0xff]
    %v4273 = vld [vmem:[%s4240 + $0x9] sm:$0xff]
    %v4274 = vld [vmem:[%s4240 + $0x21] sm:$0xff]
    %v4275 = vld [vmem:[%s4240 + $0x39] sm:$0xff]
    %v4276 = vld [vmem:[%s4240 + $0x51] sm:$0xff]
    %v4277 = vld [vmem:[%s4240 + $0x69] sm:$0xff]
    %v4278 = vld [vmem:[%s4240 + $0x81] sm:$0xff]
    %v4279 = vld [vmem:[%s4240 + $0x99] sm:$0xff]
    %v4280 = vld [vmem:[%s4240 + $0xb1] sm:$0xff]
    %v4281 = vld [vmem:[%s4240 + $0xf9] sm:$0xff]
    %v4282 = vld [vmem:[%s4240 + $0x111] sm:$0xff]
    %v4283 = vld [vmem:[%s4240 + $0x129] sm:$0xff]
    %v4284 = vld [vmem:[%s4240 + $0x141] sm:$0xff]
    %v4285 = vld [vmem:[%s4240 + $0x159] sm:$0xff]
    %v4286 = vld [vmem:[%s4240 + $0x171] sm:$0xff]
    %v4287 = vld [vmem:[%s4240 + $0x189] sm:$0xff]
    %v4288 = vld [vmem:[%s4240 + $0x1a1] sm:$0xff]
    %4305 = vrot.lane.b32.xlu0 %v4160, 4
    %v4306 = vpop.permute.xlu0 %4305
    %4307 = vrot.lane.b32.xlu0 %v4161, 4
    %v4308 = vpop.permute.xlu0 %4307
    %4309 = vrot.lane.b32.xlu0 %v4162, 4
    %v4310 = vpop.permute.xlu0 %4309
    %4311 = vrot.lane.b32.xlu0 %v4163, 4
    %v4312 = vpop.permute.xlu0 %4311
    %4313 = vrot.lane.b32.xlu0 %v4164, 4
    %v4314 = vpop.permute.xlu0 %4313
    %4315 = vrot.lane.b32.xlu0 %v4165, 4
    %v4316 = vpop.permute.xlu0 %4315
    %4317 = vrot.lane.b32.xlu0 %v4166, 4
    %v4318 = vpop.permute.xlu0 %4317
    %4319 = vrot.lane.b32.xlu0 %v4167, 4
    %v4320 = vpop.permute.xlu0 %4319
    %4321 = vrot.lane.b32.xlu0 %v4168, 4
    %v4322 = vpop.permute.xlu0 %4321
    %4323 = vrot.lane.b32.xlu0 %v4169, 4
    %v4324 = vpop.permute.xlu0 %4323
    %4325 = vrot.lane.b32.xlu0 %v4170, 4
    %v4326 = vpop.permute.xlu0 %4325
    %4327 = vrot.lane.b32.xlu0 %v4171, 4
    %v4328 = vpop.permute.xlu0 %4327
    %4329 = vrot.lane.b32.xlu0 %v4172, 4
    %v4330 = vpop.permute.xlu0 %4329
    %4331 = vrot.lane.b32.xlu0 %v4173, 4
    %v4332 = vpop.permute.xlu0 %4331
    %4333 = vrot.lane.b32.xlu0 %v4174, 4
    %v4334 = vpop.permute.xlu0 %4333
    %4335 = vrot.lane.b32.xlu0 %v4175, 4
    %v4336 = vpop.permute.xlu0 %4335
    %4369 = vrot.lane.b32.xlu0 %v4176, 8
    %v4370 = vpop.permute.xlu0 %4369
    %4371 = vrot.lane.b32.xlu0 %v4177, 8
    %v4372 = vpop.permute.xlu0 %4371
    %4373 = vrot.lane.b32.xlu0 %v4178, 8
    %v4374 = vpop.permute.xlu0 %4373
    %4375 = vrot.lane.b32.xlu0 %v4179, 8
    %v4376 = vpop.permute.xlu0 %4375
    %4377 = vrot.lane.b32.xlu0 %v4180, 8
    %v4378 = vpop.permute.xlu0 %4377
    %4379 = vrot.lane.b32.xlu0 %v4181, 8
    %v4380 = vpop.permute.xlu0 %4379
    %4381 = vrot.lane.b32.xlu0 %v4182, 8
    %v4382 = vpop.permute.xlu0 %4381
    %4383 = vrot.lane.b32.xlu0 %v4183, 8
    %v4384 = vpop.permute.xlu0 %4383
    %4385 = vrot.lane.b32.xlu0 %v4184, 8
    %v4386 = vpop.permute.xlu0 %4385
    %4387 = vrot.lane.b32.xlu0 %v4185, 8
    %v4388 = vpop.permute.xlu0 %4387
    %4389 = vrot.lane.b32.xlu0 %v4186, 8
    %v4390 = vpop.permute.xlu0 %4389
    %4391 = vrot.lane.b32.xlu0 %v4187, 8
    %v4392 = vpop.permute.xlu0 %4391
    %4393 = vrot.lane.b32.xlu0 %v4188, 8
    %v4394 = vpop.permute.xlu0 %4393
    %4395 = vrot.lane.b32.xlu0 %v4189, 8
    %v4396 = vpop.permute.xlu0 %4395
    %4397 = vrot.lane.b32.xlu0 %v4190, 8
    %v4398 = vpop.permute.xlu0 %4397
    %4399 = vrot.lane.b32.xlu0 %v4191, 8
    %v4400 = vpop.permute.xlu0 %4399
    %4433 = vrot.lane.b32.xlu0 %v4192, 12
    %v4434 = vpop.permute.xlu0 %4433
    %4435 = vrot.lane.b32.xlu0 %v4193, 12
    %v4436 = vpop.permute.xlu0 %4435
    %4437 = vrot.lane.b32.xlu0 %v4194, 12
    %v4438 = vpop.permute.xlu0 %4437
    %4439 = vrot.lane.b32.xlu0 %v4195, 12
    %v4440 = vpop.permute.xlu0 %4439
    %4441 = vrot.lane.b32.xlu0 %v4196, 12
    %v4442 = vpop.permute.xlu0 %4441
    %4443 = vrot.lane.b32.xlu0 %v4197, 12
    %v4444 = vpop.permute.xlu0 %4443
    %4445 = vrot.lane.b32.xlu0 %v4198, 12
    %v4446 = vpop.permute.xlu0 %4445
    %4447 = vrot.lane.b32.xlu0 %v4199, 12
    %v4448 = vpop.permute.xlu0 %4447
    %4449 = vrot.lane.b32.xlu0 %v4200, 12
    %v4450 = vpop.permute.xlu0 %4449
    %4451 = vrot.lane.b32.xlu0 %v4201, 12
    %v4452 = vpop.permute.xlu0 %4451
    %4453 = vrot.lane.b32.xlu0 %v4202, 12
    %v4454 = vpop.permute.xlu0 %4453
    %4455 = vrot.lane.b32.xlu0 %v4203, 12
    %v4456 = vpop.permute.xlu0 %4455
    %4457 = vrot.lane.b32.xlu0 %v4204, 12
    %v4458 = vpop.permute.xlu0 %4457
    %4459 = vrot.lane.b32.xlu0 %v4205, 12
    %v4460 = vpop.permute.xlu0 %4459
    %4461 = vrot.lane.b32.xlu0 %v4206, 12
    %v4462 = vpop.permute.xlu0 %4461
    %4463 = vrot.lane.b32.xlu0 %v4207, 12
    %v4464 = vpop.permute.xlu0 %4463
    %4497 = vrot.lane.b32.xlu0 %v4208, 16
    %v4498 = vpop.permute.xlu0 %4497
    %4499 = vrot.lane.b32.xlu0 %v4209, 16
    %v4500 = vpop.permute.xlu0 %4499
    %4501 = vrot.lane.b32.xlu0 %v4210, 16
    %v4502 = vpop.permute.xlu0 %4501
    %4503 = vrot.lane.b32.xlu0 %v4211, 16
    %v4504 = vpop.permute.xlu0 %4503
    %4505 = vrot.lane.b32.xlu0 %v4212, 16
    %v4506 = vpop.permute.xlu0 %4505
    %4507 = vrot.lane.b32.xlu0 %v4213, 16
    %v4508 = vpop.permute.xlu0 %4507
    %4509 = vrot.lane.b32.xlu0 %v4214, 16
    %v4510 = vpop.permute.xlu0 %4509
    %4511 = vrot.lane.b32.xlu0 %v4215, 16
    %v4512 = vpop.permute.xlu0 %4511
    %4513 = vrot.lane.b32.xlu0 %v4216, 16
    %v4514 = vpop.permute.xlu0 %4513
    %4515 = vrot.lane.b32.xlu0 %v4217, 16
    %v4516 = vpop.permute.xlu0 %4515
    %4517 = vrot.lane.b32.xlu0 %v4218, 16
    %v4518 = vpop.permute.xlu0 %4517
    %4519 = vrot.lane.b32.xlu0 %v4219, 16
    %v4520 = vpop.permute.xlu0 %4519
    %4521 = vrot.lane.b32.xlu0 %v4220, 16
    %v4522 = vpop.permute.xlu0 %4521
    %4523 = vrot.lane.b32.xlu0 %v4221, 16
    %v4524 = vpop.permute.xlu0 %4523
    %4525 = vrot.lane.b32.xlu0 %v4222, 16
    %v4526 = vpop.permute.xlu0 %4525
    %4527 = vrot.lane.b32.xlu0 %v4223, 16
    %v4528 = vpop.permute.xlu0 %4527
    %4561 = vrot.lane.b32.xlu0 %v4224, 20
    %v4562 = vpop.permute.xlu0 %4561
    %4563 = vrot.lane.b32.xlu0 %v4225, 20
    %v4564 = vpop.permute.xlu0 %4563
    %4565 = vrot.lane.b32.xlu0 %v4226, 20
    %v4566 = vpop.permute.xlu0 %4565
    %4567 = vrot.lane.b32.xlu0 %v4227, 20
    %v4568 = vpop.permute.xlu0 %4567
    %4569 = vrot.lane.b32.xlu0 %v4228, 20
    %v4570 = vpop.permute.xlu0 %4569
    %4571 = vrot.lane.b32.xlu0 %v4229, 20
    %v4572 = vpop.permute.xlu0 %4571
    %4573 = vrot.lane.b32.xlu0 %v4230, 20
    %v4574 = vpop.permute.xlu0 %4573
    %4575 = vrot.lane.b32.xlu0 %v4231, 20
    %v4576 = vpop.permute.xlu0 %4575
    %4577 = vrot.lane.b32.xlu0 %v4232, 20
    %v4578 = vpop.permute.xlu0 %4577
    %4579 = vrot.lane.b32.xlu0 %v4233, 20
    %v4580 = vpop.permute.xlu0 %4579
    %4581 = vrot.lane.b32.xlu0 %v4234, 20
    %v4582 = vpop.permute.xlu0 %4581
    %4583 = vrot.lane.b32.xlu0 %v4235, 20
    %v4584 = vpop.permute.xlu0 %4583
    %4585 = vrot.lane.b32.xlu0 %v4236, 20
    %v4586 = vpop.permute.xlu0 %4585
    %4587 = vrot.lane.b32.xlu0 %v4237, 20
    %v4588 = vpop.permute.xlu0 %4587
    %4589 = vrot.lane.b32.xlu0 %v4238, 20
    %v4590 = vpop.permute.xlu0 %4589
    %4591 = vrot.lane.b32.xlu0 %v4239, 20
    %v4592 = vpop.permute.xlu0 %4591
    %4625 = vrot.lane.b32.xlu0 %v4241, 24
    %v4626 = vpop.permute.xlu0 %4625
    %4627 = vrot.lane.b32.xlu0 %v4242, 24
    %v4628 = vpop.permute.xlu0 %4627
    %4629 = vrot.lane.b32.xlu0 %v4243, 24
    %v4630 = vpop.permute.xlu0 %4629
    %4631 = vrot.lane.b32.xlu0 %v4244, 24
    %v4632 = vpop.permute.xlu0 %4631
    %4633 = vrot.lane.b32.xlu0 %v4245, 24
    %v4634 = vpop.permute.xlu0 %4633
    %4635 = vrot.lane.b32.xlu0 %v4246, 24
    %v4636 = vpop.permute.xlu0 %4635
    %4637 = vrot.lane.b32.xlu0 %v4247, 24
    %v4638 = vpop.permute.xlu0 %4637
    %4639 = vrot.lane.b32.xlu0 %v4248, 24
    %v4640 = vpop.permute.xlu0 %4639
    %4641 = vrot.lane.b32.xlu0 %v4249, 24
    %v4642 = vpop.permute.xlu0 %4641
    %4643 = vrot.lane.b32.xlu0 %v4250, 24
    %v4644 = vpop.permute.xlu0 %4643
    %4645 = vrot.lane.b32.xlu0 %v4251, 24
    %v4646 = vpop.permute.xlu0 %4645
    %4647 = vrot.lane.b32.xlu0 %v4252, 24
    %v4648 = vpop.permute.xlu0 %4647
    %4649 = vrot.lane.b32.xlu0 %v4253, 24
    %v4650 = vpop.permute.xlu0 %4649
    %4651 = vrot.lane.b32.xlu0 %v4254, 24
    %v4652 = vpop.permute.xlu0 %4651
    %4653 = vrot.lane.b32.xlu0 %v4255, 24
    %v4654 = vpop.permute.xlu0 %4653
    %4655 = vrot.lane.b32.xlu0 %v4256, 24
    %v4656 = vpop.permute.xlu0 %4655
    %4689 = vrot.lane.b32.xlu0 %v4257, 28
    %v4690 = vpop.permute.xlu0 %4689
    %4691 = vrot.lane.b32.xlu0 %v4258, 28
    %v4692 = vpop.permute.xlu0 %4691
    %4693 = vrot.lane.b32.xlu0 %v4259, 28
    %v4694 = vpop.permute.xlu0 %4693
    %4695 = vrot.lane.b32.xlu0 %v4260, 28
    %v4696 = vpop.permute.xlu0 %4695
    %4697 = vrot.lane.b32.xlu0 %v4261, 28
    %v4698 = vpop.permute.xlu0 %4697
    %4699 = vrot.lane.b32.xlu0 %v4262, 28
    %v4700 = vpop.permute.xlu0 %4699
    %4701 = vrot.lane.b32.xlu0 %v4263, 28
    %v4702 = vpop.permute.xlu0 %4701
    %4703 = vrot.lane.b32.xlu0 %v4264, 28
    %v4704 = vpop.permute.xlu0 %4703
    %4705 = vrot.lane.b32.xlu0 %v4265, 28
    %v4706 = vpop.permute.xlu0 %4705
    %4707 = vrot.lane.b32.xlu0 %v4266, 28
    %v4708 = vpop.permute.xlu0 %4707
    %4709 = vrot.lane.b32.xlu0 %v4267, 28
    %v4710 = vpop.permute.xlu0 %4709
    %4711 = vrot.lane.b32.xlu0 %v4268, 28
    %v4712 = vpop.permute.xlu0 %4711
    %4713 = vrot.lane.b32.xlu0 %v4269, 28
    %v4714 = vpop.permute.xlu0 %4713
    %4715 = vrot.lane.b32.xlu0 %v4270, 28
    %v4716 = vpop.permute.xlu0 %4715
    %4717 = vrot.lane.b32.xlu0 %v4271, 28
    %v4718 = vpop.permute.xlu0 %4717
    %4719 = vrot.lane.b32.xlu0 %v4272, 28
    %v4720 = vpop.permute.xlu0 %4719
    %4753 = vrot.lane.b32.xlu0 %v4273, 32
    %v4754 = vpop.permute.xlu0 %4753
    %4755 = vrot.lane.b32.xlu0 %v4274, 32
    %v4756 = vpop.permute.xlu0 %4755
    %4757 = vrot.lane.b32.xlu0 %v4275, 32
    %v4758 = vpop.permute.xlu0 %4757
    %4759 = vrot.lane.b32.xlu0 %v4276, 32
    %v4760 = vpop.permute.xlu0 %4759
    %4761 = vrot.lane.b32.xlu0 %v4277, 32
    %v4762 = vpop.permute.xlu0 %4761
    %4763 = vrot.lane.b32.xlu0 %v4278, 32
    %v4764 = vpop.permute.xlu0 %4763
    %4765 = vrot.lane.b32.xlu0 %v4279, 32
    %v4766 = vpop.permute.xlu0 %4765
    %4767 = vrot.lane.b32.xlu0 %v4280, 32
    %v4768 = vpop.permute.xlu0 %4767
    %4769 = vrot.lane.b32.xlu0 %v4281, 32
    %v4770 = vpop.permute.xlu0 %4769
    %4771 = vrot.lane.b32.xlu0 %v4282, 32
    %v4772 = vpop.permute.xlu0 %4771
    %4773 = vrot.lane.b32.xlu0 %v4283, 32
    %v4774 = vpop.permute.xlu0 %4773
    %4775 = vrot.lane.b32.xlu0 %v4284, 32
    %v4776 = vpop.permute.xlu0 %4775
    %4777 = vrot.lane.b32.xlu0 %v4285, 32
    %v4778 = vpop.permute.xlu0 %4777
    %4779 = vrot.lane.b32.xlu0 %v4286, 32
    %v4780 = vpop.permute.xlu0 %4779
    %4781 = vrot.lane.b32.xlu0 %v4287, 32
    %v4782 = vpop.permute.xlu0 %4781
    %4783 = vrot.lane.b32.xlu0 %v4288, 32
    %v4784 = vpop.permute.xlu0 %4783
    %v4801 = vsel %vm3961, %v4144, %v4306
    %v4802 = vsel %vm3961, %v4145, %v4308
    %v4803 = vsel %vm3961, %v4146, %v4310
    %v4804 = vsel %vm3961, %v4147, %v4312
    %v4805 = vsel %vm3961, %v4148, %v4314
    %v4806 = vsel %vm3961, %v4149, %v4316
    %v4807 = vsel %vm3961, %v4150, %v4318
    %v4808 = vsel %vm3961, %v4151, %v4320
    %v4809 = vsel %vm3961, %v4152, %v4322
    %v4810 = vsel %vm3961, %v4153, %v4324
    %v4811 = vsel %vm3961, %v4154, %v4326
    %v4812 = vsel %vm3961, %v4155, %v4328
    %v4813 = vsel %vm3961, %v4156, %v4330
    %v4814 = vsel %vm3961, %v4157, %v4332
    %v4815 = vsel %vm3961, %v4158, %v4334
    %v4816 = vsel %vm3961, %v4159, %v4336
    %vm4817 = vcmask 64512
    %v4818 = vsel %vm4817, %v4801, %v4370
    %v4819 = vsel %vm4817, %v4802, %v4372
    %v4820 = vsel %vm4817, %v4803, %v4374
    %v4821 = vsel %vm4817, %v4804, %v4376
    %v4822 = vsel %vm4817, %v4805, %v4378
    %v4823 = vsel %vm4817, %v4806, %v4380
    %v4824 = vsel %vm4817, %v4807, %v4382
    %v4825 = vsel %vm4817, %v4808, %v4384
    %v4826 = vsel %vm4817, %v4809, %v4386
    %v4827 = vsel %vm4817, %v4810, %v4388
    %v4828 = vsel %vm4817, %v4811, %v4390
    %v4829 = vsel %vm4817, %v4812, %v4392
    %v4830 = vsel %vm4817, %v4813, %v4394
    %v4831 = vsel %vm4817, %v4814, %v4396
    %v4832 = vsel %vm4817, %v4815, %v4398
    %v4833 = vsel %vm4817, %v4816, %v4400
    %v4834 = vsel %vm3093, %v4818, %v4434
    %v4835 = vsel %vm3093, %v4819, %v4436
    %v4836 = vsel %vm3093, %v4820, %v4438
    %v4837 = vsel %vm3093, %v4821, %v4440
    %v4838 = vsel %vm3093, %v4822, %v4442
    %v4839 = vsel %vm3093, %v4823, %v4444
    %v4840 = vsel %vm3093, %v4824, %v4446
    %v4841 = vsel %vm3093, %v4825, %v4448
    %v4842 = vsel %vm3093, %v4826, %v4450
    %v4843 = vsel %vm3093, %v4827, %v4452
    %v4844 = vsel %vm3093, %v4828, %v4454
    %v4845 = vsel %vm3093, %v4829, %v4456
    %v4846 = vsel %vm3093, %v4830, %v4458
    %v4847 = vsel %vm3093, %v4831, %v4460
    %v4848 = vsel %vm3093, %v4832, %v4462
    %v4849 = vsel %vm3093, %v4833, %v4464
    %vm4850 = vcmask 130048
    %v4851 = vsel %vm4850, %v4834, %v4498
    %v4852 = vsel %vm4850, %v4835, %v4500
    %v4853 = vsel %vm4850, %v4836, %v4502
    %v4854 = vsel %vm4850, %v4837, %v4504
    %v4855 = vsel %vm4850, %v4838, %v4506
    %v4856 = vsel %vm4850, %v4839, %v4508
    %v4857 = vsel %vm4850, %v4840, %v4510
    %v4858 = vsel %vm4850, %v4841, %v4512
    %v4859 = vsel %vm4850, %v4842, %v4514
    %v4860 = vsel %vm4850, %v4843, %v4516
    %v4861 = vsel %vm4850, %v4844, %v4518
    %v4862 = vsel %vm4850, %v4845, %v4520
    %v4863 = vsel %vm4850, %v4846, %v4522
    %v4864 = vsel %vm4850, %v4847, %v4524
    %v4865 = vsel %vm4850, %v4848, %v4526
    %v4866 = vsel %vm4850, %v4849, %v4528
    %vm4867 = vcmask 162816
    %v4868 = vsel %vm4867, %v4851, %v4562
    %v4869 = vsel %vm4867, %v4852, %v4564
    %v4870 = vsel %vm4867, %v4853, %v4566
    %v4871 = vsel %vm4867, %v4854, %v4568
    %v4872 = vsel %vm4867, %v4855, %v4570
    %v4873 = vsel %vm4867, %v4856, %v4572
    %v4874 = vsel %vm4867, %v4857, %v4574
    %v4875 = vsel %vm4867, %v4858, %v4576
    %v4876 = vsel %vm4867, %v4859, %v4578
    %v4877 = vsel %vm4867, %v4860, %v4580
    %v4878 = vsel %vm4867, %v4861, %v4582
    %v4879 = vsel %vm4867, %v4862, %v4584
    %v4880 = vsel %vm4867, %v4863, %v4586
    %v4881 = vsel %vm4867, %v4864, %v4588
    %v4882 = vsel %vm4867, %v4865, %v4590
    %v4883 = vsel %vm4867, %v4866, %v4592
    %v4884 = vsel %vm3353, %v4868, %v4626
    %v4885 = vsel %vm3353, %v4869, %v4628
    %v4886 = vsel %vm3353, %v4870, %v4630
    %v4887 = vsel %vm3353, %v4871, %v4632
    %v4888 = vsel %vm3353, %v4872, %v4634
    %v4889 = vsel %vm3353, %v4873, %v4636
    %v4890 = vsel %vm3353, %v4874, %v4638
    %v4891 = vsel %vm3353, %v4875, %v4640
    %v4892 = vsel %vm3353, %v4876, %v4642
    %v4893 = vsel %vm3353, %v4877, %v4644
    %v4894 = vsel %vm3353, %v4878, %v4646
    %v4895 = vsel %vm3353, %v4879, %v4648
    %v4896 = vsel %vm3353, %v4880, %v4650
    %v4897 = vsel %vm3353, %v4881, %v4652
    %v4898 = vsel %vm3353, %v4882, %v4654
    %v4899 = vsel %vm3353, %v4883, %v4656
    %vm4900 = vcmask 228352
    %v4901 = vsel %vm4900, %v4884, %v4690
    %v4902 = vsel %vm4900, %v4885, %v4692
    %v4903 = vsel %vm4900, %v4886, %v4694
    %v4904 = vsel %vm4900, %v4887, %v4696
    %v4905 = vsel %vm4900, %v4888, %v4698
    %v4906 = vsel %vm4900, %v4889, %v4700
    %v4907 = vsel %vm4900, %v4890, %v4702
    %v4908 = vsel %vm4900, %v4891, %v4704
    %v4909 = vsel %vm4900, %v4892, %v4706
    %v4910 = vsel %vm4900, %v4893, %v4708
    %v4911 = vsel %vm4900, %v4894, %v4710
    %v4912 = vsel %vm4900, %v4895, %v4712
    %v4913 = vsel %vm4900, %v4896, %v4714
    %v4914 = vsel %vm4900, %v4897, %v4716
    %v4915 = vsel %vm4900, %v4898, %v4718
    %v4916 = vsel %vm4900, %v4899, %v4720
    %vm4917 = vcmask 261120
    %v4918 = vsel %vm4917, %v4901, %v4754
    %v4919 = vsel %vm4917, %v4902, %v4756
    %v4920 = vsel %vm4917, %v4903, %v4758
    %v4921 = vsel %vm4917, %v4904, %v4760
    %v4922 = vsel %vm4917, %v4905, %v4762
    %v4923 = vsel %vm4917, %v4906, %v4764
    %v4924 = vsel %vm4917, %v4907, %v4766
    %v4925 = vsel %vm4917, %v4908, %v4768
    %v4926 = vsel %vm4917, %v4909, %v4770
    %v4927 = vsel %vm4917, %v4910, %v4772
    %v4928 = vsel %vm4917, %v4911, %v4774
    %v4929 = vsel %vm4917, %v4912, %v4776
    %v4930 = vsel %vm4917, %v4913, %v4778
    %v4931 = vsel %vm4917, %v4914, %v4780
    %v4932 = vsel %vm4917, %v4915, %v4782
    %v4933 = vsel %vm4917, %v4916, %v4784
    %v4934 = vpack.c.bf16 %v4919, %v4918
    %v4935 = vpack.c.bf16 %v4921, %v4920
    %v4936 = vpack.c.bf16 %v4923, %v4922
    %v4937 = vpack.c.bf16 %v4925, %v4924
    %v4938 = vpack.c.bf16 %v4927, %v4926
    %v4939 = vpack.c.bf16 %v4929, %v4928
    %v4940 = vpack.c.bf16 %v4931, %v4930
    %v4941 = vpack.c.bf16 %v4933, %v4932
    %v4942 = vld [vmem:[%s3] sm:$0xf]
    %v4943 = vld [vmem:[%s3 + $0x4] sm:$0xf]
    %v4944 = vld [vmem:[%s3 + $0x8] sm:$0xf]
    %v4945 = vld [vmem:[%s3 + $0xc] sm:$0xf]
    %v4946 = vld [vmem:[%s3 + $0x10] sm:$0x3]
    %v4947 = vld [vmem:[%s4] sm:$0x1]
    %v4949 = vlaneseq
    %v4950 = vshrl.u32 %v4949, 7
    %v4951 = vsub.s32 0, %v4950
    %v4952 = vrot.slane %v4947, %v4951
    %v4959 = vunpack.c.l.b16 %v4942
    %v4960 = vunpack.c.l.b16 %v4943
    %v4961 = vunpack.c.l.b16 %v4944
    %v4962 = vunpack.c.l.b16 %v4945
    %v4963 = vunpack.c.l.b16 %v4946
    %v4964 = vpack.c.b16 %v4960, %v4959
    %v4965 = vpack.c.b16 %v4962, %v4961
    %v4966 = vpack.c.b16 %v4963, %v4963
    %vm4969 = vcmask 293888
    %v4971 = vsel %vm4969, %v4934, 0
    %v4974 = vsel %vm4969, %v4935, 0
    %v4977 = vsel %vm4969, %v4936, 0
    %v4980 = vsel %vm4969, %v4937, 0
    %v4983 = vsel %vm4969, %v4938, 0
    %v4986 = vsel %vm4969, %v4939, 0
    %v4989 = vsel %vm4969, %v4940, 0
    %v4992 = vsel %vm4969, %v4941, 0
    %vm4994 = vcmask 1041408
    %v4996 = vsel %vm4994, %v4966, 0
    %4998 = vmatprep.subr.bf16.mxu0 0
    %4999 = vmatpush1.bf16.msra.mxu0 0
    %5000 = vmatprep.subr.bf16.mxu0 0
    %5001 = vmatpush1.bf16.msra.mxu0 0
    %5002 = vmatprep.subr.bf16.mxu0 0
    %5003 = vmatpush1.bf16.msra.mxu0 0
    %5004 = vmatprep.subr.bf16.mxu0 0
    %5005 = vmatpush1.bf16.msra.mxu0 0
    %5006 = vmatprep.subr.bf16.mxu0 0
    %5007 = vmatpush1.bf16.msra.mxu0 0
    %5008 = vmatprep.subr.bf16.mxu0 0
    %5009 = vmatpush1.bf16.msra.mxu0 %v4996
    %5010 = vmatprep.subr.bf16.mxu0 0
    %5011 = vmatpush1.bf16.msra.mxu0 %v4965
    %5012 = vmatprep.subr.bf16.mxu0 0
    %5013 = vmatpush1.bf16.msra.mxu0 %v4964
    %5014 = vmatprep.subr.bf16.mxu0 0
    %5015 = vmatpush2.bf16.msra.mxu0 0
    %5016 = vmatprep.subr.bf16.mxu0 0
    %5017 = vmatpush2.bf16.msra.mxu0 0
    %5018 = vmatprep.subr.bf16.mxu0 0
    %5019 = vmatpush2.bf16.msra.mxu0 0
    %5020 = vmatprep.subr.bf16.mxu0 0
    %5021 = vmatpush2.bf16.msra.mxu0 0
    %5022 = vmatprep.subr.bf16.mxu0 0
    %5023 = vmatpush2.bf16.msra.mxu0 0
    %5024 = vmatprep.subr.bf16.mxu0 0
    %5025 = vmatpush2.bf16.msra.mxu0 0
    %5026 = vmatprep.subr.bf16.mxu0 0
    %5027 = vmatpush2.bf16.msra.mxu0 0
    %5028 = vmatprep.subr.bf16.mxu0 0
    %5029 = vmatpush2.bf16.msra.mxu0 0
    %5030 = vmatprep.mubr.bf16.mxu0 0
    %5031 = vmatmul.mubr.bf16.gmra.mxu0 %v4971
    %v5032 = vpop.f32.mrf.mxu0
    %v5033 = vadd.f32 %v4952, %v5032
    %v5034 = vpop.f32.mrf.mxu0
    %v5035 = vpop.f32.mrf.mxu0
    %v5036 = vadd.f32 %v4952, %v5035
    %v5037 = vpop.f32.mrf.mxu0
    %5038 = vmatprep.mubr.bf16.mxu0 0
    %5039 = vmatmul.mubr.bf16.gmra.mxu0 %v4974
    %v5040 = vpop.f32.mrf.mxu0
    %v5041 = vadd.f32 %v4952, %v5040
    %v5042 = vpop.f32.mrf.mxu0
    %v5043 = vpop.f32.mrf.mxu0
    %v5044 = vadd.f32 %v4952, %v5043
    %v5045 = vpop.f32.mrf.mxu0
    %5046 = vmatprep.mubr.bf16.mxu0 0
    %5047 = vmatmul.mubr.bf16.gmra.mxu0 %v4977
    %v5048 = vpop.f32.mrf.mxu0
    %v5049 = vadd.f32 %v4952, %v5048
    %v5050 = vpop.f32.mrf.mxu0
    %v5051 = vpop.f32.mrf.mxu0
    %v5052 = vadd.f32 %v4952, %v5051
    %v5053 = vpop.f32.mrf.mxu0
    %5054 = vmatprep.mubr.bf16.mxu0 0
    %5055 = vmatmul.mubr.bf16.gmra.mxu0 %v4980
    %v5056 = vpop.f32.mrf.mxu0
    %v5057 = vadd.f32 %v4952, %v5056
    %v5058 = vpop.f32.mrf.mxu0
    %v5059 = vpop.f32.mrf.mxu0
    %v5060 = vadd.f32 %v4952, %v5059
    %v5061 = vpop.f32.mrf.mxu0
    %5062 = vmatprep.mubr.bf16.mxu0 0
    %5063 = vmatmul.mubr.bf16.gmra.mxu0 %v4983
    %v5064 = vpop.f32.mrf.mxu0
    %v5065 = vadd.f32 %v4952, %v5064
    %v5066 = vpop.f32.mrf.mxu0
    %v5067 = vpop.f32.mrf.mxu0
    %v5068 = vadd.f32 %v4952, %v5067
    %v5069 = vpop.f32.mrf.mxu0
    %5070 = vmatprep.mubr.bf16.mxu0 0
    %5071 = vmatmul.mubr.bf16.gmra.mxu0 %v4986
    %v5072 = vpop.f32.mrf.mxu0
    %v5073 = vadd.f32 %v4952, %v5072
    %v5074 = vpop.f32.mrf.mxu0
    %v5075 = vpop.f32.mrf.mxu0
    %v5076 = vadd.f32 %v4952, %v5075
    %v5077 = vpop.f32.mrf.mxu0
    %5078 = vmatprep.mubr.bf16.mxu0 0
    %5079 = vmatmul.mubr.bf16.gmra.mxu0 %v4989
    %v5080 = vpop.f32.mrf.mxu0
    %v5081 = vadd.f32 %v4952, %v5080
    %v5082 = vpop.f32.mrf.mxu0
    %v5083 = vpop.f32.mrf.mxu0
    %v5084 = vadd.f32 %v4952, %v5083
    %v5085 = vpop.f32.mrf.mxu0
    %5086 = vmatprep.mubr.bf16.mxu0 0
    %5087 = vmatmul.mubr.bf16.gmra.mxu0 %v4992
    %v5088 = vpop.f32.mrf.mxu0
    %v5089 = vadd.f32 %v4952, %v5088
    %v5090 = vpop.f32.mrf.mxu0
    %v5091 = vpop.f32.mrf.mxu0
    %v5092 = vadd.f32 %v4952, %v5091
    %v5093 = vpop.f32.mrf.mxu0
    %5094 = vdwg.mxu0
    %v5095 = vmax.f32 %v5033, 0.0
    %v5096 = vmax.f32 %v5036, 0.0
    %v5097 = vmax.f32 %v5041, 0.0
    %v5098 = vmax.f32 %v5044, 0.0
    %v5099 = vmax.f32 %v5049, 0.0
    %v5100 = vmax.f32 %v5052, 0.0
    %v5101 = vmax.f32 %v5057, 0.0
    %v5102 = vmax.f32 %v5060, 0.0
    %v5103 = vmax.f32 %v5065, 0.0
    %v5104 = vmax.f32 %v5068, 0.0
    %v5105 = vmax.f32 %v5073, 0.0
    %v5106 = vmax.f32 %v5076, 0.0
    %v5107 = vmax.f32 %v5081, 0.0
    %v5108 = vmax.f32 %v5084, 0.0
    %v5109 = vmax.f32 %v5089, 0.0
    %v5110 = vmax.f32 %v5092, 0.0
    %v5111 = vmax.f32 %v5095, %v5096
    %v5112 = vmax.f32 %v5097, %v5098
    %v5113 = vmax.f32 %v5099, %v5100
    %v5114 = vmax.f32 %v5101, %v5102
    %v5115 = vmax.f32 %v5103, %v5104
    %v5116 = vmax.f32 %v5105, %v5106
    %v5117 = vmax.f32 %v5107, %v5108
    %v5118 = vmax.f32 %v5109, %v5110
    %5119 = vst.msk [vmem:[#allocation5] sm:$0xff] %vm4817, %v5111
    %5120 = vst.msk [vmem:[#allocation5 + $0x8] sm:$0xff] %vm4817, %v5112
    %5121 = vst.msk [vmem:[#allocation5 + $0x10] sm:$0xff] %vm4817, %v5113
    %5122 = vst.msk [vmem:[#allocation5 + $0x18] sm:$0xff] %vm4817, %v5114
    %5123 = vst.msk [vmem:[#allocation5 + $0x20] sm:$0xff] %vm4817, %v5115
    %5124 = vst.msk [vmem:[#allocation5 + $0x28] sm:$0xff] %vm4817, %v5116
    %5125 = vst.msk [vmem:[#allocation5 + $0x30] sm:$0xff] %vm4817, %v5117
    %5126 = vst.msk [vmem:[#allocation5 + $0x38] sm:$0xff] %vm4817, %v5118
    %v5127 = vld [vmem:[#allocation5] ss:$32 sm:$0x1]
    %v5128 = vld [vmem:[#allocation5] ss:$32 sm:$0x2]
    %v5129 = vor.u32 %v5127, %v5128
    %s5130 = scalar_lea.vmem [#allocation5], 1
    %v5131 = vld [vmem:[%s5130] ss:$32 sm:$0x1]
    %v5132 = vld [vmem:[%s5130] ss:$32 sm:$0x2]
    %v5133 = vor.u32 %v5131, %v5132
    %v5134 = vmax.f32 %v5129, %v5133
    %s5135 = scalar_lea.vmem [#allocation5], 2
    %v5136 = vld [vmem:[%s5135] ss:$32 sm:$0x1]
    %v5137 = vld [vmem:[%s5135] ss:$32 sm:$0x2]
    %v5138 = vor.u32 %v5136, %v5137
    %s5139 = scalar_lea.vmem [#allocation5], 3
    %v5140 = vld [vmem:[%s5139] ss:$32 sm:$0x1]
    %v5141 = vld [vmem:[%s5139] ss:$32 sm:$0x2]
    %v5142 = vor.u32 %v5140, %v5141
    %v5143 = vmax.f32 %v5138, %v5142
    %s5144 = scalar_lea.vmem [#allocation5], 4
    %v5145 = vld [vmem:[%s5144] ss:$32 sm:$0x1]
    %v5146 = vld [vmem:[%s5144] ss:$32 sm:$0x2]
    %v5147 = vor.u32 %v5145, %v5146
    %s5148 = scalar_lea.vmem [#allocation5], 5
    %v5149 = vld [vmem:[%s5148] ss:$32 sm:$0x1]
    %v5150 = vld [vmem:[%s5148] ss:$32 sm:$0x2]
    %v5151 = vor.u32 %v5149, %v5150
    %v5152 = vmax.f32 %v5147, %v5151
    %s5153 = scalar_lea.vmem [#allocation5], 6
    %v5154 = vld [vmem:[%s5153] ss:$32 sm:$0x1]
    %v5155 = vld [vmem:[%s5153] ss:$32 sm:$0x2]
    %v5156 = vor.u32 %v5154, %v5155
    %s5157 = scalar_lea.vmem [#allocation5], 7
    %v5158 = vld [vmem:[%s5157] ss:$32 sm:$0x1]
    %v5159 = vld [vmem:[%s5157] ss:$32 sm:$0x2]
    %v5160 = vor.u32 %v5158, %v5159
    %v5161 = vmax.f32 %v5156, %v5160
    %s5162 = scalar_lea.vmem [#allocation5], 8
    %v5163 = vld [vmem:[%s5162] ss:$32 sm:$0x1]
    %v5164 = vld [vmem:[%s5162] ss:$32 sm:$0x2]
    %v5165 = vor.u32 %v5163, %v5164
    %s5166 = scalar_lea.vmem [#allocation5], 9
    %v5167 = vld [vmem:[%s5166] ss:$32 sm:$0x1]
    %v5168 = vld [vmem:[%s5166] ss:$32 sm:$0x2]
    %v5169 = vor.u32 %v5167, %v5168
    %v5170 = vmax.f32 %v5165, %v5169
    %s5171 = scalar_lea.vmem [#allocation5], 10
    %v5172 = vld [vmem:[%s5171] ss:$32 sm:$0x1]
    %v5173 = vld [vmem:[%s5171] ss:$32 sm:$0x2]
    %v5174 = vor.u32 %v5172, %v5173
    %s5175 = scalar_lea.vmem [#allocation5], 11
    %v5176 = vld [vmem:[%s5175] ss:$32 sm:$0x1]
    %v5177 = vld [vmem:[%s5175] ss:$32 sm:$0x2]
    %v5178 = vor.u32 %v5176, %v5177
    %v5179 = vmax.f32 %v5174, %v5178
    %s5180 = scalar_lea.vmem [#allocation5], 12
    %v5181 = vld [vmem:[%s5180] ss:$32 sm:$0x1]
    %v5182 = vld [vmem:[%s5180] ss:$32 sm:$0x2]
    %v5183 = vor.u32 %v5181, %v5182
    %s5184 = scalar_lea.vmem [#allocation5], 13
    %v5185 = vld [vmem:[%s5184] ss:$32 sm:$0x1]
    %v5186 = vld [vmem:[%s5184] ss:$32 sm:$0x2]
    %v5187 = vor.u32 %v5185, %v5186
    %v5188 = vmax.f32 %v5183, %v5187
    %s5189 = scalar_lea.vmem [#allocation5], 14
    %v5190 = vld [vmem:[%s5189] ss:$32 sm:$0x1]
    %v5191 = vld [vmem:[%s5189] ss:$32 sm:$0x2]
    %v5192 = vor.u32 %v5190, %v5191
    %s5193 = scalar_lea.vmem [#allocation5], 15
    %v5194 = vld [vmem:[%s5193] ss:$32 sm:$0x1]
    %v5195 = vld [vmem:[%s5193] ss:$32 sm:$0x2]
    %v5196 = vor.u32 %v5194, %v5195
    %v5197 = vmax.f32 %v5192, %v5196
    %s5198 = scalar_lea.vmem [#allocation5], 16
    %v5199 = vld [vmem:[%s5198] ss:$32 sm:$0x1]
    %v5200 = vld [vmem:[%s5198] ss:$32 sm:$0x2]
    %v5201 = vor.u32 %v5199, %v5200
    %s5202 = scalar_lea.vmem [#allocation5], 17
    %v5203 = vld [vmem:[%s5202] ss:$32 sm:$0x1]
    %v5204 = vld [vmem:[%s5202] ss:$32 sm:$0x2]
    %v5205 = vor.u32 %v5203, %v5204
    %v5206 = vmax.f32 %v5201, %v5205
    %s5207 = scalar_lea.vmem [#allocation5], 18
    %v5208 = vld [vmem:[%s5207] ss:$32 sm:$0x1]
    %v5209 = vld [vmem:[%s5207] ss:$32 sm:$0x2]
    %v5210 = vor.u32 %v5208, %v5209
    %s5211 = scalar_lea.vmem [#allocation5], 19
    %v5212 = vld [vmem:[%s5211] ss:$32 sm:$0x1]
    %v5213 = vld [vmem:[%s5211] ss:$32 sm:$0x2]
    %v5214 = vor.u32 %v5212, %v5213
    %v5215 = vmax.f32 %v5210, %v5214
    %s5216 = scalar_lea.vmem [#allocation5], 20
    %v5217 = vld [vmem:[%s5216] ss:$32 sm:$0x1]
    %v5218 = vld [vmem:[%s5216] ss:$32 sm:$0x2]
    %v5219 = vor.u32 %v5217, %v5218
    %s5220 = scalar_lea.vmem [#allocation5], 21
    %v5221 = vld [vmem:[%s5220] ss:$32 sm:$0x1]
    %v5222 = vld [vmem:[%s5220] ss:$32 sm:$0x2]
    %v5223 = vor.u32 %v5221, %v5222
    %v5224 = vmax.f32 %v5219, %v5223
    %s5225 = scalar_lea.vmem [#allocation5], 22
    %v5226 = vld [vmem:[%s5225] ss:$32 sm:$0x1]
    %v5227 = vld [vmem:[%s5225] ss:$32 sm:$0x2]
    %v5228 = vor.u32 %v5226, %v5227
    %s5229 = scalar_lea.vmem [#allocation5], 23
    %v5230 = vld [vmem:[%s5229] ss:$32 sm:$0x1]
    %v5231 = vld [vmem:[%s5229] ss:$32 sm:$0x2]
    %v5232 = vor.u32 %v5230, %v5231
    %v5233 = vmax.f32 %v5228, %v5232
    %s5234 = scalar_lea.vmem [#allocation5], 24
    %v5235 = vld [vmem:[%s5234] ss:$32 sm:$0x1]
    %v5236 = vld [vmem:[%s5234] ss:$32 sm:$0x2]
    %v5237 = vor.u32 %v5235, %v5236
    %s5238 = scalar_lea.vmem [#allocation5], 25
    %v5239 = vld [vmem:[%s5238] ss:$32 sm:$0x1]
    %v5240 = vld [vmem:[%s5238] ss:$32 sm:$0x2]
    %v5241 = vor.u32 %v5239, %v5240
    %v5242 = vmax.f32 %v5237, %v5241
    %s5243 = scalar_lea.vmem [#allocation5], 26
    %v5244 = vld [vmem:[%s5243] ss:$32 sm:$0x1]
    %v5245 = vld [vmem:[%s5243] ss:$32 sm:$0x2]
    %v5246 = vor.u32 %v5244, %v5245
    %s5247 = scalar_lea.vmem [#allocation5], 27
    %v5248 = vld [vmem:[%s5247] ss:$32 sm:$0x1]
    %v5249 = vld [vmem:[%s5247] ss:$32 sm:$0x2]
    %v5250 = vor.u32 %v5248, %v5249
    %v5251 = vmax.f32 %v5246, %v5250
    %s5252 = scalar_lea.vmem [#allocation5], 28
    %v5253 = vld [vmem:[%s5252] ss:$32 sm:$0x1]
    %v5254 = vld [vmem:[%s5252] ss:$32 sm:$0x2]
    %v5255 = vor.u32 %v5253, %v5254
    %s5256 = scalar_lea.vmem [#allocation5], 29
    %v5257 = vld [vmem:[%s5256] ss:$32 sm:$0x1]
    %v5258 = vld [vmem:[%s5256] ss:$32 sm:$0x2]
    %v5259 = vor.u32 %v5257, %v5258
    %v5260 = vmax.f32 %v5255, %v5259
    %s5261 = scalar_lea.vmem [#allocation5], 30
    %v5262 = vld [vmem:[%s5261] ss:$32 sm:$0x1]
    %v5263 = vld [vmem:[%s5261] ss:$32 sm:$0x2]
    %v5264 = vor.u32 %v5262, %v5263
    %s5265 = scalar_lea.vmem [#allocation5], 31
    %v5266 = vld [vmem:[%s5265] ss:$32 sm:$0x1]
    %v5267 = vld [vmem:[%s5265] ss:$32 sm:$0x2]
    %v5268 = vor.u32 %v5266, %v5267
    %v5269 = vmax.f32 %v5264, %v5268
    %5271 = vrot.lane.b32.xlu0 %v5143, 8
    %v5272 = vpop.permute.xlu0 %5271
    %5275 = vrot.lane.b32.xlu0 %v5152, 16
    %v5276 = vpop.permute.xlu0 %5275
    %5279 = vrot.lane.b32.xlu0 %v5161, 24
    %v5280 = vpop.permute.xlu0 %5279
    %5283 = vrot.lane.b32.xlu0 %v5170, 32
    %v5284 = vpop.permute.xlu0 %5283
    %5287 = vrot.lane.b32.xlu0 %v5179, 40
    %v5288 = vpop.permute.xlu0 %5287
    %5291 = vrot.lane.b32.xlu0 %v5188, 48
    %v5292 = vpop.permute.xlu0 %5291
    %5295 = vrot.lane.b32.xlu0 %v5197, 56
    %v5296 = vpop.permute.xlu0 %5295
    %5299 = vrot.lane.b32.xlu0 %v5206, 64
    %v5300 = vpop.permute.xlu0 %5299
    %5303 = vrot.lane.b32.xlu0 %v5215, 72
    %v5304 = vpop.permute.xlu0 %5303
    %5307 = vrot.lane.b32.xlu0 %v5224, 80
    %v5308 = vpop.permute.xlu0 %5307
    %5311 = vrot.lane.b32.xlu0 %v5233, 88
    %v5312 = vpop.permute.xlu0 %5311
    %5315 = vrot.lane.b32.xlu0 %v5242, 96
    %v5316 = vpop.permute.xlu0 %5315
    %5319 = vrot.lane.b32.xlu0 %v5251, 104
    %v5320 = vpop.permute.xlu0 %5319
    %5323 = vrot.lane.b32.xlu0 %v5260, 112
    %v5324 = vpop.permute.xlu0 %5323
    %5327 = vrot.lane.b32.xlu0 %v5269, 120
    %v5328 = vpop.permute.xlu0 %5327
    %v5330 = vsel %vm4817, %v5134, %v5272
    %v5331 = vsel %vm4850, %v5330, %v5276
    %v5332 = vsel %vm3353, %v5331, %v5280
    %v5333 = vsel %vm4917, %v5332, %v5284
    %vm5334 = vcmask 326656
    %v5335 = vsel %vm5334, %v5333, %v5288
    %vm5336 = vcmask 392192
    %v5337 = vsel %vm5336, %v5335, %v5292
    %vm5338 = vcmask 457728
    %v5339 = vsel %vm5338, %v5337, %v5296
    %vm5340 = vcmask 523264
    %v5341 = vsel %vm5340, %v5339, %v5300
    %vm5342 = vcmask 588800
    %v5343 = vsel %vm5342, %v5341, %v5304
    %vm5344 = vcmask 654336
    %v5345 = vsel %vm5344, %v5343, %v5308
    %vm5346 = vcmask 719872
    %v5347 = vsel %vm5346, %v5345, %v5312
    %vm5348 = vcmask 785408
    %v5349 = vsel %vm5348, %v5347, %v5316
    %vm5350 = vcmask 850944
    %v5351 = vsel %vm5350, %v5349, %v5320
    %vm5352 = vcmask 916480
    %v5353 = vsel %vm5352, %v5351, %v5324
    %vm5354 = vcmask 982016
    %v5355 = vsel %vm5354, %v5353, %v5328
    %v5356 = vpack.c.bf16 %v5355, %v5355
    %v5357 = vld [vmem:[%s5] sm:$0xff]
    %v5358 = vld [vmem:[%s5 + $0x8] sm:$0xff]
    %v5359 = vld [vmem:[%s5 + $0x10] sm:$0xff]
    %v5360 = vld [vmem:[%s5 + $0x18] sm:$0xff]
    %v5361 = vld [vmem:[%s5 + $0x20] sm:$0xff]
    %v5362 = vld [vmem:[%s5 + $0x28] sm:$0xff]
    %v5363 = vld [vmem:[%s5 + $0x30] sm:$0xff]
    %v5364 = vld [vmem:[%s5 + $0x38] sm:$0xff]
    %v5365 = vld [vmem:[%s5 + $0x40] sm:$0xff]
    %v5366 = vld [vmem:[%s5 + $0x48] sm:$0xff]
    %v5367 = vld [vmem:[%s5 + $0x50] sm:$0xff]
    %v5368 = vld [vmem:[%s5 + $0x58] sm:$0xff]
    %v5369 = vld [vmem:[%s5 + $0x60] sm:$0xff]
    %v5370 = vld [vmem:[%s5 + $0x68] sm:$0xff]
    %v5371 = vld [vmem:[%s5 + $0x70] sm:$0xff]
    %v5372 = vld [vmem:[%s5 + $0x78] sm:$0xff]
    %v5373 = vld [vmem:[%s5 + $0x80] sm:$0xff]
    %v5374 = vld [vmem:[%s5 + $0x88] sm:$0xff]
    %v5375 = vld [vmem:[%s5 + $0x90] sm:$0xff]
    %v5376 = vld [vmem:[%s5 + $0x98] sm:$0xff]
    %v5377 = vld [vmem:[%s5 + $0xa0] sm:$0xff]
    %v5378 = vld [vmem:[%s5 + $0xa8] sm:$0xff]
    %v5379 = vld [vmem:[%s5 + $0xb0] sm:$0xff]
    %v5380 = vld [vmem:[%s5 + $0xb8] sm:$0xff]
    %v5381 = vld [vmem:[%s5 + $0xc0] sm:$0xff]
    %v5382 = vld [vmem:[%s5 + $0xc8] sm:$0xff]
    %v5383 = vld [vmem:[%s5 + $0xd0] sm:$0xff]
    %v5384 = vld [vmem:[%s5 + $0xd8] sm:$0xff]
    %v5385 = vld [vmem:[%s5 + $0xe0] sm:$0xff]
    %v5386 = vld [vmem:[%s5 + $0xe8] sm:$0xff]
    %v5387 = vld [vmem:[%s5 + $0xf0] sm:$0xff]
    %v5388 = vld [vmem:[%s5 + $0xf8] sm:$0xff]
    %v5389 = vld [vmem:[%s6] sm:$0xf]
    %v5391 = vlaneseq
    %v5392 = vshrl.u32 %v5391, 7
    %v5393 = vsub.s32 0, %v5392
    %v5394 = vrot.slane %v5389, %v5393
    %v5395 = vlaneseq
    %v5396 = vshrl.u32 %v5395, 7
    %v5397 = vsub.s32 1, %v5396
    %v5398 = vrot.slane %v5389, %v5397
    %v5399 = vlaneseq
    %v5400 = vshrl.u32 %v5399, 7
    %v5401 = vsub.s32 2, %v5400
    %v5402 = vrot.slane %v5389, %v5401
    %v5403 = vlaneseq
    %v5404 = vshrl.u32 %v5403, 7
    %v5405 = vsub.s32 3, %v5404
    %v5406 = vrot.slane %v5389, %v5405
    %v5443 = vunpack.c.l.b16 %v5357
    %v5444 = vunpack.c.h.b16 %v5357
    %v5445 = vunpack.c.l.b16 %v5358
    %v5446 = vunpack.c.h.b16 %v5358
    %v5447 = vunpack.c.l.b16 %v5359
    %v5448 = vunpack.c.h.b16 %v5359
    %v5449 = vunpack.c.l.b16 %v5360
    %v5450 = vunpack.c.h.b16 %v5360
    %v5451 = vunpack.c.l.b16 %v5361
    %v5452 = vunpack.c.h.b16 %v5361
    %v5453 = vunpack.c.l.b16 %v5362
    %v5454 = vunpack.c.h.b16 %v5362
    %v5455 = vunpack.c.l.b16 %v5363
    %v5456 = vunpack.c.h.b16 %v5363
    %v5457 = vunpack.c.l.b16 %v5364
    %v5458 = vunpack.c.h.b16 %v5364
    %v5459 = vunpack.c.l.b16 %v5365
    %v5460 = vunpack.c.h.b16 %v5365
    %v5461 = vunpack.c.l.b16 %v5366
    %v5462 = vunpack.c.h.b16 %v5366
    %v5463 = vunpack.c.l.b16 %v5367
    %v5464 = vunpack.c.h.b16 %v5367
    %v5465 = vunpack.c.l.b16 %v5368
    %v5466 = vunpack.c.h.b16 %v5368
    %v5467 = vunpack.c.l.b16 %v5369
    %v5468 = vunpack.c.h.b16 %v5369
    %v5469 = vunpack.c.l.b16 %v5370
    %v5470 = vunpack.c.h.b16 %v5370
    %v5471 = vunpack.c.l.b16 %v5371
    %v5472 = vunpack.c.h.b16 %v5371
    %v5473 = vunpack.c.l.b16 %v5372
    %v5474 = vunpack.c.h.b16 %v5372
    %v5475 = vunpack.c.l.b16 %v5373
    %v5476 = vunpack.c.h.b16 %v5373
    %v5477 = vunpack.c.l.b16 %v5374
    %v5478 = vunpack.c.h.b16 %v5374
    %v5479 = vunpack.c.l.b16 %v5375
    %v5480 = vunpack.c.h.b16 %v5375
    %v5481 = vunpack.c.l.b16 %v5376
    %v5482 = vunpack.c.h.b16 %v5376
    %v5483 = vunpack.c.l.b16 %v5377
    %v5484 = vunpack.c.h.b16 %v5377
    %v5485 = vunpack.c.l.b16 %v5378
    %v5486 = vunpack.c.h.b16 %v5378
    %v5487 = vunpack.c.l.b16 %v5379
    %v5488 = vunpack.c.h.b16 %v5379
    %v5489 = vunpack.c.l.b16 %v5380
    %v5490 = vunpack.c.h.b16 %v5380
    %v5491 = vunpack.c.l.b16 %v5381
    %v5492 = vunpack.c.h.b16 %v5381
    %v5493 = vunpack.c.l.b16 %v5382
    %v5494 = vunpack.c.h.b16 %v5382
    %v5495 = vunpack.c.l.b16 %v5383
    %v5496 = vunpack.c.h.b16 %v5383
    %v5497 = vunpack.c.l.b16 %v5384
    %v5498 = vunpack.c.h.b16 %v5384
    %v5499 = vunpack.c.l.b16 %v5385
    %v5500 = vunpack.c.h.b16 %v5385
    %v5501 = vunpack.c.l.b16 %v5386
    %v5502 = vunpack.c.h.b16 %v5386
    %v5503 = vunpack.c.l.b16 %v5387
    %v5504 = vunpack.c.h.b16 %v5387
    %v5505 = vunpack.c.l.b16 %v5388
    %v5506 = vunpack.c.h.b16 %v5388
    %v5507 = vpack.c.b16 %v5447, %v5443
    %v5508 = vpack.c.b16 %v5448, %v5444
    %v5509 = vpack.c.b16 %v5449, %v5445
    %v5510 = vpack.c.b16 %v5450, %v5446
    %v5511 = vpack.c.b16 %v5455, %v5451
    %v5512 = vpack.c.b16 %v5456, %v5452
    %v5513 = vpack.c.b16 %v5457, %v5453
    %v5514 = vpack.c.b16 %v5458, %v5454
    %v5515 = vpack.c.b16 %v5463, %v5459
    %v5516 = vpack.c.b16 %v5464, %v5460
    %v5517 = vpack.c.b16 %v5465, %v5461
    %v5518 = vpack.c.b16 %v5466, %v5462
    %v5519 = vpack.c.b16 %v5471, %v5467
    %v5520 = vpack.c.b16 %v5472, %v5468
    %v5521 = vpack.c.b16 %v5473, %v5469
    %v5522 = vpack.c.b16 %v5474, %v5470
    %v5523 = vpack.c.b16 %v5479, %v5475
    %v5524 = vpack.c.b16 %v5480, %v5476
    %v5525 = vpack.c.b16 %v5481, %v5477
    %v5526 = vpack.c.b16 %v5482, %v5478
    %v5527 = vpack.c.b16 %v5487, %v5483
    %v5528 = vpack.c.b16 %v5488, %v5484
    %v5529 = vpack.c.b16 %v5489, %v5485
    %v5530 = vpack.c.b16 %v5490, %v5486
    %v5531 = vpack.c.b16 %v5495, %v5491
    %v5532 = vpack.c.b16 %v5496, %v5492
    %v5533 = vpack.c.b16 %v5497, %v5493
    %v5534 = vpack.c.b16 %v5498, %v5494
    %v5535 = vpack.c.b16 %v5503, %v5499
    %v5536 = vpack.c.b16 %v5504, %v5500
    %v5537 = vpack.c.b16 %v5505, %v5501
    %v5538 = vpack.c.b16 %v5506, %v5502
    %5571 = vmatprep.subr.bf16.mxu0 %v5536
    %5572 = vmatpush1.bf16.msra.mxu0 %v5535
    %5573 = vmatprep.subr.bf16.mxu0 %v5532
    %5574 = vmatpush1.bf16.msra.mxu0 %v5531
    %5575 = vmatprep.subr.bf16.mxu0 %v5528
    %5576 = vmatpush1.bf16.msra.mxu0 %v5527
    %5577 = vmatprep.subr.bf16.mxu0 %v5524
    %5578 = vmatpush1.bf16.msra.mxu0 %v5523
    %5579 = vmatprep.subr.bf16.mxu0 %v5520
    %5580 = vmatpush1.bf16.msra.mxu0 %v5519
    %5581 = vmatprep.subr.bf16.mxu0 %v5516
    %5582 = vmatpush1.bf16.msra.mxu0 %v5515
    %5583 = vmatprep.subr.bf16.mxu0 %v5512
    %5584 = vmatpush1.bf16.msra.mxu0 %v5511
    %5585 = vmatprep.subr.bf16.mxu0 %v5508
    %5586 = vmatpush1.bf16.msra.mxu0 %v5507
    %5587 = vmatprep.subr.bf16.mxu0 0
    %5588 = vmatpush2.bf16.msra.mxu0 0
    %5589 = vmatprep.subr.bf16.mxu0 0
    %5590 = vmatpush2.bf16.msra.mxu0 0
    %5591 = vmatprep.subr.bf16.mxu0 0
    %5592 = vmatpush2.bf16.msra.mxu0 0
    %5593 = vmatprep.subr.bf16.mxu0 0
    %5594 = vmatpush2.bf16.msra.mxu0 0
    %5595 = vmatprep.subr.bf16.mxu0 0
    %5596 = vmatpush2.bf16.msra.mxu0 0
    %5597 = vmatprep.subr.bf16.mxu0 0
    %5598 = vmatpush2.bf16.msra.mxu0 0
    %5599 = vmatprep.subr.bf16.mxu0 0
    %5600 = vmatpush2.bf16.msra.mxu0 0
    %5601 = vmatprep.subr.bf16.mxu0 0
    %5602 = vmatpush2.bf16.msra.mxu0 0
    %5603 = vmatprep.mubr.bf16.mxu0 0
    %5604 = vmatmul.mubr.bf16.gmra.mxu0 %v5356
    %v5605 = vpop.f32.mrf.mxu0
    %v5606 = vadd.f32 %v5394, %v5605
    %v5607 = vpop.f32.mrf.mxu0
    %v5608 = vadd.f32 %v5398, %v5607
    %v5609 = vpop.f32.mrf.mxu0
    %v5610 = vpop.f32.mrf.mxu0
    %5611 = vdwg.mxu0
    %5612 = vmatprep.subr.bf16.mxu0 %v5538
    %5613 = vmatpush1.bf16.msra.mxu0 %v5537
    %5614 = vmatprep.subr.bf16.mxu0 %v5534
    %5615 = vmatpush1.bf16.msra.mxu0 %v5533
    %5616 = vmatprep.subr.bf16.mxu0 %v5530
    %5617 = vmatpush1.bf16.msra.mxu0 %v5529
    %5618 = vmatprep.subr.bf16.mxu0 %v5526
    %5619 = vmatpush1.bf16.msra.mxu0 %v5525
    %5620 = vmatprep.subr.bf16.mxu0 %v5522
    %5621 = vmatpush1.bf16.msra.mxu0 %v5521
    %5622 = vmatprep.subr.bf16.mxu0 %v5518
    %5623 = vmatpush1.bf16.msra.mxu0 %v5517
    %5624 = vmatprep.subr.bf16.mxu0 %v5514
    %5625 = vmatpush1.bf16.msra.mxu0 %v5513
    %5626 = vmatprep.subr.bf16.mxu0 %v5510
    %5627 = vmatpush1.bf16.msra.mxu0 %v5509
    %5628 = vmatprep.subr.bf16.mxu0 0
    %5629 = vmatpush2.bf16.msra.mxu0 0
    %5630 = vmatprep.subr.bf16.mxu0 0
    %5631 = vmatpush2.bf16.msra.mxu0 0
    %5632 = vmatprep.subr.bf16.mxu0 0
    %5633 = vmatpush2.bf16.msra.mxu0 0
    %5634 = vmatprep.subr.bf16.mxu0 0
    %5635 = vmatpush2.bf16.msra.mxu0 0
    %5636 = vmatprep.subr.bf16.mxu0 0
    %5637 = vmatpush2.bf16.msra.mxu0 0
    %5638 = vmatprep.subr.bf16.mxu0 0
    %5639 = vmatpush2.bf16.msra.mxu0 0
    %5640 = vmatprep.subr.bf16.mxu0 0
    %5641 = vmatpush2.bf16.msra.mxu0 0
    %5642 = vmatprep.subr.bf16.mxu0 0
    %5643 = vmatpush2.bf16.msra.mxu0 0
    %5644 = vmatprep.mubr.bf16.mxu0 0
    %5645 = vmatmul.mubr.bf16.gmra.mxu0 %v5356
    %v5646 = vpop.f32.mrf.mxu0
    %v5647 = vadd.f32 %v5402, %v5646
    %v5648 = vpop.f32.mrf.mxu0
    %v5649 = vadd.f32 %v5406, %v5648
    %v5650 = vpop.f32.mrf.mxu0
    %v5651 = vpop.f32.mrf.mxu0
    %5652 = vdwg.mxu0
    %v5653 = vmax.f32 %v5606, 0.0
    %v5654 = vmax.f32 %v5608, 0.0
    %v5655 = vmax.f32 %v5647, 0.0
    %v5656 = vmax.f32 %v5649, 0.0
    %v5657 = vpack.c.bf16 %v5653, %v5653
    %v5658 = vpack.c.bf16 %v5654, %v5654
    %v5659 = vpack.c.bf16 %v5655, %v5655
    %v5660 = vpack.c.bf16 %v5656, %v5656
    %v5661 = vld [vmem:[#allocation6] sm:$0xff]
    %v5662 = vld [vmem:[#allocation6 + $0x8] sm:$0xff]
    %v5663 = vld [vmem:[#allocation6 + $0x10] sm:$0xff]
    %v5664 = vld [vmem:[#allocation6 + $0x18] sm:$0xff]
    %v5665 = vld [vmem:[#allocation6 + $0x20] sm:$0xff]
    %v5666 = vld [vmem:[#allocation6 + $0x28] sm:$0xff]
    %v5667 = vld [vmem:[#allocation6 + $0x30] sm:$0xff]
    %v5668 = vld [vmem:[#allocation6 + $0x38] sm:$0xff]
    %v5669 = vld [vmem:[#allocation6 + $0x40] sm:$0xff]
    %v5670 = vld [vmem:[#allocation6 + $0x48] sm:$0xff]
    %v5671 = vld [vmem:[#allocation6 + $0x50] sm:$0xff]
    %v5672 = vld [vmem:[#allocation6 + $0x58] sm:$0xff]
    %v5673 = vld [vmem:[#allocation6 + $0x60] sm:$0xff]
    %v5674 = vld [vmem:[#allocation6 + $0x68] sm:$0xff]
    %v5675 = vld [vmem:[#allocation6 + $0x70] sm:$0xff]
    %v5676 = vld [vmem:[#allocation6 + $0x78] sm:$0xff]
    %v5677 = vld [vmem:[#allocation6 + $0x80] sm:$0xff]
    %v5678 = vld [vmem:[#allocation6 + $0x88] sm:$0xff]
    %v5679 = vld [vmem:[#allocation6 + $0x90] sm:$0xff]
    %v5680 = vld [vmem:[#allocation6 + $0x98] sm:$0xff]
    %v5681 = vld [vmem:[#allocation6 + $0xa0] sm:$0xff]
    %v5682 = vld [vmem:[#allocation6 + $0xa8] sm:$0xff]
    %v5683 = vld [vmem:[#allocation6 + $0xb0] sm:$0xff]
    %v5684 = vld [vmem:[#allocation6 + $0xb8] sm:$0xff]
    %v5685 = vld [vmem:[#allocation6 + $0xc0] sm:$0xff]
    %v5686 = vld [vmem:[#allocation6 + $0xc8] sm:$0xff]
    %v5687 = vld [vmem:[#allocation6 + $0xd0] sm:$0xff]
    %v5688 = vld [vmem:[#allocation6 + $0xd8] sm:$0xff]
    %v5689 = vld [vmem:[#allocation6 + $0xe0] sm:$0xff]
    %v5690 = vld [vmem:[#allocation6 + $0xe8] sm:$0xff]
    %v5691 = vld [vmem:[#allocation6 + $0xf0] sm:$0xff]
    %v5692 = vld [vmem:[#allocation6 + $0xf8] sm:$0xff]
    %v5693 = vld [vmem:[#allocation6 + $0x100] sm:$0xff]
    %v5694 = vld [vmem:[#allocation6 + $0x108] sm:$0xff]
    %v5695 = vld [vmem:[#allocation6 + $0x110] sm:$0xff]
    %v5696 = vld [vmem:[#allocation6 + $0x118] sm:$0xff]
    %v5697 = vld [vmem:[#allocation6 + $0x120] sm:$0xff]
    %v5698 = vld [vmem:[#allocation6 + $0x128] sm:$0xff]
    %v5699 = vld [vmem:[#allocation6 + $0x130] sm:$0xff]
    %v5700 = vld [vmem:[#allocation6 + $0x138] sm:$0xff]
    %v5701 = vld [vmem:[#allocation6 + $0x140] sm:$0xff]
    %v5702 = vld [vmem:[#allocation6 + $0x148] sm:$0xff]
    %v5703 = vld [vmem:[#allocation6 + $0x150] sm:$0xff]
    %v5704 = vld [vmem:[#allocation6 + $0x158] sm:$0xff]
    %v5705 = vld [vmem:[#allocation6 + $0x160] sm:$0xff]
    %v5706 = vld [vmem:[#allocation6 + $0x168] sm:$0xff]
    %v5707 = vld [vmem:[#allocation6 + $0x170] sm:$0xff]
    %v5708 = vld [vmem:[#allocation6 + $0x178] sm:$0xff]
    %v5709 = vld [vmem:[#allocation6 + $0x180] sm:$0xff]
    %v5710 = vld [vmem:[#allocation6 + $0x188] sm:$0xff]
    %v5711 = vld [vmem:[#allocation6 + $0x190] sm:$0xff]
    %v5712 = vld [vmem:[#allocation6 + $0x198] sm:$0xff]
    %v5713 = vld [vmem:[#allocation6 + $0x1a0] sm:$0xff]
    %v5714 = vld [vmem:[#allocation6 + $0x1a8] sm:$0xff]
    %v5715 = vld [vmem:[#allocation6 + $0x1b0] sm:$0xff]
    %v5716 = vld [vmem:[#allocation6 + $0x1b8] sm:$0xff]
    %v5717 = vld [vmem:[#allocation6 + $0x1c0] sm:$0xff]
    %v5718 = vld [vmem:[#allocation6 + $0x1c8] sm:$0xff]
    %v5719 = vld [vmem:[#allocation6 + $0x1d0] sm:$0xff]
    %v5720 = vld [vmem:[#allocation6 + $0x1d8] sm:$0xff]
    %v5721 = vld [vmem:[#allocation6 + $0x1e0] sm:$0xff]
    %v5722 = vld [vmem:[#allocation6 + $0x1e8] sm:$0xff]
    %v5723 = vld [vmem:[#allocation6 + $0x1f0] sm:$0xff]
    %v5724 = vld [vmem:[#allocation6 + $0x1f8] sm:$0xff]
    %v5725 = vld [vmem:[#allocation6 + $0x200] sm:$0xff]
    %v5726 = vld [vmem:[#allocation6 + $0x208] sm:$0xff]
    %v5727 = vld [vmem:[#allocation6 + $0x210] sm:$0xff]
    %v5728 = vld [vmem:[#allocation6 + $0x218] sm:$0xff]
    %v5729 = vld [vmem:[#allocation6 + $0x220] sm:$0xff]
    %v5730 = vld [vmem:[#allocation6 + $0x228] sm:$0xff]
    %v5731 = vld [vmem:[#allocation6 + $0x230] sm:$0xff]
    %v5732 = vld [vmem:[#allocation6 + $0x238] sm:$0xff]
    %v5733 = vld [vmem:[#allocation6 + $0x240] sm:$0xff]
    %v5734 = vld [vmem:[#allocation6 + $0x248] sm:$0xff]
    %v5735 = vld [vmem:[#allocation6 + $0x250] sm:$0xff]
    %v5736 = vld [vmem:[#allocation6 + $0x258] sm:$0xff]
    %v5737 = vld [vmem:[#allocation6 + $0x260] sm:$0xff]
    %v5738 = vld [vmem:[#allocation6 + $0x268] sm:$0xff]
    %v5739 = vld [vmem:[#allocation6 + $0x270] sm:$0xff]
    %v5740 = vld [vmem:[#allocation6 + $0x278] sm:$0xff]
    %v5741 = vld [vmem:[#allocation6 + $0x280] sm:$0xff]
    %v5742 = vld [vmem:[#allocation6 + $0x288] sm:$0xff]
    %v5743 = vld [vmem:[#allocation6 + $0x290] sm:$0xff]
    %v5744 = vld [vmem:[#allocation6 + $0x298] sm:$0xff]
    %v5745 = vld [vmem:[#allocation6 + $0x2a0] sm:$0xff]
    %v5746 = vld [vmem:[#allocation6 + $0x2a8] sm:$0xff]
    %v5747 = vld [vmem:[#allocation6 + $0x2b0] sm:$0xff]
    %v5748 = vld [vmem:[#allocation6 + $0x2b8] sm:$0xff]
    %v5749 = vld [vmem:[#allocation6 + $0x2c0] sm:$0xff]
    %v5750 = vld [vmem:[#allocation6 + $0x2c8] sm:$0xff]
    %v5751 = vld [vmem:[#allocation6 + $0x2d0] sm:$0xff]
    %v5752 = vld [vmem:[#allocation6 + $0x2d8] sm:$0xff]
    %v5753 = vld [vmem:[#allocation6 + $0x2e0] sm:$0xff]
    %v5754 = vld [vmem:[#allocation6 + $0x2e8] sm:$0xff]
    %v5755 = vld [vmem:[#allocation6 + $0x2f0] sm:$0xff]
    %v5756 = vld [vmem:[#allocation6 + $0x2f8] sm:$0xff]
    %v5757 = vld [vmem:[#allocation6 + $0x300] sm:$0xff]
    %v5758 = vld [vmem:[#allocation6 + $0x308] sm:$0xff]
    %v5759 = vld [vmem:[#allocation6 + $0x310] sm:$0xff]
    %v5760 = vld [vmem:[#allocation6 + $0x318] sm:$0xff]
    %v5761 = vld [vmem:[#allocation6 + $0x320] sm:$0xff]
    %v5762 = vld [vmem:[#allocation6 + $0x328] sm:$0xff]
    %v5763 = vld [vmem:[#allocation6 + $0x330] sm:$0xff]
    %v5764 = vld [vmem:[#allocation6 + $0x338] sm:$0xff]
    %v5765 = vld [vmem:[#allocation6 + $0x340] sm:$0xff]
    %v5766 = vld [vmem:[#allocation6 + $0x348] sm:$0xff]
    %v5767 = vld [vmem:[#allocation6 + $0x350] sm:$0xff]
    %v5768 = vld [vmem:[#allocation6 + $0x358] sm:$0xff]
    %v5769 = vld [vmem:[#allocation6 + $0x360] sm:$0xff]
    %v5770 = vld [vmem:[#allocation6 + $0x368] sm:$0xff]
    %v5771 = vld [vmem:[#allocation6 + $0x370] sm:$0xff]
    %v5772 = vld [vmem:[#allocation6 + $0x378] sm:$0xff]
    %v5773 = vld [vmem:[#allocation6 + $0x380] sm:$0xff]
    %v5774 = vld [vmem:[#allocation6 + $0x388] sm:$0xff]
    %v5775 = vld [vmem:[#allocation6 + $0x390] sm:$0xff]
    %v5776 = vld [vmem:[#allocation6 + $0x398] sm:$0xff]
    %v5777 = vld [vmem:[#allocation6 + $0x3a0] sm:$0xff]
    %v5778 = vld [vmem:[#allocation6 + $0x3a8] sm:$0xff]
    %v5779 = vld [vmem:[#allocation6 + $0x3b0] sm:$0xff]
    %v5780 = vld [vmem:[#allocation6 + $0x3b8] sm:$0xff]
    %v5781 = vld [vmem:[#allocation6 + $0x3c0] sm:$0xff]
    %v5782 = vld [vmem:[#allocation6 + $0x3c8] sm:$0xff]
    %v5783 = vld [vmem:[#allocation6 + $0x3d0] sm:$0xff]
    %v5784 = vld [vmem:[#allocation6 + $0x3d8] sm:$0xff]
    %v5785 = vld [vmem:[#allocation6 + $0x3e0] sm:$0xff]
    %v5786 = vld [vmem:[#allocation6 + $0x3e8] sm:$0xff]
    %v5787 = vld [vmem:[#allocation6 + $0x3f0] sm:$0xff]
    %v5788 = vld [vmem:[#allocation6 + $0x3f8] sm:$0xff]
    %v5789 = vld [vmem:[%s8] sm:$0xf]
    %v5791 = vlaneseq
    %v5792 = vshrl.u32 %v5791, 7
    %v5793 = vsub.s32 0, %v5792
    %v5794 = vrot.slane %v5789, %v5793
    %v5795 = vlaneseq
    %v5796 = vshrl.u32 %v5795, 7
    %v5797 = vsub.s32 1, %v5796
    %v5798 = vrot.slane %v5789, %v5797
    %v5799 = vlaneseq
    %v5800 = vshrl.u32 %v5799, 7
    %v5801 = vsub.s32 2, %v5800
    %v5802 = vrot.slane %v5789, %v5801
    %v5803 = vlaneseq
    %v5804 = vshrl.u32 %v5803, 7
    %v5805 = vsub.s32 3, %v5804
    %v5806 = vrot.slane %v5789, %v5805
    %v5939 = vunpack.c.l.b16 %v5661
    %v5940 = vunpack.c.h.b16 %v5661
    %v5941 = vunpack.c.l.b16 %v5662
    %v5942 = vunpack.c.h.b16 %v5662
    %v5943 = vunpack.c.l.b16 %v5663
    %v5944 = vunpack.c.h.b16 %v5663
    %v5945 = vunpack.c.l.b16 %v5664
    %v5946 = vunpack.c.h.b16 %v5664
    %v5947 = vunpack.c.l.b16 %v5665
    %v5948 = vunpack.c.h.b16 %v5665
    %v5949 = vunpack.c.l.b16 %v5666
    %v5950 = vunpack.c.h.b16 %v5666
    %v5951 = vunpack.c.l.b16 %v5667
    %v5952 = vunpack.c.h.b16 %v5667
    %v5953 = vunpack.c.l.b16 %v5668
    %v5954 = vunpack.c.h.b16 %v5668
    %v5955 = vunpack.c.l.b16 %v5669
    %v5956 = vunpack.c.h.b16 %v5669
    %v5957 = vunpack.c.l.b16 %v5670
    %v5958 = vunpack.c.h.b16 %v5670
    %v5959 = vunpack.c.l.b16 %v5671
    %v5960 = vunpack.c.h.b16 %v5671
    %v5961 = vunpack.c.l.b16 %v5672
    %v5962 = vunpack.c.h.b16 %v5672
    %v5963 = vunpack.c.l.b16 %v5673
    %v5964 = vunpack.c.h.b16 %v5673
    %v5965 = vunpack.c.l.b16 %v5674
    %v5966 = vunpack.c.h.b16 %v5674
    %v5967 = vunpack.c.l.b16 %v5675
    %v5968 = vunpack.c.h.b16 %v5675
    %v5969 = vunpack.c.l.b16 %v5676
    %v5970 = vunpack.c.h.b16 %v5676
    %v5971 = vunpack.c.l.b16 %v5677
    %v5972 = vunpack.c.h.b16 %v5677
    %v5973 = vunpack.c.l.b16 %v5678
    %v5974 = vunpack.c.h.b16 %v5678
    %v5975 = vunpack.c.l.b16 %v5679
    %v5976 = vunpack.c.h.b16 %v5679
    %v5977 = vunpack.c.l.b16 %v5680
    %v5978 = vunpack.c.h.b16 %v5680
    %v5979 = vunpack.c.l.b16 %v5681
    %v5980 = vunpack.c.h.b16 %v5681
    %v5981 = vunpack.c.l.b16 %v5682
    %v5982 = vunpack.c.h.b16 %v5682
    %v5983 = vunpack.c.l.b16 %v5683
    %v5984 = vunpack.c.h.b16 %v5683
    %v5985 = vunpack.c.l.b16 %v5684
    %v5986 = vunpack.c.h.b16 %v5684
    %v5987 = vunpack.c.l.b16 %v5685
    %v5988 = vunpack.c.h.b16 %v5685
    %v5989 = vunpack.c.l.b16 %v5686
    %v5990 = vunpack.c.h.b16 %v5686
    %v5991 = vunpack.c.l.b16 %v5687
    %v5992 = vunpack.c.h.b16 %v5687
    %v5993 = vunpack.c.l.b16 %v5688
    %v5994 = vunpack.c.h.b16 %v5688
    %v5995 = vunpack.c.l.b16 %v5689
    %v5996 = vunpack.c.h.b16 %v5689
    %v5997 = vunpack.c.l.b16 %v5690
    %v5998 = vunpack.c.h.b16 %v5690
    %v5999 = vunpack.c.l.b16 %v5691
    %v6000 = vunpack.c.h.b16 %v5691
    %v6001 = vunpack.c.l.b16 %v5692
    %v6002 = vunpack.c.h.b16 %v5692
    %v6003 = vunpack.c.l.b16 %v5693
    %v6004 = vunpack.c.h.b16 %v5693
    %v6005 = vunpack.c.l.b16 %v5694
    %v6006 = vunpack.c.h.b16 %v5694
    %v6007 = vunpack.c.l.b16 %v5695
    %v6008 = vunpack.c.h.b16 %v5695
    %v6009 = vunpack.c.l.b16 %v5696
    %v6010 = vunpack.c.h.b16 %v5696
    %v6011 = vunpack.c.l.b16 %v5697
    %v6012 = vunpack.c.h.b16 %v5697
    %v6013 = vunpack.c.l.b16 %v5698
    %v6014 = vunpack.c.h.b16 %v5698
    %v6015 = vunpack.c.l.b16 %v5699
    %v6016 = vunpack.c.h.b16 %v5699
    %v6017 = vunpack.c.l.b16 %v5700
    %v6018 = vunpack.c.h.b16 %v5700
    %v6019 = vunpack.c.l.b16 %v5701
    %v6020 = vunpack.c.h.b16 %v5701
    %v6021 = vunpack.c.l.b16 %v5702
    %v6022 = vunpack.c.h.b16 %v5702
    %v6023 = vunpack.c.l.b16 %v5703
    %v6024 = vunpack.c.h.b16 %v5703
    %v6025 = vunpack.c.l.b16 %v5704
    %v6026 = vunpack.c.h.b16 %v5704
    %v6027 = vunpack.c.l.b16 %v5705
    %v6028 = vunpack.c.h.b16 %v5705
    %v6029 = vunpack.c.l.b16 %v5706
    %v6030 = vunpack.c.h.b16 %v5706
    %v6031 = vunpack.c.l.b16 %v5707
    %v6032 = vunpack.c.h.b16 %v5707
    %v6033 = vunpack.c.l.b16 %v5708
    %v6034 = vunpack.c.h.b16 %v5708
    %v6035 = vunpack.c.l.b16 %v5709
    %v6036 = vunpack.c.h.b16 %v5709
    %v6037 = vunpack.c.l.b16 %v5710
    %v6038 = vunpack.c.h.b16 %v5710
    %v6039 = vunpack.c.l.b16 %v5711
    %v6040 = vunpack.c.h.b16 %v5711
    %v6041 = vunpack.c.l.b16 %v5712
    %v6042 = vunpack.c.h.b16 %v5712
    %v6043 = vunpack.c.l.b16 %v5713
    %v6044 = vunpack.c.h.b16 %v5713
    %v6045 = vunpack.c.l.b16 %v5714
    %v6046 = vunpack.c.h.b16 %v5714
    %v6047 = vunpack.c.l.b16 %v5715
    %v6048 = vunpack.c.h.b16 %v5715
    %v6049 = vunpack.c.l.b16 %v5716
    %v6050 = vunpack.c.h.b16 %v5716
    %v6051 = vunpack.c.l.b16 %v5717
    %v6052 = vunpack.c.h.b16 %v5717
    %v6053 = vunpack.c.l.b16 %v5718
    %v6054 = vunpack.c.h.b16 %v5718
    %v6055 = vunpack.c.l.b16 %v5719
    %v6056 = vunpack.c.h.b16 %v5719
    %v6057 = vunpack.c.l.b16 %v5720
    %v6058 = vunpack.c.h.b16 %v5720
    %v6059 = vunpack.c.l.b16 %v5721
    %v6060 = vunpack.c.h.b16 %v5721
    %v6061 = vunpack.c.l.b16 %v5722
    %v6062 = vunpack.c.h.b16 %v5722
    %v6063 = vunpack.c.l.b16 %v5723
    %v6064 = vunpack.c.h.b16 %v5723
    %v6065 = vunpack.c.l.b16 %v5724
    %v6066 = vunpack.c.h.b16 %v5724
    %v6067 = vunpack.c.l.b16 %v5725
    %v6068 = vunpack.c.h.b16 %v5725
    %v6069 = vunpack.c.l.b16 %v5726
    %v6070 = vunpack.c.h.b16 %v5726
    %v6071 = vunpack.c.l.b16 %v5727
    %v6072 = vunpack.c.h.b16 %v5727
    %v6073 = vunpack.c.l.b16 %v5728
    %v6074 = vunpack.c.h.b16 %v5728
    %v6075 = vunpack.c.l.b16 %v5729
    %v6076 = vunpack.c.h.b16 %v5729
    %v6077 = vunpack.c.l.b16 %v5730
    %v6078 = vunpack.c.h.b16 %v5730
    %v6079 = vunpack.c.l.b16 %v5731
    %v6080 = vunpack.c.h.b16 %v5731
    %v6081 = vunpack.c.l.b16 %v5732
    %v6082 = vunpack.c.h.b16 %v5732
    %v6083 = vunpack.c.l.b16 %v5733
    %v6084 = vunpack.c.h.b16 %v5733
    %v6085 = vunpack.c.l.b16 %v5734
    %v6086 = vunpack.c.h.b16 %v5734
    %v6087 = vunpack.c.l.b16 %v5735
    %v6088 = vunpack.c.h.b16 %v5735
    %v6089 = vunpack.c.l.b16 %v5736
    %v6090 = vunpack.c.h.b16 %v5736
    %v6091 = vunpack.c.l.b16 %v5737
    %v6092 = vunpack.c.h.b16 %v5737
    %v6093 = vunpack.c.l.b16 %v5738
    %v6094 = vunpack.c.h.b16 %v5738
    %v6095 = vunpack.c.l.b16 %v5739
    %v6096 = vunpack.c.h.b16 %v5739
    %v6097 = vunpack.c.l.b16 %v5740
    %v6098 = vunpack.c.h.b16 %v5740
    %v6099 = vunpack.c.l.b16 %v5741
    %v6100 = vunpack.c.h.b16 %v5741
    %v6101 = vunpack.c.l.b16 %v5742
    %v6102 = vunpack.c.h.b16 %v5742
    %v6103 = vunpack.c.l.b16 %v5743
    %v6104 = vunpack.c.h.b16 %v5743
    %v6105 = vunpack.c.l.b16 %v5744
    %v6106 = vunpack.c.h.b16 %v5744
    %v6107 = vunpack.c.l.b16 %v5745
    %v6108 = vunpack.c.h.b16 %v5745
    %v6109 = vunpack.c.l.b16 %v5746
    %v6110 = vunpack.c.h.b16 %v5746
    %v6111 = vunpack.c.l.b16 %v5747
    %v6112 = vunpack.c.h.b16 %v5747
    %v6113 = vunpack.c.l.b16 %v5748
    %v6114 = vunpack.c.h.b16 %v5748
    %v6115 = vunpack.c.l.b16 %v5749
    %v6116 = vunpack.c.h.b16 %v5749
    %v6117 = vunpack.c.l.b16 %v5750
    %v6118 = vunpack.c.h.b16 %v5750
    %v6119 = vunpack.c.l.b16 %v5751
    %v6120 = vunpack.c.h.b16 %v5751
    %v6121 = vunpack.c.l.b16 %v5752
    %v6122 = vunpack.c.h.b16 %v5752
    %v6123 = vunpack.c.l.b16 %v5753
    %v6124 = vunpack.c.h.b16 %v5753
    %v6125 = vunpack.c.l.b16 %v5754
    %v6126 = vunpack.c.h.b16 %v5754
    %v6127 = vunpack.c.l.b16 %v5755
    %v6128 = vunpack.c.h.b16 %v5755
    %v6129 = vunpack.c.l.b16 %v5756
    %v6130 = vunpack.c.h.b16 %v5756
    %v6131 = vunpack.c.l.b16 %v5757
    %v6132 = vunpack.c.h.b16 %v5757
    %v6133 = vunpack.c.l.b16 %v5758
    %v6134 = vunpack.c.h.b16 %v5758
    %v6135 = vunpack.c.l.b16 %v5759
    %v6136 = vunpack.c.h.b16 %v5759
    %v6137 = vunpack.c.l.b16 %v5760
    %v6138 = vunpack.c.h.b16 %v5760
    %v6139 = vunpack.c.l.b16 %v5761
    %v6140 = vunpack.c.h.b16 %v5761
    %v6141 = vunpack.c.l.b16 %v5762
    %v6142 = vunpack.c.h.b16 %v5762
    %v6143 = vunpack.c.l.b16 %v5763
    %v6144 = vunpack.c.h.b16 %v5763
    %v6145 = vunpack.c.l.b16 %v5764
    %v6146 = vunpack.c.h.b16 %v5764
    %v6147 = vunpack.c.l.b16 %v5765
    %v6148 = vunpack.c.h.b16 %v5765
    %v6149 = vunpack.c.l.b16 %v5766
    %v6150 = vunpack.c.h.b16 %v5766
    %v6151 = vunpack.c.l.b16 %v5767
    %v6152 = vunpack.c.h.b16 %v5767
    %v6153 = vunpack.c.l.b16 %v5768
    %v6154 = vunpack.c.h.b16 %v5768
    %v6155 = vunpack.c.l.b16 %v5769
    %v6156 = vunpack.c.h.b16 %v5769
    %v6157 = vunpack.c.l.b16 %v5770
    %v6158 = vunpack.c.h.b16 %v5770
    %v6159 = vunpack.c.l.b16 %v5771
    %v6160 = vunpack.c.h.b16 %v5771
    %v6161 = vunpack.c.l.b16 %v5772
    %v6162 = vunpack.c.h.b16 %v5772
    %v6163 = vunpack.c.l.b16 %v5773
    %v6164 = vunpack.c.h.b16 %v5773
    %v6165 = vunpack.c.l.b16 %v5774
    %v6166 = vunpack.c.h.b16 %v5774
    %v6167 = vunpack.c.l.b16 %v5775
    %v6168 = vunpack.c.h.b16 %v5775
    %v6169 = vunpack.c.l.b16 %v5776
    %v6170 = vunpack.c.h.b16 %v5776
    %v6171 = vunpack.c.l.b16 %v5777
    %v6172 = vunpack.c.h.b16 %v5777
    %v6173 = vunpack.c.l.b16 %v5778
    %v6174 = vunpack.c.h.b16 %v5778
    %v6175 = vunpack.c.l.b16 %v5779
    %v6176 = vunpack.c.h.b16 %v5779
    %v6177 = vunpack.c.l.b16 %v5780
    %v6178 = vunpack.c.h.b16 %v5780
    %v6179 = vunpack.c.l.b16 %v5781
    %v6180 = vunpack.c.h.b16 %v5781
    %v6181 = vunpack.c.l.b16 %v5782
    %v6182 = vunpack.c.h.b16 %v5782
    %v6183 = vunpack.c.l.b16 %v5783
    %v6184 = vunpack.c.h.b16 %v5783
    %v6185 = vunpack.c.l.b16 %v5784
    %v6186 = vunpack.c.h.b16 %v5784
    %v6187 = vunpack.c.l.b16 %v5785
    %v6188 = vunpack.c.h.b16 %v5785
    %v6189 = vunpack.c.l.b16 %v5786
    %v6190 = vunpack.c.h.b16 %v5786
    %v6191 = vunpack.c.l.b16 %v5787
    %v6192 = vunpack.c.h.b16 %v5787
    %v6193 = vunpack.c.l.b16 %v5788
    %v6194 = vunpack.c.h.b16 %v5788
    %v6195 = vpack.c.b16 %v5943, %v5939
    %v6196 = vpack.c.b16 %v5944, %v5940
    %v6197 = vpack.c.b16 %v5945, %v5941
    %v6198 = vpack.c.b16 %v5946, %v5942
    %v6199 = vpack.c.b16 %v5951, %v5947
    %v6200 = vpack.c.b16 %v5952, %v5948
    %v6201 = vpack.c.b16 %v5953, %v5949
    %v6202 = vpack.c.b16 %v5954, %v5950
    %v6203 = vpack.c.b16 %v5959, %v5955
    %v6204 = vpack.c.b16 %v5960, %v5956
    %v6205 = vpack.c.b16 %v5961, %v5957
    %v6206 = vpack.c.b16 %v5962, %v5958
    %v6207 = vpack.c.b16 %v5967, %v5963
    %v6208 = vpack.c.b16 %v5968, %v5964
    %v6209 = vpack.c.b16 %v5969, %v5965
    %v6210 = vpack.c.b16 %v5970, %v5966
    %v6211 = vpack.c.b16 %v5975, %v5971
    %v6212 = vpack.c.b16 %v5976, %v5972
    %v6213 = vpack.c.b16 %v5977, %v5973
    %v6214 = vpack.c.b16 %v5978, %v5974
    %v6215 = vpack.c.b16 %v5983, %v5979
    %v6216 = vpack.c.b16 %v5984, %v5980
    %v6217 = vpack.c.b16 %v5985, %v5981
    %v6218 = vpack.c.b16 %v5986, %v5982
    %v6219 = vpack.c.b16 %v5991, %v5987
    %v6220 = vpack.c.b16 %v5992, %v5988
    %v6221 = vpack.c.b16 %v5993, %v5989
    %v6222 = vpack.c.b16 %v5994, %v5990
    %v6223 = vpack.c.b16 %v5999, %v5995
    %v6224 = vpack.c.b16 %v6000, %v5996
    %v6225 = vpack.c.b16 %v6001, %v5997
    %v6226 = vpack.c.b16 %v6002, %v5998
    %v6227 = vpack.c.b16 %v6007, %v6003
    %v6228 = vpack.c.b16 %v6008, %v6004
    %v6229 = vpack.c.b16 %v6009, %v6005
    %v6230 = vpack.c.b16 %v6010, %v6006
    %v6231 = vpack.c.b16 %v6015, %v6011
    %v6232 = vpack.c.b16 %v6016, %v6012
    %v6233 = vpack.c.b16 %v6017, %v6013
    %v6234 = vpack.c.b16 %v6018, %v6014
    %v6235 = vpack.c.b16 %v6023, %v6019
    %v6236 = vpack.c.b16 %v6024, %v6020
    %v6237 = vpack.c.b16 %v6025, %v6021
    %v6238 = vpack.c.b16 %v6026, %v6022
    %v6239 = vpack.c.b16 %v6031, %v6027
    %v6240 = vpack.c.b16 %v6032, %v6028
    %v6241 = vpack.c.b16 %v6033, %v6029
    %v6242 = vpack.c.b16 %v6034, %v6030
    %v6243 = vpack.c.b16 %v6039, %v6035
    %v6244 = vpack.c.b16 %v6040, %v6036
    %v6245 = vpack.c.b16 %v6041, %v6037
    %v6246 = vpack.c.b16 %v6042, %v6038
    %v6247 = vpack.c.b16 %v6047, %v6043
    %v6248 = vpack.c.b16 %v6048, %v6044
    %v6249 = vpack.c.b16 %v6049, %v6045
    %v6250 = vpack.c.b16 %v6050, %v6046
    %v6251 = vpack.c.b16 %v6055, %v6051
    %v6252 = vpack.c.b16 %v6056, %v6052
    %v6253 = vpack.c.b16 %v6057, %v6053
    %v6254 = vpack.c.b16 %v6058, %v6054
    %v6255 = vpack.c.b16 %v6063, %v6059
    %v6256 = vpack.c.b16 %v6064, %v6060
    %v6257 = vpack.c.b16 %v6065, %v6061
    %v6258 = vpack.c.b16 %v6066, %v6062
    %v6259 = vpack.c.b16 %v6071, %v6067
    %v6260 = vpack.c.b16 %v6072, %v6068
    %v6261 = vpack.c.b16 %v6073, %v6069
    %v6262 = vpack.c.b16 %v6074, %v6070
    %v6263 = vpack.c.b16 %v6079, %v6075
    %v6264 = vpack.c.b16 %v6080, %v6076
    %v6265 = vpack.c.b16 %v6081, %v6077
    %v6266 = vpack.c.b16 %v6082, %v6078
    %v6267 = vpack.c.b16 %v6087, %v6083
    %v6268 = vpack.c.b16 %v6088, %v6084
    %v6269 = vpack.c.b16 %v6089, %v6085
    %v6270 = vpack.c.b16 %v6090, %v6086
    %v6271 = vpack.c.b16 %v6095, %v6091
    %v6272 = vpack.c.b16 %v6096, %v6092
    %v6273 = vpack.c.b16 %v6097, %v6093
    %v6274 = vpack.c.b16 %v6098, %v6094
    %v6275 = vpack.c.b16 %v6103, %v6099
    %v6276 = vpack.c.b16 %v6104, %v6100
    %v6277 = vpack.c.b16 %v6105, %v6101
    %v6278 = vpack.c.b16 %v6106, %v6102
    %v6279 = vpack.c.b16 %v6111, %v6107
    %v6280 = vpack.c.b16 %v6112, %v6108
    %v6281 = vpack.c.b16 %v6113, %v6109
    %v6282 = vpack.c.b16 %v6114, %v6110
    %v6283 = vpack.c.b16 %v6119, %v6115
    %v6284 = vpack.c.b16 %v6120, %v6116
    %v6285 = vpack.c.b16 %v6121, %v6117
    %v6286 = vpack.c.b16 %v6122, %v6118
    %v6287 = vpack.c.b16 %v6127, %v6123
    %v6288 = vpack.c.b16 %v6128, %v6124
    %v6289 = vpack.c.b16 %v6129, %v6125
    %v6290 = vpack.c.b16 %v6130, %v6126
    %v6291 = vpack.c.b16 %v6135, %v6131
    %v6292 = vpack.c.b16 %v6136, %v6132
    %v6293 = vpack.c.b16 %v6137, %v6133
    %v6294 = vpack.c.b16 %v6138, %v6134
    %v6295 = vpack.c.b16 %v6143, %v6139
    %v6296 = vpack.c.b16 %v6144, %v6140
    %v6297 = vpack.c.b16 %v6145, %v6141
    %v6298 = vpack.c.b16 %v6146, %v6142
    %v6299 = vpack.c.b16 %v6151, %v6147
    %v6300 = vpack.c.b16 %v6152, %v6148
    %v6301 = vpack.c.b16 %v6153, %v6149
    %v6302 = vpack.c.b16 %v6154, %v6150
    %v6303 = vpack.c.b16 %v6159, %v6155
    %v6304 = vpack.c.b16 %v6160, %v6156
    %v6305 = vpack.c.b16 %v6161, %v6157
    %v6306 = vpack.c.b16 %v6162, %v6158
    %v6307 = vpack.c.b16 %v6167, %v6163
    %v6308 = vpack.c.b16 %v6168, %v6164
    %v6309 = vpack.c.b16 %v6169, %v6165
    %v6310 = vpack.c.b16 %v6170, %v6166
    %v6311 = vpack.c.b16 %v6175, %v6171
    %v6312 = vpack.c.b16 %v6176, %v6172
    %v6313 = vpack.c.b16 %v6177, %v6173
    %v6314 = vpack.c.b16 %v6178, %v6174
    %v6315 = vpack.c.b16 %v6183, %v6179
    %v6316 = vpack.c.b16 %v6184, %v6180
    %v6317 = vpack.c.b16 %v6185, %v6181
    %v6318 = vpack.c.b16 %v6186, %v6182
    %v6319 = vpack.c.b16 %v6191, %v6187
    %v6320 = vpack.c.b16 %v6192, %v6188
    %v6321 = vpack.c.b16 %v6193, %v6189
    %v6322 = vpack.c.b16 %v6194, %v6190
    %6451 = vmatprep.subr.bf16.mxu0 %v6224
    %6452 = vmatpush1.bf16.msra.mxu0 %v6223
    %6453 = vmatprep.subr.bf16.mxu0 %v6220
    %6454 = vmatpush1.bf16.msra.mxu0 %v6219
    %6455 = vmatprep.subr.bf16.mxu0 %v6216
    %6456 = vmatpush1.bf16.msra.mxu0 %v6215
    %6457 = vmatprep.subr.bf16.mxu0 %v6212
    %6458 = vmatpush1.bf16.msra.mxu0 %v6211
    %6459 = vmatprep.subr.bf16.mxu0 %v6208
    %6460 = vmatpush1.bf16.msra.mxu0 %v6207
    %6461 = vmatprep.subr.bf16.mxu0 %v6204
    %6462 = vmatpush1.bf16.msra.mxu0 %v6203
    %6463 = vmatprep.subr.bf16.mxu0 %v6200
    %6464 = vmatpush1.bf16.msra.mxu0 %v6199
    %6465 = vmatprep.subr.bf16.mxu0 %v6196
    %6466 = vmatpush1.bf16.msra.mxu0 %v6195
    %6467 = vmatprep.subr.bf16.mxu0 %v6256
    %6468 = vmatpush2.bf16.msra.mxu0 %v6255
    %6469 = vmatprep.subr.bf16.mxu0 %v6252
    %6470 = vmatpush2.bf16.msra.mxu0 %v6251
    %6471 = vmatprep.subr.bf16.mxu0 %v6248
    %6472 = vmatpush2.bf16.msra.mxu0 %v6247
    %6473 = vmatprep.subr.bf16.mxu0 %v6244
    %6474 = vmatpush2.bf16.msra.mxu0 %v6243
    %6475 = vmatprep.subr.bf16.mxu0 %v6240
    %6476 = vmatpush2.bf16.msra.mxu0 %v6239
    %6477 = vmatprep.subr.bf16.mxu0 %v6236
    %6478 = vmatpush2.bf16.msra.mxu0 %v6235
    %6479 = vmatprep.subr.bf16.mxu0 %v6232
    %6480 = vmatpush2.bf16.msra.mxu0 %v6231
    %6481 = vmatprep.subr.bf16.mxu0 %v6228
    %6482 = vmatpush2.bf16.msra.mxu0 %v6227
    %6483 = vmatprep.mubr.bf16.mxu0 %v5658
    %6484 = vmatmul.mubr.bf16.gmra.mxu0 %v5657
    %v6485 = vpop.f32.mrf.mxu0
    %v6486 = vadd.f32 %v5794, %v6485
    %v6487 = vpop.f32.mrf.mxu0
    %v6488 = vadd.f32 %v5798, %v6487
    %v6489 = vpop.f32.mrf.mxu0
    %v6490 = vpop.f32.mrf.mxu0
    %6491 = vdwg.mxu0
    %6492 = vmatprep.subr.bf16.mxu0 %v6288
    %6493 = vmatpush1.bf16.msra.mxu0 %v6287
    %6494 = vmatprep.subr.bf16.mxu0 %v6284
    %6495 = vmatpush1.bf16.msra.mxu0 %v6283
    %6496 = vmatprep.subr.bf16.mxu0 %v6280
    %6497 = vmatpush1.bf16.msra.mxu0 %v6279
    %6498 = vmatprep.subr.bf16.mxu0 %v6276
    %6499 = vmatpush1.bf16.msra.mxu0 %v6275
    %6500 = vmatprep.subr.bf16.mxu0 %v6272
    %6501 = vmatpush1.bf16.msra.mxu0 %v6271
    %6502 = vmatprep.subr.bf16.mxu0 %v6268
    %6503 = vmatpush1.bf16.msra.mxu0 %v6267
    %6504 = vmatprep.subr.bf16.mxu0 %v6264
    %6505 = vmatpush1.bf16.msra.mxu0 %v6263
    %6506 = vmatprep.subr.bf16.mxu0 %v6260
    %6507 = vmatpush1.bf16.msra.mxu0 %v6259
    %6508 = vmatprep.subr.bf16.mxu0 %v6320
    %6509 = vmatpush2.bf16.msra.mxu0 %v6319
    %6510 = vmatprep.subr.bf16.mxu0 %v6316
    %6511 = vmatpush2.bf16.msra.mxu0 %v6315
    %6512 = vmatprep.subr.bf16.mxu0 %v6312
    %6513 = vmatpush2.bf16.msra.mxu0 %v6311
    %6514 = vmatprep.subr.bf16.mxu0 %v6308
    %6515 = vmatpush2.bf16.msra.mxu0 %v6307
    %6516 = vmatprep.subr.bf16.mxu0 %v6304
    %6517 = vmatpush2.bf16.msra.mxu0 %v6303
    %6518 = vmatprep.subr.bf16.mxu0 %v6300
    %6519 = vmatpush2.bf16.msra.mxu0 %v6299
    %6520 = vmatprep.subr.bf16.mxu0 %v6296
    %6521 = vmatpush2.bf16.msra.mxu0 %v6295
    %6522 = vmatprep.subr.bf16.mxu0 %v6292
    %6523 = vmatpush2.bf16.msra.mxu0 %v6291
    %6524 = vmatprep.mubr.bf16.mxu0 %v5660
    %6525 = vmatmul.mubr.bf16.gmra.mxu0 %v5659
    %v6526 = vpop.f32.mrf.mxu0
    %v6527 = vadd.f32 %v6486, %v6526
    %v6528 = vpop.f32.mrf.mxu0
    %v6529 = vadd.f32 %v6488, %v6528
    %v6530 = vpop.f32.mrf.mxu0
    %v6531 = vpop.f32.mrf.mxu0
    %6532 = vdwg.mxu0
    %6533 = vmatprep.subr.bf16.mxu0 %v6226
    %6534 = vmatpush1.bf16.msra.mxu0 %v6225
    %6535 = vmatprep.subr.bf16.mxu0 %v6222
    %6536 = vmatpush1.bf16.msra.mxu0 %v6221
    %6537 = vmatprep.subr.bf16.mxu0 %v6218
    %6538 = vmatpush1.bf16.msra.mxu0 %v6217
    %6539 = vmatprep.subr.bf16.mxu0 %v6214
    %6540 = vmatpush1.bf16.msra.mxu0 %v6213
    %6541 = vmatprep.subr.bf16.mxu0 %v6210
    %6542 = vmatpush1.bf16.msra.mxu0 %v6209
    %6543 = vmatprep.subr.bf16.mxu0 %v6206
    %6544 = vmatpush1.bf16.msra.mxu0 %v6205
    %6545 = vmatprep.subr.bf16.mxu0 %v6202
    %6546 = vmatpush1.bf16.msra.mxu0 %v6201
    %6547 = vmatprep.subr.bf16.mxu0 %v6198
    %6548 = vmatpush1.bf16.msra.mxu0 %v6197
    %6549 = vmatprep.subr.bf16.mxu0 %v6258
    %6550 = vmatpush2.bf16.msra.mxu0 %v6257
    %6551 = vmatprep.subr.bf16.mxu0 %v6254
    %6552 = vmatpush2.bf16.msra.mxu0 %v6253
    %6553 = vmatprep.subr.bf16.mxu0 %v6250
    %6554 = vmatpush2.bf16.msra.mxu0 %v6249
    %6555 = vmatprep.subr.bf16.mxu0 %v6246
    %6556 = vmatpush2.bf16.msra.mxu0 %v6245
    %6557 = vmatprep.subr.bf16.mxu0 %v6242
    %6558 = vmatpush2.bf16.msra.mxu0 %v6241
    %6559 = vmatprep.subr.bf16.mxu0 %v6238
    %6560 = vmatpush2.bf16.msra.mxu0 %v6237
    %6561 = vmatprep.subr.bf16.mxu0 %v6234
    %6562 = vmatpush2.bf16.msra.mxu0 %v6233
    %6563 = vmatprep.subr.bf16.mxu0 %v6230
    %6564 = vmatpush2.bf16.msra.mxu0 %v6229
    %6565 = vmatprep.mubr.bf16.mxu0 %v5658
    %6566 = vmatmul.mubr.bf16.gmra.mxu0 %v5657
    %v6567 = vpop.f32.mrf.mxu0
    %v6568 = vadd.f32 %v5802, %v6567
    %v6569 = vpop.f32.mrf.mxu0
    %v6570 = vadd.f32 %v5806, %v6569
    %v6571 = vpop.f32.mrf.mxu0
    %v6572 = vpop.f32.mrf.mxu0
    %6573 = vdwg.mxu0
    %6574 = vmatprep.subr.bf16.mxu0 %v6290
    %6575 = vmatpush1.bf16.msra.mxu0 %v6289
    %6576 = vmatprep.subr.bf16.mxu0 %v6286
    %6577 = vmatpush1.bf16.msra.mxu0 %v6285
    %6578 = vmatprep.subr.bf16.mxu0 %v6282
    %6579 = vmatpush1.bf16.msra.mxu0 %v6281
    %6580 = vmatprep.subr.bf16.mxu0 %v6278
    %6581 = vmatpush1.bf16.msra.mxu0 %v6277
    %6582 = vmatprep.subr.bf16.mxu0 %v6274
    %6583 = vmatpush1.bf16.msra.mxu0 %v6273
    %6584 = vmatprep.subr.bf16.mxu0 %v6270
    %6585 = vmatpush1.bf16.msra.mxu0 %v6269
    %6586 = vmatprep.subr.bf16.mxu0 %v6266
    %6587 = vmatpush1.bf16.msra.mxu0 %v6265
    %6588 = vmatprep.subr.bf16.mxu0 %v6262
    %6589 = vmatpush1.bf16.msra.mxu0 %v6261
    %6590 = vmatprep.subr.bf16.mxu0 %v6322
    %6591 = vmatpush2.bf16.msra.mxu0 %v6321
    %6592 = vmatprep.subr.bf16.mxu0 %v6318
    %6593 = vmatpush2.bf16.msra.mxu0 %v6317
    %6594 = vmatprep.subr.bf16.mxu0 %v6314
    %6595 = vmatpush2.bf16.msra.mxu0 %v6313
    %6596 = vmatprep.subr.bf16.mxu0 %v6310
    %6597 = vmatpush2.bf16.msra.mxu0 %v6309
    %6598 = vmatprep.subr.bf16.mxu0 %v6306
    %6599 = vmatpush2.bf16.msra.mxu0 %v6305
    %6600 = vmatprep.subr.bf16.mxu0 %v6302
    %6601 = vmatpush2.bf16.msra.mxu0 %v6301
    %6602 = vmatprep.subr.bf16.mxu0 %v6298
    %6603 = vmatpush2.bf16.msra.mxu0 %v6297
    %6604 = vmatprep.subr.bf16.mxu0 %v6294
    %6605 = vmatpush2.bf16.msra.mxu0 %v6293
    %6606 = vmatprep.mubr.bf16.mxu0 %v5660
    %6607 = vmatmul.mubr.bf16.gmra.mxu0 %v5659
    %v6608 = vpop.f32.mrf.mxu0
    %v6609 = vadd.f32 %v6568, %v6608
    %v6610 = vpop.f32.mrf.mxu0
    %v6611 = vadd.f32 %v6570, %v6610
    %v6612 = vpop.f32.mrf.mxu0
    %v6613 = vpop.f32.mrf.mxu0
    %6614 = vdwg.mxu0
    %v6615 = vmax.f32 %v6527, 0.0
    %v6616 = vmax.f32 %v6529, 0.0
    %v6617 = vmax.f32 %v6609, 0.0
    %v6618 = vmax.f32 %v6611, 0.0
    %v6619 = vpack.c.bf16 %v6615, %v6615
    %v6620 = vpack.c.bf16 %v6616, %v6616
    %v6621 = vpack.c.bf16 %v6617, %v6617
    %v6622 = vpack.c.bf16 %v6618, %v6618
    %v6623 = vld [vmem:[%s9] sm:$0xf]
    %v6624 = vld [vmem:[%s9 + $0x4] sm:$0xf]
    %v6625 = vld [vmem:[%s9 + $0x8] sm:$0xf]
    %v6626 = vld [vmem:[%s9 + $0xc] sm:$0xf]
    %v6627 = vld [vmem:[%s9 + $0x10] sm:$0xf]
    %v6628 = vld [vmem:[%s9 + $0x14] sm:$0xf]
    %v6629 = vld [vmem:[%s9 + $0x18] sm:$0xf]
    %v6630 = vld [vmem:[%s9 + $0x1c] sm:$0xf]
    %v6631 = vld [vmem:[%s9 + $0x20] sm:$0xf]
    %v6632 = vld [vmem:[%s9 + $0x24] sm:$0xf]
    %v6633 = vld [vmem:[%s9 + $0x28] sm:$0xf]
    %v6634 = vld [vmem:[%s9 + $0x2c] sm:$0xf]
    %v6635 = vld [vmem:[%s9 + $0x30] sm:$0xf]
    %v6636 = vld [vmem:[%s9 + $0x34] sm:$0xf]
    %v6637 = vld [vmem:[%s9 + $0x38] sm:$0xf]
    %v6638 = vld [vmem:[%s9 + $0x3c] sm:$0xf]
    %v6639 = vld [vmem:[%s9 + $0x40] sm:$0xf]
    %v6640 = vld [vmem:[%s9 + $0x44] sm:$0xf]
    %v6641 = vld [vmem:[%s9 + $0x48] sm:$0xf]
    %v6642 = vld [vmem:[%s9 + $0x4c] sm:$0xf]
    %v6643 = vld [vmem:[%s9 + $0x50] sm:$0xf]
    %v6644 = vld [vmem:[%s9 + $0x54] sm:$0xf]
    %v6645 = vld [vmem:[%s9 + $0x58] sm:$0xf]
    %v6646 = vld [vmem:[%s9 + $0x5c] sm:$0xf]
    %v6647 = vld [vmem:[%s9 + $0x60] sm:$0xf]
    %v6648 = vld [vmem:[%s9 + $0x64] sm:$0xf]
    %v6649 = vld [vmem:[%s9 + $0x68] sm:$0xf]
    %v6650 = vld [vmem:[%s9 + $0x6c] sm:$0xf]
    %v6651 = vld [vmem:[%s9 + $0x70] sm:$0xf]
    %v6652 = vld [vmem:[%s9 + $0x74] sm:$0xf]
    %v6653 = vld [vmem:[%s9 + $0x78] sm:$0xf]
    %v6654 = vld [vmem:[%s9 + $0x7c] sm:$0xf]
    %v6655 = vld [vmem:[%s9 + $0x80] sm:$0xf]
    %v6656 = vld [vmem:[%s9 + $0x84] sm:$0xf]
    %v6657 = vld [vmem:[%s9 + $0x88] sm:$0xf]
    %v6658 = vld [vmem:[%s9 + $0x8c] sm:$0xf]
    %v6659 = vld [vmem:[%s9 + $0x90] sm:$0xf]
    %v6660 = vld [vmem:[%s9 + $0x94] sm:$0xf]
    %v6661 = vld [vmem:[%s9 + $0x98] sm:$0xf]
    %v6662 = vld [vmem:[%s9 + $0x9c] sm:$0xf]
    %v6663 = vld [vmem:[%s9 + $0xa0] sm:$0xf]
    %v6664 = vld [vmem:[%s9 + $0xa4] sm:$0xf]
    %v6665 = vld [vmem:[%s9 + $0xa8] sm:$0xf]
    %v6666 = vld [vmem:[%s9 + $0xac] sm:$0xf]
    %v6667 = vld [vmem:[%s9 + $0xb0] sm:$0xf]
    %v6668 = vld [vmem:[%s9 + $0xb4] sm:$0xf]
    %v6669 = vld [vmem:[%s9 + $0xb8] sm:$0xf]
    %v6670 = vld [vmem:[%s9 + $0xbc] sm:$0xf]
    %v6671 = vld [vmem:[%s9 + $0xc0] sm:$0xf]
    %v6672 = vld [vmem:[%s9 + $0xc4] sm:$0xf]
    %v6673 = vld [vmem:[%s9 + $0xc8] sm:$0xf]
    %v6674 = vld [vmem:[%s9 + $0xcc] sm:$0xf]
    %v6675 = vld [vmem:[%s9 + $0xd0] sm:$0xf]
    %v6676 = vld [vmem:[%s9 + $0xd4] sm:$0xf]
    %v6677 = vld [vmem:[%s9 + $0xd8] sm:$0xf]
    %v6678 = vld [vmem:[%s9 + $0xdc] sm:$0xf]
    %v6679 = vld [vmem:[%s9 + $0xe0] sm:$0xf]
    %v6680 = vld [vmem:[%s9 + $0xe4] sm:$0xf]
    %v6681 = vld [vmem:[%s9 + $0xe8] sm:$0xf]
    %v6682 = vld [vmem:[%s9 + $0xec] sm:$0xf]
    %v6683 = vld [vmem:[%s9 + $0xf0] sm:$0xf]
    %v6684 = vld [vmem:[%s9 + $0xf4] sm:$0xf]
    %v6685 = vld [vmem:[%s9 + $0xf8] sm:$0xf]
    %v6686 = vld [vmem:[%s9 + $0xfc] sm:$0xf]
    %v6687 = vld [vmem:[%s10] sm:$0x1]
    %v6689 = vlaneseq
    %v6690 = vshrl.u32 %v6689, 7
    %v6691 = vsub.s32 0, %v6690
    %v6692 = vrot.slane %v6687, %v6691
    %v6758 = vunpack.c.l.b16 %v6623
    %v6759 = vunpack.c.l.b16 %v6624
    %v6760 = vunpack.c.l.b16 %v6625
    %v6761 = vunpack.c.l.b16 %v6626
    %v6762 = vunpack.c.l.b16 %v6627
    %v6763 = vunpack.c.l.b16 %v6628
    %v6764 = vunpack.c.l.b16 %v6629
    %v6765 = vunpack.c.l.b16 %v6630
    %v6766 = vunpack.c.l.b16 %v6631
    %v6767 = vunpack.c.l.b16 %v6632
    %v6768 = vunpack.c.l.b16 %v6633
    %v6769 = vunpack.c.l.b16 %v6634
    %v6770 = vunpack.c.l.b16 %v6635
    %v6771 = vunpack.c.l.b16 %v6636
    %v6772 = vunpack.c.l.b16 %v6637
    %v6773 = vunpack.c.l.b16 %v6638
    %v6774 = vunpack.c.l.b16 %v6639
    %v6775 = vunpack.c.l.b16 %v6640
    %v6776 = vunpack.c.l.b16 %v6641
    %v6777 = vunpack.c.l.b16 %v6642
    %v6778 = vunpack.c.l.b16 %v6643
    %v6779 = vunpack.c.l.b16 %v6644
    %v6780 = vunpack.c.l.b16 %v6645
    %v6781 = vunpack.c.l.b16 %v6646
    %v6782 = vunpack.c.l.b16 %v6647
    %v6783 = vunpack.c.l.b16 %v6648
    %v6784 = vunpack.c.l.b16 %v6649
    %v6785 = vunpack.c.l.b16 %v6650
    %v6786 = vunpack.c.l.b16 %v6651
    %v6787 = vunpack.c.l.b16 %v6652
    %v6788 = vunpack.c.l.b16 %v6653
    %v6789 = vunpack.c.l.b16 %v6654
    %v6790 = vunpack.c.l.b16 %v6655
    %v6791 = vunpack.c.l.b16 %v6656
    %v6792 = vunpack.c.l.b16 %v6657
    %v6793 = vunpack.c.l.b16 %v6658
    %v6794 = vunpack.c.l.b16 %v6659
    %v6795 = vunpack.c.l.b16 %v6660
    %v6796 = vunpack.c.l.b16 %v6661
    %v6797 = vunpack.c.l.b16 %v6662
    %v6798 = vunpack.c.l.b16 %v6663
    %v6799 = vunpack.c.l.b16 %v6664
    %v6800 = vunpack.c.l.b16 %v6665
    %v6801 = vunpack.c.l.b16 %v6666
    %v6802 = vunpack.c.l.b16 %v6667
    %v6803 = vunpack.c.l.b16 %v6668
    %v6804 = vunpack.c.l.b16 %v6669
    %v6805 = vunpack.c.l.b16 %v6670
    %v6806 = vunpack.c.l.b16 %v6671
    %v6807 = vunpack.c.l.b16 %v6672
    %v6808 = vunpack.c.l.b16 %v6673
    %v6809 = vunpack.c.l.b16 %v6674
    %v6810 = vunpack.c.l.b16 %v6675
    %v6811 = vunpack.c.l.b16 %v6676
    %v6812 = vunpack.c.l.b16 %v6677
    %v6813 = vunpack.c.l.b16 %v6678
    %v6814 = vunpack.c.l.b16 %v6679
    %v6815 = vunpack.c.l.b16 %v6680
    %v6816 = vunpack.c.l.b16 %v6681
    %v6817 = vunpack.c.l.b16 %v6682
    %v6818 = vunpack.c.l.b16 %v6683
    %v6819 = vunpack.c.l.b16 %v6684
    %v6820 = vunpack.c.l.b16 %v6685
    %v6821 = vunpack.c.l.b16 %v6686
    %v6822 = vpack.c.b16 %v6759, %v6758
    %v6823 = vpack.c.b16 %v6761, %v6760
    %v6824 = vpack.c.b16 %v6763, %v6762
    %v6825 = vpack.c.b16 %v6765, %v6764
    %v6826 = vpack.c.b16 %v6767, %v6766
    %v6827 = vpack.c.b16 %v6769, %v6768
    %v6828 = vpack.c.b16 %v6771, %v6770
    %v6829 = vpack.c.b16 %v6773, %v6772
    %v6830 = vpack.c.b16 %v6775, %v6774
    %v6831 = vpack.c.b16 %v6777, %v6776
    %v6832 = vpack.c.b16 %v6779, %v6778
    %v6833 = vpack.c.b16 %v6781, %v6780
    %v6834 = vpack.c.b16 %v6783, %v6782
    %v6835 = vpack.c.b16 %v6785, %v6784
    %v6836 = vpack.c.b16 %v6787, %v6786
    %v6837 = vpack.c.b16 %v6789, %v6788
    %v6838 = vpack.c.b16 %v6791, %v6790
    %v6839 = vpack.c.b16 %v6793, %v6792
    %v6840 = vpack.c.b16 %v6795, %v6794
    %v6841 = vpack.c.b16 %v6797, %v6796
    %v6842 = vpack.c.b16 %v6799, %v6798
    %v6843 = vpack.c.b16 %v6801, %v6800
    %v6844 = vpack.c.b16 %v6803, %v6802
    %v6845 = vpack.c.b16 %v6805, %v6804
    %v6846 = vpack.c.b16 %v6807, %v6806
    %v6847 = vpack.c.b16 %v6809, %v6808
    %v6848 = vpack.c.b16 %v6811, %v6810
    %v6849 = vpack.c.b16 %v6813, %v6812
    %v6850 = vpack.c.b16 %v6815, %v6814
    %v6851 = vpack.c.b16 %v6817, %v6816
    %v6852 = vpack.c.b16 %v6819, %v6818
    %v6853 = vpack.c.b16 %v6821, %v6820
    %6886 = vmatprep.subr.bf16.mxu0 0
    %6887 = vmatpush1.bf16.msra.mxu0 %v6829
    %6888 = vmatprep.subr.bf16.mxu0 0
    %6889 = vmatpush1.bf16.msra.mxu0 %v6828
    %6890 = vmatprep.subr.bf16.mxu0 0
    %6891 = vmatpush1.bf16.msra.mxu0 %v6827
    %6892 = vmatprep.subr.bf16.mxu0 0
    %6893 = vmatpush1.bf16.msra.mxu0 %v6826
    %6894 = vmatprep.subr.bf16.mxu0 0
    %6895 = vmatpush1.bf16.msra.mxu0 %v6825
    %6896 = vmatprep.subr.bf16.mxu0 0
    %6897 = vmatpush1.bf16.msra.mxu0 %v6824
    %6898 = vmatprep.subr.bf16.mxu0 0
    %6899 = vmatpush1.bf16.msra.mxu0 %v6823
    %6900 = vmatprep.subr.bf16.mxu0 0
    %6901 = vmatpush1.bf16.msra.mxu0 %v6822
    %6902 = vmatprep.subr.bf16.mxu0 0
    %6903 = vmatpush2.bf16.msra.mxu0 %v6837
    %6904 = vmatprep.subr.bf16.mxu0 0
    %6905 = vmatpush2.bf16.msra.mxu0 %v6836
    %6906 = vmatprep.subr.bf16.mxu0 0
    %6907 = vmatpush2.bf16.msra.mxu0 %v6835
    %6908 = vmatprep.subr.bf16.mxu0 0
    %6909 = vmatpush2.bf16.msra.mxu0 %v6834
    %6910 = vmatprep.subr.bf16.mxu0 0
    %6911 = vmatpush2.bf16.msra.mxu0 %v6833
    %6912 = vmatprep.subr.bf16.mxu0 0
    %6913 = vmatpush2.bf16.msra.mxu0 %v6832
    %6914 = vmatprep.subr.bf16.mxu0 0
    %6915 = vmatpush2.bf16.msra.mxu0 %v6831
    %6916 = vmatprep.subr.bf16.mxu0 0
    %6917 = vmatpush2.bf16.msra.mxu0 %v6830
    %6918 = vmatprep.mubr.bf16.mxu0 %v6620
    %6919 = vmatmul.mubr.bf16.gmra.mxu0 %v6619
    %v6920 = vpop.f32.mrf.mxu0
    %v6921 = vadd.f32 %v6692, %v6920
    %v6922 = vpop.f32.mrf.mxu0
    %v6923 = vpop.f32.mrf.mxu0
    %v6924 = vpop.f32.mrf.mxu0
    %6925 = vdwg.mxu0
    %6926 = vmatprep.subr.bf16.mxu0 0
    %6927 = vmatpush1.bf16.msra.mxu0 %v6845
    %6928 = vmatprep.subr.bf16.mxu0 0
    %6929 = vmatpush1.bf16.msra.mxu0 %v6844
    %6930 = vmatprep.subr.bf16.mxu0 0
    %6931 = vmatpush1.bf16.msra.mxu0 %v6843
    %6932 = vmatprep.subr.bf16.mxu0 0
    %6933 = vmatpush1.bf16.msra.mxu0 %v6842
    %6934 = vmatprep.subr.bf16.mxu0 0
    %6935 = vmatpush1.bf16.msra.mxu0 %v6841
    %6936 = vmatprep.subr.bf16.mxu0 0
    %6937 = vmatpush1.bf16.msra.mxu0 %v6840
    %6938 = vmatprep.subr.bf16.mxu0 0
    %6939 = vmatpush1.bf16.msra.mxu0 %v6839
    %6940 = vmatprep.subr.bf16.mxu0 0
    %6941 = vmatpush1.bf16.msra.mxu0 %v6838
    %6942 = vmatprep.subr.bf16.mxu0 0
    %6943 = vmatpush2.bf16.msra.mxu0 %v6853
    %6944 = vmatprep.subr.bf16.mxu0 0
    %6945 = vmatpush2.bf16.msra.mxu0 %v6852
    %6946 = vmatprep.subr.bf16.mxu0 0
    %6947 = vmatpush2.bf16.msra.mxu0 %v6851
    %6948 = vmatprep.subr.bf16.mxu0 0
    %6949 = vmatpush2.bf16.msra.mxu0 %v6850
    %6950 = vmatprep.subr.bf16.mxu0 0
    %6951 = vmatpush2.bf16.msra.mxu0 %v6849
    %6952 = vmatprep.subr.bf16.mxu0 0
    %6953 = vmatpush2.bf16.msra.mxu0 %v6848
    %6954 = vmatprep.subr.bf16.mxu0 0
    %6955 = vmatpush2.bf16.msra.mxu0 %v6847
    %6956 = vmatprep.subr.bf16.mxu0 0
    %6957 = vmatpush2.bf16.msra.mxu0 %v6846
    %6958 = vmatprep.mubr.bf16.mxu0 %v6622
    %6959 = vmatmul.mubr.bf16.gmra.mxu0 %v6621
    %v6960 = vpop.f32.mrf.mxu0
    %v6961 = vadd.f32 %v6921, %v6960
    %v6962 = vpop.f32.mrf.mxu0
    %v6963 = vpop.f32.mrf.mxu0
    %v6964 = vpop.f32.mrf.mxu0
    %6965 = vdwg.mxu0
    %6966 = vst [vmem:[#allocation9] sm:$0x3] %v6961
    // Predicated region
    $region50: #{net_forward.1} parent=1 // pred_check
      _
    $region51: #{net_forward.1} parent=1 // pred_check_branch
      %6968 = sbr.rel (0) target = $region53
    $region52: #{net_forward.1} parent=1 // pred_region
      %s6970 = ssub.s32 32, 32
      %6971 = vsyncadd [#allocation8], %s6970
      %s6973 = sshll.u32 [#allocation9], 4
      %s6974 = int_to_ptr.vmem [resolvable:$true] %s6973
      %6976 = dma.vmem_to_hbm [thread:$0]  %s6974, 32, %s11, [#allocation8]
    $region53: #{net_forward.1} parent=1 // pred_fallthru
      _
    // Predicated region
    $region54: #{net_forward.1} parent=1 // pred_check
      _
    $region55: #{net_forward.1} parent=1 // pred_check_branch
      %6978 = sbr.rel (0) target = $region57
    $region56: #{net_forward.1} parent=1 // pred_region
      %6979 = dma.done [#allocation8], 32
    $region57: #{net_forward.1} parent=1 // pred_fallthru
      _
    %6980 = vsyncpa [#allocation7], 1
    %6981 = vsyncpa [#allocation8], 1

</llo_original>
